<compile_context>
chip_gen: v5e
topology: v5e:2x2
jax: 0.10.0
libtpu: 0.0.40
codegen_flags: <defaults>
</compile_context>

<pallas_src>
import functools

import jax
import jax.numpy as jnp
from jax.experimental import pallas as pl
from jax.experimental.pallas import tpu as pltpu

EPS = 1e-5


def _dim_params(*sems):
    """dimension_semantics hint (megacore); harmless to drop if unsupported."""
    try:
        return pltpu.CompilerParams(dimension_semantics=tuple(sems))
    except Exception:  # pragma: no cover - older jax fallbacks
        return None


def _row_tile(hw, cap=1024):
    """Largest row tile (multiple of 8, divisor of hw) no bigger than cap."""
    if hw <= cap:
        return hw
    for t in range(cap - cap % 8, 7, -8):
        if hw % t == 0:
            return t
    return hw


# ---------------------- fused SE + BN + ReLU + 1x1 conv ----------------------

def _fused_se_conv1x1_kernel(*refs, n, out_relu, with_gap, inv_hw):
    """out = [relu](sum_i relu(x_i*m_i + c_i) @ w_i + bias); optional fused GAP."""
    xs = refs[0:n]
    ms = refs[n:2 * n]
    cs = refs[2 * n:3 * n]
    ws = refs[3 * n:4 * n]
    bias_ref = refs[4 * n]
    o_ref = refs[4 * n + 1]

    acc = None
    for i in range(n):
        # SE*BN affine + ReLU prologue in bf16 (m_i = s_i*bn_a_i, c_i = s_i*bn_b_i).
        a = jnp.maximum(xs[i][0] * ms[i][0] + cs[i][0], 0)
        d = jnp.dot(a, ws[i][...], preferred_element_type=jnp.float32)
        acc = d if acc is None else acc + d
    acc = acc + bias_ref[...]
    if out_relu:
        acc = jnp.maximum(acc, 0.0)
    o_ref[0] = acc.astype(o_ref.dtype)

    if with_gap:
        p_ref = refs[4 * n + 2]
        contrib = jnp.sum(acc, axis=0, keepdims=True) * inv_hw

        @pl.when(pl.program_id(1) == 0)
        def _():
            p_ref[0] = contrib

        @pl.when(pl.program_id(1) != 0)
        def _():
            p_ref[0] = p_ref[0] + contrib


def fused_se_conv1x1(slabs, mults, offs, weights, bias=None, relu=False,
                     with_gap=False):
    """Multi-slab fused 1x1 conv (no dense concat of the input slabs).

    slabs   : list of (B, HW, C_i) bf16 channel slabs of the dense feature map.
    mults   : list of (B, C_i) f32 = se_scale_i * bn_a_i.
    offs    : list of (B, C_i) f32 = se_scale_i * bn_b_i.
    weights : list of (C_i, N) channel slices of the full 1x1 kernel.
    Returns (B, HW, N) bf16 [and (B, N) f32 spatial mean if with_gap].
    """
    B, HW, _ = slabs[0].shape
    N = weights[0].shape[-1]
    n = len(slabs)
    if bias is None:
        bias = jnp.zeros((N,), jnp.float32)
    tm = _row_tile(HW)

    kernel = functools.partial(_fused_se_conv1x1_kernel, n=n, out_relu=relu,
                               with_gap=with_gap, inv_hw=1.0 / HW)

    in_specs, args = [], []
    for x in slabs:
        c = x.shape[-1]
        in_specs.append(pl.BlockSpec((1, tm, c), lambda b, m: (b, m, 0)))
        args.append(x.astype(jnp.bfloat16))
    for v in mults + offs:
        c = v.shape[-1]
        in_specs.append(pl.BlockSpec((1, 1, c), lambda b, m: (b, 0, 0)))
        args.append(v.reshape(B, 1, c).astype(jnp.bfloat16))
    for w in weights:
        c = w.shape[0]
        in_specs.append(pl.BlockSpec((c, N), lambda b, m: (0, 0)))
        args.append(w.astype(jnp.bfloat16))
    in_specs.append(pl.BlockSpec((1, N), lambda b, m: (0, 0)))
    args.append(bias.reshape(1, N).astype(jnp.float32))

    # TODO(synk): N (< 128 lanes) forces masked stores; a lane-dense
    # spatial-major output layout would need a transposed pipeline for these
    # small-channel stages.
    out_shape = [jax.ShapeDtypeStruct((B, HW, N), jnp.bfloat16)]
    out_specs = [pl.BlockSpec((1, tm, N), lambda b, m: (b, m, 0))]
    if with_gap:
        out_shape.append(jax.ShapeDtypeStruct((B, 1, N), jnp.float32))
        out_specs.append(pl.BlockSpec((1, 1, N), lambda b, m: (b, 0, 0)))
        sems = ("parallel", "arbitrary")      # GAP accumulates over row tiles
    else:
        sems = ("parallel", "parallel")

    res = pl.pallas_call(
        kernel,
        out_shape=tuple(out_shape) if with_gap else out_shape[0],
        grid=(B, HW // tm),
        in_specs=in_specs,
        out_specs=tuple(out_specs) if with_gap else out_specs[0],
        compiler_params=_dim_params(*sems),
    )(*args)
    if with_gap:
        h, pooled = res
        return h, pooled.reshape(B, N)
    return res


# ------------------------------ 3x3 conv + GAP -------------------------------

def _conv3x3_gap_kernel(g_ref, w_ref, o_ref, p_ref, *, H, W):
    """3x3 conv (pad=1, stride=1) as 3 matmuls of K=3*Cin over the kw-merged,
    row-padded operand; also emits the spatial mean of the raw output (the
    next layer's SE pools it)."""
    HW = H * W
    acc = None
    for kh in range(3):
        off = kh * W                                   # static, multiple of 8
        win = g_ref[0, off:off + HW, :]                # aligned (HW, 3*Cin) bf16
        d = jnp.dot(win, w_ref[kh], preferred_element_type=jnp.float32)
        acc = d if acc is None else acc + d
    o_ref[0] = acc.astype(o_ref.dtype)
    p_ref[0] = jnp.mean(acc, axis=0, keepdims=True)


def conv3x3_with_gap(h_flat, w3, H, W):
    """h_flat: (B, HW, Cin) bf16; w3: (3, 3*Cin, Cout) ordered (kh, (kw, ci), co).
    Returns (new (B, HW, Cout) bf16, pooled (B, Cout) f32 spatial mean)."""
    B, HW, Cin = h_flat.shape
    Cout = w3.shape[-1]
    # kw-merged operand built once in XLA (3x the small bottleneck tensor):
    # column padding handles the kw edge taps, one zero image-row above/below
    # handles the kh edge taps, so the kernel needs no masks and only aligned
    # static slices.
    h4 = h_flat.reshape(B, H, W, Cin)
    hpw = jnp.pad(h4, ((0, 0), (0, 0), (1, 1), (0, 0)))
    g = jnp.concatenate(
        [hpw[:, :, 0:W], hpw[:, :, 1:W + 1], hpw[:, :, 2:W + 2]], axis=-1)
    g = g.reshape(B, HW, 3 * Cin)
    g = jnp.pad(g, ((0, 0), (W, W), (0, 0)))           # (B, (H+2)*W, 3*Cin)
    P = (H + 2) * W

    # TODO(synk): row-tile with a halo (Element-style index_map) for large H*W
    # so the whole padded image need not be resident per grid step on v7x.
    kernel = functools.partial(_conv3x3_gap_kernel, H=H, W=W)
    new, pooled = pl.pallas_call(
        kernel,
        out_shape=(jax.ShapeDtypeStruct((B, HW, Cout), jnp.bfloat16),
                   jax.ShapeDtypeStruct((B, 1, Cout), jnp.float32)),
        grid=(B,),
        in_specs=[pl.BlockSpec((1, P, 3 * Cin), lambda b: (b, 0, 0)),
                  pl.BlockSpec((3, 3 * Cin, Cout), lambda b: (0, 0, 0))],
        out_specs=(pl.BlockSpec((1, HW, Cout), lambda b: (b, 0, 0)),
                   pl.BlockSpec((1, 1, Cout), lambda b: (b, 0, 0))),
        compiler_params=_dim_params("parallel"),
    )(g.astype(jnp.bfloat16), w3.astype(jnp.bfloat16))
    return new, pooled.reshape(B, Cout)


# ----------------------------- final SE + pooled -----------------------------

def _final_se_kernel(x_ref, s_ref, a_ref, b_ref, o_ref, p_ref, *, inv_hw):
    x = x_ref[0].astype(jnp.float32)
    feat = s_ref[0] * (x * a_ref[0] + b_ref[0])
    o_ref[0] = feat
    contrib = jnp.sum(jnp.maximum(feat, 0.0), axis=0, keepdims=True) * inv_hw

    @pl.when(pl.program_id(1) == 0)
    def _():
        p_ref[0] = contrib

    @pl.when(pl.program_id(1) != 0)
    def _():
        p_ref[0] = p_ref[0] + contrib


def final_se(x_flat, se_scale, bn_a, bn_b):
    """features = se * norm5(x); fused epilogue pooled = GAP(relu(features))."""
    B, HW, C = x_flat.shape
    tm = _row_tile(HW)
    s3 = se_scale.reshape(B, 1, C).astype(jnp.float32)
    a3 = bn_a.reshape(1, 1, C).astype(jnp.float32)
    b3 = bn_b.reshape(1, 1, C).astype(jnp.float32)
    kernel = functools.partial(_final_se_kernel, inv_hw=1.0 / HW)
    feat, pooled = pl.pallas_call(
        kernel,
        out_shape=(jax.ShapeDtypeStruct((B, HW, C), jnp.float32),
                   jax.ShapeDtypeStruct((B, 1, C), jnp.float32)),
        grid=(B, HW // tm),
        in_specs=[pl.BlockSpec((1, tm, C), lambda b, m: (b, m, 0)),
                  pl.BlockSpec((1, 1, C), lambda b, m: (b, 0, 0)),
                  pl.BlockSpec((1, 1, C), lambda b, m: (0, 0, 0)),
                  pl.BlockSpec((1, 1, C), lambda b, m: (0, 0, 0))],
        out_specs=(pl.BlockSpec((1, tm, C), lambda b, m: (b, m, 0)),
                   pl.BlockSpec((1, 1, C), lambda b, m: (b, 0, 0))),
        compiler_params=_dim_params("parallel", "arbitrary"),
    )(x_flat.astype(jnp.bfloat16), s3, a3, b3)
    return feat, pooled.reshape(B, C)


# ------------------------ tiny (B, C) math in plain XLA -----------------------

def _se_scale(pooled, bn_a, bn_b, w_down, w_up):
    """sigmoid(relu(BN_affine(mean) @ w_down) @ w_up).
    AdaptiveAvgPool(BN(x)) == BN affine applied to the spatial mean, so the
    SE branch only ever needs the (B, C) pooled vector."""
    pooled_bn = pooled * bn_a[None, :] + bn_b[None, :]
    h = jnp.maximum(pooled_bn @ w_down, 0.0)
    return jax.nn.sigmoid(h @ w_up)


def _split_affine(s, bn_a, bn_b, w_full, slab_sizes):
    """Per-slab (se*bn_a, se*bn_b, weight-slice) for the multi-slab matmul."""
    mults, offs, weights = [], [], []
    off = 0
    for c in slab_sizes:
        a = bn_a[off:off + c]
        b = bn_b[off:off + c]
        si = s[:, off:off + c]
        mults.append(si * a[None, :])
        offs.append(si * b[None, :])
        weights.append(w_full[off:off + c, :])
        off += c
    return mults, offs, weights


# ------------------------------ parameters ----------------------------------

def bn_affine(key, c):
    """Fold eval-mode BatchNorm2d into per-channel (a, b): y = x*a + b."""
    k1, k2, k3, k4 = jax.random.split(key, 4)
    gamma = jax.random.uniform(k1, (c,), jnp.float32, 0.5, 1.5)
    beta = 0.1 * jax.random.normal(k2, (c,), jnp.float32)
    mean = 0.1 * jax.random.normal(k3, (c,), jnp.float32)
    var = jax.random.uniform(k4, (c,), jnp.float32, 0.5, 1.5)
    a = gamma / jnp.sqrt(var + EPS)
    b = beta - mean * a
    return a, b


def init_layer_params(key, cin, growth, bn_size):
    keys = jax.random.split(key, 6)
    bn1_a, bn1_b = bn_affine(keys[0], cin)
    bn2_a, bn2_b = bn_affine(keys[1], bn_size * growth)
    cr = cin // 16
    w_down = jax.random.normal(keys[2], (cin, cr), jnp.float32) / jnp.sqrt(float(cin))
    w_up = jax.random.normal(keys[3], (cr, cin), jnp.float32) / jnp.sqrt(float(cr))
    w1 = jax.random.normal(keys[4], (cin, bn_size * growth), jnp.float32) / jnp.sqrt(float(cin))
    w2 = jax.random.normal(keys[5], (3, 3, bn_size * growth, growth), jnp.float32) \
        / jnp.sqrt(float(9 * bn_size * growth))
    return dict(
        bn1_a=bn1_a, bn1_b=bn1_b,
        # norm2's scale folded into the 1x1 conv weights (static fold).
        w1f=(w1 * bn2_a[None, :]).astype(jnp.bfloat16),
        bn2_b=bn2_b,
        w_down=w_down, w_up=w_up,
        # (kh, (kw, ci), co) layout matched by the kw-merged conv operand.
        w2=w2.reshape(3, 3 * bn_size * growth, growth).astype(jnp.bfloat16))


def init_transition_params(key, cin, cout):
    keys = jax.random.split(key, 4)
    bn_a, bn_b = bn_affine(keys[0], cin)
    cr = cin // 16
    w_down = jax.random.normal(keys[1], (cin, cr), jnp.float32) / jnp.sqrt(float(cin))
    w_up = jax.random.normal(keys[2], (cr, cin), jnp.float32) / jnp.sqrt(float(cr))
    w_conv = jax.random.normal(keys[3], (cin, cout), jnp.float32) / jnp.sqrt(float(cin))
    return dict(bn_a=bn_a, bn_b=bn_b, w_down=w_down, w_up=w_up,
                w_conv=w_conv.astype(jnp.bfloat16))


def init_model(key, growth_rate, block_config, num_init_features, bn_size,
               num_classes):
    params = dict(blocks=[], transitions=[])
    num_features = num_init_features
    for i, num_layers in enumerate(block_config):
        layers = []
        for j in range(num_layers):
            key, sk = jax.random.split(key)
            layers.append(init_layer_params(
                sk, num_features + j * growth_rate, growth_rate, bn_size))
        params['blocks'].append(layers)
        num_features += num_layers * growth_rate
        if i != len(block_config) - 1:
            key, sk = jax.random.split(key)
            params['transitions'].append(
                init_transition_params(sk, num_features, num_features // 2))
            num_features //= 2
    key, k1, k2, k3, k4, k5 = jax.random.split(key, 6)
    params['norm5_a'], params['norm5_b'] = bn_affine(k1, num_features)
    cr = num_features // 16
    params['fse_down'] = jax.random.normal(k2, (num_features, cr), jnp.float32) / jnp.sqrt(float(num_features))
    params['fse_up'] = jax.random.normal(k3, (cr, num_features), jnp.float32) / jnp.sqrt(float(cr))
    params['cls_w'] = jax.random.normal(k4, (num_classes, num_features), jnp.float32) / jnp.sqrt(float(num_features))
    params['cls_b'] = 0.01 * jax.random.normal(k5, (num_classes,), jnp.float32)
    return params, num_features


# ------------------------------ forward pass --------------------------------

def se_dense_layer_fwd(slabs, pooled, p, H, W):
    """slabs: list of (B, HW, C_i) bf16; pooled: (B, sum C_i) f32 spatial mean."""
    s = _se_scale(pooled, p['bn1_a'], p['bn1_b'], p['w_down'], p['w_up'])
    sizes = [x.shape[-1] for x in slabs]
    mults, offs, weights = _split_affine(s, p['bn1_a'], p['bn1_b'], p['w1f'], sizes)
    # conv1(relu(se * norm1(x))) with norm2's scale folded into w1f; bias+relu2
    # as the matmul epilogue.  Only partial matmuls per slab -- no dense concat.
    h = fused_se_conv1x1(slabs, mults, offs, weights, bias=p['bn2_b'], relu=True)
    # conv2 (3x3, pad=1); GAP of `new` (for the next layer's SE) rides along.
    new, pooled_new = conv3x3_with_gap(h, p['w2'], H, W)
    # drop_rate == 0 -> no dropout (matches default config).
    return slabs + [new], jnp.concatenate([pooled, pooled_new], axis=-1)


def transition_fwd(slabs, pooled, p, B, H, W):
    s = _se_scale(pooled, p['bn_a'], p['bn_b'], p['w_down'], p['w_up'])
    sizes = [x.shape[-1] for x in slabs]
    mults, offs, weights = _split_affine(s, p['bn_a'], p['bn_b'], p['w_conv'], sizes)
    # SE/BN/ReLU fused into the 1x1 conv; its GAP epilogue is the next block's
    # pooled vector for free (GAP(avgpool2x2(h)) == GAP(h) exactly).
    h, pooled_new = fused_se_conv1x1(slabs, mults, offs, weights, with_gap=True)
    Co = h.shape[-1]
    # AvgPool2d(2,2): tiny fixed reduction on already-halved channels, plain XLA.
    h4 = h.reshape(B, H, W, Co).astype(jnp.float32)
    h4 = h4.reshape(B, H // 2, 2, W // 2, 2, Co).mean(axis=(2, 4))
    Hn, Wn = H // 2, W // 2
    x_new = h4.reshape(B, Hn * Wn, Co).astype(jnp.bfloat16)
    return [x_new], pooled_new, Hn, Wn


def model_forward(x_nchw, params):
    x = jnp.transpose(x_nchw, (0, 2, 3, 1))                   # NCHW -> NHWC
    B, H, W, C = x.shape
    x_f32 = x.reshape(B, H * W, C)
    slabs = [x_f32.astype(jnp.bfloat16)]
    pooled = jnp.mean(x_f32.astype(jnp.float32), axis=1)      # (B, C) f32
    for i, layers in enumerate(params['blocks']):
        for lp in layers:
            slabs, pooled = se_dense_layer_fwd(slabs, pooled, lp, H, W)
        if i < len(params['transitions']):
            slabs, pooled, H, W = transition_fwd(
                slabs, pooled, params['transitions'][i], B, H, W)
    # One concat of the dense slab at the very end (out1 needs it as a single
    # array anyway); never per layer.
    x_cat = jnp.concatenate(slabs, axis=-1) if len(slabs) > 1 else slabs[0]
    C = x_cat.shape[-1]
    a5, b5 = params['norm5_a'], params['norm5_b']
    s = _se_scale(pooled, a5, b5, params['fse_down'], params['fse_up'])
    # features = se * norm5(x); classifier GAP(relu(.)) fused in the same kernel.
    feat, pooled_relu = final_se(x_cat, s, a5, b5)             # f32, f32
    out1 = jnp.transpose(feat.reshape(B, H, W, C), (0, 3, 1, 2))   # NCHW
    out = pooled_relu @ params['cls_w'].T + params['cls_b'][None, :]
    return out, out1, params['cls_w']


# --------------------------------- main --------------------------------------

if __name__ == "__main__":
    key = jax.random.PRNGKey(0)
    kp, kx = jax.random.split(key)

    # Small but structurally faithful config (all SE reductions stay >= 1).
    growth_rate = 16
    block_config = (2, 2)
    num_init_features = 32
    bn_size = 2
    num_classes = 6

    params, num_features = init_model(
        kp, growth_rate, block_config, num_init_features, bn_size, num_classes)

    # Input in PyTorch NCHW layout: the first dense block expects
    # num_init_features channels.
    x = jax.random.normal(kx, (2, num_init_features, 16, 16), jnp.float32)

    out, out1, cls_weight = jax.jit(model_forward)(x, params)
    jax.block_until_ready((out, out1, cls_weight))

    assert out.shape == (2, num_classes)
    assert out1.shape == (2, num_features, 8, 8)
    assert cls_weight.shape == (num_classes, num_features)
    assert bool(jnp.all(jnp.isfinite(out))) and bool(jnp.all(jnp.isfinite(out1)))
    print("KERNEL_OK")
</pallas_src>

<mosaic_0001>
module attributes {stable_mosaic.version = 11 : i64} {
  func.func @_fused_se_conv1x1_kernel(%arg0: i32, %arg1: i32, %arg2: memref<1x256x32xbf16, #tpu.memory_space<vmem>>, %arg3: memref<1x1x32xbf16, #tpu.memory_space<vmem>>, %arg4: memref<1x1x32xbf16, #tpu.memory_space<vmem>>, %arg5: memref<32x32xbf16, #tpu.memory_space<vmem>>, %arg6: memref<1x32xf32, #tpu.memory_space<vmem>>, %arg7: memref<1x256x32xbf16, #tpu.memory_space<vmem>>) attributes {dimension_semantics = [#tpu.dimension_semantics<parallel>, #tpu.dimension_semantics<parallel>], iteration_bounds = array<i64: 2, 1>, scalar_prefetch = 0 : i64, scratch_operands = 0 : i64, tpu.core_type = #tpu.core_type<tc>, window_params = [{transform_indices = @transform_0, window_bounds = array<i64: 1, 256, 32>}, {transform_indices = @transform_1, window_bounds = array<i64: 1, 1, 32>}, {transform_indices = @transform_2, window_bounds = array<i64: 1, 1, 32>}, {pipeline_mode = #tpu.pipeline_mode<synchronous>, transform_indices = @transform_3, window_bounds = array<i64: 32, 32>}, {pipeline_mode = #tpu.pipeline_mode<synchronous>, transform_indices = @transform_4, window_bounds = array<i64: 1, 32>}, {transform_indices = @transform_5, window_bounds = array<i64: 1, 256, 32>}]} {
    %c0 = arith.constant 0 : index
    %c0_0 = arith.constant 0 : index
    %c0_1 = arith.constant 0 : index
    %0 = vector.load %arg2[%c0, %c0_0, %c0_1] : memref<1x256x32xbf16, #tpu.memory_space<vmem>>, vector<1x256x32xbf16>
    %1 = vector.shape_cast %0 : vector<1x256x32xbf16> to vector<256x32xbf16>
    %c0_2 = arith.constant 0 : index
    %c0_3 = arith.constant 0 : index
    %c0_4 = arith.constant 0 : index
    %2 = vector.load %arg3[%c0_2, %c0_3, %c0_4] : memref<1x1x32xbf16, #tpu.memory_space<vmem>>, vector<1x1x32xbf16>
    %3 = vector.shape_cast %2 : vector<1x1x32xbf16> to vector<1x32xbf16>
    %4 = vector.broadcast %3 : vector<1x32xbf16> to vector<256x32xbf16>
    %5 = arith.mulf %1, %4 : vector<256x32xbf16>
    %c0_5 = arith.constant 0 : index
    %c0_6 = arith.constant 0 : index
    %c0_7 = arith.constant 0 : index
    %6 = vector.load %arg4[%c0_5, %c0_6, %c0_7] : memref<1x1x32xbf16, #tpu.memory_space<vmem>>, vector<1x1x32xbf16>
    %7 = vector.shape_cast %6 : vector<1x1x32xbf16> to vector<1x32xbf16>
    %8 = vector.broadcast %7 : vector<1x32xbf16> to vector<256x32xbf16>
    %9 = arith.addf %5, %8 : vector<256x32xbf16>
    %cst = arith.constant 0.000000e+00 : bf16
    %10 = vector.broadcast %cst : bf16 to vector<256x32xbf16>
    %11 = arith.maximumf %9, %10 : vector<256x32xbf16>
    %c0_8 = arith.constant 0 : index
    %c0_9 = arith.constant 0 : index
    %12 = vector.load %arg5[%c0_8, %c0_9] : memref<32x32xbf16, #tpu.memory_space<vmem>>, vector<32x32xbf16>
    %cst_10 = arith.constant dense<0.000000e+00> : vector<256x32xf32>
    %13 = tpu.matmul %11, %12, %cst_10 {dimension_numbers = #tpu.dot_dimension_numbers<[1], [0], [0], [1], [0, 0, 1, 1], [], []>} : vector<256x32xbf16>, vector<32x32xbf16>, vector<256x32xf32> -> vector<256x32xf32>
    %c0_11 = arith.constant 0 : index
    %c0_12 = arith.constant 0 : index
    %14 = vector.load %arg6[%c0_11, %c0_12] : memref<1x32xf32, #tpu.memory_space<vmem>>, vector<1x32xf32>
    %15 = vector.broadcast %14 : vector<1x32xf32> to vector<256x32xf32>
    %16 = arith.addf %13, %15 : vector<256x32xf32>
    %cst_13 = arith.constant 0.000000e+00 : f32
    %17 = vector.broadcast %cst_13 : f32 to vector<256x32xf32>
    %18 = arith.maximumf %16, %17 : vector<256x32xf32>
    %19 = arith.truncf %18 : vector<256x32xf32> to vector<256x32xbf16>
    %c0_14 = arith.constant 0 : index
    %c0_15 = arith.constant 0 : index
    %c0_16 = arith.constant 0 : index
    %20 = vector.load %arg7[%c0_14, %c0_15, %c0_16] : memref<1x256x32xbf16, #tpu.memory_space<vmem>>, vector<1x256x32xbf16>
    %21 = vector.shape_cast %20 : vector<1x256x32xbf16> to vector<256x32xbf16>
    %22 = vector.shape_cast %19 : vector<256x32xbf16> to vector<1x256x32xbf16>
    tpu.vector_store %arg7[%c0_14, %c0_15, %c0_16], %22 {strides = array<i32>} : memref<1x256x32xbf16, #tpu.memory_space<vmem>>, vector<1x256x32xbf16>,
    return
  }
  func.func @transform_0(%arg0: i32, %arg1: i32) -> (i32, i32, i32) {
    %c0_i32 = arith.constant 0 : i32
    %c0_i32_0 = arith.constant 0 : i32
    return %arg0, %arg1, %c0_i32 : i32, i32, i32
  }
  func.func @transform_1(%arg0: i32, %arg1: i32) -> (i32, i32, i32) {
    %c0_i32 = arith.constant 0 : i32
    %c0_i32_0 = arith.constant 0 : i32
    %c0_i32_1 = arith.constant 0 : i32
    return %arg0, %c0_i32, %c0_i32_0 : i32, i32, i32
  }
  func.func @transform_2(%arg0: i32, %arg1: i32) -> (i32, i32, i32) {
    %c0_i32 = arith.constant 0 : i32
    %c0_i32_0 = arith.constant 0 : i32
    %c0_i32_1 = arith.constant 0 : i32
    return %arg0, %c0_i32, %c0_i32_0 : i32, i32, i32
  }
  func.func @transform_3(%arg0: i32, %arg1: i32) -> (i32, i32) {
    %c0_i32 = arith.constant 0 : i32
    %c0_i32_0 = arith.constant 0 : i32
    %c0_i32_1 = arith.constant 0 : i32
    return %c0_i32, %c0_i32_0 : i32, i32
  }
  func.func @transform_4(%arg0: i32, %arg1: i32) -> (i32, i32) {
    %c0_i32 = arith.constant 0 : i32
    %c0_i32_0 = arith.constant 0 : i32
    %c0_i32_1 = arith.constant 0 : i32
    return %c0_i32, %c0_i32_0 : i32, i32
  }
  func.func @transform_5(%arg0: i32, %arg1: i32) -> (i32, i32, i32) {
    %c0_i32 = arith.constant 0 : i32
    %c0_i32_0 = arith.constant 0 : i32
    return %arg0, %arg1, %c0_i32 : i32, i32, i32
  }
}

module attributes {stable_mosaic.version = 11 : i64} {
  func.func @_conv3x3_gap_kernel(%arg0: i32, %arg1: memref<1x288x96xbf16, #tpu.memory_space<vmem>>, %arg2: memref<3x96x16xbf16, #tpu.memory_space<vmem>>, %arg3: memref<1x256x16xbf16, #tpu.memory_space<vmem>>, %arg4: memref<1x1x16xf32, #tpu.memory_space<vmem>>) attributes {dimension_semantics = [#tpu.dimension_semantics<parallel>], iteration_bounds = array<i64: 2>, scalar_prefetch = 0 : i64, scratch_operands = 0 : i64, tpu.core_type = #tpu.core_type<tc>, window_params = [{transform_indices = @transform_0, window_bounds = array<i64: 1, 288, 96>}, {pipeline_mode = #tpu.pipeline_mode<synchronous>, transform_indices = @transform_1, window_bounds = array<i64: 3, 96, 16>}, {transform_indices = @transform_2, window_bounds = array<i64: 1, 256, 16>}, {transform_indices = @transform_3, window_bounds = array<i64: 1, 1, 16>}]} {
    %c0 = arith.constant 0 : index
    %c0_0 = arith.constant 0 : index
    %c0_1 = arith.constant 0 : index
    %0 = vector.load %arg1[%c0, %c0_0, %c0_1] : memref<1x288x96xbf16, #tpu.memory_space<vmem>>, vector<1x256x96xbf16>
    %1 = vector.shape_cast %0 : vector<1x256x96xbf16> to vector<256x96xbf16>
    %c0_2 = arith.constant 0 : index
    %c0_3 = arith.constant 0 : index
    %c0_4 = arith.constant 0 : index
    %2 = vector.load %arg2[%c0_2, %c0_3, %c0_4] : memref<3x96x16xbf16, #tpu.memory_space<vmem>>, vector<1x96x16xbf16>
    %3 = vector.shape_cast %2 : vector<1x96x16xbf16> to vector<96x16xbf16>
    %cst = arith.constant dense<0.000000e+00> : vector<256x16xf32>
    %4 = tpu.matmul %1, %3, %cst {dimension_numbers = #tpu.dot_dimension_numbers<[1], [0], [0], [1], [0, 0, 1, 1], [], []>} : vector<256x96xbf16>, vector<96x16xbf16>, vector<256x16xf32> -> vector<256x16xf32>
    %c0_5 = arith.constant 0 : index
    %c16 = arith.constant 16 : index
    %c0_6 = arith.constant 0 : index
    %5 = vector.load %arg1[%c0_5, %c16, %c0_6] : memref<1x288x96xbf16, #tpu.memory_space<vmem>>, vector<1x256x96xbf16>
    %6 = vector.shape_cast %5 : vector<1x256x96xbf16> to vector<256x96xbf16>
    %c1 = arith.constant 1 : index
    %c0_7 = arith.constant 0 : index
    %c0_8 = arith.constant 0 : index
    %7 = vector.load %arg2[%c1, %c0_7, %c0_8] : memref<3x96x16xbf16, #tpu.memory_space<vmem>>, vector<1x96x16xbf16>
    %8 = vector.shape_cast %7 : vector<1x96x16xbf16> to vector<96x16xbf16>
    %cst_9 = arith.constant dense<0.000000e+00> : vector<256x16xf32>
    %9 = tpu.matmul %6, %8, %cst_9 {dimension_numbers = #tpu.dot_dimension_numbers<[1], [0], [0], [1], [0, 0, 1, 1], [], []>} : vector<256x96xbf16>, vector<96x16xbf16>, vector<256x16xf32> -> vector<256x16xf32>
    %10 = arith.addf %4, %9 : vector<256x16xf32>
    %c0_10 = arith.constant 0 : index
    %c32 = arith.constant 32 : index
    %c0_11 = arith.constant 0 : index
    %11 = vector.load %arg1[%c0_10, %c32, %c0_11] : memref<1x288x96xbf16, #tpu.memory_space<vmem>>, vector<1x256x96xbf16>
    %12 = vector.shape_cast %11 : vector<1x256x96xbf16> to vector<256x96xbf16>
    %c2 = arith.constant 2 : index
    %c0_12 = arith.constant 0 : index
    %c0_13 = arith.constant 0 : index
    %13 = vector.load %arg2[%c2, %c0_12, %c0_13] : memref<3x96x16xbf16, #tpu.memory_space<vmem>>, vector<1x96x16xbf16>
    %14 = vector.shape_cast %13 : vector<1x96x16xbf16> to vector<96x16xbf16>
    %cst_14 = arith.constant dense<0.000000e+00> : vector<256x16xf32>
    %15 = tpu.matmul %12, %14, %cst_14 {dimension_numbers = #tpu.dot_dimension_numbers<[1], [0], [0], [1], [0, 0, 1, 1], [], []>} : vector<256x96xbf16>, vector<96x16xbf16>, vector<256x16xf32> -> vector<256x16xf32>
    %16 = arith.addf %10, %15 : vector<256x16xf32>
    %17 = arith.truncf %16 : vector<256x16xf32> to vector<256x16xbf16>
    %c0_15 = arith.constant 0 : index
    %c0_16 = arith.constant 0 : index
    %c0_17 = arith.constant 0 : index
    %18 = vector.load %arg3[%c0_15, %c0_16, %c0_17] : memref<1x256x16xbf16, #tpu.memory_space<vmem>>, vector<1x256x16xbf16>
    %19 = vector.shape_cast %18 : vector<1x256x16xbf16> to vector<256x16xbf16>
    %20 = vector.shape_cast %17 : vector<256x16xbf16> to vector<1x256x16xbf16>
    tpu.vector_store %arg3[%c0_15, %c0_16, %c0_17], %20 {strides = array<i32>} : memref<1x256x16xbf16, #tpu.memory_space<vmem>>, vector<1x256x16xbf16>,
    %cst_18 = arith.constant dense<0.000000e+00> : vector<16xf32>
    %21 = vector.multi_reduction <add>, %16, %cst_18 [0] : vector<256x16xf32> to vector<16xf32>
    %22 = vector.shape_cast %21 : vector<16xf32> to vector<1x16xf32>
    %cst_19 = arith.constant 2.560000e+02 : f32
    %23 = vector.broadcast %cst_19 : f32 to vector<1x16xf32>
    %24 = arith.divf %22, %23 : vector<1x16xf32>
    %c0_20 = arith.constant 0 : index
    %c0_21 = arith.constant 0 : index
    %c0_22 = arith.constant 0 : index
    %25 = vector.load %arg4[%c0_20, %c0_21, %c0_22] : memref<1x1x16xf32, #tpu.memory_space<vmem>>, vector<1x1x16xf32>
    %26 = vector.shape_cast %25 : vector<1x1x16xf32> to vector<1x16xf32>
    %27 = vector.shape_cast %24 : vector<1x16xf32> to vector<1x1x16xf32>
    tpu.vector_store %arg4[%c0_20, %c0_21, %c0_22], %27 {strides = array<i32>} : memref<1x1x16xf32, #tpu.memory_space<vmem>>, vector<1x1x16xf32>,
    return
  }
  func.func @transform_0(%arg0: i32) -> (i32, i32, i32) {
    %c0_i32 = arith.constant 0 : i32
    %c0_i32_0 = arith.constant 0 : i32
    %c0_i32_1 = arith.constant 0 : i32
    return %arg0, %c0_i32, %c0_i32_0 : i32, i32, i32
  }
  func.func @transform_1(%arg0: i32) -> (i32, i32, i32) {
    %c0_i32 = arith.constant 0 : i32
    %c0_i32_0 = arith.constant 0 : i32
    %c0_i32_1 = arith.constant 0 : i32
    %c0_i32_2 = arith.constant 0 : i32
    return %c0_i32, %c0_i32_0, %c0_i32_1 : i32, i32, i32
  }
  func.func @transform_2(%arg0: i32) -> (i32, i32, i32) {
    %c0_i32 = arith.constant 0 : i32
    %c0_i32_0 = arith.constant 0 : i32
    %c0_i32_1 = arith.constant 0 : i32
    return %arg0, %c0_i32, %c0_i32_0 : i32, i32, i32
  }
  func.func @transform_3(%arg0: i32) -> (i32, i32, i32) {
    %c0_i32 = arith.constant 0 : i32
    %c0_i32_0 = arith.constant 0 : i32
    %c0_i32_1 = arith.constant 0 : i32
    return %arg0, %c0_i32, %c0_i32_0 : i32, i32, i32
  }
}

module attributes {stable_mosaic.version = 11 : i64} {
  func.func @_fused_se_conv1x1_kernel(%arg0: i32, %arg1: i32, %arg2: memref<1x256x32xbf16, #tpu.memory_space<vmem>>, %arg3: memref<1x256x16xbf16, #tpu.memory_space<vmem>>, %arg4: memref<1x1x32xbf16, #tpu.memory_space<vmem>>, %arg5: memref<1x1x16xbf16, #tpu.memory_space<vmem>>, %arg6: memref<1x1x32xbf16, #tpu.memory_space<vmem>>, %arg7: memref<1x1x16xbf16, #tpu.memory_space<vmem>>, %arg8: memref<32x32xbf16, #tpu.memory_space<vmem>>, %arg9: memref<16x32xbf16, #tpu.memory_space<vmem>>, %arg10: memref<1x32xf32, #tpu.memory_space<vmem>>, %arg11: memref<1x256x32xbf16, #tpu.memory_space<vmem>>) attributes {dimension_semantics = [#tpu.dimension_semantics<parallel>, #tpu.dimension_semantics<parallel>], iteration_bounds = array<i64: 2, 1>, scalar_prefetch = 0 : i64, scratch_operands = 0 : i64, tpu.core_type = #tpu.core_type<tc>, window_params = [{transform_indices = @transform_0, window_bounds = array<i64: 1, 256, 32>}, {transform_indices = @transform_1, window_bounds = array<i64: 1, 256, 16>}, {transform_indices = @transform_2, window_bounds = array<i64: 1, 1, 32>}, {transform_indices = @transform_3, window_bounds = array<i64: 1, 1, 16>}, {transform_indices = @transform_4, window_bounds = array<i64: 1, 1, 32>}, {transform_indices = @transform_5, window_bounds = array<i64: 1, 1, 16>}, {pipeline_mode = #tpu.pipeline_mode<synchronous>, transform_indices = @transform_6, window_bounds = array<i64: 32, 32>}, {pipeline_mode = #tpu.pipeline_mode<synchronous>, transform_indices = @transform_7, window_bounds = array<i64: 16, 32>}, {pipeline_mode = #tpu.pipeline_mode<synchronous>, transform_indices = @transform_8, window_bounds = array<i64: 1, 32>}, {transform_indices = @transform_9, window_bounds = array<i64: 1, 256, 32>}]} {
    %c0 = arith.constant 0 : index
    %c0_0 = arith.constant 0 : index
    %c0_1 = arith.constant 0 : index
    %0 = vector.load %arg2[%c0, %c0_0, %c0_1] : memref<1x256x32xbf16, #tpu.memory_space<vmem>>, vector<1x256x32xbf16>
    %1 = vector.shape_cast %0 : vector<1x256x32xbf16> to vector<256x32xbf16>
    %c0_2 = arith.constant 0 : index
    %c0_3 = arith.constant 0 : index
    %c0_4 = arith.constant 0 : index
    %2 = vector.load %arg4[%c0_2, %c0_3, %c0_4] : memref<1x1x32xbf16, #tpu.memory_space<vmem>>, vector<1x1x32xbf16>
    %3 = vector.shape_cast %2 : vector<1x1x32xbf16> to vector<1x32xbf16>
    %4 = vector.broadcast %3 : vector<1x32xbf16> to vector<256x32xbf16>
    %5 = arith.mulf %1, %4 : vector<256x32xbf16>
    %c0_5 = arith.constant 0 : index
    %c0_6 = arith.constant 0 : index
    %c0_7 = arith.constant 0 : index
    %6 = vector.load %arg6[%c0_5, %c0_6, %c0_7] : memref<1x1x32xbf16, #tpu.memory_space<vmem>>, vector<1x1x32xbf16>
    %7 = vector.shape_cast %6 : vector<1x1x32xbf16> to vector<1x32xbf16>
    %8 = vector.broadcast %7 : vector<1x32xbf16> to vector<256x32xbf16>
    %9 = arith.addf %5, %8 : vector<256x32xbf16>
    %cst = arith.constant 0.000000e+00 : bf16
    %10 = vector.broadcast %cst : bf16 to vector<256x32xbf16>
    %11 = arith.maximumf %9, %10 : vector<256x32xbf16>
    %c0_8 = arith.constant 0 : index
    %c0_9 = arith.constant 0 : index
    %12 = vector.load %arg8[%c0_8, %c0_9] : memref<32x32xbf16, #tpu.memory_space<vmem>>, vector<32x32xbf16>
    %cst_10 = arith.constant dense<0.000000e+00> : vector<256x32xf32>
    %13 = tpu.matmul %11, %12, %cst_10 {dimension_numbers = #tpu.dot_dimension_numbers<[1], [0], [0], [1], [0, 0, 1, 1], [], []>} : vector<256x32xbf16>, vector<32x32xbf16>, vector<256x32xf32> -> vector<256x32xf32>
    %c0_11 = arith.constant 0 : index
    %c0_12 = arith.constant 0 : index
    %c0_13 = arith.constant 0 : index
    %14 = vector.load %arg3[%c0_11, %c0_12, %c0_13] : memref<1x256x16xbf16, #tpu.memory_space<vmem>>, vector<1x256x16xbf16>
    %15 = vector.shape_cast %14 : vector<1x256x16xbf16> to vector<256x16xbf16>
    %c0_14 = arith.constant 0 : index
    %c0_15 = arith.constant 0 : index
    %c0_16 = arith.constant 0 : index
    %16 = vector.load %arg5[%c0_14, %c0_15, %c0_16] : memref<1x1x16xbf16, #tpu.memory_space<vmem>>, vector<1x1x16xbf16>
    %17 = vector.shape_cast %16 : vector<1x1x16xbf16> to vector<1x16xbf16>
    %18 = vector.broadcast %17 : vector<1x16xbf16> to vector<256x16xbf16>
    %19 = arith.mulf %15, %18 : vector<256x16xbf16>
    %c0_17 = arith.constant 0 : index
    %c0_18 = arith.constant 0 : index
    %c0_19 = arith.constant 0 : index
    %20 = vector.load %arg7[%c0_17, %c0_18, %c0_19] : memref<1x1x16xbf16, #tpu.memory_space<vmem>>, vector<1x1x16xbf16>
    %21 = vector.shape_cast %20 : vector<1x1x16xbf16> to vector<1x16xbf16>
    %22 = vector.broadcast %21 : vector<1x16xbf16> to vector<256x16xbf16>
    %23 = arith.addf %19, %22 : vector<256x16xbf16>
    %cst_20 = arith.constant 0.000000e+00 : bf16
    %24 = vector.broadcast %cst_20 : bf16 to vector<256x16xbf16>
    %25 = arith.maximumf %23, %24 : vector<256x16xbf16>
    %c0_21 = arith.constant 0 : index
    %c0_22 = arith.constant 0 : index
    %26 = vector.load %arg9[%c0_21, %c0_22] : memref<16x32xbf16, #tpu.memory_space<vmem>>, vector<16x32xbf16>
    %cst_23 = arith.constant dense<0.000000e+00> : vector<256x32xf32>
    %27 = tpu.matmul %25, %26, %cst_23 {dimension_numbers = #tpu.dot_dimension_numbers<[1], [0], [0], [1], [0, 0, 1, 1], [], []>} : vector<256x16xbf16>, vector<16x32xbf16>, vector<256x32xf32> -> vector<256x32xf32>
    %28 = arith.addf %13, %27 : vector<256x32xf32>
    %c0_24 = arith.constant 0 : index
    %c0_25 = arith.constant 0 : index
    %29 = vector.load %arg10[%c0_24, %c0_25] : memref<1x32xf32, #tpu.memory_space<vmem>>, vector<1x32xf32>
    %30 = vector.broadcast %29 : vector<1x32xf32> to vector<256x32xf32>
    %31 = arith.addf %28, %30 : vector<256x32xf32>
    %cst_26 = arith.constant 0.000000e+00 : f32
    %32 = vector.broadcast %cst_26 : f32 to vector<256x32xf32>
    %33 = arith.maximumf %31, %32 : vector<256x32xf32>
    %34 = arith.truncf %33 : vector<256x32xf32> to vector<256x32xbf16>
    %c0_27 = arith.constant 0 : index
    %c0_28 = arith.constant 0 : index
    %c0_29 = arith.constant 0 : index
    %35 = vector.load %arg11[%c0_27, %c0_28, %c0_29] : memref<1x256x32xbf16, #tpu.memory_space<vmem>>, vector<1x256x32xbf16>
    %36 = vector.shape_cast %35 : vector<1x256x32xbf16> to vector<256x32xbf16>
    %37 = vector.shape_cast %34 : vector<256x32xbf16> to vector<1x256x32xbf16>
    tpu.vector_store %arg11[%c0_27, %c0_28, %c0_29], %37 {strides = array<i32>} : memref<1x256x32xbf16, #tpu.memory_space<vmem>>, vector<1x256x32xbf16>,
    return
  }
  func.func @transform_0(%arg0: i32, %arg1: i32) -> (i32, i32, i32) {
    %c0_i32 = arith.constant 0 : i32
    %c0_i32_0 = arith.constant 0 : i32
    return %arg0, %arg1, %c0_i32 : i32, i32, i32
  }
  func.func @transform_1(%arg0: i32, %arg1: i32) -> (i32, i32, i32) {
    %c0_i32 = arith.constant 0 : i32
    %c0_i32_0 = arith.constant 0 : i32
    return %arg0, %arg1, %c0_i32 : i32, i32, i32
  }
  func.func @transform_2(%arg0: i32, %arg1: i32) -> (i32, i32, i32) {
    %c0_i32 = arith.constant 0 : i32
    %c0_i32_0 = arith.constant 0 : i32
    %c0_i32_1 = arith.constant 0 : i32
    return %arg0, %c0_i32, %c0_i32_0 : i32, i32, i32
  }
  func.func @transform_3(%arg0: i32, %arg1: i32) -> (i32, i32, i32) {
    %c0_i32 = arith.constant 0 : i32
    %c0_i32_0 = arith.constant 0 : i32
    %c0_i32_1 = arith.constant 0 : i32
    return %arg0, %c0_i32, %c0_i32_0 : i32, i32, i32
  }
  func.func @transform_4(%arg0: i32, %arg1: i32) -> (i32, i32, i32) {
    %c0_i32 = arith.constant 0 : i32
    %c0_i32_0 = arith.constant 0 : i32
    %c0_i32_1 = arith.constant 0 : i32
    return %arg0, %c0_i32, %c0_i32_0 : i32, i32, i32
  }
  func.func @transform_5(%arg0: i32, %arg1: i32) -> (i32, i32, i32) {
    %c0_i32 = arith.constant 0 : i32
    %c0_i32_0 = arith.constant 0 : i32
    %c0_i32_1 = arith.constant 0 : i32
    return %arg0, %c0_i32, %c0_i32_0 : i32, i32, i32
  }
  func.func @transform_6(%arg0: i32, %arg1: i32) -> (i32, i32) {
    %c0_i32 = arith.constant 0 : i32
    %c0_i32_0 = arith.constant 0 : i32
    %c0_i32_1 = arith.constant 0 : i32
    return %c0_i32, %c0_i32_0 : i32, i32
  }
  func.func @transform_7(%arg0: i32, %arg1: i32) -> (i32, i32) {
    %c0_i32 = arith.constant 0 : i32
    %c0_i32_0 = arith.constant 0 : i32
    %c0_i32_1 = arith.constant 0 : i32
    return %c0_i32, %c0_i32_0 : i32, i32
  }
  func.func @transform_8(%arg0: i32, %arg1: i32) -> (i32, i32) {
    %c0_i32 = arith.constant 0 : i32
    %c0_i32_0 = arith.constant 0 : i32
    %c0_i32_1 = arith.constant 0 : i32
    return %c0_i32, %c0_i32_0 : i32, i32
  }
  func.func @transform_9(%arg0: i32, %arg1: i32) -> (i32, i32, i32) {
    %c0_i32 = arith.constant 0 : i32
    %c0_i32_0 = arith.constant 0 : i32
    return %arg0, %arg1, %c0_i32 : i32, i32, i32
  }
}

module attributes {stable_mosaic.version = 11 : i64} {
  func.func @_fused_se_conv1x1_kernel(%arg0: i32, %arg1: i32, %arg2: memref<1x256x32xbf16, #tpu.memory_space<vmem>>, %arg3: memref<1x256x16xbf16, #tpu.memory_space<vmem>>, %arg4: memref<1x256x16xbf16, #tpu.memory_space<vmem>>, %arg5: memref<1x1x32xbf16, #tpu.memory_space<vmem>>, %arg6: memref<1x1x16xbf16, #tpu.memory_space<vmem>>, %arg7: memref<1x1x16xbf16, #tpu.memory_space<vmem>>, %arg8: memref<1x1x32xbf16, #tpu.memory_space<vmem>>, %arg9: memref<1x1x16xbf16, #tpu.memory_space<vmem>>, %arg10: memref<1x1x16xbf16, #tpu.memory_space<vmem>>, %arg11: memref<32x32xbf16, #tpu.memory_space<vmem>>, %arg12: memref<16x32xbf16, #tpu.memory_space<vmem>>, %arg13: memref<16x32xbf16, #tpu.memory_space<vmem>>, %arg14: memref<1x32xf32, #tpu.memory_space<vmem>>, %arg15: memref<1x256x32xbf16, #tpu.memory_space<vmem>>, %arg16: memref<1x1x32xf32, #tpu.memory_space<vmem>>) attributes {dimension_semantics = [#tpu.dimension_semantics<parallel>, #tpu.dimension_semantics<arbitrary>], iteration_bounds = array<i64: 2, 1>, scalar_prefetch = 0 : i64, scratch_operands = 0 : i64, tpu.core_type = #tpu.core_type<tc>, window_params = [{transform_indices = @transform_0, window_bounds = array<i64: 1, 256, 32>}, {transform_indices = @transform_1, window_bounds = array<i64: 1, 256, 16>}, {transform_indices = @transform_2, window_bounds = array<i64: 1, 256, 16>}, {transform_indices = @transform_3, window_bounds = array<i64: 1, 1, 32>}, {transform_indices = @transform_4, window_bounds = array<i64: 1, 1, 16>}, {transform_indices = @transform_5, window_bounds = array<i64: 1, 1, 16>}, {transform_indices = @transform_6, window_bounds = array<i64: 1, 1, 32>}, {transform_indices = @transform_7, window_bounds = array<i64: 1, 1, 16>}, {transform_indices = @transform_8, window_bounds = array<i64: 1, 1, 16>}, {pipeline_mode = #tpu.pipeline_mode<synchronous>, transform_indices = @transform_9, window_bounds = array<i64: 32, 32>}, {pipeline_mode = #tpu.pipeline_mode<synchronous>, transform_indices = @transform_10, window_bounds = array<i64: 16, 32>}, {pipeline_mode = #tpu.pipeline_mode<synchronous>, transform_indices = @transform_11, window_bounds = array<i64: 16, 32>}, {pipeline_mode = #tpu.pipeline_mode<synchronous>, transform_indices = @transform_12, window_bounds = array<i64: 1, 32>}, {transform_indices = @transform_13, window_bounds = array<i64: 1, 256, 32>}, {transform_indices = @transform_14, window_bounds = array<i64: 1, 1, 32>}]} {
    %c0 = arith.constant 0 : index
    %c0_0 = arith.constant 0 : index
    %c0_1 = arith.constant 0 : index
    %0 = vector.load %arg2[%c0, %c0_0, %c0_1] : memref<1x256x32xbf16, #tpu.memory_space<vmem>>, vector<1x256x32xbf16>
    %1 = vector.shape_cast %0 : vector<1x256x32xbf16> to vector<256x32xbf16>
    %c0_2 = arith.constant 0 : index
    %c0_3 = arith.constant 0 : index
    %c0_4 = arith.constant 0 : index
    %2 = vector.load %arg5[%c0_2, %c0_3, %c0_4] : memref<1x1x32xbf16, #tpu.memory_space<vmem>>, vector<1x1x32xbf16>
    %3 = vector.shape_cast %2 : vector<1x1x32xbf16> to vector<1x32xbf16>
    %4 = vector.broadcast %3 : vector<1x32xbf16> to vector<256x32xbf16>
    %5 = arith.mulf %1, %4 : vector<256x32xbf16>
    %c0_5 = arith.constant 0 : index
    %c0_6 = arith.constant 0 : index
    %c0_7 = arith.constant 0 : index
    %6 = vector.load %arg8[%c0_5, %c0_6, %c0_7] : memref<1x1x32xbf16, #tpu.memory_space<vmem>>, vector<1x1x32xbf16>
    %7 = vector.shape_cast %6 : vector<1x1x32xbf16> to vector<1x32xbf16>
    %8 = vector.broadcast %7 : vector<1x32xbf16> to vector<256x32xbf16>
    %9 = arith.addf %5, %8 : vector<256x32xbf16>
    %cst = arith.constant 0.000000e+00 : bf16
    %10 = vector.broadcast %cst : bf16 to vector<256x32xbf16>
    %11 = arith.maximumf %9, %10 : vector<256x32xbf16>
    %c0_8 = arith.constant 0 : index
    %c0_9 = arith.constant 0 : index
    %12 = vector.load %arg11[%c0_8, %c0_9] : memref<32x32xbf16, #tpu.memory_space<vmem>>, vector<32x32xbf16>
    %cst_10 = arith.constant dense<0.000000e+00> : vector<256x32xf32>
    %13 = tpu.matmul %11, %12, %cst_10 {dimension_numbers = #tpu.dot_dimension_numbers<[1], [0], [0], [1], [0, 0, 1, 1], [], []>} : vector<256x32xbf16>, vector<32x32xbf16>, vector<256x32xf32> -> vector<256x32xf32>
    %c0_11 = arith.constant 0 : index
    %c0_12 = arith.constant 0 : index
    %c0_13 = arith.constant 0 : index
    %14 = vector.load %arg3[%c0_11, %c0_12, %c0_13] : memref<1x256x16xbf16, #tpu.memory_space<vmem>>, vector<1x256x16xbf16>
    %15 = vector.shape_cast %14 : vector<1x256x16xbf16> to vector<256x16xbf16>
    %c0_14 = arith.constant 0 : index
    %c0_15 = arith.constant 0 : index
    %c0_16 = arith.constant 0 : index
    %16 = vector.load %arg6[%c0_14, %c0_15, %c0_16] : memref<1x1x16xbf16, #tpu.memory_space<vmem>>, vector<1x1x16xbf16>
    %17 = vector.shape_cast %16 : vector<1x1x16xbf16> to vector<1x16xbf16>
    %18 = vector.broadcast %17 : vector<1x16xbf16> to vector<256x16xbf16>
    %19 = arith.mulf %15, %18 : vector<256x16xbf16>
    %c0_17 = arith.constant 0 : index
    %c0_18 = arith.constant 0 : index
    %c0_19 = arith.constant 0 : index
    %20 = vector.load %arg9[%c0_17, %c0_18, %c0_19] : memref<1x1x16xbf16, #tpu.memory_space<vmem>>, vector<1x1x16xbf16>
    %21 = vector.shape_cast %20 : vector<1x1x16xbf16> to vector<1x16xbf16>
    %22 = vector.broadcast %21 : vector<1x16xbf16> to vector<256x16xbf16>
    %23 = arith.addf %19, %22 : vector<256x16xbf16>
    %cst_20 = arith.constant 0.000000e+00 : bf16
    %24 = vector.broadcast %cst_20 : bf16 to vector<256x16xbf16>
    %25 = arith.maximumf %23, %24 : vector<256x16xbf16>
    %c0_21 = arith.constant 0 : index
    %c0_22 = arith.constant 0 : index
    %26 = vector.load %arg12[%c0_21, %c0_22] : memref<16x32xbf16, #tpu.memory_space<vmem>>, vector<16x32xbf16>
    %cst_23 = arith.constant dense<0.000000e+00> : vector<256x32xf32>
    %27 = tpu.matmul %25, %26, %cst_23 {dimension_numbers = #tpu.dot_dimension_numbers<[1], [0], [0], [1], [0, 0, 1, 1], [], []>} : vector<256x16xbf16>, vector<16x32xbf16>, vector<256x32xf32> -> vector<256x32xf32>
    %28 = arith.addf %13, %27 : vector<256x32xf32>
    %c0_24 = arith.constant 0 : index
    %c0_25 = arith.constant 0 : index
    %c0_26 = arith.constant 0 : index
    %29 = vector.load %arg4[%c0_24, %c0_25, %c0_26] : memref<1x256x16xbf16, #tpu.memory_space<vmem>>, vector<1x256x16xbf16>
    %30 = vector.shape_cast %29 : vector<1x256x16xbf16> to vector<256x16xbf16>
    %c0_27 = arith.constant 0 : index
    %c0_28 = arith.constant 0 : index
    %c0_29 = arith.constant 0 : index
    %31 = vector.load %arg7[%c0_27, %c0_28, %c0_29] : memref<1x1x16xbf16, #tpu.memory_space<vmem>>, vector<1x1x16xbf16>
    %32 = vector.shape_cast %31 : vector<1x1x16xbf16> to vector<1x16xbf16>
    %33 = vector.broadcast %32 : vector<1x16xbf16> to vector<256x16xbf16>
    %34 = arith.mulf %30, %33 : vector<256x16xbf16>
    %c0_30 = arith.constant 0 : index
    %c0_31 = arith.constant 0 : index
    %c0_32 = arith.constant 0 : index
    %35 = vector.load %arg10[%c0_30, %c0_31, %c0_32] : memref<1x1x16xbf16, #tpu.memory_space<vmem>>, vector<1x1x16xbf16>
    %36 = vector.shape_cast %35 : vector<1x1x16xbf16> to vector<1x16xbf16>
    %37 = vector.broadcast %36 : vector<1x16xbf16> to vector<256x16xbf16>
    %38 = arith.addf %34, %37 : vector<256x16xbf16>
    %cst_33 = arith.constant 0.000000e+00 : bf16
    %39 = vector.broadcast %cst_33 : bf16 to vector<256x16xbf16>
    %40 = arith.maximumf %38, %39 : vector<256x16xbf16>
    %c0_34 = arith.constant 0 : index
    %c0_35 = arith.constant 0 : index
    %41 = vector.load %arg13[%c0_34, %c0_35] : memref<16x32xbf16, #tpu.memory_space<vmem>>, vector<16x32xbf16>
    %cst_36 = arith.constant dense<0.000000e+00> : vector<256x32xf32>
    %42 = tpu.matmul %40, %41, %cst_36 {dimension_numbers = #tpu.dot_dimension_numbers<[1], [0], [0], [1], [0, 0, 1, 1], [], []>} : vector<256x16xbf16>, vector<16x32xbf16>, vector<256x32xf32> -> vector<256x32xf32>
    %43 = arith.addf %28, %42 : vector<256x32xf32>
    %c0_37 = arith.constant 0 : index
    %c0_38 = arith.constant 0 : index
    %44 = vector.load %arg14[%c0_37, %c0_38] : memref<1x32xf32, #tpu.memory_space<vmem>>, vector<1x32xf32>
    %45 = vector.broadcast %44 : vector<1x32xf32> to vector<256x32xf32>
    %46 = arith.addf %43, %45 : vector<256x32xf32>
    %47 = arith.truncf %46 : vector<256x32xf32> to vector<256x32xbf16>
    %c0_39 = arith.constant 0 : index
    %c0_40 = arith.constant 0 : index
    %c0_41 = arith.constant 0 : index
    %48 = vector.load %arg15[%c0_39, %c0_40, %c0_41] : memref<1x256x32xbf16, #tpu.memory_space<vmem>>, vector<1x256x32xbf16>
    %49 = vector.shape_cast %48 : vector<1x256x32xbf16> to vector<256x32xbf16>
    %50 = vector.shape_cast %47 : vector<256x32xbf16> to vector<1x256x32xbf16>
    tpu.vector_store %arg15[%c0_39, %c0_40, %c0_41], %50 {strides = array<i32>} : memref<1x256x32xbf16, #tpu.memory_space<vmem>>, vector<1x256x32xbf16>,
    %cst_42 = arith.constant dense<0.000000e+00> : vector<32xf32>
    %51 = vector.multi_reduction <add>, %46, %cst_42 [0] : vector<256x32xf32> to vector<32xf32>
    %52 = vector.shape_cast %51 : vector<32xf32> to vector<1x32xf32>
    %cst_43 = arith.constant 3.906250e-03 : f32
    %53 = vector.broadcast %cst_43 : f32 to vector<1x32xf32>
    %54 = arith.mulf %52, %53 : vector<1x32xf32>
    %c0_i32 = arith.constant 0 : i32
    %55 = arith.cmpi eq, %arg1, %c0_i32 : i32
    %56 = arith.extui %55 : i1 to i32
    %c0_i32_44 = arith.constant 0 : i32
    %57 = arith.cmpi ne, %56, %c0_i32_44 : i32
    scf.if %57 {
      %c0_47 = arith.constant 0 : index
      %c0_48 = arith.constant 0 : index
      %c0_49 = arith.constant 0 : index
      %61 = vector.load %arg16[%c0_47, %c0_48, %c0_49] : memref<1x1x32xf32, #tpu.memory_space<vmem>>, vector<1x1x32xf32>
      %62 = vector.shape_cast %61 : vector<1x1x32xf32> to vector<1x32xf32>
      %63 = vector.shape_cast %54 : vector<1x32xf32> to vector<1x1x32xf32>
      tpu.vector_store %arg16[%c0_47, %c0_48, %c0_49], %63 {strides = array<i32>} : memref<1x1x32xf32, #tpu.memory_space<vmem>>, vector<1x1x32xf32>,
    } else {
    }
    %c0_i32_45 = arith.constant 0 : i32
    %58 = arith.cmpi ne, %arg1, %c0_i32_45 : i32
    %59 = arith.extui %58 : i1 to i32
    %c0_i32_46 = arith.constant 0 : i32
    %60 = arith.cmpi ne, %59, %c0_i32_46 : i32
    scf.if %60 {
      %c0_47 = arith.constant 0 : index
      %c0_48 = arith.constant 0 : index
      %c0_49 = arith.constant 0 : index
      %61 = vector.load %arg16[%c0_47, %c0_48, %c0_49] : memref<1x1x32xf32, #tpu.memory_space<vmem>>, vector<1x1x32xf32>
      %62 = vector.shape_cast %61 : vector<1x1x32xf32> to vector<1x32xf32>
      %63 = arith.addf %62, %54 : vector<1x32xf32>
      %c0_50 = arith.constant 0 : index
      %c0_51 = arith.constant 0 : index
      %c0_52 = arith.constant 0 : index
      %64 = vector.load %arg16[%c0_50, %c0_51, %c0_52] : memref<1x1x32xf32, #tpu.memory_space<vmem>>, vector<1x1x32xf32>
      %65 = vector.shape_cast %64 : vector<1x1x32xf32> to vector<1x32xf32>
      %66 = vector.shape_cast %63 : vector<1x32xf32> to vector<1x1x32xf32>
      tpu.vector_store %arg16[%c0_50, %c0_51, %c0_52], %66 {strides = array<i32>} : memref<1x1x32xf32, #tpu.memory_space<vmem>>, vector<1x1x32xf32>,
    } else {
    }
    return
  }
  func.func @transform_0(%arg0: i32, %arg1: i32) -> (i32, i32, i32) {
    %c0_i32 = arith.constant 0 : i32
    %c0_i32_0 = arith.constant 0 : i32
    return %arg0, %arg1, %c0_i32 : i32, i32, i32
  }
  func.func @transform_1(%arg0: i32, %arg1: i32) -> (i32, i32, i32) {
    %c0_i32 = arith.constant 0 : i32
    %c0_i32_0 = arith.constant 0 : i32
    return %arg0, %arg1, %c0_i32 : i32, i32, i32
  }
  func.func @transform_2(%arg0: i32, %arg1: i32) -> (i32, i32, i32) {
    %c0_i32 = arith.constant 0 : i32
    %c0_i32_0 = arith.constant 0 : i32
    return %arg0, %arg1, %c0_i32 : i32, i32, i32
  }
  func.func @transform_3(%arg0: i32, %arg1: i32) -> (i32, i32, i32) {
    %c0_i32 = arith.constant 0 : i32
    %c0_i32_0 = arith.constant 0 : i32
    %c0_i32_1 = arith.constant 0 : i32
    return %arg0, %c0_i32, %c0_i32_0 : i32, i32, i32
  }
  func.func @transform_4(%arg0: i32, %arg1: i32) -> (i32, i32, i32) {
    %c0_i32 = arith.constant 0 : i32
    %c0_i32_0 = arith.constant 0 : i32
    %c0_i32_1 = arith.constant 0 : i32
    return %arg0, %c0_i32, %c0_i32_0 : i32, i32, i32
  }
  func.func @transform_5(%arg0: i32, %arg1: i32) -> (i32, i32, i32) {
    %c0_i32 = arith.constant 0 : i32
    %c0_i32_0 = arith.constant 0 : i32
    %c0_i32_1 = arith.constant 0 : i32
    return %arg0, %c0_i32, %c0_i32_0 : i32, i32, i32
  }
  func.func @transform_6(%arg0: i32, %arg1: i32) -> (i32, i32, i32) {
    %c0_i32 = arith.constant 0 : i32
    %c0_i32_0 = arith.constant 0 : i32
    %c0_i32_1 = arith.constant 0 : i32
    return %arg0, %c0_i32, %c0_i32_0 : i32, i32, i32
  }
  func.func @transform_7(%arg0: i32, %arg1: i32) -> (i32, i32, i32) {
    %c0_i32 = arith.constant 0 : i32
    %c0_i32_0 = arith.constant 0 : i32
    %c0_i32_1 = arith.constant 0 : i32
    return %arg0, %c0_i32, %c0_i32_0 : i32, i32, i32
  }
  func.func @transform_8(%arg0: i32, %arg1: i32) -> (i32, i32, i32) {
    %c0_i32 = arith.constant 0 : i32
    %c0_i32_0 = arith.constant 0 : i32
    %c0_i32_1 = arith.constant 0 : i32
    return %arg0, %c0_i32, %c0_i32_0 : i32, i32, i32
  }
  func.func @transform_9(%arg0: i32, %arg1: i32) -> (i32, i32) {
    %c0_i32 = arith.constant 0 : i32
    %c0_i32_0 = arith.constant 0 : i32
    %c0_i32_1 = arith.constant 0 : i32
    return %c0_i32, %c0_i32_0 : i32, i32
  }
  func.func @transform_10(%arg0: i32, %arg1: i32) -> (i32, i32) {
    %c0_i32 = arith.constant 0 : i32
    %c0_i32_0 = arith.constant 0 : i32
    %c0_i32_1 = arith.constant 0 : i32
    return %c0_i32, %c0_i32_0 : i32, i32
  }
  func.func @transform_11(%arg0: i32, %arg1: i32) -> (i32, i32) {
    %c0_i32 = arith.constant 0 : i32
    %c0_i32_0 = arith.constant 0 : i32
    %c0_i32_1 = arith.constant 0 : i32
    return %c0_i32, %c0_i32_0 : i32, i32
  }
  func.func @transform_12(%arg0: i32, %arg1: i32) -> (i32, i32) {
    %c0_i32 = arith.constant 0 : i32
    %c0_i32_0 = arith.constant 0 : i32
    %c0_i32_1 = arith.constant 0 : i32
    return %c0_i32, %c0_i32_0 : i32, i32
  }
  func.func @transform_13(%arg0: i32, %arg1: i32) -> (i32, i32, i32) {
    %c0_i32 = arith.constant 0 : i32
    %c0_i32_0 = arith.constant 0 : i32
    return %arg0, %arg1, %c0_i32 : i32, i32, i32
  }
  func.func @transform_14(%arg0: i32, %arg1: i32) -> (i32, i32, i32) {
    %c0_i32 = arith.constant 0 : i32
    %c0_i32_0 = arith.constant 0 : i32
    %c0_i32_1 = arith.constant 0 : i32
    return %arg0, %c0_i32, %c0_i32_0 : i32, i32, i32
  }
}

module attributes {stable_mosaic.version = 11 : i64} {
  func.func @_fused_se_conv1x1_kernel(%arg0: i32, %arg1: i32, %arg2: memref<1x64x32xbf16, #tpu.memory_space<vmem>>, %arg3: memref<1x1x32xbf16, #tpu.memory_space<vmem>>, %arg4: memref<1x1x32xbf16, #tpu.memory_space<vmem>>, %arg5: memref<32x32xbf16, #tpu.memory_space<vmem>>, %arg6: memref<1x32xf32, #tpu.memory_space<vmem>>, %arg7: memref<1x64x32xbf16, #tpu.memory_space<vmem>>) attributes {dimension_semantics = [#tpu.dimension_semantics<parallel>, #tpu.dimension_semantics<parallel>], iteration_bounds = array<i64: 2, 1>, scalar_prefetch = 0 : i64, scratch_operands = 0 : i64, tpu.core_type = #tpu.core_type<tc>, window_params = [{transform_indices = @transform_0, window_bounds = array<i64: 1, 64, 32>}, {transform_indices = @transform_1, window_bounds = array<i64: 1, 1, 32>}, {transform_indices = @transform_2, window_bounds = array<i64: 1, 1, 32>}, {pipeline_mode = #tpu.pipeline_mode<synchronous>, transform_indices = @transform_3, window_bounds = array<i64: 32, 32>}, {pipeline_mode = #tpu.pipeline_mode<synchronous>, transform_indices = @transform_4, window_bounds = array<i64: 1, 32>}, {transform_indices = @transform_5, window_bounds = array<i64: 1, 64, 32>}]} {
    %c0 = arith.constant 0 : index
    %c0_0 = arith.constant 0 : index
    %c0_1 = arith.constant 0 : index
    %0 = vector.load %arg2[%c0, %c0_0, %c0_1] : memref<1x64x32xbf16, #tpu.memory_space<vmem>>, vector<1x64x32xbf16>
    %1 = vector.shape_cast %0 : vector<1x64x32xbf16> to vector<64x32xbf16>
    %c0_2 = arith.constant 0 : index
    %c0_3 = arith.constant 0 : index
    %c0_4 = arith.constant 0 : index
    %2 = vector.load %arg3[%c0_2, %c0_3, %c0_4] : memref<1x1x32xbf16, #tpu.memory_space<vmem>>, vector<1x1x32xbf16>
    %3 = vector.shape_cast %2 : vector<1x1x32xbf16> to vector<1x32xbf16>
    %4 = vector.broadcast %3 : vector<1x32xbf16> to vector<64x32xbf16>
    %5 = arith.mulf %1, %4 : vector<64x32xbf16>
    %c0_5 = arith.constant 0 : index
    %c0_6 = arith.constant 0 : index
    %c0_7 = arith.constant 0 : index
    %6 = vector.load %arg4[%c0_5, %c0_6, %c0_7] : memref<1x1x32xbf16, #tpu.memory_space<vmem>>, vector<1x1x32xbf16>
    %7 = vector.shape_cast %6 : vector<1x1x32xbf16> to vector<1x32xbf16>
    %8 = vector.broadcast %7 : vector<1x32xbf16> to vector<64x32xbf16>
    %9 = arith.addf %5, %8 : vector<64x32xbf16>
    %cst = arith.constant 0.000000e+00 : bf16
    %10 = vector.broadcast %cst : bf16 to vector<64x32xbf16>
    %11 = arith.maximumf %9, %10 : vector<64x32xbf16>
    %c0_8 = arith.constant 0 : index
    %c0_9 = arith.constant 0 : index
    %12 = vector.load %arg5[%c0_8, %c0_9] : memref<32x32xbf16, #tpu.memory_space<vmem>>, vector<32x32xbf16>
    %cst_10 = arith.constant dense<0.000000e+00> : vector<64x32xf32>
    %13 = tpu.matmul %11, %12, %cst_10 {dimension_numbers = #tpu.dot_dimension_numbers<[1], [0], [0], [1], [0, 0, 1, 1], [], []>} : vector<64x32xbf16>, vector<32x32xbf16>, vector<64x32xf32> -> vector<64x32xf32>
    %c0_11 = arith.constant 0 : index
    %c0_12 = arith.constant 0 : index
    %14 = vector.load %arg6[%c0_11, %c0_12] : memref<1x32xf32, #tpu.memory_space<vmem>>, vector<1x32xf32>
    %15 = vector.broadcast %14 : vector<1x32xf32> to vector<64x32xf32>
    %16 = arith.addf %13, %15 : vector<64x32xf32>
    %cst_13 = arith.constant 0.000000e+00 : f32
    %17 = vector.broadcast %cst_13 : f32 to vector<64x32xf32>
    %18 = arith.maximumf %16, %17 : vector<64x32xf32>
    %19 = arith.truncf %18 : vector<64x32xf32> to vector<64x32xbf16>
    %c0_14 = arith.constant 0 : index
    %c0_15 = arith.constant 0 : index
    %c0_16 = arith.constant 0 : index
    %20 = vector.load %arg7[%c0_14, %c0_15, %c0_16] : memref<1x64x32xbf16, #tpu.memory_space<vmem>>, vector<1x64x32xbf16>
    %21 = vector.shape_cast %20 : vector<1x64x32xbf16> to vector<64x32xbf16>
    %22 = vector.shape_cast %19 : vector<64x32xbf16> to vector<1x64x32xbf16>
    tpu.vector_store %arg7[%c0_14, %c0_15, %c0_16], %22 {strides = array<i32>} : memref<1x64x32xbf16, #tpu.memory_space<vmem>>, vector<1x64x32xbf16>,
    return
  }
  func.func @transform_0(%arg0: i32, %arg1: i32) -> (i32, i32, i32) {
    %c0_i32 = arith.constant 0 : i32
    %c0_i32_0 = arith.constant 0 : i32
    return %arg0, %arg1, %c0_i32 : i32, i32, i32
  }
  func.func @transform_1(%arg0: i32, %arg1: i32) -> (i32, i32, i32) {
    %c0_i32 = arith.constant 0 : i32
    %c0_i32_0 = arith.constant 0 : i32
    %c0_i32_1 = arith.constant 0 : i32
    return %arg0, %c0_i32, %c0_i32_0 : i32, i32, i32
  }
  func.func @transform_2(%arg0: i32, %arg1: i32) -> (i32, i32, i32) {
    %c0_i32 = arith.constant 0 : i32
    %c0_i32_0 = arith.constant 0 : i32
    %c0_i32_1 = arith.constant 0 : i32
    return %arg0, %c0_i32, %c0_i32_0 : i32, i32, i32
  }
  func.func @transform_3(%arg0: i32, %arg1: i32) -> (i32, i32) {
    %c0_i32 = arith.constant 0 : i32
    %c0_i32_0 = arith.constant 0 : i32
    %c0_i32_1 = arith.constant 0 : i32
    return %c0_i32, %c0_i32_0 : i32, i32
  }
  func.func @transform_4(%arg0: i32, %arg1: i32) -> (i32, i32) {
    %c0_i32 = arith.constant 0 : i32
    %c0_i32_0 = arith.constant 0 : i32
    %c0_i32_1 = arith.constant 0 : i32
    return %c0_i32, %c0_i32_0 : i32, i32
  }
  func.func @transform_5(%arg0: i32, %arg1: i32) -> (i32, i32, i32) {
    %c0_i32 = arith.constant 0 : i32
    %c0_i32_0 = arith.constant 0 : i32
    return %arg0, %arg1, %c0_i32 : i32, i32, i32
  }
}

module attributes {stable_mosaic.version = 11 : i64} {
  func.func @_conv3x3_gap_kernel(%arg0: i32, %arg1: memref<1x80x96xbf16, #tpu.memory_space<vmem>>, %arg2: memref<3x96x16xbf16, #tpu.memory_space<vmem>>, %arg3: memref<1x64x16xbf16, #tpu.memory_space<vmem>>, %arg4: memref<1x1x16xf32, #tpu.memory_space<vmem>>) attributes {dimension_semantics = [#tpu.dimension_semantics<parallel>], iteration_bounds = array<i64: 2>, scalar_prefetch = 0 : i64, scratch_operands = 0 : i64, tpu.core_type = #tpu.core_type<tc>, window_params = [{transform_indices = @transform_0, window_bounds = array<i64: 1, 80, 96>}, {pipeline_mode = #tpu.pipeline_mode<synchronous>, transform_indices = @transform_1, window_bounds = array<i64: 3, 96, 16>}, {transform_indices = @transform_2, window_bounds = array<i64: 1, 64, 16>}, {transform_indices = @transform_3, window_bounds = array<i64: 1, 1, 16>}]} {
    %c0 = arith.constant 0 : index
    %c0_0 = arith.constant 0 : index
    %c0_1 = arith.constant 0 : index
    %0 = vector.load %arg1[%c0, %c0_0, %c0_1] : memref<1x80x96xbf16, #tpu.memory_space<vmem>>, vector<1x64x96xbf16>
    %1 = vector.shape_cast %0 : vector<1x64x96xbf16> to vector<64x96xbf16>
    %c0_2 = arith.constant 0 : index
    %c0_3 = arith.constant 0 : index
    %c0_4 = arith.constant 0 : index
    %2 = vector.load %arg2[%c0_2, %c0_3, %c0_4] : memref<3x96x16xbf16, #tpu.memory_space<vmem>>, vector<1x96x16xbf16>
    %3 = vector.shape_cast %2 : vector<1x96x16xbf16> to vector<96x16xbf16>
    %cst = arith.constant dense<0.000000e+00> : vector<64x16xf32>
    %4 = tpu.matmul %1, %3, %cst {dimension_numbers = #tpu.dot_dimension_numbers<[1], [0], [0], [1], [0, 0, 1, 1], [], []>} : vector<64x96xbf16>, vector<96x16xbf16>, vector<64x16xf32> -> vector<64x16xf32>
    %c0_5 = arith.constant 0 : index
    %c8 = arith.constant 8 : index
    %c0_6 = arith.constant 0 : index
    %5 = vector.load %arg1[%c0_5, %c8, %c0_6] : memref<1x80x96xbf16, #tpu.memory_space<vmem>>, vector<1x64x96xbf16>
    %6 = vector.shape_cast %5 : vector<1x64x96xbf16> to vector<64x96xbf16>
    %c1 = arith.constant 1 : index
    %c0_7 = arith.constant 0 : index
    %c0_8 = arith.constant 0 : index
    %7 = vector.load %arg2[%c1, %c0_7, %c0_8] : memref<3x96x16xbf16, #tpu.memory_space<vmem>>, vector<1x96x16xbf16>
    %8 = vector.shape_cast %7 : vector<1x96x16xbf16> to vector<96x16xbf16>
    %cst_9 = arith.constant dense<0.000000e+00> : vector<64x16xf32>
    %9 = tpu.matmul %6, %8, %cst_9 {dimension_numbers = #tpu.dot_dimension_numbers<[1], [0], [0], [1], [0, 0, 1, 1], [], []>} : vector<64x96xbf16>, vector<96x16xbf16>, vector<64x16xf32> -> vector<64x16xf32>
    %10 = arith.addf %4, %9 : vector<64x16xf32>
    %c0_10 = arith.constant 0 : index
    %c16 = arith.constant 16 : index
    %c0_11 = arith.constant 0 : index
    %11 = vector.load %arg1[%c0_10, %c16, %c0_11] : memref<1x80x96xbf16, #tpu.memory_space<vmem>>, vector<1x64x96xbf16>
    %12 = vector.shape_cast %11 : vector<1x64x96xbf16> to vector<64x96xbf16>
    %c2 = arith.constant 2 : index
    %c0_12 = arith.constant 0 : index
    %c0_13 = arith.constant 0 : index
    %13 = vector.load %arg2[%c2, %c0_12, %c0_13] : memref<3x96x16xbf16, #tpu.memory_space<vmem>>, vector<1x96x16xbf16>
    %14 = vector.shape_cast %13 : vector<1x96x16xbf16> to vector<96x16xbf16>
    %cst_14 = arith.constant dense<0.000000e+00> : vector<64x16xf32>
    %15 = tpu.matmul %12, %14, %cst_14 {dimension_numbers = #tpu.dot_dimension_numbers<[1], [0], [0], [1], [0, 0, 1, 1], [], []>} : vector<64x96xbf16>, vector<96x16xbf16>, vector<64x16xf32> -> vector<64x16xf32>
    %16 = arith.addf %10, %15 : vector<64x16xf32>
    %17 = arith.truncf %16 : vector<64x16xf32> to vector<64x16xbf16>
    %c0_15 = arith.constant 0 : index
    %c0_16 = arith.constant 0 : index
    %c0_17 = arith.constant 0 : index
    %18 = vector.load %arg3[%c0_15, %c0_16, %c0_17] : memref<1x64x16xbf16, #tpu.memory_space<vmem>>, vector<1x64x16xbf16>
    %19 = vector.shape_cast %18 : vector<1x64x16xbf16> to vector<64x16xbf16>
    %20 = vector.shape_cast %17 : vector<64x16xbf16> to vector<1x64x16xbf16>
    tpu.vector_store %arg3[%c0_15, %c0_16, %c0_17], %20 {strides = array<i32>} : memref<1x64x16xbf16, #tpu.memory_space<vmem>>, vector<1x64x16xbf16>,
    %cst_18 = arith.constant dense<0.000000e+00> : vector<16xf32>
    %21 = vector.multi_reduction <add>, %16, %cst_18 [0] : vector<64x16xf32> to vector<16xf32>
    %22 = vector.shape_cast %21 : vector<16xf32> to vector<1x16xf32>
    %cst_19 = arith.constant 6.400000e+01 : f32
    %23 = vector.broadcast %cst_19 : f32 to vector<1x16xf32>
    %24 = arith.divf %22, %23 : vector<1x16xf32>
    %c0_20 = arith.constant 0 : index
    %c0_21 = arith.constant 0 : index
    %c0_22 = arith.constant 0 : index
    %25 = vector.load %arg4[%c0_20, %c0_21, %c0_22] : memref<1x1x16xf32, #tpu.memory_space<vmem>>, vector<1x1x16xf32>
    %26 = vector.shape_cast %25 : vector<1x1x16xf32> to vector<1x16xf32>
    %27 = vector.shape_cast %24 : vector<1x16xf32> to vector<1x1x16xf32>
    tpu.vector_store %arg4[%c0_20, %c0_21, %c0_22], %27 {strides = array<i32>} : memref<1x1x16xf32, #tpu.memory_space<vmem>>, vector<1x1x16xf32>,
    return
  }
  func.func @transform_0(%arg0: i32) -> (i32, i32, i32) {
    %c0_i32 = arith.constant 0 : i32
    %c0_i32_0 = arith.constant 0 : i32
    %c0_i32_1 = arith.constant 0 : i32
    return %arg0, %c0_i32, %c0_i32_0 : i32, i32, i32
  }
  func.func @transform_1(%arg0: i32) -> (i32, i32, i32) {
    %c0_i32 = arith.constant 0 : i32
    %c0_i32_0 = arith.constant 0 : i32
    %c0_i32_1 = arith.constant 0 : i32
    %c0_i32_2 = arith.constant 0 : i32
    return %c0_i32, %c0_i32_0, %c0_i32_1 : i32, i32, i32
  }
  func.func @transform_2(%arg0: i32) -> (i32, i32, i32) {
    %c0_i32 = arith.constant 0 : i32
    %c0_i32_0 = arith.constant 0 : i32
    %c0_i32_1 = arith.constant 0 : i32
    return %arg0, %c0_i32, %c0_i32_0 : i32, i32, i32
  }
  func.func @transform_3(%arg0: i32) -> (i32, i32, i32) {
    %c0_i32 = arith.constant 0 : i32
    %c0_i32_0 = arith.constant 0 : i32
    %c0_i32_1 = arith.constant 0 : i32
    return %arg0, %c0_i32, %c0_i32_0 : i32, i32, i32
  }
}

module attributes {stable_mosaic.version = 11 : i64} {
  func.func @_fused_se_conv1x1_kernel(%arg0: i32, %arg1: i32, %arg2: memref<1x64x32xbf16, #tpu.memory_space<vmem>>, %arg3: memref<1x64x16xbf16, #tpu.memory_space<vmem>>, %arg4: memref<1x1x32xbf16, #tpu.memory_space<vmem>>, %arg5: memref<1x1x16xbf16, #tpu.memory_space<vmem>>, %arg6: memref<1x1x32xbf16, #tpu.memory_space<vmem>>, %arg7: memref<1x1x16xbf16, #tpu.memory_space<vmem>>, %arg8: memref<32x32xbf16, #tpu.memory_space<vmem>>, %arg9: memref<16x32xbf16, #tpu.memory_space<vmem>>, %arg10: memref<1x32xf32, #tpu.memory_space<vmem>>, %arg11: memref<1x64x32xbf16, #tpu.memory_space<vmem>>) attributes {dimension_semantics = [#tpu.dimension_semantics<parallel>, #tpu.dimension_semantics<parallel>], iteration_bounds = array<i64: 2, 1>, scalar_prefetch = 0 : i64, scratch_operands = 0 : i64, tpu.core_type = #tpu.core_type<tc>, window_params = [{transform_indices = @transform_0, window_bounds = array<i64: 1, 64, 32>}, {transform_indices = @transform_1, window_bounds = array<i64: 1, 64, 16>}, {transform_indices = @transform_2, window_bounds = array<i64: 1, 1, 32>}, {transform_indices = @transform_3, window_bounds = array<i64: 1, 1, 16>}, {transform_indices = @transform_4, window_bounds = array<i64: 1, 1, 32>}, {transform_indices = @transform_5, window_bounds = array<i64: 1, 1, 16>}, {pipeline_mode = #tpu.pipeline_mode<synchronous>, transform_indices = @transform_6, window_bounds = array<i64: 32, 32>}, {pipeline_mode = #tpu.pipeline_mode<synchronous>, transform_indices = @transform_7, window_bounds = array<i64: 16, 32>}, {pipeline_mode = #tpu.pipeline_mode<synchronous>, transform_indices = @transform_8, window_bounds = array<i64: 1, 32>}, {transform_indices = @transform_9, window_bounds = array<i64: 1, 64, 32>}]} {
    %c0 = arith.constant 0 : index
    %c0_0 = arith.constant 0 : index
    %c0_1 = arith.constant 0 : index
    %0 = vector.load %arg2[%c0, %c0_0, %c0_1] : memref<1x64x32xbf16, #tpu.memory_space<vmem>>, vector<1x64x32xbf16>
    %1 = vector.shape_cast %0 : vector<1x64x32xbf16> to vector<64x32xbf16>
    %c0_2 = arith.constant 0 : index
    %c0_3 = arith.constant 0 : index
    %c0_4 = arith.constant 0 : index
    %2 = vector.load %arg4[%c0_2, %c0_3, %c0_4] : memref<1x1x32xbf16, #tpu.memory_space<vmem>>, vector<1x1x32xbf16>
    %3 = vector.shape_cast %2 : vector<1x1x32xbf16> to vector<1x32xbf16>
    %4 = vector.broadcast %3 : vector<1x32xbf16> to vector<64x32xbf16>
    %5 = arith.mulf %1, %4 : vector<64x32xbf16>
    %c0_5 = arith.constant 0 : index
    %c0_6 = arith.constant 0 : index
    %c0_7 = arith.constant 0 : index
    %6 = vector.load %arg6[%c0_5, %c0_6, %c0_7] : memref<1x1x32xbf16, #tpu.memory_space<vmem>>, vector<1x1x32xbf16>
    %7 = vector.shape_cast %6 : vector<1x1x32xbf16> to vector<1x32xbf16>
    %8 = vector.broadcast %7 : vector<1x32xbf16> to vector<64x32xbf16>
    %9 = arith.addf %5, %8 : vector<64x32xbf16>
    %cst = arith.constant 0.000000e+00 : bf16
    %10 = vector.broadcast %cst : bf16 to vector<64x32xbf16>
    %11 = arith.maximumf %9, %10 : vector<64x32xbf16>
    %c0_8 = arith.constant 0 : index
    %c0_9 = arith.constant 0 : index
    %12 = vector.load %arg8[%c0_8, %c0_9] : memref<32x32xbf16, #tpu.memory_space<vmem>>, vector<32x32xbf16>
    %cst_10 = arith.constant dense<0.000000e+00> : vector<64x32xf32>
    %13 = tpu.matmul %11, %12, %cst_10 {dimension_numbers = #tpu.dot_dimension_numbers<[1], [0], [0], [1], [0, 0, 1, 1], [], []>} : vector<64x32xbf16>, vector<32x32xbf16>, vector<64x32xf32> -> vector<64x32xf32>
    %c0_11 = arith.constant 0 : index
    %c0_12 = arith.constant 0 : index
    %c0_13 = arith.constant 0 : index
    %14 = vector.load %arg3[%c0_11, %c0_12, %c0_13] : memref<1x64x16xbf16, #tpu.memory_space<vmem>>, vector<1x64x16xbf16>
    %15 = vector.shape_cast %14 : vector<1x64x16xbf16> to vector<64x16xbf16>
    %c0_14 = arith.constant 0 : index
    %c0_15 = arith.constant 0 : index
    %c0_16 = arith.constant 0 : index
    %16 = vector.load %arg5[%c0_14, %c0_15, %c0_16] : memref<1x1x16xbf16, #tpu.memory_space<vmem>>, vector<1x1x16xbf16>
    %17 = vector.shape_cast %16 : vector<1x1x16xbf16> to vector<1x16xbf16>
    %18 = vector.broadcast %17 : vector<1x16xbf16> to vector<64x16xbf16>
    %19 = arith.mulf %15, %18 : vector<64x16xbf16>
    %c0_17 = arith.constant 0 : index
    %c0_18 = arith.constant 0 : index
    %c0_19 = arith.constant 0 : index
    %20 = vector.load %arg7[%c0_17, %c0_18, %c0_19] : memref<1x1x16xbf16, #tpu.memory_space<vmem>>, vector<1x1x16xbf16>
    %21 = vector.shape_cast %20 : vector<1x1x16xbf16> to vector<1x16xbf16>
    %22 = vector.broadcast %21 : vector<1x16xbf16> to vector<64x16xbf16>
    %23 = arith.addf %19, %22 : vector<64x16xbf16>
    %cst_20 = arith.constant 0.000000e+00 : bf16
    %24 = vector.broadcast %cst_20 : bf16 to vector<64x16xbf16>
    %25 = arith.maximumf %23, %24 : vector<64x16xbf16>
    %c0_21 = arith.constant 0 : index
    %c0_22 = arith.constant 0 : index
    %26 = vector.load %arg9[%c0_21, %c0_22] : memref<16x32xbf16, #tpu.memory_space<vmem>>, vector<16x32xbf16>
    %cst_23 = arith.constant dense<0.000000e+00> : vector<64x32xf32>
    %27 = tpu.matmul %25, %26, %cst_23 {dimension_numbers = #tpu.dot_dimension_numbers<[1], [0], [0], [1], [0, 0, 1, 1], [], []>} : vector<64x16xbf16>, vector<16x32xbf16>, vector<64x32xf32> -> vector<64x32xf32>
    %28 = arith.addf %13, %27 : vector<64x32xf32>
    %c0_24 = arith.constant 0 : index
    %c0_25 = arith.constant 0 : index
    %29 = vector.load %arg10[%c0_24, %c0_25] : memref<1x32xf32, #tpu.memory_space<vmem>>, vector<1x32xf32>
    %30 = vector.broadcast %29 : vector<1x32xf32> to vector<64x32xf32>
    %31 = arith.addf %28, %30 : vector<64x32xf32>
    %cst_26 = arith.constant 0.000000e+00 : f32
    %32 = vector.broadcast %cst_26 : f32 to vector<64x32xf32>
    %33 = arith.maximumf %31, %32 : vector<64x32xf32>
    %34 = arith.truncf %33 : vector<64x32xf32> to vector<64x32xbf16>
    %c0_27 = arith.constant 0 : index
    %c0_28 = arith.constant 0 : index
    %c0_29 = arith.constant 0 : index
    %35 = vector.load %arg11[%c0_27, %c0_28, %c0_29] : memref<1x64x32xbf16, #tpu.memory_space<vmem>>, vector<1x64x32xbf16>
    %36 = vector.shape_cast %35 : vector<1x64x32xbf16> to vector<64x32xbf16>
    %37 = vector.shape_cast %34 : vector<64x32xbf16> to vector<1x64x32xbf16>
    tpu.vector_store %arg11[%c0_27, %c0_28, %c0_29], %37 {strides = array<i32>} : memref<1x64x32xbf16, #tpu.memory_space<vmem>>, vector<1x64x32xbf16>,
    return
  }
  func.func @transform_0(%arg0: i32, %arg1: i32) -> (i32, i32, i32) {
    %c0_i32 = arith.constant 0 : i32
    %c0_i32_0 = arith.constant 0 : i32
    return %arg0, %arg1, %c0_i32 : i32, i32, i32
  }
  func.func @transform_1(%arg0: i32, %arg1: i32) -> (i32, i32, i32) {
    %c0_i32 = arith.constant 0 : i32
    %c0_i32_0 = arith.constant 0 : i32
    return %arg0, %arg1, %c0_i32 : i32, i32, i32
  }
  func.func @transform_2(%arg0: i32, %arg1: i32) -> (i32, i32, i32) {
    %c0_i32 = arith.constant 0 : i32
    %c0_i32_0 = arith.constant 0 : i32
    %c0_i32_1 = arith.constant 0 : i32
    return %arg0, %c0_i32, %c0_i32_0 : i32, i32, i32
  }
  func.func @transform_3(%arg0: i32, %arg1: i32) -> (i32, i32, i32) {
    %c0_i32 = arith.constant 0 : i32
    %c0_i32_0 = arith.constant 0 : i32
    %c0_i32_1 = arith.constant 0 : i32
    return %arg0, %c0_i32, %c0_i32_0 : i32, i32, i32
  }
  func.func @transform_4(%arg0: i32, %arg1: i32) -> (i32, i32, i32) {
    %c0_i32 = arith.constant 0 : i32
    %c0_i32_0 = arith.constant 0 : i32
    %c0_i32_1 = arith.constant 0 : i32
    return %arg0, %c0_i32, %c0_i32_0 : i32, i32, i32
  }
  func.func @transform_5(%arg0: i32, %arg1: i32) -> (i32, i32, i32) {
    %c0_i32 = arith.constant 0 : i32
    %c0_i32_0 = arith.constant 0 : i32
    %c0_i32_1 = arith.constant 0 : i32
    return %arg0, %c0_i32, %c0_i32_0 : i32, i32, i32
  }
  func.func @transform_6(%arg0: i32, %arg1: i32) -> (i32, i32) {
    %c0_i32 = arith.constant 0 : i32
    %c0_i32_0 = arith.constant 0 : i32
    %c0_i32_1 = arith.constant 0 : i32
    return %c0_i32, %c0_i32_0 : i32, i32
  }
  func.func @transform_7(%arg0: i32, %arg1: i32) -> (i32, i32) {
    %c0_i32 = arith.constant 0 : i32
    %c0_i32_0 = arith.constant 0 : i32
    %c0_i32_1 = arith.constant 0 : i32
    return %c0_i32, %c0_i32_0 : i32, i32
  }
  func.func @transform_8(%arg0: i32, %arg1: i32) -> (i32, i32) {
    %c0_i32 = arith.constant 0 : i32
    %c0_i32_0 = arith.constant 0 : i32
    %c0_i32_1 = arith.constant 0 : i32
    return %c0_i32, %c0_i32_0 : i32, i32
  }
  func.func @transform_9(%arg0: i32, %arg1: i32) -> (i32, i32, i32) {
    %c0_i32 = arith.constant 0 : i32
    %c0_i32_0 = arith.constant 0 : i32
    return %arg0, %arg1, %c0_i32 : i32, i32, i32
  }
}

module attributes {stable_mosaic.version = 11 : i64} {
  func.func @_final_se_kernel(%arg0: i32, %arg1: i32, %arg2: memref<1x64x64xbf16, #tpu.memory_space<vmem>>, %arg3: memref<1x1x64xf32, #tpu.memory_space<vmem>>, %arg4: memref<1x1x64xf32, #tpu.memory_space<vmem>>, %arg5: memref<1x1x64xf32, #tpu.memory_space<vmem>>, %arg6: memref<1x64x64xf32, #tpu.memory_space<vmem>>, %arg7: memref<1x1x64xf32, #tpu.memory_space<vmem>>) attributes {dimension_semantics = [#tpu.dimension_semantics<parallel>, #tpu.dimension_semantics<arbitrary>], iteration_bounds = array<i64: 2, 1>, scalar_prefetch = 0 : i64, scratch_operands = 0 : i64, tpu.core_type = #tpu.core_type<tc>, window_params = [{transform_indices = @transform_0, window_bounds = array<i64: 1, 64, 64>}, {transform_indices = @transform_1, window_bounds = array<i64: 1, 1, 64>}, {pipeline_mode = #tpu.pipeline_mode<synchronous>, transform_indices = @transform_2, window_bounds = array<i64: 1, 1, 64>}, {pipeline_mode = #tpu.pipeline_mode<synchronous>, transform_indices = @transform_3, window_bounds = array<i64: 1, 1, 64>}, {transform_indices = @transform_4, window_bounds = array<i64: 1, 64, 64>}, {transform_indices = @transform_5, window_bounds = array<i64: 1, 1, 64>}]} {
    %c0 = arith.constant 0 : index
    %c0_0 = arith.constant 0 : index
    %c0_1 = arith.constant 0 : index
    %0 = vector.load %arg2[%c0, %c0_0, %c0_1] : memref<1x64x64xbf16, #tpu.memory_space<vmem>>, vector<1x64x64xbf16>
    %1 = vector.shape_cast %0 : vector<1x64x64xbf16> to vector<64x64xbf16>
    %2 = arith.extf %1 : vector<64x64xbf16> to vector<64x64xf32>
    %c0_2 = arith.constant 0 : index
    %c0_3 = arith.constant 0 : index
    %c0_4 = arith.constant 0 : index
    %3 = vector.load %arg3[%c0_2, %c0_3, %c0_4] : memref<1x1x64xf32, #tpu.memory_space<vmem>>, vector<1x1x64xf32>
    %4 = vector.shape_cast %3 : vector<1x1x64xf32> to vector<1x64xf32>
    %c0_5 = arith.constant 0 : index
    %c0_6 = arith.constant 0 : index
    %c0_7 = arith.constant 0 : index
    %5 = vector.load %arg4[%c0_5, %c0_6, %c0_7] : memref<1x1x64xf32, #tpu.memory_space<vmem>>, vector<1x1x64xf32>
    %6 = vector.shape_cast %5 : vector<1x1x64xf32> to vector<1x64xf32>
    %7 = vector.broadcast %6 : vector<1x64xf32> to vector<64x64xf32>
    %8 = arith.mulf %2, %7 : vector<64x64xf32>
    %c0_8 = arith.constant 0 : index
    %c0_9 = arith.constant 0 : index
    %c0_10 = arith.constant 0 : index
    %9 = vector.load %arg5[%c0_8, %c0_9, %c0_10] : memref<1x1x64xf32, #tpu.memory_space<vmem>>, vector<1x1x64xf32>
    %10 = vector.shape_cast %9 : vector<1x1x64xf32> to vector<1x64xf32>
    %11 = vector.broadcast %10 : vector<1x64xf32> to vector<64x64xf32>
    %12 = arith.addf %8, %11 : vector<64x64xf32>
    %13 = vector.broadcast %4 : vector<1x64xf32> to vector<64x64xf32>
    %14 = arith.mulf %13, %12 : vector<64x64xf32>
    %c0_11 = arith.constant 0 : index
    %c0_12 = arith.constant 0 : index
    %c0_13 = arith.constant 0 : index
    %15 = vector.load %arg6[%c0_11, %c0_12, %c0_13] : memref<1x64x64xf32, #tpu.memory_space<vmem>>, vector<1x64x64xf32>
    %16 = vector.shape_cast %15 : vector<1x64x64xf32> to vector<64x64xf32>
    %17 = vector.shape_cast %14 : vector<64x64xf32> to vector<1x64x64xf32>
    tpu.vector_store %arg6[%c0_11, %c0_12, %c0_13], %17 {strides = array<i32>} : memref<1x64x64xf32, #tpu.memory_space<vmem>>, vector<1x64x64xf32>,
    %cst = arith.constant 0.000000e+00 : f32
    %18 = vector.broadcast %cst : f32 to vector<64x64xf32>
    %19 = arith.maximumf %14, %18 : vector<64x64xf32>
    %cst_14 = arith.constant dense<0.000000e+00> : vector<64xf32>
    %20 = vector.multi_reduction <add>, %19, %cst_14 [0] : vector<64x64xf32> to vector<64xf32>
    %21 = vector.shape_cast %20 : vector<64xf32> to vector<1x64xf32>
    %cst_15 = arith.constant 1.562500e-02 : f32
    %22 = vector.broadcast %cst_15 : f32 to vector<1x64xf32>
    %23 = arith.mulf %21, %22 : vector<1x64xf32>
    %c0_i32 = arith.constant 0 : i32
    %24 = arith.cmpi eq, %arg1, %c0_i32 : i32
    %25 = arith.extui %24 : i1 to i32
    %c0_i32_16 = arith.constant 0 : i32
    %26 = arith.cmpi ne, %25, %c0_i32_16 : i32
    scf.if %26 {
      %c0_19 = arith.constant 0 : index
      %c0_20 = arith.constant 0 : index
      %c0_21 = arith.constant 0 : index
      %30 = vector.load %arg7[%c0_19, %c0_20, %c0_21] : memref<1x1x64xf32, #tpu.memory_space<vmem>>, vector<1x1x64xf32>
      %31 = vector.shape_cast %30 : vector<1x1x64xf32> to vector<1x64xf32>
      %32 = vector.shape_cast %23 : vector<1x64xf32> to vector<1x1x64xf32>
      tpu.vector_store %arg7[%c0_19, %c0_20, %c0_21], %32 {strides = array<i32>} : memref<1x1x64xf32, #tpu.memory_space<vmem>>, vector<1x1x64xf32>,
    } else {
    }
    %c0_i32_17 = arith.constant 0 : i32
    %27 = arith.cmpi ne, %arg1, %c0_i32_17 : i32
    %28 = arith.extui %27 : i1 to i32
    %c0_i32_18 = arith.constant 0 : i32
    %29 = arith.cmpi ne, %28, %c0_i32_18 : i32
    scf.if %29 {
      %c0_19 = arith.constant 0 : index
      %c0_20 = arith.constant 0 : index
      %c0_21 = arith.constant 0 : index
      %30 = vector.load %arg7[%c0_19, %c0_20, %c0_21] : memref<1x1x64xf32, #tpu.memory_space<vmem>>, vector<1x1x64xf32>
      %31 = vector.shape_cast %30 : vector<1x1x64xf32> to vector<1x64xf32>
      %32 = arith.addf %31, %23 : vector<1x64xf32>
      %c0_22 = arith.constant 0 : index
      %c0_23 = arith.constant 0 : index
      %c0_24 = arith.constant 0 : index
      %33 = vector.load %arg7[%c0_22, %c0_23, %c0_24] : memref<1x1x64xf32, #tpu.memory_space<vmem>>, vector<1x1x64xf32>
      %34 = vector.shape_cast %33 : vector<1x1x64xf32> to vector<1x64xf32>
      %35 = vector.shape_cast %32 : vector<1x64xf32> to vector<1x1x64xf32>
      tpu.vector_store %arg7[%c0_22, %c0_23, %c0_24], %35 {strides = array<i32>} : memref<1x1x64xf32, #tpu.memory_space<vmem>>, vector<1x1x64xf32>,
    } else {
    }
    return
  }
  func.func @transform_0(%arg0: i32, %arg1: i32) -> (i32, i32, i32) {
    %c0_i32 = arith.constant 0 : i32
    %c0_i32_0 = arith.constant 0 : i32
    return %arg0, %arg1, %c0_i32 : i32, i32, i32
  }
  func.func @transform_1(%arg0: i32, %arg1: i32) -> (i32, i32, i32) {
    %c0_i32 = arith.constant 0 : i32
    %c0_i32_0 = arith.constant 0 : i32
    %c0_i32_1 = arith.constant 0 : i32
    return %arg0, %c0_i32, %c0_i32_0 : i32, i32, i32
  }
  func.func @transform_2(%arg0: i32, %arg1: i32) -> (i32, i32, i32) {
    %c0_i32 = arith.constant 0 : i32
    %c0_i32_0 = arith.constant 0 : i32
    %c0_i32_1 = arith.constant 0 : i32
    %c0_i32_2 = arith.constant 0 : i32
    return %c0_i32, %c0_i32_0, %c0_i32_1 : i32, i32, i32
  }
  func.func @transform_3(%arg0: i32, %arg1: i32) -> (i32, i32, i32) {
    %c0_i32 = arith.constant 0 : i32
    %c0_i32_0 = arith.constant 0 : i32
    %c0_i32_1 = arith.constant 0 : i32
    %c0_i32_2 = arith.constant 0 : i32
    return %c0_i32, %c0_i32_0, %c0_i32_1 : i32, i32, i32
  }
  func.func @transform_4(%arg0: i32, %arg1: i32) -> (i32, i32, i32) {
    %c0_i32 = arith.constant 0 : i32
    %c0_i32_0 = arith.constant 0 : i32
    return %arg0, %arg1, %c0_i32 : i32, i32, i32
  }
  func.func @transform_5(%arg0: i32, %arg1: i32) -> (i32, i32, i32) {
    %c0_i32 = arith.constant 0 : i32
    %c0_i32_0 = arith.constant 0 : i32
    %c0_i32_1 = arith.constant 0 : i32
    return %arg0, %c0_i32, %c0_i32_0 : i32, i32, i32
  }
}

</mosaic_0001>

<llo_original>
// kernel: model_forward.10
$region0: #{model_forward.10}
  #allocation0 [shape = 'u32[]', space=smem, size = 0x4, offset = 0x4, fixed_abs, tag = 'smem constant byte address 0x4 - core index']
  #allocation1 [shape = 'u32[72,128]{1,0:T(1,128)}', space=vmem, size = 0x9000, scoped, tag = 'internal scratch']
  %s0 = inlined_call_operand.vmem [shape: bf16[2,256,32], index: 0, kind: input, shape index: {}]
  %s1 = inlined_call_operand.vmem [shape: bf16[2,1,32], index: 1, kind: input, shape index: {}]
  %s2 = inlined_call_operand.vmem [shape: bf16[2,1,32], index: 2, kind: input, shape index: {}]
  %s3 = inlined_call_operand.vmem [shape: bf16[32,32], index: 3, kind: input, shape index: {}]
  %s4 = inlined_call_operand.vmem [shape: f32[1,32], index: 4, kind: input, shape index: {}]
  %s5 = inlined_call_operand.vmem [shape: bf16[2,256,32], index: 5, kind: output, shape index: {}]
  %s6 = sld [smem:[#allocation0]]
  $region53: #{model_forward.10} parent=0
    _
  %s8 = ssub.s32 1, %s6
  %s9 = scalar_select 0, %s8, %s6
  loop: start=0, step=1, limit=4
  $region2: #{model_forward.10} parent=0 // loop_pre_header
    _
  $region3: #{model_forward.10} parent=0 // loop_header
    %s11 = sphi 0, %s15
    %p12 = scmp.ge.s32.totalorder %s11, 4
    %s18 = sphi 0, %s30
    %s19 = sphi 0, %s26
    %s20 = sphi 0, %s18
    %s21 = sphi 0, %s19
    %s22 = sphi 0, %s20
    %s23 = sphi 0, %s21
    %s35 = sphi 0, %s37
    %s38 = sphi 0, %s35
    %s39 = sphi 0, %s38
    %s55 = sphi 0, %s39
    %s61 = sphi 0, %s63
    %s64 = sphi 0, %s61
    %s65 = sphi 0, %s64
    %s81 = sphi 0, %s65
    %s87 = sphi 0, %s89
    %s90 = sphi 0, %s87
    %s91 = sphi 0, %s90
    %s107 = sphi 0, %s91
    %s111 = sphi 0, %s111
    %s113 = sphi 0, %s111
    %s114 = sphi 0, %s113
    %s128 = sphi 0, %s114
    %s132 = sphi 0, %s132
    %s134 = sphi 0, %s132
    %s135 = sphi 0, %s134
    %s149 = sphi 0, %s135
    %s157 = sphi 0, %s159
    %s160 = sphi 0, %s157
    %s161 = sphi 0, %s160
    %s177 = sphi 0, %s161
  $region4: #{model_forward.10} parent=0 // loop_header_branch
    %14 = sbr.rel (%p12) target = $region8
  $region5: #{model_forward.10} parent=0 // loop_body
    %s16 = ssub.s32 %s11, 1
    %s17 = ssub.s32 %s11, 2
    %s24 = sadd.s32 1, %s19
    %p25 = scmp.ge.s32.totalorder %s24, 1
    %s26 = scalar_select %p25, 0, %s24
    %s27 = sadd.s32 1, %s18
    %s28 = scalar_select %p25, %s27, %s18
    %p29 = scmp.ge.s32.totalorder %s28, 2
    %s30 = scalar_select %p29, 0, %s28
    %s31 = ssub.s32 %s18, %s30
    %s32 = ssub.s32 %s19, %s26
    %s33 = sor.u32 %s31, %s32
    %p34 = scmp.eq.s32.totalorder %s33, 0
    %s36 = sadd.s32 %s35, 1
    %s37 = scalar_select %p34, %s35, %s36
    %p40 = pneg %p34
    %p41 = scmp.eq.s32.totalorder %s11, 1
    %p42 = por %p40, %p41
    %p43 = scmp.ne.s32.totalorder %s35, %s38
    %p44 = scmp.eq.s32.totalorder %s11, 0
    %p45 = por %p43, %p44
    %p46 = scmp.ne.s32.totalorder %s35, %s38
    %p47 = scmp.eq.s32.totalorder %s16, 1
    %p48 = por %p46, %p47
    %p49 = scmp.ne.s32.totalorder %s38, %s39
    %p50 = scmp.eq.s32.totalorder %s16, 0
    %p51 = por %p49, %p50
    %p52 = scmp.ne.s32.totalorder %s38, %s39
    %p53 = scmp.eq.s32.totalorder %s17, 1
    %p54 = por %p52, %p53
    %p56 = scmp.ne.s32.totalorder %s39, %s55
    %p57 = scmp.eq.s32.totalorder %s17, 0
    %p58 = por %p56, %p57
    %s59 = ssub.s32 %s18, %s30
    %p60 = scmp.eq.s32.totalorder %s59, 0
    %s62 = sadd.s32 %s61, 1
    %s63 = scalar_select %p60, %s61, %s62
    %p66 = pneg %p60
    %p67 = scmp.eq.s32.totalorder %s11, 1
    %p68 = por %p66, %p67
    %p69 = scmp.ne.s32.totalorder %s61, %s64
    %p70 = scmp.eq.s32.totalorder %s11, 0
    %p71 = por %p69, %p70
    %p72 = scmp.ne.s32.totalorder %s61, %s64
    %p73 = scmp.eq.s32.totalorder %s16, 1
    %p74 = por %p72, %p73
    %p75 = scmp.ne.s32.totalorder %s64, %s65
    %p76 = scmp.eq.s32.totalorder %s16, 0
    %p77 = por %p75, %p76
    %p78 = scmp.ne.s32.totalorder %s64, %s65
    %p79 = scmp.eq.s32.totalorder %s17, 1
    %p80 = por %p78, %p79
    %p82 = scmp.ne.s32.totalorder %s65, %s81
    %p83 = scmp.eq.s32.totalorder %s17, 0
    %p84 = por %p82, %p83
    %s85 = ssub.s32 %s18, %s30
    %p86 = scmp.eq.s32.totalorder %s85, 0
    %s88 = sadd.s32 %s87, 1
    %s89 = scalar_select %p86, %s87, %s88
    %p92 = pneg %p86
    %p93 = scmp.eq.s32.totalorder %s11, 1
    %p94 = por %p92, %p93
    %p95 = scmp.ne.s32.totalorder %s87, %s90
    %p96 = scmp.eq.s32.totalorder %s11, 0
    %p97 = por %p95, %p96
    %p98 = scmp.ne.s32.totalorder %s87, %s90
    %p99 = scmp.eq.s32.totalorder %s16, 1
    %p100 = por %p98, %p99
    %p101 = scmp.ne.s32.totalorder %s90, %s91
    %p102 = scmp.eq.s32.totalorder %s16, 0
    %p103 = por %p101, %p102
    %p104 = scmp.ne.s32.totalorder %s90, %s91
    %p105 = scmp.eq.s32.totalorder %s17, 1
    %p106 = por %p104, %p105
    %p108 = scmp.ne.s32.totalorder %s91, %s107
    %p109 = scmp.eq.s32.totalorder %s17, 0
    %p110 = por %p108, %p109
    %s112 = sadd.s32 %s111, 1
    %p115 = scmp.eq.s32.totalorder %s11, 1
    %p116 = scmp.ne.s32.totalorder %s111, %s113
    %p117 = scmp.eq.s32.totalorder %s11, 0
    %p118 = por %p116, %p117
    %p119 = scmp.ne.s32.totalorder %s111, %s113
    %p120 = scmp.eq.s32.totalorder %s16, 1
    %p121 = por %p119, %p120
    %p122 = scmp.ne.s32.totalorder %s113, %s114
    %p123 = scmp.eq.s32.totalorder %s16, 0
    %p124 = por %p122, %p123
    %p125 = scmp.ne.s32.totalorder %s113, %s114
    %p126 = scmp.eq.s32.totalorder %s17, 1
    %p127 = por %p125, %p126
    %p129 = scmp.ne.s32.totalorder %s114, %s128
    %p130 = scmp.eq.s32.totalorder %s17, 0
    %p131 = por %p129, %p130
    %s133 = sadd.s32 %s132, 1
    %p136 = scmp.eq.s32.totalorder %s11, 1
    %p137 = scmp.ne.s32.totalorder %s132, %s134
    %p138 = scmp.eq.s32.totalorder %s11, 0
    %p139 = por %p137, %p138
    %p140 = scmp.ne.s32.totalorder %s132, %s134
    %p141 = scmp.eq.s32.totalorder %s16, 1
    %p142 = por %p140, %p141
    %p143 = scmp.ne.s32.totalorder %s134, %s135
    %p144 = scmp.eq.s32.totalorder %s16, 0
    %p145 = por %p143, %p144
    %p146 = scmp.ne.s32.totalorder %s134, %s135
    %p147 = scmp.eq.s32.totalorder %s17, 1
    %p148 = por %p146, %p147
    %p150 = scmp.ne.s32.totalorder %s135, %s149
    %p151 = scmp.eq.s32.totalorder %s17, 0
    %p152 = por %p150, %p151
    %s153 = ssub.s32 %s18, %s30
    %s154 = ssub.s32 %s19, %s26
    %s155 = sor.u32 %s153, %s154
    %p156 = scmp.eq.s32.totalorder %s155, 0
    %s158 = sadd.s32 %s157, 1
    %s159 = scalar_select %p156, %s157, %s158
    %p162 = pneg %p156
    %p163 = scmp.eq.s32.totalorder %s11, 1
    %p164 = por %p162, %p163
    %p165 = scmp.ne.s32.totalorder %s157, %s160
    %p166 = scmp.eq.s32.totalorder %s11, 0
    %p167 = por %p165, %p166
    %p168 = scmp.ne.s32.totalorder %s157, %s160
    %p169 = scmp.eq.s32.totalorder %s16, 1
    %p170 = por %p168, %p169
    %p171 = scmp.ne.s32.totalorder %s160, %s161
    %p172 = scmp.eq.s32.totalorder %s16, 0
    %p173 = por %p171, %p172
    %p174 = scmp.ne.s32.totalorder %s160, %s161
    %p175 = scmp.eq.s32.totalorder %s17, 1
    %p176 = por %p174, %p175
    %p178 = scmp.ne.s32.totalorder %s161, %s177
    %p179 = scmp.eq.s32.totalorder %s17, 0
    %p180 = por %p178, %p179
    %p181 = scmp.le.s32.totalorder 1, %s11
    %p182 = scmp.lt.s32.totalorder %s11, 3
    %p183 = pnand %p181, %p182
    %p184 = pneg %p183
    // Predicated region
    $region9: #{model_forward.10} parent=5 // pred_check
      _
    $region10: #{model_forward.10} parent=5 // pred_check_branch
      %186 = sbr.rel (%p183) target = $region12
    $region11: #{model_forward.10} parent=5 // pred_region
      %s187 = ssub.s32 %s11, 1
      // Predicated region
      $region13: #{model_forward.10} parent=11 // pred_check
        %p188 = pneg %p124
      $region14: #{model_forward.10} parent=11 // pred_check_branch
        %190 = sbr.rel (%p188) target = $region16
      $region15: #{model_forward.10} parent=11 // pred_region
        _
      $region16: #{model_forward.10} parent=11 // pred_fallthru
        _
      // Predicated region
      $region17: #{model_forward.10} parent=11 // pred_check
        %p191 = pneg %p145
      $region18: #{model_forward.10} parent=11 // pred_check_branch
        %193 = sbr.rel (%p191) target = $region20
      $region19: #{model_forward.10} parent=11 // pred_region
        _
      $region20: #{model_forward.10} parent=11 // pred_fallthru
        _
    $region12: #{model_forward.10} parent=5 // pred_fallthru
      _
    %p194 = scmp.lt.s32.totalorder %s11, 2
    // Predicated region
    $region21: #{model_forward.10} parent=5 // pred_check
      %p195 = pneg %p194
    $region22: #{model_forward.10} parent=5 // pred_check_branch
      %197 = sbr.rel (%p195) target = $region24
    $region23: #{model_forward.10} parent=5 // pred_region
      // Predicated region
      $region25: #{model_forward.10} parent=23 // pred_check
        %p198 = pneg %p45
      $region26: #{model_forward.10} parent=23 // pred_check_branch
        %200 = sbr.rel (%p198) target = $region28
      $region27: #{model_forward.10} parent=23 // pred_region
        %s201 = smul.u32 32, %s19
        %p202 = scmp.lt.s32.totalorder %s18, 1
        %s203 = scalar_select %p202, %s18, 1
        %p204 = scmp.lt.s32.totalorder %s201, 31
        %s205 = scalar_select %p204, %s201, 31
        %s206 = smul.addr %s203, 32
        %s207 = sadd.s32 %s205, %s206
        %s208 = smul.addr %s207, 4
        %s209 = scalar_lea.vmem %s0, %s208
        %s210 = smul.u32 32, %s19
      $region28: #{model_forward.10} parent=23 // pred_fallthru
        _
      // Predicated region
      $region29: #{model_forward.10} parent=23 // pred_check
        %p211 = pneg %p71
      $region30: #{model_forward.10} parent=23 // pred_check_branch
        %213 = sbr.rel (%p211) target = $region32
      $region31: #{model_forward.10} parent=23 // pred_region
        %p214 = scmp.lt.s32.totalorder %s18, 1
        %s215 = scalar_select %p214, %s18, 1
        %s216 = scalar_lea.vmem %s1, %s215
      $region32: #{model_forward.10} parent=23 // pred_fallthru
        _
      // Predicated region
      $region33: #{model_forward.10} parent=23 // pred_check
        %p217 = pneg %p97
      $region34: #{model_forward.10} parent=23 // pred_check_branch
        %219 = sbr.rel (%p217) target = $region36
      $region35: #{model_forward.10} parent=23 // pred_region
        %p220 = scmp.lt.s32.totalorder %s18, 1
        %s221 = scalar_select %p220, %s18, 1
        %s222 = scalar_lea.vmem %s2, %s221
      $region36: #{model_forward.10} parent=23 // pred_fallthru
        _
    $region24: #{model_forward.10} parent=5 // pred_fallthru
      _
    %p223 = scmp.le.s32.totalorder 1, %s11
    %p224 = scmp.lt.s32.totalorder %s11, 3
    %p225 = pnand %p223, %p224
    %p226 = pneg %p225
    // Predicated region
    $region37: #{model_forward.10} parent=5 // pred_check
      _
    $region38: #{model_forward.10} parent=5 // pred_check_branch
      %228 = sbr.rel (%p225) target = $region40
    $region39: #{model_forward.10} parent=5 // pred_region
      %s229 = ssub.s32 %s11, 1
      %s230 = smul.u32 32, %s21
      %p231 = scmp.lt.s32.totalorder %s20, 1
      %s232 = scalar_select %p231, %s20, 1
      %p233 = scmp.lt.s32.totalorder %s230, 31
      %s234 = scalar_select %p233, %s230, 31
      %s235 = smul.addr %s232, 32
      %s236 = sadd.s32 %s234, %s235
      %s237 = smul.addr %s236, 4
      %s238 = scalar_lea.vmem %s0, %s237
      %p239 = pneg %p51
      %p240 = pneg %p48
      %p241 = scmp.lt.s32.totalorder %s20, 1
      %s242 = scalar_select %p241, %s20, 1
      %s243 = scalar_lea.vmem %s1, %s242
      %p244 = pneg %p77
      %p245 = pneg %p74
      %p246 = scmp.lt.s32.totalorder %s20, 1
      %s247 = scalar_select %p246, %s20, 1
      %s248 = scalar_lea.vmem %s2, %s247
      %p249 = pneg %p103
      %p250 = pneg %p100
      %p251 = pneg %p124
      %p252 = pneg %p121
      %p253 = pneg %p145
      %p254 = pneg %p142
      %p255 = pneg %p173
      %p256 = pneg %p170
      %s257 = smul.u32 32, %s21
      %p258 = scmp.lt.s32.totalorder %s20, 1
      %s259 = scalar_select %p258, %s20, 1
      %p260 = scmp.lt.s32.totalorder %s257, 31
      %s261 = scalar_select %p260, %s257, 31
      %s262 = smul.addr %s259, 32
      %s263 = sadd.s32 %s261, %s262
      %s264 = smul.addr %s263, 4
      %s265 = scalar_lea.vmem %s5, %s264
      %s266 = smul.u32 32, %s21
      %p267 = scmp.lt.s32.totalorder %s20, 1
      %s268 = scalar_select %p267, %s20, 1
      %p269 = scmp.lt.s32.totalorder %s266, 31
      %s270 = scalar_select %p269, %s266, 31
      %s271 = smul.addr %s268, 32
      %s272 = sadd.s32 %s270, %s271
      %s273 = smul.addr %s272, 4
      %s274 = scalar_lea.vmem %s0, %s273
      %s275 = smul.u32 32, %s21
      %p276 = scmp.lt.s32.totalorder %s20, 1
      %s277 = scalar_select %p276, %s20, 1
      %s278 = scalar_lea.vmem %s1, %s277
      %p279 = scmp.lt.s32.totalorder %s20, 1
      %s280 = scalar_select %p279, %s20, 1
      %s281 = scalar_lea.vmem %s2, %s280
      %s282 = smul.u32 32, %s21
      %p283 = scmp.lt.s32.totalorder %s20, 1
      %s284 = scalar_select %p283, %s20, 1
      %p285 = scmp.lt.s32.totalorder %s282, 31
      %s286 = scalar_select %p285, %s282, 31
      %s287 = smul.addr %s284, 32
      %s288 = sadd.s32 %s286, %s287
      %s289 = smul.addr %s288, 4
      %s290 = scalar_lea.vmem %s5, %s289
      %s291 = smul.u32 32, %s21
      %v293 = vld [vmem:[%s274] sm:$0xf]
      %v294 = vld [vmem:[%s274 + $0x4] sm:$0xf]
      %v295 = vld [vmem:[%s274 + $0x8] sm:$0xf]
      %v296 = vld [vmem:[%s274 + $0xc] sm:$0xf]
      %v297 = vld [vmem:[%s274 + $0x10] sm:$0xf]
      %v298 = vld [vmem:[%s274 + $0x14] sm:$0xf]
      %v299 = vld [vmem:[%s274 + $0x18] sm:$0xf]
      %v300 = vld [vmem:[%s274 + $0x1c] sm:$0xf]
      %v301 = vld [vmem:[%s274 + $0x20] sm:$0xf]
      %v302 = vld [vmem:[%s274 + $0x24] sm:$0xf]
      %v303 = vld [vmem:[%s274 + $0x28] sm:$0xf]
      %v304 = vld [vmem:[%s274 + $0x2c] sm:$0xf]
      %v305 = vld [vmem:[%s274 + $0x30] sm:$0xf]
      %v306 = vld [vmem:[%s274 + $0x34] sm:$0xf]
      %v307 = vld [vmem:[%s274 + $0x38] sm:$0xf]
      %v308 = vld [vmem:[%s274 + $0x3c] sm:$0xf]
      %v309 = vld [vmem:[%s274 + $0x40] sm:$0xf]
      %v310 = vld [vmem:[%s274 + $0x44] sm:$0xf]
      %v311 = vld [vmem:[%s274 + $0x48] sm:$0xf]
      %v312 = vld [vmem:[%s274 + $0x4c] sm:$0xf]
      %v313 = vld [vmem:[%s274 + $0x50] sm:$0xf]
      %v314 = vld [vmem:[%s274 + $0x54] sm:$0xf]
      %v315 = vld [vmem:[%s274 + $0x58] sm:$0xf]
      %v316 = vld [vmem:[%s274 + $0x5c] sm:$0xf]
      %v317 = vld [vmem:[%s274 + $0x60] sm:$0xf]
      %v318 = vld [vmem:[%s274 + $0x64] sm:$0xf]
      %v319 = vld [vmem:[%s274 + $0x68] sm:$0xf]
      %v320 = vld [vmem:[%s274 + $0x6c] sm:$0xf]
      %v321 = vld [vmem:[%s274 + $0x70] sm:$0xf]
      %v322 = vld [vmem:[%s274 + $0x74] sm:$0xf]
      %v323 = vld [vmem:[%s274 + $0x78] sm:$0xf]
      %v324 = vld [vmem:[%s274 + $0x7c] sm:$0xf]
      %v325 = vld [vmem:[%s278] sm:$0x1]
      %v327 = vpack.i.b16 %v325, %v325
      %v329 = vperm.slane %v327, 0
      %v330 = vunpack.c.l.bf16 %v293
      %v331 = vunpack.c.l.bf16 %v294
      %v332 = vunpack.c.l.bf16 %v295
      %v333 = vunpack.c.l.bf16 %v296
      %v334 = vunpack.c.l.bf16 %v297
      %v335 = vunpack.c.l.bf16 %v298
      %v336 = vunpack.c.l.bf16 %v299
      %v337 = vunpack.c.l.bf16 %v300
      %v338 = vunpack.c.l.bf16 %v301
      %v339 = vunpack.c.l.bf16 %v302
      %v340 = vunpack.c.l.bf16 %v303
      %v341 = vunpack.c.l.bf16 %v304
      %v342 = vunpack.c.l.bf16 %v305
      %v343 = vunpack.c.l.bf16 %v306
      %v344 = vunpack.c.l.bf16 %v307
      %v345 = vunpack.c.l.bf16 %v308
      %v346 = vunpack.c.l.bf16 %v309
      %v347 = vunpack.c.l.bf16 %v310
      %v348 = vunpack.c.l.bf16 %v311
      %v349 = vunpack.c.l.bf16 %v312
      %v350 = vunpack.c.l.bf16 %v313
      %v351 = vunpack.c.l.bf16 %v314
      %v352 = vunpack.c.l.bf16 %v315
      %v353 = vunpack.c.l.bf16 %v316
      %v354 = vunpack.c.l.bf16 %v317
      %v355 = vunpack.c.l.bf16 %v318
      %v356 = vunpack.c.l.bf16 %v319
      %v357 = vunpack.c.l.bf16 %v320
      %v358 = vunpack.c.l.bf16 %v321
      %v359 = vunpack.c.l.bf16 %v322
      %v360 = vunpack.c.l.bf16 %v323
      %v361 = vunpack.c.l.bf16 %v324
      %v362 = vunpack.c.l.bf16 %v329
      %v363 = vmul.f32 %v330, %v362
      %v364 = vmul.f32 %v331, %v362
      %v365 = vmul.f32 %v332, %v362
      %v366 = vmul.f32 %v333, %v362
      %v367 = vmul.f32 %v334, %v362
      %v368 = vmul.f32 %v335, %v362
      %v369 = vmul.f32 %v336, %v362
      %v370 = vmul.f32 %v337, %v362
      %v371 = vmul.f32 %v338, %v362
      %v372 = vmul.f32 %v339, %v362
      %v373 = vmul.f32 %v340, %v362
      %v374 = vmul.f32 %v341, %v362
      %v375 = vmul.f32 %v342, %v362
      %v376 = vmul.f32 %v343, %v362
      %v377 = vmul.f32 %v344, %v362
      %v378 = vmul.f32 %v345, %v362
      %v379 = vmul.f32 %v346, %v362
      %v380 = vmul.f32 %v347, %v362
      %v381 = vmul.f32 %v348, %v362
      %v382 = vmul.f32 %v349, %v362
      %v383 = vmul.f32 %v350, %v362
      %v384 = vmul.f32 %v351, %v362
      %v385 = vmul.f32 %v352, %v362
      %v386 = vmul.f32 %v353, %v362
      %v387 = vmul.f32 %v354, %v362
      %v388 = vmul.f32 %v355, %v362
      %v389 = vmul.f32 %v356, %v362
      %v390 = vmul.f32 %v357, %v362
      %v391 = vmul.f32 %v358, %v362
      %v392 = vmul.f32 %v359, %v362
      %v393 = vmul.f32 %v360, %v362
      %v394 = vmul.f32 %v361, %v362
      %v395 = vpack.c.bf16 %v363, %v363
      %v396 = vpack.c.bf16 %v364, %v364
      %v397 = vpack.c.bf16 %v365, %v365
      %v398 = vpack.c.bf16 %v366, %v366
      %v399 = vpack.c.bf16 %v367, %v367
      %v400 = vpack.c.bf16 %v368, %v368
      %v401 = vpack.c.bf16 %v369, %v369
      %v402 = vpack.c.bf16 %v370, %v370
      %v403 = vpack.c.bf16 %v371, %v371
      %v404 = vpack.c.bf16 %v372, %v372
      %v405 = vpack.c.bf16 %v373, %v373
      %v406 = vpack.c.bf16 %v374, %v374
      %v407 = vpack.c.bf16 %v375, %v375
      %v408 = vpack.c.bf16 %v376, %v376
      %v409 = vpack.c.bf16 %v377, %v377
      %v410 = vpack.c.bf16 %v378, %v378
      %v411 = vpack.c.bf16 %v379, %v379
      %v412 = vpack.c.bf16 %v380, %v380
      %v413 = vpack.c.bf16 %v381, %v381
      %v414 = vpack.c.bf16 %v382, %v382
      %v415 = vpack.c.bf16 %v383, %v383
      %v416 = vpack.c.bf16 %v384, %v384
      %v417 = vpack.c.bf16 %v385, %v385
      %v418 = vpack.c.bf16 %v386, %v386
      %v419 = vpack.c.bf16 %v387, %v387
      %v420 = vpack.c.bf16 %v388, %v388
      %v421 = vpack.c.bf16 %v389, %v389
      %v422 = vpack.c.bf16 %v390, %v390
      %v423 = vpack.c.bf16 %v391, %v391
      %v424 = vpack.c.bf16 %v392, %v392
      %v425 = vpack.c.bf16 %v393, %v393
      %v426 = vpack.c.bf16 %v394, %v394
      %v427 = vld [vmem:[%s281] sm:$0x1]
      %v429 = vpack.i.b16 %v427, %v427
      %v431 = vperm.slane %v429, 0
      %v432 = vunpack.c.l.bf16 %v395
      %v433 = vunpack.c.l.bf16 %v396
      %v434 = vunpack.c.l.bf16 %v397
      %v435 = vunpack.c.l.bf16 %v398
      %v436 = vunpack.c.l.bf16 %v399
      %v437 = vunpack.c.l.bf16 %v400
      %v438 = vunpack.c.l.bf16 %v401
      %v439 = vunpack.c.l.bf16 %v402
      %v440 = vunpack.c.l.bf16 %v403
      %v441 = vunpack.c.l.bf16 %v404
      %v442 = vunpack.c.l.bf16 %v405
      %v443 = vunpack.c.l.bf16 %v406
      %v444 = vunpack.c.l.bf16 %v407
      %v445 = vunpack.c.l.bf16 %v408
      %v446 = vunpack.c.l.bf16 %v409
      %v447 = vunpack.c.l.bf16 %v410
      %v448 = vunpack.c.l.bf16 %v411
      %v449 = vunpack.c.l.bf16 %v412
      %v450 = vunpack.c.l.bf16 %v413
      %v451 = vunpack.c.l.bf16 %v414
      %v452 = vunpack.c.l.bf16 %v415
      %v453 = vunpack.c.l.bf16 %v416
      %v454 = vunpack.c.l.bf16 %v417
      %v455 = vunpack.c.l.bf16 %v418
      %v456 = vunpack.c.l.bf16 %v419
      %v457 = vunpack.c.l.bf16 %v420
      %v458 = vunpack.c.l.bf16 %v421
      %v459 = vunpack.c.l.bf16 %v422
      %v460 = vunpack.c.l.bf16 %v423
      %v461 = vunpack.c.l.bf16 %v424
      %v462 = vunpack.c.l.bf16 %v425
      %v463 = vunpack.c.l.bf16 %v426
      %v464 = vunpack.c.l.bf16 %v431
      %v465 = vadd.f32 %v432, %v464
      %v466 = vadd.f32 %v433, %v464
      %v467 = vadd.f32 %v434, %v464
      %v468 = vadd.f32 %v435, %v464
      %v469 = vadd.f32 %v436, %v464
      %v470 = vadd.f32 %v437, %v464
      %v471 = vadd.f32 %v438, %v464
      %v472 = vadd.f32 %v439, %v464
      %v473 = vadd.f32 %v440, %v464
      %v474 = vadd.f32 %v441, %v464
      %v475 = vadd.f32 %v442, %v464
      %v476 = vadd.f32 %v443, %v464
      %v477 = vadd.f32 %v444, %v464
      %v478 = vadd.f32 %v445, %v464
      %v479 = vadd.f32 %v446, %v464
      %v480 = vadd.f32 %v447, %v464
      %v481 = vadd.f32 %v448, %v464
      %v482 = vadd.f32 %v449, %v464
      %v483 = vadd.f32 %v450, %v464
      %v484 = vadd.f32 %v451, %v464
      %v485 = vadd.f32 %v452, %v464
      %v486 = vadd.f32 %v453, %v464
      %v487 = vadd.f32 %v454, %v464
      %v488 = vadd.f32 %v455, %v464
      %v489 = vadd.f32 %v456, %v464
      %v490 = vadd.f32 %v457, %v464
      %v491 = vadd.f32 %v458, %v464
      %v492 = vadd.f32 %v459, %v464
      %v493 = vadd.f32 %v460, %v464
      %v494 = vadd.f32 %v461, %v464
      %v495 = vadd.f32 %v462, %v464
      %v496 = vadd.f32 %v463, %v464
      %v497 = vpack.c.bf16 %v465, %v465
      %v498 = vpack.c.bf16 %v466, %v466
      %v499 = vpack.c.bf16 %v467, %v467
      %v500 = vpack.c.bf16 %v468, %v468
      %v501 = vpack.c.bf16 %v469, %v469
      %v502 = vpack.c.bf16 %v470, %v470
      %v503 = vpack.c.bf16 %v471, %v471
      %v504 = vpack.c.bf16 %v472, %v472
      %v505 = vpack.c.bf16 %v473, %v473
      %v506 = vpack.c.bf16 %v474, %v474
      %v507 = vpack.c.bf16 %v475, %v475
      %v508 = vpack.c.bf16 %v476, %v476
      %v509 = vpack.c.bf16 %v477, %v477
      %v510 = vpack.c.bf16 %v478, %v478
      %v511 = vpack.c.bf16 %v479, %v479
      %v512 = vpack.c.bf16 %v480, %v480
      %v513 = vpack.c.bf16 %v481, %v481
      %v514 = vpack.c.bf16 %v482, %v482
      %v515 = vpack.c.bf16 %v483, %v483
      %v516 = vpack.c.bf16 %v484, %v484
      %v517 = vpack.c.bf16 %v485, %v485
      %v518 = vpack.c.bf16 %v486, %v486
      %v519 = vpack.c.bf16 %v487, %v487
      %v520 = vpack.c.bf16 %v488, %v488
      %v521 = vpack.c.bf16 %v489, %v489
      %v522 = vpack.c.bf16 %v490, %v490
      %v523 = vpack.c.bf16 %v491, %v491
      %v524 = vpack.c.bf16 %v492, %v492
      %v525 = vpack.c.bf16 %v493, %v493
      %v526 = vpack.c.bf16 %v494, %v494
      %v527 = vpack.c.bf16 %v495, %v495
      %v528 = vpack.c.bf16 %v496, %v496
      %v529 = vunpack.c.l.bf16 %v497
      %v530 = vunpack.c.l.bf16 %v498
      %v531 = vunpack.c.l.bf16 %v499
      %v532 = vunpack.c.l.bf16 %v500
      %v533 = vunpack.c.l.bf16 %v501
      %v534 = vunpack.c.l.bf16 %v502
      %v535 = vunpack.c.l.bf16 %v503
      %v536 = vunpack.c.l.bf16 %v504
      %v537 = vunpack.c.l.bf16 %v505
      %v538 = vunpack.c.l.bf16 %v506
      %v539 = vunpack.c.l.bf16 %v507
      %v540 = vunpack.c.l.bf16 %v508
      %v541 = vunpack.c.l.bf16 %v509
      %v542 = vunpack.c.l.bf16 %v510
      %v543 = vunpack.c.l.bf16 %v511
      %v544 = vunpack.c.l.bf16 %v512
      %v545 = vunpack.c.l.bf16 %v513
      %v546 = vunpack.c.l.bf16 %v514
      %v547 = vunpack.c.l.bf16 %v515
      %v548 = vunpack.c.l.bf16 %v516
      %v549 = vunpack.c.l.bf16 %v517
      %v550 = vunpack.c.l.bf16 %v518
      %v551 = vunpack.c.l.bf16 %v519
      %v552 = vunpack.c.l.bf16 %v520
      %v553 = vunpack.c.l.bf16 %v521
      %v554 = vunpack.c.l.bf16 %v522
      %v555 = vunpack.c.l.bf16 %v523
      %v556 = vunpack.c.l.bf16 %v524
      %v557 = vunpack.c.l.bf16 %v525
      %v558 = vunpack.c.l.bf16 %v526
      %v559 = vunpack.c.l.bf16 %v527
      %v560 = vunpack.c.l.bf16 %v528
      %v561 = vmax.f32 %v529, 0.0
      %v562 = vmax.f32 %v530, 0.0
      %v563 = vmax.f32 %v531, 0.0
      %v564 = vmax.f32 %v532, 0.0
      %v565 = vmax.f32 %v533, 0.0
      %v566 = vmax.f32 %v534, 0.0
      %v567 = vmax.f32 %v535, 0.0
      %v568 = vmax.f32 %v536, 0.0
      %v569 = vmax.f32 %v537, 0.0
      %v570 = vmax.f32 %v538, 0.0
      %v571 = vmax.f32 %v539, 0.0
      %v572 = vmax.f32 %v540, 0.0
      %v573 = vmax.f32 %v541, 0.0
      %v574 = vmax.f32 %v542, 0.0
      %v575 = vmax.f32 %v543, 0.0
      %v576 = vmax.f32 %v544, 0.0
      %v577 = vmax.f32 %v545, 0.0
      %v578 = vmax.f32 %v546, 0.0
      %v579 = vmax.f32 %v547, 0.0
      %v580 = vmax.f32 %v548, 0.0
      %v581 = vmax.f32 %v549, 0.0
      %v582 = vmax.f32 %v550, 0.0
      %v583 = vmax.f32 %v551, 0.0
      %v584 = vmax.f32 %v552, 0.0
      %v585 = vmax.f32 %v553, 0.0
      %v586 = vmax.f32 %v554, 0.0
      %v587 = vmax.f32 %v555, 0.0
      %v588 = vmax.f32 %v556, 0.0
      %v589 = vmax.f32 %v557, 0.0
      %v590 = vmax.f32 %v558, 0.0
      %v591 = vmax.f32 %v559, 0.0
      %v592 = vmax.f32 %v560, 0.0
      %v593 = vpack.c.bf16 %v562, %v561
      %v594 = vpack.c.bf16 %v564, %v563
      %v595 = vpack.c.bf16 %v566, %v565
      %v596 = vpack.c.bf16 %v568, %v567
      %v597 = vpack.c.bf16 %v570, %v569
      %v598 = vpack.c.bf16 %v572, %v571
      %v599 = vpack.c.bf16 %v574, %v573
      %v600 = vpack.c.bf16 %v576, %v575
      %v601 = vpack.c.bf16 %v578, %v577
      %v602 = vpack.c.bf16 %v580, %v579
      %v603 = vpack.c.bf16 %v582, %v581
      %v604 = vpack.c.bf16 %v584, %v583
      %v605 = vpack.c.bf16 %v586, %v585
      %v606 = vpack.c.bf16 %v588, %v587
      %v607 = vpack.c.bf16 %v590, %v589
      %v608 = vpack.c.bf16 %v592, %v591
      %v609 = vld [vmem:[%s3] sm:$0xf]
      %v610 = vld [vmem:[%s3 + $0x4] sm:$0xf]
      %v611 = vld [vmem:[%s3 + $0x8] sm:$0xf]
      %v612 = vld [vmem:[%s3 + $0xc] sm:$0xf]
      %v613 = vld [vmem:[%s4] sm:$0x1]
      %v615 = vperm.slane %v613, 0
      %v621 = vunpack.c.l.b16 %v609
      %v622 = vunpack.c.l.b16 %v610
      %v623 = vunpack.c.l.b16 %v611
      %v624 = vunpack.c.l.b16 %v612
      %v625 = vpack.c.b16 %v622, %v621
      %v626 = vpack.c.b16 %v624, %v623
      %vm629 = vcmask 261120
      %v631 = vsel %vm629, %v593, 0
      %v634 = vsel %vm629, %v594, 0
      %v637 = vsel %vm629, %v595, 0
      %v640 = vsel %vm629, %v596, 0
      %v643 = vsel %vm629, %v597, 0
      %v646 = vsel %vm629, %v598, 0
      %v649 = vsel %vm629, %v599, 0
      %v652 = vsel %vm629, %v600, 0
      %v655 = vsel %vm629, %v601, 0
      %v658 = vsel %vm629, %v602, 0
      %v661 = vsel %vm629, %v603, 0
      %v664 = vsel %vm629, %v604, 0
      %v667 = vsel %vm629, %v605, 0
      %v670 = vsel %vm629, %v606, 0
      %v673 = vsel %vm629, %v607, 0
      %v676 = vsel %vm629, %v608, 0
      %678 = vmatpush.bf16.msra.mxu0 0
      %679 = vmatpush.bf16.msra.mxu0 0
      %680 = vmatpush.bf16.msra.mxu0 0
      %681 = vmatpush.bf16.msra.mxu0 0
      %682 = vmatpush.bf16.msra.mxu0 0
      %683 = vmatpush.bf16.msra.mxu0 0
      %684 = vmatpush.bf16.msra.mxu0 %v626
      %685 = vmatpush.bf16.msra.mxu0 %v625
      %686 = vmatmul.bf16.gmra.mxu0 %v631
      %v687 = vpop.f32.mrf.mxu0
      %v688 = vadd.f32 %v615, %v687
      %v689 = vpop.f32.mrf.mxu0
      %v690 = vadd.f32 %v615, %v689
      %691 = vmatmul.bf16.gmra.mxu0 %v634
      %v692 = vpop.f32.mrf.mxu0
      %v693 = vadd.f32 %v615, %v692
      %v694 = vpop.f32.mrf.mxu0
      %v695 = vadd.f32 %v615, %v694
      %696 = vmatmul.bf16.gmra.mxu0 %v637
      %v697 = vpop.f32.mrf.mxu0
      %v698 = vadd.f32 %v615, %v697
      %v699 = vpop.f32.mrf.mxu0
      %v700 = vadd.f32 %v615, %v699
      %701 = vmatmul.bf16.gmra.mxu0 %v640
      %v702 = vpop.f32.mrf.mxu0
      %v703 = vadd.f32 %v615, %v702
      %v704 = vpop.f32.mrf.mxu0
      %v705 = vadd.f32 %v615, %v704
      %706 = vmatmul.bf16.gmra.mxu0 %v643
      %v707 = vpop.f32.mrf.mxu0
      %v708 = vadd.f32 %v615, %v707
      %v709 = vpop.f32.mrf.mxu0
      %v710 = vadd.f32 %v615, %v709
      %711 = vmatmul.bf16.gmra.mxu0 %v646
      %v712 = vpop.f32.mrf.mxu0
      %v713 = vadd.f32 %v615, %v712
      %v714 = vpop.f32.mrf.mxu0
      %v715 = vadd.f32 %v615, %v714
      %716 = vmatmul.bf16.gmra.mxu0 %v649
      %v717 = vpop.f32.mrf.mxu0
      %v718 = vadd.f32 %v615, %v717
      %v719 = vpop.f32.mrf.mxu0
      %v720 = vadd.f32 %v615, %v719
      %721 = vmatmul.bf16.gmra.mxu0 %v652
      %v722 = vpop.f32.mrf.mxu0
      %v723 = vadd.f32 %v615, %v722
      %v724 = vpop.f32.mrf.mxu0
      %v725 = vadd.f32 %v615, %v724
      %726 = vmatmul.bf16.gmra.mxu0 %v655
      %v727 = vpop.f32.mrf.mxu0
      %v728 = vadd.f32 %v615, %v727
      %v729 = vpop.f32.mrf.mxu0
      %v730 = vadd.f32 %v615, %v729
      %731 = vmatmul.bf16.gmra.mxu0 %v658
      %v732 = vpop.f32.mrf.mxu0
      %v733 = vadd.f32 %v615, %v732
      %v734 = vpop.f32.mrf.mxu0
      %v735 = vadd.f32 %v615, %v734
      %736 = vmatmul.bf16.gmra.mxu0 %v661
      %v737 = vpop.f32.mrf.mxu0
      %v738 = vadd.f32 %v615, %v737
      %v739 = vpop.f32.mrf.mxu0
      %v740 = vadd.f32 %v615, %v739
      %741 = vmatmul.bf16.gmra.mxu0 %v664
      %v742 = vpop.f32.mrf.mxu0
      %v743 = vadd.f32 %v615, %v742
      %v744 = vpop.f32.mrf.mxu0
      %v745 = vadd.f32 %v615, %v744
      %746 = vmatmul.bf16.gmra.mxu0 %v667
      %v747 = vpop.f32.mrf.mxu0
      %v748 = vadd.f32 %v615, %v747
      %v749 = vpop.f32.mrf.mxu0
      %v750 = vadd.f32 %v615, %v749
      %751 = vmatmul.bf16.gmra.mxu0 %v670
      %v752 = vpop.f32.mrf.mxu0
      %v753 = vadd.f32 %v615, %v752
      %v754 = vpop.f32.mrf.mxu0
      %v755 = vadd.f32 %v615, %v754
      %756 = vmatmul.bf16.gmra.mxu0 %v673
      %v757 = vpop.f32.mrf.mxu0
      %v758 = vadd.f32 %v615, %v757
      %v759 = vpop.f32.mrf.mxu0
      %v760 = vadd.f32 %v615, %v759
      %761 = vmatmul.bf16.gmra.mxu0 %v676
      %v762 = vpop.f32.mrf.mxu0
      %v763 = vadd.f32 %v615, %v762
      %v764 = vpop.f32.mrf.mxu0
      %v765 = vadd.f32 %v615, %v764
      %766 = vdwg.mxu0
      %v767 = vmax.f32 %v688, 0.0
      %v768 = vmax.f32 %v690, 0.0
      %v769 = vmax.f32 %v693, 0.0
      %v770 = vmax.f32 %v695, 0.0
      %v771 = vmax.f32 %v698, 0.0
      %v772 = vmax.f32 %v700, 0.0
      %v773 = vmax.f32 %v703, 0.0
      %v774 = vmax.f32 %v705, 0.0
      %v775 = vmax.f32 %v708, 0.0
      %v776 = vmax.f32 %v710, 0.0
      %v777 = vmax.f32 %v713, 0.0
      %v778 = vmax.f32 %v715, 0.0
      %v779 = vmax.f32 %v718, 0.0
      %v780 = vmax.f32 %v720, 0.0
      %v781 = vmax.f32 %v723, 0.0
      %v782 = vmax.f32 %v725, 0.0
      %v783 = vmax.f32 %v728, 0.0
      %v784 = vmax.f32 %v730, 0.0
      %v785 = vmax.f32 %v733, 0.0
      %v786 = vmax.f32 %v735, 0.0
      %v787 = vmax.f32 %v738, 0.0
      %v788 = vmax.f32 %v740, 0.0
      %v789 = vmax.f32 %v743, 0.0
      %v790 = vmax.f32 %v745, 0.0
      %v791 = vmax.f32 %v748, 0.0
      %v792 = vmax.f32 %v750, 0.0
      %v793 = vmax.f32 %v753, 0.0
      %v794 = vmax.f32 %v755, 0.0
      %v795 = vmax.f32 %v758, 0.0
      %v796 = vmax.f32 %v760, 0.0
      %v797 = vmax.f32 %v763, 0.0
      %v798 = vmax.f32 %v765, 0.0
      %v799 = vpack.c.bf16 %v767, %v767
      %v800 = vpack.c.bf16 %v768, %v768
      %v801 = vpack.c.bf16 %v769, %v769
      %v802 = vpack.c.bf16 %v770, %v770
      %v803 = vpack.c.bf16 %v771, %v771
      %v804 = vpack.c.bf16 %v772, %v772
      %v805 = vpack.c.bf16 %v773, %v773
      %v806 = vpack.c.bf16 %v774, %v774
      %v807 = vpack.c.bf16 %v775, %v775
      %v808 = vpack.c.bf16 %v776, %v776
      %v809 = vpack.c.bf16 %v777, %v777
      %v810 = vpack.c.bf16 %v778, %v778
      %v811 = vpack.c.bf16 %v779, %v779
      %v812 = vpack.c.bf16 %v780, %v780
      %v813 = vpack.c.bf16 %v781, %v781
      %v814 = vpack.c.bf16 %v782, %v782
      %v815 = vpack.c.bf16 %v783, %v783
      %v816 = vpack.c.bf16 %v784, %v784
      %v817 = vpack.c.bf16 %v785, %v785
      %v818 = vpack.c.bf16 %v786, %v786
      %v819 = vpack.c.bf16 %v787, %v787
      %v820 = vpack.c.bf16 %v788, %v788
      %v821 = vpack.c.bf16 %v789, %v789
      %v822 = vpack.c.bf16 %v790, %v790
      %v823 = vpack.c.bf16 %v791, %v791
      %v824 = vpack.c.bf16 %v792, %v792
      %v825 = vpack.c.bf16 %v793, %v793
      %v826 = vpack.c.bf16 %v794, %v794
      %v827 = vpack.c.bf16 %v795, %v795
      %v828 = vpack.c.bf16 %v796, %v796
      %v829 = vpack.c.bf16 %v797, %v797
      %v830 = vpack.c.bf16 %v798, %v798
      %vm831 = vcmask 257024
      %832 = vst.msk [vmem:[%s290] sm:$0xf] %vm831, %v799
      %833 = vst.msk [vmem:[%s290 + $0x4] sm:$0xf] %vm831, %v800
      %834 = vst.msk [vmem:[%s290 + $0x8] sm:$0xf] %vm831, %v801
      %835 = vst.msk [vmem:[%s290 + $0xc] sm:$0xf] %vm831, %v802
      %836 = vst.msk [vmem:[%s290 + $0x10] sm:$0xf] %vm831, %v803
      %837 = vst.msk [vmem:[%s290 + $0x14] sm:$0xf] %vm831, %v804
      %838 = vst.msk [vmem:[%s290 + $0x18] sm:$0xf] %vm831, %v805
      %839 = vst.msk [vmem:[%s290 + $0x1c] sm:$0xf] %vm831, %v806
      %840 = vst.msk [vmem:[%s290 + $0x20] sm:$0xf] %vm831, %v807
      %841 = vst.msk [vmem:[%s290 + $0x24] sm:$0xf] %vm831, %v808
      %842 = vst.msk [vmem:[%s290 + $0x28] sm:$0xf] %vm831, %v809
      %843 = vst.msk [vmem:[%s290 + $0x2c] sm:$0xf] %vm831, %v810
      %844 = vst.msk [vmem:[%s290 + $0x30] sm:$0xf] %vm831, %v811
      %845 = vst.msk [vmem:[%s290 + $0x34] sm:$0xf] %vm831, %v812
      %846 = vst.msk [vmem:[%s290 + $0x38] sm:$0xf] %vm831, %v813
      %847 = vst.msk [vmem:[%s290 + $0x3c] sm:$0xf] %vm831, %v814
      %848 = vst.msk [vmem:[%s290 + $0x40] sm:$0xf] %vm831, %v815
      %849 = vst.msk [vmem:[%s290 + $0x44] sm:$0xf] %vm831, %v816
      %850 = vst.msk [vmem:[%s290 + $0x48] sm:$0xf] %vm831, %v817
      %851 = vst.msk [vmem:[%s290 + $0x4c] sm:$0xf] %vm831, %v818
      %852 = vst.msk [vmem:[%s290 + $0x50] sm:$0xf] %vm831, %v819
      %853 = vst.msk [vmem:[%s290 + $0x54] sm:$0xf] %vm831, %v820
      %854 = vst.msk [vmem:[%s290 + $0x58] sm:$0xf] %vm831, %v821
      %855 = vst.msk [vmem:[%s290 + $0x5c] sm:$0xf] %vm831, %v822
      %856 = vst.msk [vmem:[%s290 + $0x60] sm:$0xf] %vm831, %v823
      %857 = vst.msk [vmem:[%s290 + $0x64] sm:$0xf] %vm831, %v824
      %858 = vst.msk [vmem:[%s290 + $0x68] sm:$0xf] %vm831, %v825
      %859 = vst.msk [vmem:[%s290 + $0x6c] sm:$0xf] %vm831, %v826
      %860 = vst.msk [vmem:[%s290 + $0x70] sm:$0xf] %vm831, %v827
      %861 = vst.msk [vmem:[%s290 + $0x74] sm:$0xf] %vm831, %v828
      %862 = vst.msk [vmem:[%s290 + $0x78] sm:$0xf] %vm831, %v829
      %863 = vst.msk [vmem:[%s290 + $0x7c] sm:$0xf] %vm831, %v830
      %s864 = smul.u32 32, %s21
      %p865 = scmp.lt.s32.totalorder %s20, 1
      %s866 = scalar_select %p865, %s20, 1
      %p867 = scmp.lt.s32.totalorder %s864, 31
      %s868 = scalar_select %p867, %s864, 31
      %s869 = smul.addr %s866, 32
      %s870 = sadd.s32 %s868, %s869
      %s871 = smul.addr %s870, 4
      %s872 = scalar_lea.vmem %s5, %s871
      // Predicated region
      $region41: #{model_forward.10} parent=39 // pred_check
        %p873 = pneg %p170
      $region42: #{model_forward.10} parent=39 // pred_check_branch
        %875 = sbr.rel (%p873) target = $region44
      $region43: #{model_forward.10} parent=39 // pred_region
        %s876 = smul.u32 32, %s21
      $region44: #{model_forward.10} parent=39 // pred_fallthru
        _
    $region40: #{model_forward.10} parent=5 // pred_fallthru
      _
    %p877 = scmp.le.s32.totalorder 2, %s11
    // Predicated region
    $region45: #{model_forward.10} parent=5 // pred_check
      %p878 = pneg %p877
    $region46: #{model_forward.10} parent=5 // pred_check_branch
      %880 = sbr.rel (%p878) target = $region48
    $region47: #{model_forward.10} parent=5 // pred_region
      %s881 = ssub.s32 %s11, 2
      // Predicated region
      $region49: #{model_forward.10} parent=47 // pred_check
        %p882 = pneg %p176
      $region50: #{model_forward.10} parent=47 // pred_check_branch
        %884 = sbr.rel (%p882) target = $region52
      $region51: #{model_forward.10} parent=47 // pred_region
        %s885 = smul.u32 32, %s23
        %p886 = scmp.lt.s32.totalorder %s22, 1
        %s887 = scalar_select %p886, %s22, 1
        %p888 = scmp.lt.s32.totalorder %s885, 31
        %s889 = scalar_select %p888, %s885, 31
        %s890 = smul.addr %s887, 32
        %s891 = sadd.s32 %s889, %s890
        %s892 = smul.addr %s891, 4
        %s893 = scalar_lea.vmem %s5, %s892
      $region52: #{model_forward.10} parent=47 // pred_fallthru
        _
    $region48: #{model_forward.10} parent=5 // pred_fallthru
      _
  $region6: #{model_forward.10} parent=0 // loop_footer
    %s15 = sadd.s32 1, %s11
  $region7: #{model_forward.10} parent=0 // loop_footer_branch
    %10 = sbr.rel target = $region3
  $region8: #{model_forward.10} parent=0 // loop_exit
    _

// kernel: model_forward.11
$region0: #{model_forward.11}
  #allocation0 [shape = 'u32[]', space=smem, size = 0x4, offset = 0x4, fixed_abs, tag = 'smem constant byte address 0x4 - core index']
  #allocation1 [shape = 'u32[72,128]{1,0:T(1,128)}', space=vmem, size = 0x9000, scoped, tag = 'internal scratch']
  %s0 = inlined_call_operand.vmem [shape: bf16[2,288,96], index: 0, kind: input, shape index: {}]
  %s1 = inlined_call_operand.vmem [shape: bf16[3,96,16], index: 1, kind: input, shape index: {}]
  %s2 = inlined_call_operand.vmem [shape: bf16[2,256,16], index: 2, kind: output, shape index: {0}]
  %s3 = inlined_call_operand.vmem [shape: f32[2,1,16], index: 3, kind: output, shape index: {1}]
  %4 = xla_tuple %s2, %s3
  %s5 = sld [smem:[#allocation0]]
  $region49: #{model_forward.11} parent=0
    _
  %s7 = ssub.s32 1, %s5
  %s8 = scalar_select 0, %s7, %s5
  loop: start=0, step=1, limit=4
  $region2: #{model_forward.11} parent=0 // loop_pre_header
    _
  $region3: #{model_forward.11} parent=0 // loop_header
    %s10 = sphi 0, %s14
    %p11 = scmp.ge.s32.totalorder %s10, 4
    %s20 = sphi 0, %s22
    %s23 = sphi 0, %s20
    %s24 = sphi 0, %s23
    %s40 = sphi 0, %s24
    %s44 = sphi 0, %s44
    %s46 = sphi 0, %s44
    %s47 = sphi 0, %s46
    %s61 = sphi 0, %s47
    %s67 = sphi 0, %s69
    %s70 = sphi 0, %s67
    %s71 = sphi 0, %s70
    %s87 = sphi 0, %s71
    %s93 = sphi 0, %s95
    %s96 = sphi 0, %s93
    %s97 = sphi 0, %s96
    %s113 = sphi 0, %s97
  $region4: #{model_forward.11} parent=0 // loop_header_branch
    %13 = sbr.rel (%p11) target = $region8
  $region5: #{model_forward.11} parent=0 // loop_body
    %s15 = ssub.s32 %s10, 1
    %s16 = ssub.s32 %s10, 2
    %s17 = sadd.s32 %s10, 1
    %s18 = ssub.s32 %s10, %s17
    %p19 = scmp.eq.s32.totalorder %s18, 0
    %s21 = sadd.s32 %s20, 1
    %s22 = scalar_select %p19, %s20, %s21
    %p25 = pneg %p19
    %p26 = scmp.eq.s32.totalorder %s10, 1
    %p27 = por %p25, %p26
    %p28 = scmp.ne.s32.totalorder %s20, %s23
    %p29 = scmp.eq.s32.totalorder %s10, 0
    %p30 = por %p28, %p29
    %p31 = scmp.ne.s32.totalorder %s20, %s23
    %p32 = scmp.eq.s32.totalorder %s15, 1
    %p33 = por %p31, %p32
    %p34 = scmp.ne.s32.totalorder %s23, %s24
    %p35 = scmp.eq.s32.totalorder %s15, 0
    %p36 = por %p34, %p35
    %p37 = scmp.ne.s32.totalorder %s23, %s24
    %p38 = scmp.eq.s32.totalorder %s16, 1
    %p39 = por %p37, %p38
    %p41 = scmp.ne.s32.totalorder %s24, %s40
    %p42 = scmp.eq.s32.totalorder %s16, 0
    %p43 = por %p41, %p42
    %s45 = sadd.s32 %s44, 1
    %p48 = scmp.eq.s32.totalorder %s10, 1
    %p49 = scmp.ne.s32.totalorder %s44, %s46
    %p50 = scmp.eq.s32.totalorder %s10, 0
    %p51 = por %p49, %p50
    %p52 = scmp.ne.s32.totalorder %s44, %s46
    %p53 = scmp.eq.s32.totalorder %s15, 1
    %p54 = por %p52, %p53
    %p55 = scmp.ne.s32.totalorder %s46, %s47
    %p56 = scmp.eq.s32.totalorder %s15, 0
    %p57 = por %p55, %p56
    %p58 = scmp.ne.s32.totalorder %s46, %s47
    %p59 = scmp.eq.s32.totalorder %s16, 1
    %p60 = por %p58, %p59
    %p62 = scmp.ne.s32.totalorder %s47, %s61
    %p63 = scmp.eq.s32.totalorder %s16, 0
    %p64 = por %p62, %p63
    %s65 = ssub.s32 %s10, %s17
    %p66 = scmp.eq.s32.totalorder %s65, 0
    %s68 = sadd.s32 %s67, 1
    %s69 = scalar_select %p66, %s67, %s68
    %p72 = pneg %p66
    %p73 = scmp.eq.s32.totalorder %s10, 1
    %p74 = por %p72, %p73
    %p75 = scmp.ne.s32.totalorder %s67, %s70
    %p76 = scmp.eq.s32.totalorder %s10, 0
    %p77 = por %p75, %p76
    %p78 = scmp.ne.s32.totalorder %s67, %s70
    %p79 = scmp.eq.s32.totalorder %s15, 1
    %p80 = por %p78, %p79
    %p81 = scmp.ne.s32.totalorder %s70, %s71
    %p82 = scmp.eq.s32.totalorder %s15, 0
    %p83 = por %p81, %p82
    %p84 = scmp.ne.s32.totalorder %s70, %s71
    %p85 = scmp.eq.s32.totalorder %s16, 1
    %p86 = por %p84, %p85
    %p88 = scmp.ne.s32.totalorder %s71, %s87
    %p89 = scmp.eq.s32.totalorder %s16, 0
    %p90 = por %p88, %p89
    %s91 = ssub.s32 %s10, %s17
    %p92 = scmp.eq.s32.totalorder %s91, 0
    %s94 = sadd.s32 %s93, 1
    %s95 = scalar_select %p92, %s93, %s94
    %p98 = pneg %p92
    %p99 = scmp.eq.s32.totalorder %s10, 1
    %p100 = por %p98, %p99
    %p101 = scmp.ne.s32.totalorder %s93, %s96
    %p102 = scmp.eq.s32.totalorder %s10, 0
    %p103 = por %p101, %p102
    %p104 = scmp.ne.s32.totalorder %s93, %s96
    %p105 = scmp.eq.s32.totalorder %s15, 1
    %p106 = por %p104, %p105
    %p107 = scmp.ne.s32.totalorder %s96, %s97
    %p108 = scmp.eq.s32.totalorder %s15, 0
    %p109 = por %p107, %p108
    %p110 = scmp.ne.s32.totalorder %s96, %s97
    %p111 = scmp.eq.s32.totalorder %s16, 1
    %p112 = por %p110, %p111
    %p114 = scmp.ne.s32.totalorder %s97, %s113
    %p115 = scmp.eq.s32.totalorder %s16, 0
    %p116 = por %p114, %p115
    %p117 = scmp.le.s32.totalorder 1, %s10
    %p118 = scmp.lt.s32.totalorder %s10, 3
    %p119 = pnand %p117, %p118
    %p120 = pneg %p119
    // Predicated region
    $region9: #{model_forward.11} parent=5 // pred_check
      _
    $region10: #{model_forward.11} parent=5 // pred_check_branch
      %122 = sbr.rel (%p119) target = $region12
    $region11: #{model_forward.11} parent=5 // pred_region
      %s123 = ssub.s32 %s10, 1
      // Predicated region
      $region13: #{model_forward.11} parent=11 // pred_check
        %p124 = pneg %p57
      $region14: #{model_forward.11} parent=11 // pred_check_branch
        %126 = sbr.rel (%p124) target = $region16
      $region15: #{model_forward.11} parent=11 // pred_region
        _
      $region16: #{model_forward.11} parent=11 // pred_fallthru
        _
    $region12: #{model_forward.11} parent=5 // pred_fallthru
      _
    %p127 = scmp.lt.s32.totalorder %s10, 2
    // Predicated region
    $region17: #{model_forward.11} parent=5 // pred_check
      %p128 = pneg %p127
    $region18: #{model_forward.11} parent=5 // pred_check_branch
      %130 = sbr.rel (%p128) target = $region20
    $region19: #{model_forward.11} parent=5 // pred_region
      // Predicated region
      $region21: #{model_forward.11} parent=19 // pred_check
        %p131 = pneg %p30
      $region22: #{model_forward.11} parent=19 // pred_check_branch
        %133 = sbr.rel (%p131) target = $region24
      $region23: #{model_forward.11} parent=19 // pred_region
        %p134 = scmp.lt.s32.totalorder %s10, 1
        %s135 = scalar_select %p134, %s10, 1
        %s136 = smul.addr %s135, 36
        %s137 = smul.addr %s136, 4
        %s138 = scalar_lea.vmem %s0, %s137
      $region24: #{model_forward.11} parent=19 // pred_fallthru
        _
    $region20: #{model_forward.11} parent=5 // pred_fallthru
      _
    %p139 = scmp.le.s32.totalorder 1, %s10
    %p140 = scmp.lt.s32.totalorder %s10, 3
    %p141 = pnand %p139, %p140
    %p142 = pneg %p141
    // Predicated region
    $region25: #{model_forward.11} parent=5 // pred_check
      _
    $region26: #{model_forward.11} parent=5 // pred_check_branch
      %144 = sbr.rel (%p141) target = $region28
    $region27: #{model_forward.11} parent=5 // pred_region
      %s145 = ssub.s32 %s10, 1
      %p146 = scmp.lt.s32.totalorder %s15, 1
      %s147 = scalar_select %p146, %s15, 1
      %s148 = smul.addr %s147, 36
      %s149 = smul.addr %s148, 4
      %s150 = scalar_lea.vmem %s0, %s149
      %p151 = pneg %p36
      %p152 = pneg %p33
      %p153 = pneg %p57
      %p154 = pneg %p54
      %p155 = pneg %p83
      %p156 = pneg %p80
      %p157 = scmp.lt.s32.totalorder %s15, 1
      %s158 = scalar_select %p157, %s15, 1
      %s159 = smul.addr %s158, 32
      %s160 = smul.addr %s159, 4
      %s161 = scalar_lea.vmem %s2, %s160
      %p162 = pneg %p109
      %p163 = pneg %p106
      %p164 = scmp.lt.s32.totalorder %s15, 1
      %s165 = scalar_select %p164, %s15, 1
      %s166 = scalar_lea.vmem %s3, %s165
      %p167 = scmp.lt.s32.totalorder %s15, 1
      %s168 = scalar_select %p167, %s15, 1
      %s169 = smul.addr %s168, 36
      %s170 = smul.addr %s169, 4
      %s171 = scalar_lea.vmem %s0, %s170
      %p172 = scmp.lt.s32.totalorder %s15, 1
      %s173 = scalar_select %p172, %s15, 1
      %s174 = smul.addr %s173, 32
      %s175 = smul.addr %s174, 4
      %s176 = scalar_lea.vmem %s2, %s175
      %p177 = scmp.lt.s32.totalorder %s15, 1
      %s178 = scalar_select %p177, %s15, 1
      %s179 = scalar_lea.vmem %s3, %s178
      %v181 = vld [vmem:[%s171] sm:$0xf]
      %v182 = vld [vmem:[%s171 + $0x4] sm:$0xf]
      %v183 = vld [vmem:[%s171 + $0x8] sm:$0xf]
      %v184 = vld [vmem:[%s171 + $0xc] sm:$0xf]
      %v185 = vld [vmem:[%s171 + $0x10] sm:$0xf]
      %v186 = vld [vmem:[%s171 + $0x14] sm:$0xf]
      %v187 = vld [vmem:[%s171 + $0x18] sm:$0xf]
      %v188 = vld [vmem:[%s171 + $0x1c] sm:$0xf]
      %v189 = vld [vmem:[%s171 + $0x20] sm:$0xf]
      %v190 = vld [vmem:[%s171 + $0x24] sm:$0xf]
      %v191 = vld [vmem:[%s171 + $0x28] sm:$0xf]
      %v192 = vld [vmem:[%s171 + $0x2c] sm:$0xf]
      %v193 = vld [vmem:[%s171 + $0x30] sm:$0xf]
      %v194 = vld [vmem:[%s171 + $0x34] sm:$0xf]
      %v195 = vld [vmem:[%s171 + $0x38] sm:$0xf]
      %v196 = vld [vmem:[%s171 + $0x3c] sm:$0xf]
      %v197 = vld [vmem:[%s171 + $0x40] sm:$0xf]
      %v198 = vld [vmem:[%s171 + $0x44] sm:$0xf]
      %v199 = vld [vmem:[%s171 + $0x48] sm:$0xf]
      %v200 = vld [vmem:[%s171 + $0x4c] sm:$0xf]
      %v201 = vld [vmem:[%s171 + $0x50] sm:$0xf]
      %v202 = vld [vmem:[%s171 + $0x54] sm:$0xf]
      %v203 = vld [vmem:[%s171 + $0x58] sm:$0xf]
      %v204 = vld [vmem:[%s171 + $0x5c] sm:$0xf]
      %v205 = vld [vmem:[%s171 + $0x60] sm:$0xf]
      %v206 = vld [vmem:[%s171 + $0x64] sm:$0xf]
      %v207 = vld [vmem:[%s171 + $0x68] sm:$0xf]
      %v208 = vld [vmem:[%s171 + $0x6c] sm:$0xf]
      %v209 = vld [vmem:[%s171 + $0x70] sm:$0xf]
      %v210 = vld [vmem:[%s171 + $0x74] sm:$0xf]
      %v211 = vld [vmem:[%s171 + $0x78] sm:$0xf]
      %v212 = vld [vmem:[%s171 + $0x7c] sm:$0xf]
      %v213 = vld [vmem:[%s1] sm:$0xf]
      %v214 = vld [vmem:[%s1 + $0x4] sm:$0xf]
      %v215 = vld [vmem:[%s1 + $0x8] sm:$0xf]
      %v216 = vld [vmem:[%s1 + $0xc] sm:$0xf]
      %v217 = vld [vmem:[%s1 + $0x10] sm:$0xf]
      %v218 = vld [vmem:[%s1 + $0x14] sm:$0xf]
      %v219 = vld [vmem:[%s1 + $0x18] sm:$0xf]
      %v220 = vld [vmem:[%s1 + $0x1c] sm:$0xf]
      %v221 = vld [vmem:[%s1 + $0x20] sm:$0xf]
      %v222 = vld [vmem:[%s1 + $0x24] sm:$0xf]
      %v223 = vld [vmem:[%s1 + $0x28] sm:$0xf]
      %v224 = vld [vmem:[%s1 + $0x2c] sm:$0xf]
      %v225 = vld [vmem:[%s171 + $0x80] sm:$0xf]
      %v226 = vld [vmem:[%s171 + $0x84] sm:$0xf]
      %s227 = scalar_lea.vmem %s1, 48
      %v228 = vld [vmem:[%s227] sm:$0xf]
      %v229 = vld [vmem:[%s227 + $0x4] sm:$0xf]
      %v230 = vld [vmem:[%s227 + $0x8] sm:$0xf]
      %v231 = vld [vmem:[%s227 + $0xc] sm:$0xf]
      %v232 = vld [vmem:[%s227 + $0x10] sm:$0xf]
      %v233 = vld [vmem:[%s227 + $0x14] sm:$0xf]
      %v234 = vld [vmem:[%s227 + $0x18] sm:$0xf]
      %v235 = vld [vmem:[%s227 + $0x1c] sm:$0xf]
      %v236 = vld [vmem:[%s227 + $0x20] sm:$0xf]
      %v237 = vld [vmem:[%s227 + $0x24] sm:$0xf]
      %v238 = vld [vmem:[%s227 + $0x28] sm:$0xf]
      %v239 = vld [vmem:[%s227 + $0x2c] sm:$0xf]
      %v272 = vunpack.c.l.b16 %v183
      %v273 = vunpack.c.l.b16 %v184
      %v274 = vunpack.c.l.b16 %v185
      %v275 = vunpack.c.l.b16 %v186
      %v276 = vunpack.c.l.b16 %v187
      %v277 = vunpack.c.l.b16 %v188
      %v278 = vunpack.c.l.b16 %v189
      %v279 = vunpack.c.l.b16 %v190
      %v280 = vunpack.c.l.b16 %v191
      %v281 = vunpack.c.l.b16 %v192
      %v282 = vunpack.c.l.b16 %v193
      %v283 = vunpack.c.l.b16 %v194
      %v284 = vunpack.c.l.b16 %v195
      %v285 = vunpack.c.l.b16 %v196
      %v286 = vunpack.c.l.b16 %v197
      %v287 = vunpack.c.l.b16 %v198
      %v288 = vunpack.c.l.b16 %v199
      %v289 = vunpack.c.l.b16 %v200
      %v290 = vunpack.c.l.b16 %v201
      %v291 = vunpack.c.l.b16 %v202
      %v292 = vunpack.c.l.b16 %v203
      %v293 = vunpack.c.l.b16 %v204
      %v294 = vunpack.c.l.b16 %v205
      %v295 = vunpack.c.l.b16 %v206
      %v296 = vunpack.c.l.b16 %v207
      %v297 = vunpack.c.l.b16 %v208
      %v298 = vunpack.c.l.b16 %v209
      %v299 = vunpack.c.l.b16 %v210
      %v300 = vunpack.c.l.b16 %v211
      %v301 = vunpack.c.l.b16 %v212
      %v302 = vunpack.c.l.b16 %v225
      %v303 = vunpack.c.l.b16 %v226
      %v304 = vpack.c.b16 %v273, %v272
      %v305 = vpack.c.b16 %v275, %v274
      %v306 = vpack.c.b16 %v277, %v276
      %v307 = vpack.c.b16 %v279, %v278
      %v308 = vpack.c.b16 %v281, %v280
      %v309 = vpack.c.b16 %v283, %v282
      %v310 = vpack.c.b16 %v285, %v284
      %v311 = vpack.c.b16 %v287, %v286
      %v312 = vpack.c.b16 %v289, %v288
      %v313 = vpack.c.b16 %v291, %v290
      %v314 = vpack.c.b16 %v293, %v292
      %v315 = vpack.c.b16 %v295, %v294
      %v316 = vpack.c.b16 %v297, %v296
      %v317 = vpack.c.b16 %v299, %v298
      %v318 = vpack.c.b16 %v301, %v300
      %v319 = vpack.c.b16 %v303, %v302
      %v332 = vunpack.c.l.b16 %v228
      %v333 = vunpack.c.l.b16 %v229
      %v334 = vunpack.c.l.b16 %v230
      %v335 = vunpack.c.l.b16 %v231
      %v336 = vunpack.c.l.b16 %v232
      %v337 = vunpack.c.l.b16 %v233
      %v338 = vunpack.c.l.b16 %v234
      %v339 = vunpack.c.l.b16 %v235
      %v340 = vunpack.c.l.b16 %v236
      %v341 = vunpack.c.l.b16 %v237
      %v342 = vunpack.c.l.b16 %v238
      %v343 = vunpack.c.l.b16 %v239
      %v344 = vpack.c.b16 %v333, %v332
      %v345 = vpack.c.b16 %v335, %v334
      %v346 = vpack.c.b16 %v337, %v336
      %v347 = vpack.c.b16 %v339, %v338
      %v348 = vpack.c.b16 %v341, %v340
      %v349 = vpack.c.b16 %v343, %v342
      %vm356 = vcmask 785408
      %v358 = vsel %vm356, %v304, 0
      %v361 = vsel %vm356, %v305, 0
      %v364 = vsel %vm356, %v306, 0
      %v367 = vsel %vm356, %v307, 0
      %v370 = vsel %vm356, %v308, 0
      %v373 = vsel %vm356, %v309, 0
      %v376 = vsel %vm356, %v310, 0
      %v379 = vsel %vm356, %v311, 0
      %v382 = vsel %vm356, %v312, 0
      %v385 = vsel %vm356, %v313, 0
      %v388 = vsel %vm356, %v314, 0
      %v391 = vsel %vm356, %v315, 0
      %v394 = vsel %vm356, %v316, 0
      %v397 = vsel %vm356, %v317, 0
      %v400 = vsel %vm356, %v318, 0
      %v403 = vsel %vm356, %v319, 0
      %405 = vmatpush.bf16.msra.mxu0 0
      %406 = vmatpush.bf16.msra.mxu0 0
      %407 = vmatpush.bf16.msra.mxu0 %v349
      %408 = vmatpush.bf16.msra.mxu0 %v348
      %409 = vmatpush.bf16.msra.mxu0 %v347
      %410 = vmatpush.bf16.msra.mxu0 %v346
      %411 = vmatpush.bf16.msra.mxu0 %v345
      %412 = vmatpush.bf16.msra.mxu0 %v344
      %413 = vmatmul.bf16.gmra.mxu0 %v358
      %v414 = vpop.f32.mrf.mxu0
      %v415 = vadd.f32 0.0, %v414
      %v416 = vpop.f32.mrf.mxu0
      %v417 = vadd.f32 0.0, %v416
      %418 = vmatmul.bf16.gmra.mxu0 %v361
      %v419 = vpop.f32.mrf.mxu0
      %v420 = vadd.f32 0.0, %v419
      %v421 = vpop.f32.mrf.mxu0
      %v422 = vadd.f32 0.0, %v421
      %423 = vmatmul.bf16.gmra.mxu0 %v364
      %v424 = vpop.f32.mrf.mxu0
      %v425 = vadd.f32 0.0, %v424
      %v426 = vpop.f32.mrf.mxu0
      %v427 = vadd.f32 0.0, %v426
      %428 = vmatmul.bf16.gmra.mxu0 %v367
      %v429 = vpop.f32.mrf.mxu0
      %v430 = vadd.f32 0.0, %v429
      %v431 = vpop.f32.mrf.mxu0
      %v432 = vadd.f32 0.0, %v431
      %433 = vmatmul.bf16.gmra.mxu0 %v370
      %v434 = vpop.f32.mrf.mxu0
      %v435 = vadd.f32 0.0, %v434
      %v436 = vpop.f32.mrf.mxu0
      %v437 = vadd.f32 0.0, %v436
      %438 = vmatmul.bf16.gmra.mxu0 %v373
      %v439 = vpop.f32.mrf.mxu0
      %v440 = vadd.f32 0.0, %v439
      %v441 = vpop.f32.mrf.mxu0
      %v442 = vadd.f32 0.0, %v441
      %443 = vmatmul.bf16.gmra.mxu0 %v376
      %v444 = vpop.f32.mrf.mxu0
      %v445 = vadd.f32 0.0, %v444
      %v446 = vpop.f32.mrf.mxu0
      %v447 = vadd.f32 0.0, %v446
      %448 = vmatmul.bf16.gmra.mxu0 %v379
      %v449 = vpop.f32.mrf.mxu0
      %v450 = vadd.f32 0.0, %v449
      %v451 = vpop.f32.mrf.mxu0
      %v452 = vadd.f32 0.0, %v451
      %453 = vmatmul.bf16.gmra.mxu0 %v382
      %v454 = vpop.f32.mrf.mxu0
      %v455 = vadd.f32 0.0, %v454
      %v456 = vpop.f32.mrf.mxu0
      %v457 = vadd.f32 0.0, %v456
      %458 = vmatmul.bf16.gmra.mxu0 %v385
      %v459 = vpop.f32.mrf.mxu0
      %v460 = vadd.f32 0.0, %v459
      %v461 = vpop.f32.mrf.mxu0
      %v462 = vadd.f32 0.0, %v461
      %463 = vmatmul.bf16.gmra.mxu0 %v388
      %v464 = vpop.f32.mrf.mxu0
      %v465 = vadd.f32 0.0, %v464
      %v466 = vpop.f32.mrf.mxu0
      %v467 = vadd.f32 0.0, %v466
      %468 = vmatmul.bf16.gmra.mxu0 %v391
      %v469 = vpop.f32.mrf.mxu0
      %v470 = vadd.f32 0.0, %v469
      %v471 = vpop.f32.mrf.mxu0
      %v472 = vadd.f32 0.0, %v471
      %473 = vmatmul.bf16.gmra.mxu0 %v394
      %v474 = vpop.f32.mrf.mxu0
      %v475 = vadd.f32 0.0, %v474
      %v476 = vpop.f32.mrf.mxu0
      %v477 = vadd.f32 0.0, %v476
      %478 = vmatmul.bf16.gmra.mxu0 %v397
      %v479 = vpop.f32.mrf.mxu0
      %v480 = vadd.f32 0.0, %v479
      %v481 = vpop.f32.mrf.mxu0
      %v482 = vadd.f32 0.0, %v481
      %483 = vmatmul.bf16.gmra.mxu0 %v400
      %v484 = vpop.f32.mrf.mxu0
      %v485 = vadd.f32 0.0, %v484
      %v486 = vpop.f32.mrf.mxu0
      %v487 = vadd.f32 0.0, %v486
      %488 = vmatmul.bf16.gmra.mxu0 %v403
      %v489 = vpop.f32.mrf.mxu0
      %v490 = vadd.f32 0.0, %v489
      %v491 = vpop.f32.mrf.mxu0
      %v492 = vadd.f32 0.0, %v491
      %493 = vdwg.mxu0
      %v496 = vunpack.c.l.b16 %v181
      %v497 = vunpack.c.l.b16 %v182
      %v498 = vpack.c.b16 %v497, %v496
      %v511 = vunpack.c.l.b16 %v213
      %v512 = vunpack.c.l.b16 %v214
      %v513 = vunpack.c.l.b16 %v215
      %v514 = vunpack.c.l.b16 %v216
      %v515 = vunpack.c.l.b16 %v217
      %v516 = vunpack.c.l.b16 %v218
      %v517 = vunpack.c.l.b16 %v219
      %v518 = vunpack.c.l.b16 %v220
      %v519 = vunpack.c.l.b16 %v221
      %v520 = vunpack.c.l.b16 %v222
      %v521 = vunpack.c.l.b16 %v223
      %v522 = vunpack.c.l.b16 %v224
      %v523 = vpack.c.b16 %v512, %v511
      %v524 = vpack.c.b16 %v514, %v513
      %v525 = vpack.c.b16 %v516, %v515
      %v526 = vpack.c.b16 %v518, %v517
      %v527 = vpack.c.b16 %v520, %v519
      %v528 = vpack.c.b16 %v522, %v521
      %v536 = vsel %vm356, %v498, 0
      %538 = vmatpush.bf16.msra.mxu0 0
      %539 = vmatpush.bf16.msra.mxu0 0
      %540 = vmatpush.bf16.msra.mxu0 %v528
      %541 = vmatpush.bf16.msra.mxu0 %v527
      %542 = vmatpush.bf16.msra.mxu0 %v526
      %543 = vmatpush.bf16.msra.mxu0 %v525
      %544 = vmatpush.bf16.msra.mxu0 %v524
      %545 = vmatpush.bf16.msra.mxu0 %v523
      %546 = vmatmul.bf16.gmra.mxu0 %v536
      %v547 = vpop.f32.mrf.mxu0
      %v548 = vadd.f32 %v415, %v547
      %v549 = vpop.f32.mrf.mxu0
      %v550 = vadd.f32 %v417, %v549
      %551 = vmatmul.bf16.gmra.mxu0 %v358
      %v552 = vpop.f32.mrf.mxu0
      %v553 = vadd.f32 %v420, %v552
      %v554 = vpop.f32.mrf.mxu0
      %v555 = vadd.f32 %v422, %v554
      %556 = vmatmul.bf16.gmra.mxu0 %v361
      %v557 = vpop.f32.mrf.mxu0
      %v558 = vadd.f32 %v425, %v557
      %v559 = vpop.f32.mrf.mxu0
      %v560 = vadd.f32 %v427, %v559
      %561 = vmatmul.bf16.gmra.mxu0 %v364
      %v562 = vpop.f32.mrf.mxu0
      %v563 = vadd.f32 %v430, %v562
      %v564 = vpop.f32.mrf.mxu0
      %v565 = vadd.f32 %v432, %v564
      %566 = vmatmul.bf16.gmra.mxu0 %v367
      %v567 = vpop.f32.mrf.mxu0
      %v568 = vadd.f32 %v435, %v567
      %v569 = vpop.f32.mrf.mxu0
      %v570 = vadd.f32 %v437, %v569
      %571 = vmatmul.bf16.gmra.mxu0 %v370
      %v572 = vpop.f32.mrf.mxu0
      %v573 = vadd.f32 %v440, %v572
      %v574 = vpop.f32.mrf.mxu0
      %v575 = vadd.f32 %v442, %v574
      %576 = vmatmul.bf16.gmra.mxu0 %v373
      %v577 = vpop.f32.mrf.mxu0
      %v578 = vadd.f32 %v445, %v577
      %v579 = vpop.f32.mrf.mxu0
      %v580 = vadd.f32 %v447, %v579
      %581 = vmatmul.bf16.gmra.mxu0 %v376
      %v582 = vpop.f32.mrf.mxu0
      %v583 = vadd.f32 %v450, %v582
      %v584 = vpop.f32.mrf.mxu0
      %v585 = vadd.f32 %v452, %v584
      %586 = vmatmul.bf16.gmra.mxu0 %v379
      %v587 = vpop.f32.mrf.mxu0
      %v588 = vadd.f32 %v455, %v587
      %v589 = vpop.f32.mrf.mxu0
      %v590 = vadd.f32 %v457, %v589
      %591 = vmatmul.bf16.gmra.mxu0 %v382
      %v592 = vpop.f32.mrf.mxu0
      %v593 = vadd.f32 %v460, %v592
      %v594 = vpop.f32.mrf.mxu0
      %v595 = vadd.f32 %v462, %v594
      %596 = vmatmul.bf16.gmra.mxu0 %v385
      %v597 = vpop.f32.mrf.mxu0
      %v598 = vadd.f32 %v465, %v597
      %v599 = vpop.f32.mrf.mxu0
      %v600 = vadd.f32 %v467, %v599
      %601 = vmatmul.bf16.gmra.mxu0 %v388
      %v602 = vpop.f32.mrf.mxu0
      %v603 = vadd.f32 %v470, %v602
      %v604 = vpop.f32.mrf.mxu0
      %v605 = vadd.f32 %v472, %v604
      %606 = vmatmul.bf16.gmra.mxu0 %v391
      %v607 = vpop.f32.mrf.mxu0
      %v608 = vadd.f32 %v475, %v607
      %v609 = vpop.f32.mrf.mxu0
      %v610 = vadd.f32 %v477, %v609
      %611 = vmatmul.bf16.gmra.mxu0 %v394
      %v612 = vpop.f32.mrf.mxu0
      %v613 = vadd.f32 %v480, %v612
      %v614 = vpop.f32.mrf.mxu0
      %v615 = vadd.f32 %v482, %v614
      %616 = vmatmul.bf16.gmra.mxu0 %v397
      %v617 = vpop.f32.mrf.mxu0
      %v618 = vadd.f32 %v485, %v617
      %v619 = vpop.f32.mrf.mxu0
      %v620 = vadd.f32 %v487, %v619
      %621 = vmatmul.bf16.gmra.mxu0 %v400
      %v622 = vpop.f32.mrf.mxu0
      %v623 = vadd.f32 %v490, %v622
      %v624 = vpop.f32.mrf.mxu0
      %v625 = vadd.f32 %v492, %v624
      %626 = vdwg.mxu0
      %v627 = vld [vmem:[%s171 + $0x10] sm:$0xf]
      %v628 = vld [vmem:[%s171 + $0x14] sm:$0xf]
      %v629 = vld [vmem:[%s171 + $0x18] sm:$0xf]
      %v630 = vld [vmem:[%s171 + $0x1c] sm:$0xf]
      %v631 = vld [vmem:[%s171 + $0x20] sm:$0xf]
      %v632 = vld [vmem:[%s171 + $0x24] sm:$0xf]
      %v633 = vld [vmem:[%s171 + $0x28] sm:$0xf]
      %v634 = vld [vmem:[%s171 + $0x2c] sm:$0xf]
      %v635 = vld [vmem:[%s171 + $0x30] sm:$0xf]
      %v636 = vld [vmem:[%s171 + $0x34] sm:$0xf]
      %v637 = vld [vmem:[%s171 + $0x38] sm:$0xf]
      %v638 = vld [vmem:[%s171 + $0x3c] sm:$0xf]
      %v639 = vld [vmem:[%s171 + $0x40] sm:$0xf]
      %v640 = vld [vmem:[%s171 + $0x44] sm:$0xf]
      %v641 = vld [vmem:[%s171 + $0x48] sm:$0xf]
      %v642 = vld [vmem:[%s171 + $0x4c] sm:$0xf]
      %v643 = vld [vmem:[%s171 + $0x50] sm:$0xf]
      %v644 = vld [vmem:[%s171 + $0x54] sm:$0xf]
      %v645 = vld [vmem:[%s171 + $0x58] sm:$0xf]
      %v646 = vld [vmem:[%s171 + $0x5c] sm:$0xf]
      %v647 = vld [vmem:[%s171 + $0x60] sm:$0xf]
      %v648 = vld [vmem:[%s171 + $0x64] sm:$0xf]
      %v649 = vld [vmem:[%s171 + $0x68] sm:$0xf]
      %v650 = vld [vmem:[%s171 + $0x6c] sm:$0xf]
      %v651 = vld [vmem:[%s171 + $0x70] sm:$0xf]
      %v652 = vld [vmem:[%s171 + $0x74] sm:$0xf]
      %v653 = vld [vmem:[%s171 + $0x78] sm:$0xf]
      %v654 = vld [vmem:[%s171 + $0x7c] sm:$0xf]
      %v655 = vld [vmem:[%s171 + $0x80] sm:$0xf]
      %v656 = vld [vmem:[%s171 + $0x84] sm:$0xf]
      %v657 = vld [vmem:[%s171 + $0x88] sm:$0xf]
      %v658 = vld [vmem:[%s171 + $0x8c] sm:$0xf]
      %s659 = scalar_lea.vmem %s1, 96
      %v660 = vld [vmem:[%s659] sm:$0xf]
      %v661 = vld [vmem:[%s659 + $0x4] sm:$0xf]
      %v662 = vld [vmem:[%s659 + $0x8] sm:$0xf]
      %v663 = vld [vmem:[%s659 + $0xc] sm:$0xf]
      %v664 = vld [vmem:[%s659 + $0x10] sm:$0xf]
      %v665 = vld [vmem:[%s659 + $0x14] sm:$0xf]
      %v666 = vld [vmem:[%s659 + $0x18] sm:$0xf]
      %v667 = vld [vmem:[%s659 + $0x1c] sm:$0xf]
      %v668 = vld [vmem:[%s659 + $0x20] sm:$0xf]
      %v669 = vld [vmem:[%s659 + $0x24] sm:$0xf]
      %v670 = vld [vmem:[%s659 + $0x28] sm:$0xf]
      %v671 = vld [vmem:[%s659 + $0x2c] sm:$0xf]
      %v704 = vunpack.c.l.b16 %v627
      %v705 = vunpack.c.l.b16 %v628
      %v706 = vunpack.c.l.b16 %v629
      %v707 = vunpack.c.l.b16 %v630
      %v708 = vunpack.c.l.b16 %v631
      %v709 = vunpack.c.l.b16 %v632
      %v710 = vunpack.c.l.b16 %v633
      %v711 = vunpack.c.l.b16 %v634
      %v712 = vunpack.c.l.b16 %v635
      %v713 = vunpack.c.l.b16 %v636
      %v714 = vunpack.c.l.b16 %v637
      %v715 = vunpack.c.l.b16 %v638
      %v716 = vunpack.c.l.b16 %v639
      %v717 = vunpack.c.l.b16 %v640
      %v718 = vunpack.c.l.b16 %v641
      %v719 = vunpack.c.l.b16 %v642
      %v720 = vunpack.c.l.b16 %v643
      %v721 = vunpack.c.l.b16 %v644
      %v722 = vunpack.c.l.b16 %v645
      %v723 = vunpack.c.l.b16 %v646
      %v724 = vunpack.c.l.b16 %v647
      %v725 = vunpack.c.l.b16 %v648
      %v726 = vunpack.c.l.b16 %v649
      %v727 = vunpack.c.l.b16 %v650
      %v728 = vunpack.c.l.b16 %v651
      %v729 = vunpack.c.l.b16 %v652
      %v730 = vunpack.c.l.b16 %v653
      %v731 = vunpack.c.l.b16 %v654
      %v732 = vunpack.c.l.b16 %v655
      %v733 = vunpack.c.l.b16 %v656
      %v734 = vunpack.c.l.b16 %v657
      %v735 = vunpack.c.l.b16 %v658
      %v736 = vpack.c.b16 %v705, %v704
      %v737 = vpack.c.b16 %v707, %v706
      %v738 = vpack.c.b16 %v709, %v708
      %v739 = vpack.c.b16 %v711, %v710
      %v740 = vpack.c.b16 %v713, %v712
      %v741 = vpack.c.b16 %v715, %v714
      %v742 = vpack.c.b16 %v717, %v716
      %v743 = vpack.c.b16 %v719, %v718
      %v744 = vpack.c.b16 %v721, %v720
      %v745 = vpack.c.b16 %v723, %v722
      %v746 = vpack.c.b16 %v725, %v724
      %v747 = vpack.c.b16 %v727, %v726
      %v748 = vpack.c.b16 %v729, %v728
      %v749 = vpack.c.b16 %v731, %v730
      %v750 = vpack.c.b16 %v733, %v732
      %v751 = vpack.c.b16 %v735, %v734
      %v764 = vunpack.c.l.b16 %v660
      %v765 = vunpack.c.l.b16 %v661
      %v766 = vunpack.c.l.b16 %v662
      %v767 = vunpack.c.l.b16 %v663
      %v768 = vunpack.c.l.b16 %v664
      %v769 = vunpack.c.l.b16 %v665
      %v770 = vunpack.c.l.b16 %v666
      %v771 = vunpack.c.l.b16 %v667
      %v772 = vunpack.c.l.b16 %v668
      %v773 = vunpack.c.l.b16 %v669
      %v774 = vunpack.c.l.b16 %v670
      %v775 = vunpack.c.l.b16 %v671
      %v776 = vpack.c.b16 %v765, %v764
      %v777 = vpack.c.b16 %v767, %v766
      %v778 = vpack.c.b16 %v769, %v768
      %v779 = vpack.c.b16 %v771, %v770
      %v780 = vpack.c.b16 %v773, %v772
      %v781 = vpack.c.b16 %v775, %v774
      %v789 = vsel %vm356, %v736, 0
      %v792 = vsel %vm356, %v737, 0
      %v795 = vsel %vm356, %v738, 0
      %v798 = vsel %vm356, %v739, 0
      %v801 = vsel %vm356, %v740, 0
      %v804 = vsel %vm356, %v741, 0
      %v807 = vsel %vm356, %v742, 0
      %v810 = vsel %vm356, %v743, 0
      %v813 = vsel %vm356, %v744, 0
      %v816 = vsel %vm356, %v745, 0
      %v819 = vsel %vm356, %v746, 0
      %v822 = vsel %vm356, %v747, 0
      %v825 = vsel %vm356, %v748, 0
      %v828 = vsel %vm356, %v749, 0
      %v831 = vsel %vm356, %v750, 0
      %v834 = vsel %vm356, %v751, 0
      %836 = vmatpush.bf16.msra.mxu0 0
      %837 = vmatpush.bf16.msra.mxu0 0
      %838 = vmatpush.bf16.msra.mxu0 %v781
      %839 = vmatpush.bf16.msra.mxu0 %v780
      %840 = vmatpush.bf16.msra.mxu0 %v779
      %841 = vmatpush.bf16.msra.mxu0 %v778
      %842 = vmatpush.bf16.msra.mxu0 %v777
      %843 = vmatpush.bf16.msra.mxu0 %v776
      %844 = vmatmul.bf16.gmra.mxu0 %v789
      %v845 = vpop.f32.mrf.mxu0
      %v846 = vadd.f32 0.0, %v845
      %v847 = vpop.f32.mrf.mxu0
      %v848 = vadd.f32 0.0, %v847
      %849 = vmatmul.bf16.gmra.mxu0 %v792
      %v850 = vpop.f32.mrf.mxu0
      %v851 = vadd.f32 0.0, %v850
      %v852 = vpop.f32.mrf.mxu0
      %v853 = vadd.f32 0.0, %v852
      %854 = vmatmul.bf16.gmra.mxu0 %v795
      %v855 = vpop.f32.mrf.mxu0
      %v856 = vadd.f32 0.0, %v855
      %v857 = vpop.f32.mrf.mxu0
      %v858 = vadd.f32 0.0, %v857
      %859 = vmatmul.bf16.gmra.mxu0 %v798
      %v860 = vpop.f32.mrf.mxu0
      %v861 = vadd.f32 0.0, %v860
      %v862 = vpop.f32.mrf.mxu0
      %v863 = vadd.f32 0.0, %v862
      %864 = vmatmul.bf16.gmra.mxu0 %v801
      %v865 = vpop.f32.mrf.mxu0
      %v866 = vadd.f32 0.0, %v865
      %v867 = vpop.f32.mrf.mxu0
      %v868 = vadd.f32 0.0, %v867
      %869 = vmatmul.bf16.gmra.mxu0 %v804
      %v870 = vpop.f32.mrf.mxu0
      %v871 = vadd.f32 0.0, %v870
      %v872 = vpop.f32.mrf.mxu0
      %v873 = vadd.f32 0.0, %v872
      %874 = vmatmul.bf16.gmra.mxu0 %v807
      %v875 = vpop.f32.mrf.mxu0
      %v876 = vadd.f32 0.0, %v875
      %v877 = vpop.f32.mrf.mxu0
      %v878 = vadd.f32 0.0, %v877
      %879 = vmatmul.bf16.gmra.mxu0 %v810
      %v880 = vpop.f32.mrf.mxu0
      %v881 = vadd.f32 0.0, %v880
      %v882 = vpop.f32.mrf.mxu0
      %v883 = vadd.f32 0.0, %v882
      %884 = vmatmul.bf16.gmra.mxu0 %v813
      %v885 = vpop.f32.mrf.mxu0
      %v886 = vadd.f32 0.0, %v885
      %v887 = vpop.f32.mrf.mxu0
      %v888 = vadd.f32 0.0, %v887
      %889 = vmatmul.bf16.gmra.mxu0 %v816
      %v890 = vpop.f32.mrf.mxu0
      %v891 = vadd.f32 0.0, %v890
      %v892 = vpop.f32.mrf.mxu0
      %v893 = vadd.f32 0.0, %v892
      %894 = vmatmul.bf16.gmra.mxu0 %v819
      %v895 = vpop.f32.mrf.mxu0
      %v896 = vadd.f32 0.0, %v895
      %v897 = vpop.f32.mrf.mxu0
      %v898 = vadd.f32 0.0, %v897
      %899 = vmatmul.bf16.gmra.mxu0 %v822
      %v900 = vpop.f32.mrf.mxu0
      %v901 = vadd.f32 0.0, %v900
      %v902 = vpop.f32.mrf.mxu0
      %v903 = vadd.f32 0.0, %v902
      %904 = vmatmul.bf16.gmra.mxu0 %v825
      %v905 = vpop.f32.mrf.mxu0
      %v906 = vadd.f32 0.0, %v905
      %v907 = vpop.f32.mrf.mxu0
      %v908 = vadd.f32 0.0, %v907
      %909 = vmatmul.bf16.gmra.mxu0 %v828
      %v910 = vpop.f32.mrf.mxu0
      %v911 = vadd.f32 0.0, %v910
      %v912 = vpop.f32.mrf.mxu0
      %v913 = vadd.f32 0.0, %v912
      %914 = vmatmul.bf16.gmra.mxu0 %v831
      %v915 = vpop.f32.mrf.mxu0
      %v916 = vadd.f32 0.0, %v915
      %v917 = vpop.f32.mrf.mxu0
      %v918 = vadd.f32 0.0, %v917
      %919 = vmatmul.bf16.gmra.mxu0 %v834
      %v920 = vpop.f32.mrf.mxu0
      %v921 = vadd.f32 0.0, %v920
      %v922 = vpop.f32.mrf.mxu0
      %v923 = vadd.f32 0.0, %v922
      %924 = vdwg.mxu0
      %v925 = vadd.f32 %v548, %v846
      %v926 = vadd.f32 %v550, %v848
      %v927 = vadd.f32 %v553, %v851
      %v928 = vadd.f32 %v555, %v853
      %v929 = vadd.f32 %v558, %v856
      %v930 = vadd.f32 %v560, %v858
      %v931 = vadd.f32 %v563, %v861
      %v932 = vadd.f32 %v565, %v863
      %v933 = vadd.f32 %v568, %v866
      %v934 = vadd.f32 %v570, %v868
      %v935 = vadd.f32 %v573, %v871
      %v936 = vadd.f32 %v575, %v873
      %v937 = vadd.f32 %v578, %v876
      %v938 = vadd.f32 %v580, %v878
      %v939 = vadd.f32 %v583, %v881
      %v940 = vadd.f32 %v585, %v883
      %v941 = vadd.f32 %v588, %v886
      %v942 = vadd.f32 %v590, %v888
      %v943 = vadd.f32 %v593, %v891
      %v944 = vadd.f32 %v595, %v893
      %v945 = vadd.f32 %v598, %v896
      %v946 = vadd.f32 %v600, %v898
      %v947 = vadd.f32 %v603, %v901
      %v948 = vadd.f32 %v605, %v903
      %v949 = vadd.f32 %v608, %v906
      %v950 = vadd.f32 %v610, %v908
      %v951 = vadd.f32 %v613, %v911
      %v952 = vadd.f32 %v615, %v913
      %v953 = vadd.f32 %v618, %v916
      %v954 = vadd.f32 %v620, %v918
      %v955 = vadd.f32 %v623, %v921
      %v956 = vadd.f32 %v625, %v923
      %v957 = vpack.c.bf16 %v925, %v925
      %v958 = vpack.c.bf16 %v926, %v926
      %v959 = vpack.c.bf16 %v927, %v927
      %v960 = vpack.c.bf16 %v928, %v928
      %v961 = vpack.c.bf16 %v929, %v929
      %v962 = vpack.c.bf16 %v930, %v930
      %v963 = vpack.c.bf16 %v931, %v931
      %v964 = vpack.c.bf16 %v932, %v932
      %v965 = vpack.c.bf16 %v933, %v933
      %v966 = vpack.c.bf16 %v934, %v934
      %v967 = vpack.c.bf16 %v935, %v935
      %v968 = vpack.c.bf16 %v936, %v936
      %v969 = vpack.c.bf16 %v937, %v937
      %v970 = vpack.c.bf16 %v938, %v938
      %v971 = vpack.c.bf16 %v939, %v939
      %v972 = vpack.c.bf16 %v940, %v940
      %v973 = vpack.c.bf16 %v941, %v941
      %v974 = vpack.c.bf16 %v942, %v942
      %v975 = vpack.c.bf16 %v943, %v943
      %v976 = vpack.c.bf16 %v944, %v944
      %v977 = vpack.c.bf16 %v945, %v945
      %v978 = vpack.c.bf16 %v946, %v946
      %v979 = vpack.c.bf16 %v947, %v947
      %v980 = vpack.c.bf16 %v948, %v948
      %v981 = vpack.c.bf16 %v949, %v949
      %v982 = vpack.c.bf16 %v950, %v950
      %v983 = vpack.c.bf16 %v951, %v951
      %v984 = vpack.c.bf16 %v952, %v952
      %v985 = vpack.c.bf16 %v953, %v953
      %v986 = vpack.c.bf16 %v954, %v954
      %v987 = vpack.c.bf16 %v955, %v955
      %v988 = vpack.c.bf16 %v956, %v956
      %vm989 = vcmask 125952
      %990 = vst.msk [vmem:[%s176] sm:$0xf] %vm989, %v957
      %991 = vst.msk [vmem:[%s176 + $0x4] sm:$0xf] %vm989, %v958
      %992 = vst.msk [vmem:[%s176 + $0x8] sm:$0xf] %vm989, %v959
      %993 = vst.msk [vmem:[%s176 + $0xc] sm:$0xf] %vm989, %v960
      %994 = vst.msk [vmem:[%s176 + $0x10] sm:$0xf] %vm989, %v961
      %995 = vst.msk [vmem:[%s176 + $0x14] sm:$0xf] %vm989, %v962
      %996 = vst.msk [vmem:[%s176 + $0x18] sm:$0xf] %vm989, %v963
      %997 = vst.msk [vmem:[%s176 + $0x1c] sm:$0xf] %vm989, %v964
      %998 = vst.msk [vmem:[%s176 + $0x20] sm:$0xf] %vm989, %v965
      %999 = vst.msk [vmem:[%s176 + $0x24] sm:$0xf] %vm989, %v966
      %1000 = vst.msk [vmem:[%s176 + $0x28] sm:$0xf] %vm989, %v967
      %1001 = vst.msk [vmem:[%s176 + $0x2c] sm:$0xf] %vm989, %v968
      %1002 = vst.msk [vmem:[%s176 + $0x30] sm:$0xf] %vm989, %v969
      %1003 = vst.msk [vmem:[%s176 + $0x34] sm:$0xf] %vm989, %v970
      %1004 = vst.msk [vmem:[%s176 + $0x38] sm:$0xf] %vm989, %v971
      %1005 = vst.msk [vmem:[%s176 + $0x3c] sm:$0xf] %vm989, %v972
      %1006 = vst.msk [vmem:[%s176 + $0x40] sm:$0xf] %vm989, %v973
      %1007 = vst.msk [vmem:[%s176 + $0x44] sm:$0xf] %vm989, %v974
      %1008 = vst.msk [vmem:[%s176 + $0x48] sm:$0xf] %vm989, %v975
      %1009 = vst.msk [vmem:[%s176 + $0x4c] sm:$0xf] %vm989, %v976
      %1010 = vst.msk [vmem:[%s176 + $0x50] sm:$0xf] %vm989, %v977
      %1011 = vst.msk [vmem:[%s176 + $0x54] sm:$0xf] %vm989, %v978
      %1012 = vst.msk [vmem:[%s176 + $0x58] sm:$0xf] %vm989, %v979
      %1013 = vst.msk [vmem:[%s176 + $0x5c] sm:$0xf] %vm989, %v980
      %1014 = vst.msk [vmem:[%s176 + $0x60] sm:$0xf] %vm989, %v981
      %1015 = vst.msk [vmem:[%s176 + $0x64] sm:$0xf] %vm989, %v982
      %1016 = vst.msk [vmem:[%s176 + $0x68] sm:$0xf] %vm989, %v983
      %1017 = vst.msk [vmem:[%s176 + $0x6c] sm:$0xf] %vm989, %v984
      %1018 = vst.msk [vmem:[%s176 + $0x70] sm:$0xf] %vm989, %v985
      %1019 = vst.msk [vmem:[%s176 + $0x74] sm:$0xf] %vm989, %v986
      %1020 = vst.msk [vmem:[%s176 + $0x78] sm:$0xf] %vm989, %v987
      %1021 = vst.msk [vmem:[%s176 + $0x7c] sm:$0xf] %vm989, %v988
      %vm1022 = vcmask 130048
      %v1023 = vsel %vm1022, %v925, 0.0
      %v1024 = vsel %vm1022, %v926, 0.0
      %v1025 = vadd.f32 %v1023, %v1024
      %v1026 = vsel %vm1022, %v927, 0.0
      %v1027 = vadd.f32 %v1025, %v1026
      %v1028 = vsel %vm1022, %v928, 0.0
      %v1029 = vadd.f32 %v1027, %v1028
      %v1030 = vsel %vm1022, %v929, 0.0
      %v1031 = vadd.f32 %v1029, %v1030
      %v1032 = vsel %vm1022, %v930, 0.0
      %v1033 = vadd.f32 %v1031, %v1032
      %v1034 = vsel %vm1022, %v931, 0.0
      %v1035 = vadd.f32 %v1033, %v1034
      %v1036 = vsel %vm1022, %v932, 0.0
      %v1037 = vadd.f32 %v1035, %v1036
      %v1038 = vsel %vm1022, %v933, 0.0
      %v1039 = vadd.f32 %v1037, %v1038
      %v1040 = vsel %vm1022, %v934, 0.0
      %v1041 = vadd.f32 %v1039, %v1040
      %v1042 = vsel %vm1022, %v935, 0.0
      %v1043 = vadd.f32 %v1041, %v1042
      %v1044 = vsel %vm1022, %v936, 0.0
      %v1045 = vadd.f32 %v1043, %v1044
      %v1046 = vsel %vm1022, %v937, 0.0
      %v1047 = vadd.f32 %v1045, %v1046
      %v1048 = vsel %vm1022, %v938, 0.0
      %v1049 = vadd.f32 %v1047, %v1048
      %v1050 = vsel %vm1022, %v939, 0.0
      %v1051 = vadd.f32 %v1049, %v1050
      %v1052 = vsel %vm1022, %v940, 0.0
      %v1053 = vadd.f32 %v1051, %v1052
      %v1054 = vsel %vm1022, %v941, 0.0
      %v1055 = vadd.f32 %v1053, %v1054
      %v1056 = vsel %vm1022, %v942, 0.0
      %v1057 = vadd.f32 %v1055, %v1056
      %v1058 = vsel %vm1022, %v943, 0.0
      %v1059 = vadd.f32 %v1057, %v1058
      %v1060 = vsel %vm1022, %v944, 0.0
      %v1061 = vadd.f32 %v1059, %v1060
      %v1062 = vsel %vm1022, %v945, 0.0
      %v1063 = vadd.f32 %v1061, %v1062
      %v1064 = vsel %vm1022, %v946, 0.0
      %v1065 = vadd.f32 %v1063, %v1064
      %v1066 = vsel %vm1022, %v947, 0.0
      %v1067 = vadd.f32 %v1065, %v1066
      %v1068 = vsel %vm1022, %v948, 0.0
      %v1069 = vadd.f32 %v1067, %v1068
      %v1070 = vsel %vm1022, %v949, 0.0
      %v1071 = vadd.f32 %v1069, %v1070
      %v1072 = vsel %vm1022, %v950, 0.0
      %v1073 = vadd.f32 %v1071, %v1072
      %v1074 = vsel %vm1022, %v951, 0.0
      %v1075 = vadd.f32 %v1073, %v1074
      %v1076 = vsel %vm1022, %v952, 0.0
      %v1077 = vadd.f32 %v1075, %v1076
      %v1078 = vsel %vm1022, %v953, 0.0
      %v1079 = vadd.f32 %v1077, %v1078
      %v1080 = vsel %vm1022, %v954, 0.0
      %v1081 = vadd.f32 %v1079, %v1080
      %v1082 = vsel %vm1022, %v955, 0.0
      %v1083 = vadd.f32 %v1081, %v1082
      %v1084 = vsel %vm1022, %v956, 0.0
      %v1085 = vadd.f32 %v1083, %v1084
      %v1086 = vrot.slane %v1085, 4
      %v1087 = vadd.f32 %v1085, %v1086
      %v1088 = vrot.slane %v1087, 2
      %v1089 = vadd.f32 %v1087, %v1088
      %v1090 = vrot.slane %v1089, 1
      %v1091 = vadd.f32 %v1089, %v1090
      %v1092 = vrcp.pop 256.0
      %v1093 = vmul.f32 256.0, %v1092
      %v1094 = vsub.f32 1.0, %v1093
      %v1095 = vmul.f32 %v1092, %v1094
      %v1096 = vadd.f32 %v1092, %v1095
      %vm1097 = vweird.f32 %v1092
      %v1098 = vsel %vm1097, %v1092, %v1096
      %v1099 = vmul.f32 %v1091, %v1098
      %vm1100 = vcmask 122880
      %1101 = vst.msk [vmem:[%s179] sm:$0x1] %vm1100, %v1099
      %p1102 = scmp.lt.s32.totalorder %s15, 1
      %s1103 = scalar_select %p1102, %s15, 1
      %s1104 = smul.addr %s1103, 32
      %s1105 = smul.addr %s1104, 4
      %s1106 = scalar_lea.vmem %s2, %s1105
      %p1107 = scmp.lt.s32.totalorder %s15, 1
      %s1108 = scalar_select %p1107, %s15, 1
      %s1109 = scalar_lea.vmem %s3, %s1108
      // Predicated region
      $region29: #{model_forward.11} parent=27 // pred_check
        %p1110 = pneg %p80
      $region30: #{model_forward.11} parent=27 // pred_check_branch
        %1112 = sbr.rel (%p1110) target = $region32
      $region31: #{model_forward.11} parent=27 // pred_region
        _
      $region32: #{model_forward.11} parent=27 // pred_fallthru
        _
      // Predicated region
      $region33: #{model_forward.11} parent=27 // pred_check
        %p1113 = pneg %p106
      $region34: #{model_forward.11} parent=27 // pred_check_branch
        %1115 = sbr.rel (%p1113) target = $region36
      $region35: #{model_forward.11} parent=27 // pred_region
        _
      $region36: #{model_forward.11} parent=27 // pred_fallthru
        _
    $region28: #{model_forward.11} parent=5 // pred_fallthru
      _
    %p1116 = scmp.le.s32.totalorder 2, %s10
    // Predicated region
    $region37: #{model_forward.11} parent=5 // pred_check
      %p1117 = pneg %p1116
    $region38: #{model_forward.11} parent=5 // pred_check_branch
      %1119 = sbr.rel (%p1117) target = $region40
    $region39: #{model_forward.11} parent=5 // pred_region
      %s1120 = ssub.s32 %s10, 2
      // Predicated region
      $region41: #{model_forward.11} parent=39 // pred_check
        %p1121 = pneg %p86
      $region42: #{model_forward.11} parent=39 // pred_check_branch
        %1123 = sbr.rel (%p1121) target = $region44
      $region43: #{model_forward.11} parent=39 // pred_region
        %p1124 = scmp.lt.s32.totalorder %s16, 1
        %s1125 = scalar_select %p1124, %s16, 1
        %s1126 = smul.addr %s1125, 32
        %s1127 = smul.addr %s1126, 4
        %s1128 = scalar_lea.vmem %s2, %s1127
      $region44: #{model_forward.11} parent=39 // pred_fallthru
        _
      // Predicated region
      $region45: #{model_forward.11} parent=39 // pred_check
        %p1129 = pneg %p112
      $region46: #{model_forward.11} parent=39 // pred_check_branch
        %1131 = sbr.rel (%p1129) target = $region48
      $region47: #{model_forward.11} parent=39 // pred_region
        %p1132 = scmp.lt.s32.totalorder %s16, 1
        %s1133 = scalar_select %p1132, %s16, 1
        %s1134 = scalar_lea.vmem %s3, %s1133
      $region48: #{model_forward.11} parent=39 // pred_fallthru
        _
    $region40: #{model_forward.11} parent=5 // pred_fallthru
      _
  $region6: #{model_forward.11} parent=0 // loop_footer
    %s14 = sadd.s32 1, %s10
  $region7: #{model_forward.11} parent=0 // loop_footer_branch
    %9 = sbr.rel target = $region3
  $region8: #{model_forward.11} parent=0 // loop_exit
    _

// kernel: model_forward.12
$region0: #{model_forward.12}
  #allocation0 [shape = 'u32[]', space=smem, size = 0x4, offset = 0x4, fixed_abs, tag = 'smem constant byte address 0x4 - core index']
  #allocation1 [shape = 'u32[72,128]{1,0:T(1,128)}', space=vmem, size = 0x9000, scoped, tag = 'internal scratch']
  %s0 = inlined_call_operand.vmem [shape: bf16[2,256,32], index: 0, kind: input, shape index: {}]
  %s1 = inlined_call_operand.vmem [shape: bf16[2,256,16], index: 1, kind: input, shape index: {}]
  %s2 = inlined_call_operand.vmem [shape: bf16[2,1,32], index: 2, kind: input, shape index: {}]
  %s3 = inlined_call_operand.vmem [shape: bf16[2,1,16], index: 3, kind: input, shape index: {}]
  %s4 = inlined_call_operand.vmem [shape: bf16[2,1,32], index: 4, kind: input, shape index: {}]
  %s5 = inlined_call_operand.vmem [shape: bf16[2,1,16], index: 5, kind: input, shape index: {}]
  %s6 = inlined_call_operand.vmem [shape: bf16[32,32], index: 6, kind: input, shape index: {}]
  %s7 = inlined_call_operand.vmem [shape: bf16[16,32], index: 7, kind: input, shape index: {}]
  %s8 = inlined_call_operand.vmem [shape: f32[1,32], index: 8, kind: input, shape index: {}]
  %s9 = inlined_call_operand.vmem [shape: bf16[2,256,32], index: 9, kind: output, shape index: {}]
  %s10 = sld [smem:[#allocation0]]
  $region69: #{model_forward.12} parent=0
    _
  %s12 = ssub.s32 1, %s10
  %s13 = scalar_select 0, %s12, %s10
  loop: start=0, step=1, limit=4
  $region2: #{model_forward.12} parent=0 // loop_pre_header
    _
  $region3: #{model_forward.12} parent=0 // loop_header
    %s15 = sphi 0, %s19
    %p16 = scmp.ge.s32.totalorder %s15, 4
    %s22 = sphi 0, %s34
    %s23 = sphi 0, %s30
    %s24 = sphi 0, %s22
    %s25 = sphi 0, %s23
    %s26 = sphi 0, %s24
    %s27 = sphi 0, %s25
    %s39 = sphi 0, %s41
    %s42 = sphi 0, %s39
    %s43 = sphi 0, %s42
    %s59 = sphi 0, %s43
    %s67 = sphi 0, %s69
    %s70 = sphi 0, %s67
    %s71 = sphi 0, %s70
    %s87 = sphi 0, %s71
    %s93 = sphi 0, %s95
    %s96 = sphi 0, %s93
    %s97 = sphi 0, %s96
    %s113 = sphi 0, %s97
    %s119 = sphi 0, %s121
    %s122 = sphi 0, %s119
    %s123 = sphi 0, %s122
    %s139 = sphi 0, %s123
    %s145 = sphi 0, %s147
    %s148 = sphi 0, %s145
    %s149 = sphi 0, %s148
    %s165 = sphi 0, %s149
    %s171 = sphi 0, %s173
    %s174 = sphi 0, %s171
    %s175 = sphi 0, %s174
    %s191 = sphi 0, %s175
    %s195 = sphi 0, %s195
    %s197 = sphi 0, %s195
    %s198 = sphi 0, %s197
    %s212 = sphi 0, %s198
    %s216 = sphi 0, %s216
    %s218 = sphi 0, %s216
    %s219 = sphi 0, %s218
    %s233 = sphi 0, %s219
    %s237 = sphi 0, %s237
    %s239 = sphi 0, %s237
    %s240 = sphi 0, %s239
    %s254 = sphi 0, %s240
    %s262 = sphi 0, %s264
    %s265 = sphi 0, %s262
    %s266 = sphi 0, %s265
    %s282 = sphi 0, %s266
  $region4: #{model_forward.12} parent=0 // loop_header_branch
    %18 = sbr.rel (%p16) target = $region8
  $region5: #{model_forward.12} parent=0 // loop_body
    %s20 = ssub.s32 %s15, 1
    %s21 = ssub.s32 %s15, 2
    %s28 = sadd.s32 1, %s23
    %p29 = scmp.ge.s32.totalorder %s28, 1
    %s30 = scalar_select %p29, 0, %s28
    %s31 = sadd.s32 1, %s22
    %s32 = scalar_select %p29, %s31, %s22
    %p33 = scmp.ge.s32.totalorder %s32, 2
    %s34 = scalar_select %p33, 0, %s32
    %s35 = ssub.s32 %s22, %s34
    %s36 = ssub.s32 %s23, %s30
    %s37 = sor.u32 %s35, %s36
    %p38 = scmp.eq.s32.totalorder %s37, 0
    %s40 = sadd.s32 %s39, 1
    %s41 = scalar_select %p38, %s39, %s40
    %p44 = pneg %p38
    %p45 = scmp.eq.s32.totalorder %s15, 1
    %p46 = por %p44, %p45
    %p47 = scmp.ne.s32.totalorder %s39, %s42
    %p48 = scmp.eq.s32.totalorder %s15, 0
    %p49 = por %p47, %p48
    %p50 = scmp.ne.s32.totalorder %s39, %s42
    %p51 = scmp.eq.s32.totalorder %s20, 1
    %p52 = por %p50, %p51
    %p53 = scmp.ne.s32.totalorder %s42, %s43
    %p54 = scmp.eq.s32.totalorder %s20, 0
    %p55 = por %p53, %p54
    %p56 = scmp.ne.s32.totalorder %s42, %s43
    %p57 = scmp.eq.s32.totalorder %s21, 1
    %p58 = por %p56, %p57
    %p60 = scmp.ne.s32.totalorder %s43, %s59
    %p61 = scmp.eq.s32.totalorder %s21, 0
    %p62 = por %p60, %p61
    %s63 = ssub.s32 %s22, %s34
    %s64 = ssub.s32 %s23, %s30
    %s65 = sor.u32 %s63, %s64
    %p66 = scmp.eq.s32.totalorder %s65, 0
    %s68 = sadd.s32 %s67, 1
    %s69 = scalar_select %p66, %s67, %s68
    %p72 = pneg %p66
    %p73 = scmp.eq.s32.totalorder %s15, 1
    %p74 = por %p72, %p73
    %p75 = scmp.ne.s32.totalorder %s67, %s70
    %p76 = scmp.eq.s32.totalorder %s15, 0
    %p77 = por %p75, %p76
    %p78 = scmp.ne.s32.totalorder %s67, %s70
    %p79 = scmp.eq.s32.totalorder %s20, 1
    %p80 = por %p78, %p79
    %p81 = scmp.ne.s32.totalorder %s70, %s71
    %p82 = scmp.eq.s32.totalorder %s20, 0
    %p83 = por %p81, %p82
    %p84 = scmp.ne.s32.totalorder %s70, %s71
    %p85 = scmp.eq.s32.totalorder %s21, 1
    %p86 = por %p84, %p85
    %p88 = scmp.ne.s32.totalorder %s71, %s87
    %p89 = scmp.eq.s32.totalorder %s21, 0
    %p90 = por %p88, %p89
    %s91 = ssub.s32 %s22, %s34
    %p92 = scmp.eq.s32.totalorder %s91, 0
    %s94 = sadd.s32 %s93, 1
    %s95 = scalar_select %p92, %s93, %s94
    %p98 = pneg %p92
    %p99 = scmp.eq.s32.totalorder %s15, 1
    %p100 = por %p98, %p99
    %p101 = scmp.ne.s32.totalorder %s93, %s96
    %p102 = scmp.eq.s32.totalorder %s15, 0
    %p103 = por %p101, %p102
    %p104 = scmp.ne.s32.totalorder %s93, %s96
    %p105 = scmp.eq.s32.totalorder %s20, 1
    %p106 = por %p104, %p105
    %p107 = scmp.ne.s32.totalorder %s96, %s97
    %p108 = scmp.eq.s32.totalorder %s20, 0
    %p109 = por %p107, %p108
    %p110 = scmp.ne.s32.totalorder %s96, %s97
    %p111 = scmp.eq.s32.totalorder %s21, 1
    %p112 = por %p110, %p111
    %p114 = scmp.ne.s32.totalorder %s97, %s113
    %p115 = scmp.eq.s32.totalorder %s21, 0
    %p116 = por %p114, %p115
    %s117 = ssub.s32 %s22, %s34
    %p118 = scmp.eq.s32.totalorder %s117, 0
    %s120 = sadd.s32 %s119, 1
    %s121 = scalar_select %p118, %s119, %s120
    %p124 = pneg %p118
    %p125 = scmp.eq.s32.totalorder %s15, 1
    %p126 = por %p124, %p125
    %p127 = scmp.ne.s32.totalorder %s119, %s122
    %p128 = scmp.eq.s32.totalorder %s15, 0
    %p129 = por %p127, %p128
    %p130 = scmp.ne.s32.totalorder %s119, %s122
    %p131 = scmp.eq.s32.totalorder %s20, 1
    %p132 = por %p130, %p131
    %p133 = scmp.ne.s32.totalorder %s122, %s123
    %p134 = scmp.eq.s32.totalorder %s20, 0
    %p135 = por %p133, %p134
    %p136 = scmp.ne.s32.totalorder %s122, %s123
    %p137 = scmp.eq.s32.totalorder %s21, 1
    %p138 = por %p136, %p137
    %p140 = scmp.ne.s32.totalorder %s123, %s139
    %p141 = scmp.eq.s32.totalorder %s21, 0
    %p142 = por %p140, %p141
    %s143 = ssub.s32 %s22, %s34
    %p144 = scmp.eq.s32.totalorder %s143, 0
    %s146 = sadd.s32 %s145, 1
    %s147 = scalar_select %p144, %s145, %s146
    %p150 = pneg %p144
    %p151 = scmp.eq.s32.totalorder %s15, 1
    %p152 = por %p150, %p151
    %p153 = scmp.ne.s32.totalorder %s145, %s148
    %p154 = scmp.eq.s32.totalorder %s15, 0
    %p155 = por %p153, %p154
    %p156 = scmp.ne.s32.totalorder %s145, %s148
    %p157 = scmp.eq.s32.totalorder %s20, 1
    %p158 = por %p156, %p157
    %p159 = scmp.ne.s32.totalorder %s148, %s149
    %p160 = scmp.eq.s32.totalorder %s20, 0
    %p161 = por %p159, %p160
    %p162 = scmp.ne.s32.totalorder %s148, %s149
    %p163 = scmp.eq.s32.totalorder %s21, 1
    %p164 = por %p162, %p163
    %p166 = scmp.ne.s32.totalorder %s149, %s165
    %p167 = scmp.eq.s32.totalorder %s21, 0
    %p168 = por %p166, %p167
    %s169 = ssub.s32 %s22, %s34
    %p170 = scmp.eq.s32.totalorder %s169, 0
    %s172 = sadd.s32 %s171, 1
    %s173 = scalar_select %p170, %s171, %s172
    %p176 = pneg %p170
    %p177 = scmp.eq.s32.totalorder %s15, 1
    %p178 = por %p176, %p177
    %p179 = scmp.ne.s32.totalorder %s171, %s174
    %p180 = scmp.eq.s32.totalorder %s15, 0
    %p181 = por %p179, %p180
    %p182 = scmp.ne.s32.totalorder %s171, %s174
    %p183 = scmp.eq.s32.totalorder %s20, 1
    %p184 = por %p182, %p183
    %p185 = scmp.ne.s32.totalorder %s174, %s175
    %p186 = scmp.eq.s32.totalorder %s20, 0
    %p187 = por %p185, %p186
    %p188 = scmp.ne.s32.totalorder %s174, %s175
    %p189 = scmp.eq.s32.totalorder %s21, 1
    %p190 = por %p188, %p189
    %p192 = scmp.ne.s32.totalorder %s175, %s191
    %p193 = scmp.eq.s32.totalorder %s21, 0
    %p194 = por %p192, %p193
    %s196 = sadd.s32 %s195, 1
    %p199 = scmp.eq.s32.totalorder %s15, 1
    %p200 = scmp.ne.s32.totalorder %s195, %s197
    %p201 = scmp.eq.s32.totalorder %s15, 0
    %p202 = por %p200, %p201
    %p203 = scmp.ne.s32.totalorder %s195, %s197
    %p204 = scmp.eq.s32.totalorder %s20, 1
    %p205 = por %p203, %p204
    %p206 = scmp.ne.s32.totalorder %s197, %s198
    %p207 = scmp.eq.s32.totalorder %s20, 0
    %p208 = por %p206, %p207
    %p209 = scmp.ne.s32.totalorder %s197, %s198
    %p210 = scmp.eq.s32.totalorder %s21, 1
    %p211 = por %p209, %p210
    %p213 = scmp.ne.s32.totalorder %s198, %s212
    %p214 = scmp.eq.s32.totalorder %s21, 0
    %p215 = por %p213, %p214
    %s217 = sadd.s32 %s216, 1
    %p220 = scmp.eq.s32.totalorder %s15, 1
    %p221 = scmp.ne.s32.totalorder %s216, %s218
    %p222 = scmp.eq.s32.totalorder %s15, 0
    %p223 = por %p221, %p222
    %p224 = scmp.ne.s32.totalorder %s216, %s218
    %p225 = scmp.eq.s32.totalorder %s20, 1
    %p226 = por %p224, %p225
    %p227 = scmp.ne.s32.totalorder %s218, %s219
    %p228 = scmp.eq.s32.totalorder %s20, 0
    %p229 = por %p227, %p228
    %p230 = scmp.ne.s32.totalorder %s218, %s219
    %p231 = scmp.eq.s32.totalorder %s21, 1
    %p232 = por %p230, %p231
    %p234 = scmp.ne.s32.totalorder %s219, %s233
    %p235 = scmp.eq.s32.totalorder %s21, 0
    %p236 = por %p234, %p235
    %s238 = sadd.s32 %s237, 1
    %p241 = scmp.eq.s32.totalorder %s15, 1
    %p242 = scmp.ne.s32.totalorder %s237, %s239
    %p243 = scmp.eq.s32.totalorder %s15, 0
    %p244 = por %p242, %p243
    %p245 = scmp.ne.s32.totalorder %s237, %s239
    %p246 = scmp.eq.s32.totalorder %s20, 1
    %p247 = por %p245, %p246
    %p248 = scmp.ne.s32.totalorder %s239, %s240
    %p249 = scmp.eq.s32.totalorder %s20, 0
    %p250 = por %p248, %p249
    %p251 = scmp.ne.s32.totalorder %s239, %s240
    %p252 = scmp.eq.s32.totalorder %s21, 1
    %p253 = por %p251, %p252
    %p255 = scmp.ne.s32.totalorder %s240, %s254
    %p256 = scmp.eq.s32.totalorder %s21, 0
    %p257 = por %p255, %p256
    %s258 = ssub.s32 %s22, %s34
    %s259 = ssub.s32 %s23, %s30
    %s260 = sor.u32 %s258, %s259
    %p261 = scmp.eq.s32.totalorder %s260, 0
    %s263 = sadd.s32 %s262, 1
    %s264 = scalar_select %p261, %s262, %s263
    %p267 = pneg %p261
    %p268 = scmp.eq.s32.totalorder %s15, 1
    %p269 = por %p267, %p268
    %p270 = scmp.ne.s32.totalorder %s262, %s265
    %p271 = scmp.eq.s32.totalorder %s15, 0
    %p272 = por %p270, %p271
    %p273 = scmp.ne.s32.totalorder %s262, %s265
    %p274 = scmp.eq.s32.totalorder %s20, 1
    %p275 = por %p273, %p274
    %p276 = scmp.ne.s32.totalorder %s265, %s266
    %p277 = scmp.eq.s32.totalorder %s20, 0
    %p278 = por %p276, %p277
    %p279 = scmp.ne.s32.totalorder %s265, %s266
    %p280 = scmp.eq.s32.totalorder %s21, 1
    %p281 = por %p279, %p280
    %p283 = scmp.ne.s32.totalorder %s266, %s282
    %p284 = scmp.eq.s32.totalorder %s21, 0
    %p285 = por %p283, %p284
    %p286 = scmp.le.s32.totalorder 1, %s15
    %p287 = scmp.lt.s32.totalorder %s15, 3
    %p288 = pnand %p286, %p287
    %p289 = pneg %p288
    // Predicated region
    $region9: #{model_forward.12} parent=5 // pred_check
      _
    $region10: #{model_forward.12} parent=5 // pred_check_branch
      %291 = sbr.rel (%p288) target = $region12
    $region11: #{model_forward.12} parent=5 // pred_region
      %s292 = ssub.s32 %s15, 1
      // Predicated region
      $region13: #{model_forward.12} parent=11 // pred_check
        %p293 = pneg %p208
      $region14: #{model_forward.12} parent=11 // pred_check_branch
        %295 = sbr.rel (%p293) target = $region16
      $region15: #{model_forward.12} parent=11 // pred_region
        _
      $region16: #{model_forward.12} parent=11 // pred_fallthru
        _
      // Predicated region
      $region17: #{model_forward.12} parent=11 // pred_check
        %p296 = pneg %p229
      $region18: #{model_forward.12} parent=11 // pred_check_branch
        %298 = sbr.rel (%p296) target = $region20
      $region19: #{model_forward.12} parent=11 // pred_region
        _
      $region20: #{model_forward.12} parent=11 // pred_fallthru
        _
      // Predicated region
      $region21: #{model_forward.12} parent=11 // pred_check
        %p299 = pneg %p250
      $region22: #{model_forward.12} parent=11 // pred_check_branch
        %301 = sbr.rel (%p299) target = $region24
      $region23: #{model_forward.12} parent=11 // pred_region
        _
      $region24: #{model_forward.12} parent=11 // pred_fallthru
        _
    $region12: #{model_forward.12} parent=5 // pred_fallthru
      _
    %p302 = scmp.lt.s32.totalorder %s15, 2
    // Predicated region
    $region25: #{model_forward.12} parent=5 // pred_check
      %p303 = pneg %p302
    $region26: #{model_forward.12} parent=5 // pred_check_branch
      %305 = sbr.rel (%p303) target = $region28
    $region27: #{model_forward.12} parent=5 // pred_region
      // Predicated region
      $region29: #{model_forward.12} parent=27 // pred_check
        %p306 = pneg %p49
      $region30: #{model_forward.12} parent=27 // pred_check_branch
        %308 = sbr.rel (%p306) target = $region32
      $region31: #{model_forward.12} parent=27 // pred_region
        %s309 = smul.u32 32, %s23
        %p310 = scmp.lt.s32.totalorder %s22, 1
        %s311 = scalar_select %p310, %s22, 1
        %p312 = scmp.lt.s32.totalorder %s309, 31
        %s313 = scalar_select %p312, %s309, 31
        %s314 = smul.addr %s311, 32
        %s315 = sadd.s32 %s313, %s314
        %s316 = smul.addr %s315, 4
        %s317 = scalar_lea.vmem %s0, %s316
        %s318 = smul.u32 32, %s23
      $region32: #{model_forward.12} parent=27 // pred_fallthru
        _
      // Predicated region
      $region33: #{model_forward.12} parent=27 // pred_check
        %p319 = pneg %p77
      $region34: #{model_forward.12} parent=27 // pred_check_branch
        %321 = sbr.rel (%p319) target = $region36
      $region35: #{model_forward.12} parent=27 // pred_region
        %s322 = smul.u32 32, %s23
        %p323 = scmp.lt.s32.totalorder %s22, 1
        %s324 = scalar_select %p323, %s22, 1
        %p325 = scmp.lt.s32.totalorder %s322, 31
        %s326 = scalar_select %p325, %s322, 31
        %s327 = smul.addr %s324, 32
        %s328 = sadd.s32 %s326, %s327
        %s329 = smul.addr %s328, 4
        %s330 = scalar_lea.vmem %s1, %s329
        %s331 = smul.u32 32, %s23
      $region36: #{model_forward.12} parent=27 // pred_fallthru
        _
      // Predicated region
      $region37: #{model_forward.12} parent=27 // pred_check
        %p332 = pneg %p103
      $region38: #{model_forward.12} parent=27 // pred_check_branch
        %334 = sbr.rel (%p332) target = $region40
      $region39: #{model_forward.12} parent=27 // pred_region
        %p335 = scmp.lt.s32.totalorder %s22, 1
        %s336 = scalar_select %p335, %s22, 1
        %s337 = scalar_lea.vmem %s2, %s336
      $region40: #{model_forward.12} parent=27 // pred_fallthru
        _
      // Predicated region
      $region41: #{model_forward.12} parent=27 // pred_check
        %p338 = pneg %p129
      $region42: #{model_forward.12} parent=27 // pred_check_branch
        %340 = sbr.rel (%p338) target = $region44
      $region43: #{model_forward.12} parent=27 // pred_region
        %p341 = scmp.lt.s32.totalorder %s22, 1
        %s342 = scalar_select %p341, %s22, 1
        %s343 = scalar_lea.vmem %s3, %s342
      $region44: #{model_forward.12} parent=27 // pred_fallthru
        _
      // Predicated region
      $region45: #{model_forward.12} parent=27 // pred_check
        %p344 = pneg %p155
      $region46: #{model_forward.12} parent=27 // pred_check_branch
        %346 = sbr.rel (%p344) target = $region48
      $region47: #{model_forward.12} parent=27 // pred_region
        %p347 = scmp.lt.s32.totalorder %s22, 1
        %s348 = scalar_select %p347, %s22, 1
        %s349 = scalar_lea.vmem %s4, %s348
      $region48: #{model_forward.12} parent=27 // pred_fallthru
        _
      // Predicated region
      $region49: #{model_forward.12} parent=27 // pred_check
        %p350 = pneg %p181
      $region50: #{model_forward.12} parent=27 // pred_check_branch
        %352 = sbr.rel (%p350) target = $region52
      $region51: #{model_forward.12} parent=27 // pred_region
        %p353 = scmp.lt.s32.totalorder %s22, 1
        %s354 = scalar_select %p353, %s22, 1
        %s355 = scalar_lea.vmem %s5, %s354
      $region52: #{model_forward.12} parent=27 // pred_fallthru
        _
    $region28: #{model_forward.12} parent=5 // pred_fallthru
      _
    %p356 = scmp.le.s32.totalorder 1, %s15
    %p357 = scmp.lt.s32.totalorder %s15, 3
    %p358 = pnand %p356, %p357
    %p359 = pneg %p358
    // Predicated region
    $region53: #{model_forward.12} parent=5 // pred_check
      _
    $region54: #{model_forward.12} parent=5 // pred_check_branch
      %361 = sbr.rel (%p358) target = $region56
    $region55: #{model_forward.12} parent=5 // pred_region
      %s362 = ssub.s32 %s15, 1
      %s363 = smul.u32 32, %s25
      %p364 = scmp.lt.s32.totalorder %s24, 1
      %s365 = scalar_select %p364, %s24, 1
      %p366 = scmp.lt.s32.totalorder %s363, 31
      %s367 = scalar_select %p366, %s363, 31
      %s368 = smul.addr %s365, 32
      %s369 = sadd.s32 %s367, %s368
      %s370 = smul.addr %s369, 4
      %s371 = scalar_lea.vmem %s0, %s370
      %p372 = pneg %p55
      %p373 = pneg %p52
      %s374 = smul.u32 32, %s25
      %p375 = scmp.lt.s32.totalorder %s24, 1
      %s376 = scalar_select %p375, %s24, 1
      %p377 = scmp.lt.s32.totalorder %s374, 31
      %s378 = scalar_select %p377, %s374, 31
      %s379 = smul.addr %s376, 32
      %s380 = sadd.s32 %s378, %s379
      %s381 = smul.addr %s380, 4
      %s382 = scalar_lea.vmem %s1, %s381
      %p383 = pneg %p83
      %p384 = pneg %p80
      %p385 = scmp.lt.s32.totalorder %s24, 1
      %s386 = scalar_select %p385, %s24, 1
      %s387 = scalar_lea.vmem %s2, %s386
      %p388 = pneg %p109
      %p389 = pneg %p106
      %p390 = scmp.lt.s32.totalorder %s24, 1
      %s391 = scalar_select %p390, %s24, 1
      %s392 = scalar_lea.vmem %s3, %s391
      %p393 = pneg %p135
      %p394 = pneg %p132
      %p395 = scmp.lt.s32.totalorder %s24, 1
      %s396 = scalar_select %p395, %s24, 1
      %s397 = scalar_lea.vmem %s4, %s396
      %p398 = pneg %p161
      %p399 = pneg %p158
      %p400 = scmp.lt.s32.totalorder %s24, 1
      %s401 = scalar_select %p400, %s24, 1
      %s402 = scalar_lea.vmem %s5, %s401
      %p403 = pneg %p187
      %p404 = pneg %p184
      %p405 = pneg %p208
      %p406 = pneg %p205
      %p407 = pneg %p229
      %p408 = pneg %p226
      %p409 = pneg %p250
      %p410 = pneg %p247
      %p411 = pneg %p278
      %p412 = pneg %p275
      %s413 = smul.u32 32, %s25
      %p414 = scmp.lt.s32.totalorder %s24, 1
      %s415 = scalar_select %p414, %s24, 1
      %p416 = scmp.lt.s32.totalorder %s413, 31
      %s417 = scalar_select %p416, %s413, 31
      %s418 = smul.addr %s415, 32
      %s419 = sadd.s32 %s417, %s418
      %s420 = smul.addr %s419, 4
      %s421 = scalar_lea.vmem %s9, %s420
      %s422 = smul.u32 32, %s25
      %p423 = scmp.lt.s32.totalorder %s24, 1
      %s424 = scalar_select %p423, %s24, 1
      %p425 = scmp.lt.s32.totalorder %s422, 31
      %s426 = scalar_select %p425, %s422, 31
      %s427 = smul.addr %s424, 32
      %s428 = sadd.s32 %s426, %s427
      %s429 = smul.addr %s428, 4
      %s430 = scalar_lea.vmem %s0, %s429
      %s431 = smul.u32 32, %s25
      %s432 = smul.u32 32, %s25
      %p433 = scmp.lt.s32.totalorder %s24, 1
      %s434 = scalar_select %p433, %s24, 1
      %p435 = scmp.lt.s32.totalorder %s432, 31
      %s436 = scalar_select %p435, %s432, 31
      %s437 = smul.addr %s434, 32
      %s438 = sadd.s32 %s436, %s437
      %s439 = smul.addr %s438, 4
      %s440 = scalar_lea.vmem %s1, %s439
      %s441 = smul.u32 32, %s25
      %p442 = scmp.lt.s32.totalorder %s24, 1
      %s443 = scalar_select %p442, %s24, 1
      %s444 = scalar_lea.vmem %s2, %s443
      %p445 = scmp.lt.s32.totalorder %s24, 1
      %s446 = scalar_select %p445, %s24, 1
      %s447 = scalar_lea.vmem %s3, %s446
      %p448 = scmp.lt.s32.totalorder %s24, 1
      %s449 = scalar_select %p448, %s24, 1
      %s450 = scalar_lea.vmem %s4, %s449
      %p451 = scmp.lt.s32.totalorder %s24, 1
      %s452 = scalar_select %p451, %s24, 1
      %s453 = scalar_lea.vmem %s5, %s452
      %s454 = smul.u32 32, %s25
      %p455 = scmp.lt.s32.totalorder %s24, 1
      %s456 = scalar_select %p455, %s24, 1
      %p457 = scmp.lt.s32.totalorder %s454, 31
      %s458 = scalar_select %p457, %s454, 31
      %s459 = smul.addr %s456, 32
      %s460 = sadd.s32 %s458, %s459
      %s461 = smul.addr %s460, 4
      %s462 = scalar_lea.vmem %s9, %s461
      %s463 = smul.u32 32, %s25
      %v465 = vld [vmem:[%s430] sm:$0xf]
      %v466 = vld [vmem:[%s430 + $0x4] sm:$0xf]
      %v467 = vld [vmem:[%s430 + $0x8] sm:$0xf]
      %v468 = vld [vmem:[%s430 + $0xc] sm:$0xf]
      %v469 = vld [vmem:[%s430 + $0x10] sm:$0xf]
      %v470 = vld [vmem:[%s430 + $0x14] sm:$0xf]
      %v471 = vld [vmem:[%s430 + $0x18] sm:$0xf]
      %v472 = vld [vmem:[%s430 + $0x1c] sm:$0xf]
      %v473 = vld [vmem:[%s430 + $0x20] sm:$0xf]
      %v474 = vld [vmem:[%s430 + $0x24] sm:$0xf]
      %v475 = vld [vmem:[%s430 + $0x28] sm:$0xf]
      %v476 = vld [vmem:[%s430 + $0x2c] sm:$0xf]
      %v477 = vld [vmem:[%s430 + $0x30] sm:$0xf]
      %v478 = vld [vmem:[%s430 + $0x34] sm:$0xf]
      %v479 = vld [vmem:[%s430 + $0x38] sm:$0xf]
      %v480 = vld [vmem:[%s430 + $0x3c] sm:$0xf]
      %v481 = vld [vmem:[%s430 + $0x40] sm:$0xf]
      %v482 = vld [vmem:[%s430 + $0x44] sm:$0xf]
      %v483 = vld [vmem:[%s430 + $0x48] sm:$0xf]
      %v484 = vld [vmem:[%s430 + $0x4c] sm:$0xf]
      %v485 = vld [vmem:[%s430 + $0x50] sm:$0xf]
      %v486 = vld [vmem:[%s430 + $0x54] sm:$0xf]
      %v487 = vld [vmem:[%s430 + $0x58] sm:$0xf]
      %v488 = vld [vmem:[%s430 + $0x5c] sm:$0xf]
      %v489 = vld [vmem:[%s430 + $0x60] sm:$0xf]
      %v490 = vld [vmem:[%s430 + $0x64] sm:$0xf]
      %v491 = vld [vmem:[%s430 + $0x68] sm:$0xf]
      %v492 = vld [vmem:[%s430 + $0x6c] sm:$0xf]
      %v493 = vld [vmem:[%s430 + $0x70] sm:$0xf]
      %v494 = vld [vmem:[%s430 + $0x74] sm:$0xf]
      %v495 = vld [vmem:[%s430 + $0x78] sm:$0xf]
      %v496 = vld [vmem:[%s430 + $0x7c] sm:$0xf]
      %v497 = vld [vmem:[%s444] sm:$0x1]
      %v499 = vpack.i.b16 %v497, %v497
      %v501 = vperm.slane %v499, 0
      %v502 = vunpack.c.l.bf16 %v465
      %v503 = vunpack.c.l.bf16 %v466
      %v504 = vunpack.c.l.bf16 %v467
      %v505 = vunpack.c.l.bf16 %v468
      %v506 = vunpack.c.l.bf16 %v469
      %v507 = vunpack.c.l.bf16 %v470
      %v508 = vunpack.c.l.bf16 %v471
      %v509 = vunpack.c.l.bf16 %v472
      %v510 = vunpack.c.l.bf16 %v473
      %v511 = vunpack.c.l.bf16 %v474
      %v512 = vunpack.c.l.bf16 %v475
      %v513 = vunpack.c.l.bf16 %v476
      %v514 = vunpack.c.l.bf16 %v477
      %v515 = vunpack.c.l.bf16 %v478
      %v516 = vunpack.c.l.bf16 %v479
      %v517 = vunpack.c.l.bf16 %v480
      %v518 = vunpack.c.l.bf16 %v481
      %v519 = vunpack.c.l.bf16 %v482
      %v520 = vunpack.c.l.bf16 %v483
      %v521 = vunpack.c.l.bf16 %v484
      %v522 = vunpack.c.l.bf16 %v485
      %v523 = vunpack.c.l.bf16 %v486
      %v524 = vunpack.c.l.bf16 %v487
      %v525 = vunpack.c.l.bf16 %v488
      %v526 = vunpack.c.l.bf16 %v489
      %v527 = vunpack.c.l.bf16 %v490
      %v528 = vunpack.c.l.bf16 %v491
      %v529 = vunpack.c.l.bf16 %v492
      %v530 = vunpack.c.l.bf16 %v493
      %v531 = vunpack.c.l.bf16 %v494
      %v532 = vunpack.c.l.bf16 %v495
      %v533 = vunpack.c.l.bf16 %v496
      %v534 = vunpack.c.l.bf16 %v501
      %v535 = vmul.f32 %v502, %v534
      %v536 = vmul.f32 %v503, %v534
      %v537 = vmul.f32 %v504, %v534
      %v538 = vmul.f32 %v505, %v534
      %v539 = vmul.f32 %v506, %v534
      %v540 = vmul.f32 %v507, %v534
      %v541 = vmul.f32 %v508, %v534
      %v542 = vmul.f32 %v509, %v534
      %v543 = vmul.f32 %v510, %v534
      %v544 = vmul.f32 %v511, %v534
      %v545 = vmul.f32 %v512, %v534
      %v546 = vmul.f32 %v513, %v534
      %v547 = vmul.f32 %v514, %v534
      %v548 = vmul.f32 %v515, %v534
      %v549 = vmul.f32 %v516, %v534
      %v550 = vmul.f32 %v517, %v534
      %v551 = vmul.f32 %v518, %v534
      %v552 = vmul.f32 %v519, %v534
      %v553 = vmul.f32 %v520, %v534
      %v554 = vmul.f32 %v521, %v534
      %v555 = vmul.f32 %v522, %v534
      %v556 = vmul.f32 %v523, %v534
      %v557 = vmul.f32 %v524, %v534
      %v558 = vmul.f32 %v525, %v534
      %v559 = vmul.f32 %v526, %v534
      %v560 = vmul.f32 %v527, %v534
      %v561 = vmul.f32 %v528, %v534
      %v562 = vmul.f32 %v529, %v534
      %v563 = vmul.f32 %v530, %v534
      %v564 = vmul.f32 %v531, %v534
      %v565 = vmul.f32 %v532, %v534
      %v566 = vmul.f32 %v533, %v534
      %v567 = vpack.c.bf16 %v535, %v535
      %v568 = vpack.c.bf16 %v536, %v536
      %v569 = vpack.c.bf16 %v537, %v537
      %v570 = vpack.c.bf16 %v538, %v538
      %v571 = vpack.c.bf16 %v539, %v539
      %v572 = vpack.c.bf16 %v540, %v540
      %v573 = vpack.c.bf16 %v541, %v541
      %v574 = vpack.c.bf16 %v542, %v542
      %v575 = vpack.c.bf16 %v543, %v543
      %v576 = vpack.c.bf16 %v544, %v544
      %v577 = vpack.c.bf16 %v545, %v545
      %v578 = vpack.c.bf16 %v546, %v546
      %v579 = vpack.c.bf16 %v547, %v547
      %v580 = vpack.c.bf16 %v548, %v548
      %v581 = vpack.c.bf16 %v549, %v549
      %v582 = vpack.c.bf16 %v550, %v550
      %v583 = vpack.c.bf16 %v551, %v551
      %v584 = vpack.c.bf16 %v552, %v552
      %v585 = vpack.c.bf16 %v553, %v553
      %v586 = vpack.c.bf16 %v554, %v554
      %v587 = vpack.c.bf16 %v555, %v555
      %v588 = vpack.c.bf16 %v556, %v556
      %v589 = vpack.c.bf16 %v557, %v557
      %v590 = vpack.c.bf16 %v558, %v558
      %v591 = vpack.c.bf16 %v559, %v559
      %v592 = vpack.c.bf16 %v560, %v560
      %v593 = vpack.c.bf16 %v561, %v561
      %v594 = vpack.c.bf16 %v562, %v562
      %v595 = vpack.c.bf16 %v563, %v563
      %v596 = vpack.c.bf16 %v564, %v564
      %v597 = vpack.c.bf16 %v565, %v565
      %v598 = vpack.c.bf16 %v566, %v566
      %v599 = vld [vmem:[%s450] sm:$0x1]
      %v601 = vpack.i.b16 %v599, %v599
      %v603 = vperm.slane %v601, 0
      %v604 = vunpack.c.l.bf16 %v567
      %v605 = vunpack.c.l.bf16 %v568
      %v606 = vunpack.c.l.bf16 %v569
      %v607 = vunpack.c.l.bf16 %v570
      %v608 = vunpack.c.l.bf16 %v571
      %v609 = vunpack.c.l.bf16 %v572
      %v610 = vunpack.c.l.bf16 %v573
      %v611 = vunpack.c.l.bf16 %v574
      %v612 = vunpack.c.l.bf16 %v575
      %v613 = vunpack.c.l.bf16 %v576
      %v614 = vunpack.c.l.bf16 %v577
      %v615 = vunpack.c.l.bf16 %v578
      %v616 = vunpack.c.l.bf16 %v579
      %v617 = vunpack.c.l.bf16 %v580
      %v618 = vunpack.c.l.bf16 %v581
      %v619 = vunpack.c.l.bf16 %v582
      %v620 = vunpack.c.l.bf16 %v583
      %v621 = vunpack.c.l.bf16 %v584
      %v622 = vunpack.c.l.bf16 %v585
      %v623 = vunpack.c.l.bf16 %v586
      %v624 = vunpack.c.l.bf16 %v587
      %v625 = vunpack.c.l.bf16 %v588
      %v626 = vunpack.c.l.bf16 %v589
      %v627 = vunpack.c.l.bf16 %v590
      %v628 = vunpack.c.l.bf16 %v591
      %v629 = vunpack.c.l.bf16 %v592
      %v630 = vunpack.c.l.bf16 %v593
      %v631 = vunpack.c.l.bf16 %v594
      %v632 = vunpack.c.l.bf16 %v595
      %v633 = vunpack.c.l.bf16 %v596
      %v634 = vunpack.c.l.bf16 %v597
      %v635 = vunpack.c.l.bf16 %v598
      %v636 = vunpack.c.l.bf16 %v603
      %v637 = vadd.f32 %v604, %v636
      %v638 = vadd.f32 %v605, %v636
      %v639 = vadd.f32 %v606, %v636
      %v640 = vadd.f32 %v607, %v636
      %v641 = vadd.f32 %v608, %v636
      %v642 = vadd.f32 %v609, %v636
      %v643 = vadd.f32 %v610, %v636
      %v644 = vadd.f32 %v611, %v636
      %v645 = vadd.f32 %v612, %v636
      %v646 = vadd.f32 %v613, %v636
      %v647 = vadd.f32 %v614, %v636
      %v648 = vadd.f32 %v615, %v636
      %v649 = vadd.f32 %v616, %v636
      %v650 = vadd.f32 %v617, %v636
      %v651 = vadd.f32 %v618, %v636
      %v652 = vadd.f32 %v619, %v636
      %v653 = vadd.f32 %v620, %v636
      %v654 = vadd.f32 %v621, %v636
      %v655 = vadd.f32 %v622, %v636
      %v656 = vadd.f32 %v623, %v636
      %v657 = vadd.f32 %v624, %v636
      %v658 = vadd.f32 %v625, %v636
      %v659 = vadd.f32 %v626, %v636
      %v660 = vadd.f32 %v627, %v636
      %v661 = vadd.f32 %v628, %v636
      %v662 = vadd.f32 %v629, %v636
      %v663 = vadd.f32 %v630, %v636
      %v664 = vadd.f32 %v631, %v636
      %v665 = vadd.f32 %v632, %v636
      %v666 = vadd.f32 %v633, %v636
      %v667 = vadd.f32 %v634, %v636
      %v668 = vadd.f32 %v635, %v636
      %v669 = vpack.c.bf16 %v637, %v637
      %v670 = vpack.c.bf16 %v638, %v638
      %v671 = vpack.c.bf16 %v639, %v639
      %v672 = vpack.c.bf16 %v640, %v640
      %v673 = vpack.c.bf16 %v641, %v641
      %v674 = vpack.c.bf16 %v642, %v642
      %v675 = vpack.c.bf16 %v643, %v643
      %v676 = vpack.c.bf16 %v644, %v644
      %v677 = vpack.c.bf16 %v645, %v645
      %v678 = vpack.c.bf16 %v646, %v646
      %v679 = vpack.c.bf16 %v647, %v647
      %v680 = vpack.c.bf16 %v648, %v648
      %v681 = vpack.c.bf16 %v649, %v649
      %v682 = vpack.c.bf16 %v650, %v650
      %v683 = vpack.c.bf16 %v651, %v651
      %v684 = vpack.c.bf16 %v652, %v652
      %v685 = vpack.c.bf16 %v653, %v653
      %v686 = vpack.c.bf16 %v654, %v654
      %v687 = vpack.c.bf16 %v655, %v655
      %v688 = vpack.c.bf16 %v656, %v656
      %v689 = vpack.c.bf16 %v657, %v657
      %v690 = vpack.c.bf16 %v658, %v658
      %v691 = vpack.c.bf16 %v659, %v659
      %v692 = vpack.c.bf16 %v660, %v660
      %v693 = vpack.c.bf16 %v661, %v661
      %v694 = vpack.c.bf16 %v662, %v662
      %v695 = vpack.c.bf16 %v663, %v663
      %v696 = vpack.c.bf16 %v664, %v664
      %v697 = vpack.c.bf16 %v665, %v665
      %v698 = vpack.c.bf16 %v666, %v666
      %v699 = vpack.c.bf16 %v667, %v667
      %v700 = vpack.c.bf16 %v668, %v668
      %v701 = vunpack.c.l.bf16 %v669
      %v702 = vunpack.c.l.bf16 %v670
      %v703 = vunpack.c.l.bf16 %v671
      %v704 = vunpack.c.l.bf16 %v672
      %v705 = vunpack.c.l.bf16 %v673
      %v706 = vunpack.c.l.bf16 %v674
      %v707 = vunpack.c.l.bf16 %v675
      %v708 = vunpack.c.l.bf16 %v676
      %v709 = vunpack.c.l.bf16 %v677
      %v710 = vunpack.c.l.bf16 %v678
      %v711 = vunpack.c.l.bf16 %v679
      %v712 = vunpack.c.l.bf16 %v680
      %v713 = vunpack.c.l.bf16 %v681
      %v714 = vunpack.c.l.bf16 %v682
      %v715 = vunpack.c.l.bf16 %v683
      %v716 = vunpack.c.l.bf16 %v684
      %v717 = vunpack.c.l.bf16 %v685
      %v718 = vunpack.c.l.bf16 %v686
      %v719 = vunpack.c.l.bf16 %v687
      %v720 = vunpack.c.l.bf16 %v688
      %v721 = vunpack.c.l.bf16 %v689
      %v722 = vunpack.c.l.bf16 %v690
      %v723 = vunpack.c.l.bf16 %v691
      %v724 = vunpack.c.l.bf16 %v692
      %v725 = vunpack.c.l.bf16 %v693
      %v726 = vunpack.c.l.bf16 %v694
      %v727 = vunpack.c.l.bf16 %v695
      %v728 = vunpack.c.l.bf16 %v696
      %v729 = vunpack.c.l.bf16 %v697
      %v730 = vunpack.c.l.bf16 %v698
      %v731 = vunpack.c.l.bf16 %v699
      %v732 = vunpack.c.l.bf16 %v700
      %v733 = vmax.f32 %v701, 0.0
      %v734 = vmax.f32 %v702, 0.0
      %v735 = vmax.f32 %v703, 0.0
      %v736 = vmax.f32 %v704, 0.0
      %v737 = vmax.f32 %v705, 0.0
      %v738 = vmax.f32 %v706, 0.0
      %v739 = vmax.f32 %v707, 0.0
      %v740 = vmax.f32 %v708, 0.0
      %v741 = vmax.f32 %v709, 0.0
      %v742 = vmax.f32 %v710, 0.0
      %v743 = vmax.f32 %v711, 0.0
      %v744 = vmax.f32 %v712, 0.0
      %v745 = vmax.f32 %v713, 0.0
      %v746 = vmax.f32 %v714, 0.0
      %v747 = vmax.f32 %v715, 0.0
      %v748 = vmax.f32 %v716, 0.0
      %v749 = vmax.f32 %v717, 0.0
      %v750 = vmax.f32 %v718, 0.0
      %v751 = vmax.f32 %v719, 0.0
      %v752 = vmax.f32 %v720, 0.0
      %v753 = vmax.f32 %v721, 0.0
      %v754 = vmax.f32 %v722, 0.0
      %v755 = vmax.f32 %v723, 0.0
      %v756 = vmax.f32 %v724, 0.0
      %v757 = vmax.f32 %v725, 0.0
      %v758 = vmax.f32 %v726, 0.0
      %v759 = vmax.f32 %v727, 0.0
      %v760 = vmax.f32 %v728, 0.0
      %v761 = vmax.f32 %v729, 0.0
      %v762 = vmax.f32 %v730, 0.0
      %v763 = vmax.f32 %v731, 0.0
      %v764 = vmax.f32 %v732, 0.0
      %v765 = vpack.c.bf16 %v734, %v733
      %v766 = vpack.c.bf16 %v736, %v735
      %v767 = vpack.c.bf16 %v738, %v737
      %v768 = vpack.c.bf16 %v740, %v739
      %v769 = vpack.c.bf16 %v742, %v741
      %v770 = vpack.c.bf16 %v744, %v743
      %v771 = vpack.c.bf16 %v746, %v745
      %v772 = vpack.c.bf16 %v748, %v747
      %v773 = vpack.c.bf16 %v750, %v749
      %v774 = vpack.c.bf16 %v752, %v751
      %v775 = vpack.c.bf16 %v754, %v753
      %v776 = vpack.c.bf16 %v756, %v755
      %v777 = vpack.c.bf16 %v758, %v757
      %v778 = vpack.c.bf16 %v760, %v759
      %v779 = vpack.c.bf16 %v762, %v761
      %v780 = vpack.c.bf16 %v764, %v763
      %v781 = vld [vmem:[%s6] sm:$0xf]
      %v782 = vld [vmem:[%s6 + $0x4] sm:$0xf]
      %v783 = vld [vmem:[%s6 + $0x8] sm:$0xf]
      %v784 = vld [vmem:[%s6 + $0xc] sm:$0xf]
      %v785 = vld [vmem:[%s440] sm:$0xf]
      %v786 = vld [vmem:[%s440 + $0x4] sm:$0xf]
      %v787 = vld [vmem:[%s440 + $0x8] sm:$0xf]
      %v788 = vld [vmem:[%s440 + $0xc] sm:$0xf]
      %v789 = vld [vmem:[%s440 + $0x10] sm:$0xf]
      %v790 = vld [vmem:[%s440 + $0x14] sm:$0xf]
      %v791 = vld [vmem:[%s440 + $0x18] sm:$0xf]
      %v792 = vld [vmem:[%s440 + $0x1c] sm:$0xf]
      %v793 = vld [vmem:[%s440 + $0x20] sm:$0xf]
      %v794 = vld [vmem:[%s440 + $0x24] sm:$0xf]
      %v795 = vld [vmem:[%s440 + $0x28] sm:$0xf]
      %v796 = vld [vmem:[%s440 + $0x2c] sm:$0xf]
      %v797 = vld [vmem:[%s440 + $0x30] sm:$0xf]
      %v798 = vld [vmem:[%s440 + $0x34] sm:$0xf]
      %v799 = vld [vmem:[%s440 + $0x38] sm:$0xf]
      %v800 = vld [vmem:[%s440 + $0x3c] sm:$0xf]
      %v801 = vld [vmem:[%s440 + $0x40] sm:$0xf]
      %v802 = vld [vmem:[%s440 + $0x44] sm:$0xf]
      %v803 = vld [vmem:[%s440 + $0x48] sm:$0xf]
      %v804 = vld [vmem:[%s440 + $0x4c] sm:$0xf]
      %v805 = vld [vmem:[%s440 + $0x50] sm:$0xf]
      %v806 = vld [vmem:[%s440 + $0x54] sm:$0xf]
      %v807 = vld [vmem:[%s440 + $0x58] sm:$0xf]
      %v808 = vld [vmem:[%s440 + $0x5c] sm:$0xf]
      %v809 = vld [vmem:[%s440 + $0x60] sm:$0xf]
      %v810 = vld [vmem:[%s440 + $0x64] sm:$0xf]
      %v811 = vld [vmem:[%s440 + $0x68] sm:$0xf]
      %v812 = vld [vmem:[%s440 + $0x6c] sm:$0xf]
      %v813 = vld [vmem:[%s440 + $0x70] sm:$0xf]
      %v814 = vld [vmem:[%s440 + $0x74] sm:$0xf]
      %v815 = vld [vmem:[%s440 + $0x78] sm:$0xf]
      %v816 = vld [vmem:[%s440 + $0x7c] sm:$0xf]
      %v817 = vld [vmem:[%s447] sm:$0x1]
      %v819 = vpack.i.b16 %v817, %v817
      %v821 = vperm.slane %v819, 0
      %v822 = vunpack.c.l.bf16 %v785
      %v823 = vunpack.c.l.bf16 %v786
      %v824 = vunpack.c.l.bf16 %v787
      %v825 = vunpack.c.l.bf16 %v788
      %v826 = vunpack.c.l.bf16 %v789
      %v827 = vunpack.c.l.bf16 %v790
      %v828 = vunpack.c.l.bf16 %v791
      %v829 = vunpack.c.l.bf16 %v792
      %v830 = vunpack.c.l.bf16 %v793
      %v831 = vunpack.c.l.bf16 %v794
      %v832 = vunpack.c.l.bf16 %v795
      %v833 = vunpack.c.l.bf16 %v796
      %v834 = vunpack.c.l.bf16 %v797
      %v835 = vunpack.c.l.bf16 %v798
      %v836 = vunpack.c.l.bf16 %v799
      %v837 = vunpack.c.l.bf16 %v800
      %v838 = vunpack.c.l.bf16 %v801
      %v839 = vunpack.c.l.bf16 %v802
      %v840 = vunpack.c.l.bf16 %v803
      %v841 = vunpack.c.l.bf16 %v804
      %v842 = vunpack.c.l.bf16 %v805
      %v843 = vunpack.c.l.bf16 %v806
      %v844 = vunpack.c.l.bf16 %v807
      %v845 = vunpack.c.l.bf16 %v808
      %v846 = vunpack.c.l.bf16 %v809
      %v847 = vunpack.c.l.bf16 %v810
      %v848 = vunpack.c.l.bf16 %v811
      %v849 = vunpack.c.l.bf16 %v812
      %v850 = vunpack.c.l.bf16 %v813
      %v851 = vunpack.c.l.bf16 %v814
      %v852 = vunpack.c.l.bf16 %v815
      %v853 = vunpack.c.l.bf16 %v816
      %v854 = vunpack.c.l.bf16 %v821
      %v855 = vmul.f32 %v822, %v854
      %v856 = vmul.f32 %v823, %v854
      %v857 = vmul.f32 %v824, %v854
      %v858 = vmul.f32 %v825, %v854
      %v859 = vmul.f32 %v826, %v854
      %v860 = vmul.f32 %v827, %v854
      %v861 = vmul.f32 %v828, %v854
      %v862 = vmul.f32 %v829, %v854
      %v863 = vmul.f32 %v830, %v854
      %v864 = vmul.f32 %v831, %v854
      %v865 = vmul.f32 %v832, %v854
      %v866 = vmul.f32 %v833, %v854
      %v867 = vmul.f32 %v834, %v854
      %v868 = vmul.f32 %v835, %v854
      %v869 = vmul.f32 %v836, %v854
      %v870 = vmul.f32 %v837, %v854
      %v871 = vmul.f32 %v838, %v854
      %v872 = vmul.f32 %v839, %v854
      %v873 = vmul.f32 %v840, %v854
      %v874 = vmul.f32 %v841, %v854
      %v875 = vmul.f32 %v842, %v854
      %v876 = vmul.f32 %v843, %v854
      %v877 = vmul.f32 %v844, %v854
      %v878 = vmul.f32 %v845, %v854
      %v879 = vmul.f32 %v846, %v854
      %v880 = vmul.f32 %v847, %v854
      %v881 = vmul.f32 %v848, %v854
      %v882 = vmul.f32 %v849, %v854
      %v883 = vmul.f32 %v850, %v854
      %v884 = vmul.f32 %v851, %v854
      %v885 = vmul.f32 %v852, %v854
      %v886 = vmul.f32 %v853, %v854
      %v887 = vpack.c.bf16 %v855, %v855
      %v888 = vpack.c.bf16 %v856, %v856
      %v889 = vpack.c.bf16 %v857, %v857
      %v890 = vpack.c.bf16 %v858, %v858
      %v891 = vpack.c.bf16 %v859, %v859
      %v892 = vpack.c.bf16 %v860, %v860
      %v893 = vpack.c.bf16 %v861, %v861
      %v894 = vpack.c.bf16 %v862, %v862
      %v895 = vpack.c.bf16 %v863, %v863
      %v896 = vpack.c.bf16 %v864, %v864
      %v897 = vpack.c.bf16 %v865, %v865
      %v898 = vpack.c.bf16 %v866, %v866
      %v899 = vpack.c.bf16 %v867, %v867
      %v900 = vpack.c.bf16 %v868, %v868
      %v901 = vpack.c.bf16 %v869, %v869
      %v902 = vpack.c.bf16 %v870, %v870
      %v903 = vpack.c.bf16 %v871, %v871
      %v904 = vpack.c.bf16 %v872, %v872
      %v905 = vpack.c.bf16 %v873, %v873
      %v906 = vpack.c.bf16 %v874, %v874
      %v907 = vpack.c.bf16 %v875, %v875
      %v908 = vpack.c.bf16 %v876, %v876
      %v909 = vpack.c.bf16 %v877, %v877
      %v910 = vpack.c.bf16 %v878, %v878
      %v911 = vpack.c.bf16 %v879, %v879
      %v912 = vpack.c.bf16 %v880, %v880
      %v913 = vpack.c.bf16 %v881, %v881
      %v914 = vpack.c.bf16 %v882, %v882
      %v915 = vpack.c.bf16 %v883, %v883
      %v916 = vpack.c.bf16 %v884, %v884
      %v917 = vpack.c.bf16 %v885, %v885
      %v918 = vpack.c.bf16 %v886, %v886
      %v919 = vld [vmem:[%s453] sm:$0x1]
      %v921 = vpack.i.b16 %v919, %v919
      %v923 = vperm.slane %v921, 0
      %v924 = vunpack.c.l.bf16 %v887
      %v925 = vunpack.c.l.bf16 %v888
      %v926 = vunpack.c.l.bf16 %v889
      %v927 = vunpack.c.l.bf16 %v890
      %v928 = vunpack.c.l.bf16 %v891
      %v929 = vunpack.c.l.bf16 %v892
      %v930 = vunpack.c.l.bf16 %v893
      %v931 = vunpack.c.l.bf16 %v894
      %v932 = vunpack.c.l.bf16 %v895
      %v933 = vunpack.c.l.bf16 %v896
      %v934 = vunpack.c.l.bf16 %v897
      %v935 = vunpack.c.l.bf16 %v898
      %v936 = vunpack.c.l.bf16 %v899
      %v937 = vunpack.c.l.bf16 %v900
      %v938 = vunpack.c.l.bf16 %v901
      %v939 = vunpack.c.l.bf16 %v902
      %v940 = vunpack.c.l.bf16 %v903
      %v941 = vunpack.c.l.bf16 %v904
      %v942 = vunpack.c.l.bf16 %v905
      %v943 = vunpack.c.l.bf16 %v906
      %v944 = vunpack.c.l.bf16 %v907
      %v945 = vunpack.c.l.bf16 %v908
      %v946 = vunpack.c.l.bf16 %v909
      %v947 = vunpack.c.l.bf16 %v910
      %v948 = vunpack.c.l.bf16 %v911
      %v949 = vunpack.c.l.bf16 %v912
      %v950 = vunpack.c.l.bf16 %v913
      %v951 = vunpack.c.l.bf16 %v914
      %v952 = vunpack.c.l.bf16 %v915
      %v953 = vunpack.c.l.bf16 %v916
      %v954 = vunpack.c.l.bf16 %v917
      %v955 = vunpack.c.l.bf16 %v918
      %v956 = vunpack.c.l.bf16 %v923
      %v957 = vadd.f32 %v924, %v956
      %v958 = vadd.f32 %v925, %v956
      %v959 = vadd.f32 %v926, %v956
      %v960 = vadd.f32 %v927, %v956
      %v961 = vadd.f32 %v928, %v956
      %v962 = vadd.f32 %v929, %v956
      %v963 = vadd.f32 %v930, %v956
      %v964 = vadd.f32 %v931, %v956
      %v965 = vadd.f32 %v932, %v956
      %v966 = vadd.f32 %v933, %v956
      %v967 = vadd.f32 %v934, %v956
      %v968 = vadd.f32 %v935, %v956
      %v969 = vadd.f32 %v936, %v956
      %v970 = vadd.f32 %v937, %v956
      %v971 = vadd.f32 %v938, %v956
      %v972 = vadd.f32 %v939, %v956
      %v973 = vadd.f32 %v940, %v956
      %v974 = vadd.f32 %v941, %v956
      %v975 = vadd.f32 %v942, %v956
      %v976 = vadd.f32 %v943, %v956
      %v977 = vadd.f32 %v944, %v956
      %v978 = vadd.f32 %v945, %v956
      %v979 = vadd.f32 %v946, %v956
      %v980 = vadd.f32 %v947, %v956
      %v981 = vadd.f32 %v948, %v956
      %v982 = vadd.f32 %v949, %v956
      %v983 = vadd.f32 %v950, %v956
      %v984 = vadd.f32 %v951, %v956
      %v985 = vadd.f32 %v952, %v956
      %v986 = vadd.f32 %v953, %v956
      %v987 = vadd.f32 %v954, %v956
      %v988 = vadd.f32 %v955, %v956
      %v989 = vpack.c.bf16 %v957, %v957
      %v990 = vpack.c.bf16 %v958, %v958
      %v991 = vpack.c.bf16 %v959, %v959
      %v992 = vpack.c.bf16 %v960, %v960
      %v993 = vpack.c.bf16 %v961, %v961
      %v994 = vpack.c.bf16 %v962, %v962
      %v995 = vpack.c.bf16 %v963, %v963
      %v996 = vpack.c.bf16 %v964, %v964
      %v997 = vpack.c.bf16 %v965, %v965
      %v998 = vpack.c.bf16 %v966, %v966
      %v999 = vpack.c.bf16 %v967, %v967
      %v1000 = vpack.c.bf16 %v968, %v968
      %v1001 = vpack.c.bf16 %v969, %v969
      %v1002 = vpack.c.bf16 %v970, %v970
      %v1003 = vpack.c.bf16 %v971, %v971
      %v1004 = vpack.c.bf16 %v972, %v972
      %v1005 = vpack.c.bf16 %v973, %v973
      %v1006 = vpack.c.bf16 %v974, %v974
      %v1007 = vpack.c.bf16 %v975, %v975
      %v1008 = vpack.c.bf16 %v976, %v976
      %v1009 = vpack.c.bf16 %v977, %v977
      %v1010 = vpack.c.bf16 %v978, %v978
      %v1011 = vpack.c.bf16 %v979, %v979
      %v1012 = vpack.c.bf16 %v980, %v980
      %v1013 = vpack.c.bf16 %v981, %v981
      %v1014 = vpack.c.bf16 %v982, %v982
      %v1015 = vpack.c.bf16 %v983, %v983
      %v1016 = vpack.c.bf16 %v984, %v984
      %v1017 = vpack.c.bf16 %v985, %v985
      %v1018 = vpack.c.bf16 %v986, %v986
      %v1019 = vpack.c.bf16 %v987, %v987
      %v1020 = vpack.c.bf16 %v988, %v988
      %v1021 = vunpack.c.l.bf16 %v989
      %v1022 = vunpack.c.l.bf16 %v990
      %v1023 = vunpack.c.l.bf16 %v991
      %v1024 = vunpack.c.l.bf16 %v992
      %v1025 = vunpack.c.l.bf16 %v993
      %v1026 = vunpack.c.l.bf16 %v994
      %v1027 = vunpack.c.l.bf16 %v995
      %v1028 = vunpack.c.l.bf16 %v996
      %v1029 = vunpack.c.l.bf16 %v997
      %v1030 = vunpack.c.l.bf16 %v998
      %v1031 = vunpack.c.l.bf16 %v999
      %v1032 = vunpack.c.l.bf16 %v1000
      %v1033 = vunpack.c.l.bf16 %v1001
      %v1034 = vunpack.c.l.bf16 %v1002
      %v1035 = vunpack.c.l.bf16 %v1003
      %v1036 = vunpack.c.l.bf16 %v1004
      %v1037 = vunpack.c.l.bf16 %v1005
      %v1038 = vunpack.c.l.bf16 %v1006
      %v1039 = vunpack.c.l.bf16 %v1007
      %v1040 = vunpack.c.l.bf16 %v1008
      %v1041 = vunpack.c.l.bf16 %v1009
      %v1042 = vunpack.c.l.bf16 %v1010
      %v1043 = vunpack.c.l.bf16 %v1011
      %v1044 = vunpack.c.l.bf16 %v1012
      %v1045 = vunpack.c.l.bf16 %v1013
      %v1046 = vunpack.c.l.bf16 %v1014
      %v1047 = vunpack.c.l.bf16 %v1015
      %v1048 = vunpack.c.l.bf16 %v1016
      %v1049 = vunpack.c.l.bf16 %v1017
      %v1050 = vunpack.c.l.bf16 %v1018
      %v1051 = vunpack.c.l.bf16 %v1019
      %v1052 = vunpack.c.l.bf16 %v1020
      %v1053 = vmax.f32 %v1021, 0.0
      %v1054 = vmax.f32 %v1022, 0.0
      %v1055 = vmax.f32 %v1023, 0.0
      %v1056 = vmax.f32 %v1024, 0.0
      %v1057 = vmax.f32 %v1025, 0.0
      %v1058 = vmax.f32 %v1026, 0.0
      %v1059 = vmax.f32 %v1027, 0.0
      %v1060 = vmax.f32 %v1028, 0.0
      %v1061 = vmax.f32 %v1029, 0.0
      %v1062 = vmax.f32 %v1030, 0.0
      %v1063 = vmax.f32 %v1031, 0.0
      %v1064 = vmax.f32 %v1032, 0.0
      %v1065 = vmax.f32 %v1033, 0.0
      %v1066 = vmax.f32 %v1034, 0.0
      %v1067 = vmax.f32 %v1035, 0.0
      %v1068 = vmax.f32 %v1036, 0.0
      %v1069 = vmax.f32 %v1037, 0.0
      %v1070 = vmax.f32 %v1038, 0.0
      %v1071 = vmax.f32 %v1039, 0.0
      %v1072 = vmax.f32 %v1040, 0.0
      %v1073 = vmax.f32 %v1041, 0.0
      %v1074 = vmax.f32 %v1042, 0.0
      %v1075 = vmax.f32 %v1043, 0.0
      %v1076 = vmax.f32 %v1044, 0.0
      %v1077 = vmax.f32 %v1045, 0.0
      %v1078 = vmax.f32 %v1046, 0.0
      %v1079 = vmax.f32 %v1047, 0.0
      %v1080 = vmax.f32 %v1048, 0.0
      %v1081 = vmax.f32 %v1049, 0.0
      %v1082 = vmax.f32 %v1050, 0.0
      %v1083 = vmax.f32 %v1051, 0.0
      %v1084 = vmax.f32 %v1052, 0.0
      %v1085 = vpack.c.bf16 %v1054, %v1053
      %v1086 = vpack.c.bf16 %v1056, %v1055
      %v1087 = vpack.c.bf16 %v1058, %v1057
      %v1088 = vpack.c.bf16 %v1060, %v1059
      %v1089 = vpack.c.bf16 %v1062, %v1061
      %v1090 = vpack.c.bf16 %v1064, %v1063
      %v1091 = vpack.c.bf16 %v1066, %v1065
      %v1092 = vpack.c.bf16 %v1068, %v1067
      %v1093 = vpack.c.bf16 %v1070, %v1069
      %v1094 = vpack.c.bf16 %v1072, %v1071
      %v1095 = vpack.c.bf16 %v1074, %v1073
      %v1096 = vpack.c.bf16 %v1076, %v1075
      %v1097 = vpack.c.bf16 %v1078, %v1077
      %v1098 = vpack.c.bf16 %v1080, %v1079
      %v1099 = vpack.c.bf16 %v1082, %v1081
      %v1100 = vpack.c.bf16 %v1084, %v1083
      %v1101 = vld [vmem:[%s7] sm:$0xf]
      %v1102 = vld [vmem:[%s7 + $0x4] sm:$0xf]
      %v1105 = vunpack.c.l.b16 %v1101
      %v1106 = vunpack.c.l.b16 %v1102
      %v1107 = vpack.c.b16 %v1106, %v1105
      %vm1109 = vcmask 130048
      %v1111 = vsel %vm1109, %v1085, 0
      %v1114 = vsel %vm1109, %v1086, 0
      %v1117 = vsel %vm1109, %v1087, 0
      %v1120 = vsel %vm1109, %v1088, 0
      %v1123 = vsel %vm1109, %v1089, 0
      %v1126 = vsel %vm1109, %v1090, 0
      %v1129 = vsel %vm1109, %v1091, 0
      %v1132 = vsel %vm1109, %v1092, 0
      %v1135 = vsel %vm1109, %v1093, 0
      %v1138 = vsel %vm1109, %v1094, 0
      %v1141 = vsel %vm1109, %v1095, 0
      %v1144 = vsel %vm1109, %v1096, 0
      %v1147 = vsel %vm1109, %v1097, 0
      %v1150 = vsel %vm1109, %v1098, 0
      %v1153 = vsel %vm1109, %v1099, 0
      %v1156 = vsel %vm1109, %v1100, 0
      %1158 = vmatpush.bf16.msra.mxu0 0
      %1159 = vmatpush.bf16.msra.mxu0 0
      %1160 = vmatpush.bf16.msra.mxu0 0
      %1161 = vmatpush.bf16.msra.mxu0 0
      %1162 = vmatpush.bf16.msra.mxu0 0
      %1163 = vmatpush.bf16.msra.mxu0 0
      %1164 = vmatpush.bf16.msra.mxu0 0
      %1165 = vmatpush.bf16.msra.mxu0 %v1107
      %1166 = vmatmul.bf16.gmra.mxu0 %v1111
      %v1167 = vpop.f32.mrf.mxu0
      %v1168 = vadd.f32 0.0, %v1167
      %v1169 = vpop.f32.mrf.mxu0
      %v1170 = vadd.f32 0.0, %v1169
      %1171 = vmatmul.bf16.gmra.mxu0 %v1114
      %v1172 = vpop.f32.mrf.mxu0
      %v1173 = vadd.f32 0.0, %v1172
      %v1174 = vpop.f32.mrf.mxu0
      %v1175 = vadd.f32 0.0, %v1174
      %1176 = vmatmul.bf16.gmra.mxu0 %v1117
      %v1177 = vpop.f32.mrf.mxu0
      %v1178 = vadd.f32 0.0, %v1177
      %v1179 = vpop.f32.mrf.mxu0
      %v1180 = vadd.f32 0.0, %v1179
      %1181 = vmatmul.bf16.gmra.mxu0 %v1120
      %v1182 = vpop.f32.mrf.mxu0
      %v1183 = vadd.f32 0.0, %v1182
      %v1184 = vpop.f32.mrf.mxu0
      %v1185 = vadd.f32 0.0, %v1184
      %1186 = vmatmul.bf16.gmra.mxu0 %v1123
      %v1187 = vpop.f32.mrf.mxu0
      %v1188 = vadd.f32 0.0, %v1187
      %v1189 = vpop.f32.mrf.mxu0
      %v1190 = vadd.f32 0.0, %v1189
      %1191 = vmatmul.bf16.gmra.mxu0 %v1126
      %v1192 = vpop.f32.mrf.mxu0
      %v1193 = vadd.f32 0.0, %v1192
      %v1194 = vpop.f32.mrf.mxu0
      %v1195 = vadd.f32 0.0, %v1194
      %1196 = vmatmul.bf16.gmra.mxu0 %v1129
      %v1197 = vpop.f32.mrf.mxu0
      %v1198 = vadd.f32 0.0, %v1197
      %v1199 = vpop.f32.mrf.mxu0
      %v1200 = vadd.f32 0.0, %v1199
      %1201 = vmatmul.bf16.gmra.mxu0 %v1132
      %v1202 = vpop.f32.mrf.mxu0
      %v1203 = vadd.f32 0.0, %v1202
      %v1204 = vpop.f32.mrf.mxu0
      %v1205 = vadd.f32 0.0, %v1204
      %1206 = vmatmul.bf16.gmra.mxu0 %v1135
      %v1207 = vpop.f32.mrf.mxu0
      %v1208 = vadd.f32 0.0, %v1207
      %v1209 = vpop.f32.mrf.mxu0
      %v1210 = vadd.f32 0.0, %v1209
      %1211 = vmatmul.bf16.gmra.mxu0 %v1138
      %v1212 = vpop.f32.mrf.mxu0
      %v1213 = vadd.f32 0.0, %v1212
      %v1214 = vpop.f32.mrf.mxu0
      %v1215 = vadd.f32 0.0, %v1214
      %1216 = vmatmul.bf16.gmra.mxu0 %v1141
      %v1217 = vpop.f32.mrf.mxu0
      %v1218 = vadd.f32 0.0, %v1217
      %v1219 = vpop.f32.mrf.mxu0
      %v1220 = vadd.f32 0.0, %v1219
      %1221 = vmatmul.bf16.gmra.mxu0 %v1144
      %v1222 = vpop.f32.mrf.mxu0
      %v1223 = vadd.f32 0.0, %v1222
      %v1224 = vpop.f32.mrf.mxu0
      %v1225 = vadd.f32 0.0, %v1224
      %1226 = vmatmul.bf16.gmra.mxu0 %v1147
      %v1227 = vpop.f32.mrf.mxu0
      %v1228 = vadd.f32 0.0, %v1227
      %v1229 = vpop.f32.mrf.mxu0
      %v1230 = vadd.f32 0.0, %v1229
      %1231 = vmatmul.bf16.gmra.mxu0 %v1150
      %v1232 = vpop.f32.mrf.mxu0
      %v1233 = vadd.f32 0.0, %v1232
      %v1234 = vpop.f32.mrf.mxu0
      %v1235 = vadd.f32 0.0, %v1234
      %1236 = vmatmul.bf16.gmra.mxu0 %v1153
      %v1237 = vpop.f32.mrf.mxu0
      %v1238 = vadd.f32 0.0, %v1237
      %v1239 = vpop.f32.mrf.mxu0
      %v1240 = vadd.f32 0.0, %v1239
      %1241 = vmatmul.bf16.gmra.mxu0 %v1156
      %v1242 = vpop.f32.mrf.mxu0
      %v1243 = vadd.f32 0.0, %v1242
      %v1244 = vpop.f32.mrf.mxu0
      %v1245 = vadd.f32 0.0, %v1244
      %1246 = vdwg.mxu0
      %v1251 = vunpack.c.l.b16 %v781
      %v1252 = vunpack.c.l.b16 %v782
      %v1253 = vunpack.c.l.b16 %v783
      %v1254 = vunpack.c.l.b16 %v784
      %v1255 = vpack.c.b16 %v1252, %v1251
      %v1256 = vpack.c.b16 %v1254, %v1253
      %vm1259 = vcmask 261120
      %v1261 = vsel %vm1259, %v765, 0
      %v1264 = vsel %vm1259, %v766, 0
      %v1267 = vsel %vm1259, %v767, 0
      %v1270 = vsel %vm1259, %v768, 0
      %v1273 = vsel %vm1259, %v769, 0
      %v1276 = vsel %vm1259, %v770, 0
      %v1279 = vsel %vm1259, %v771, 0
      %v1282 = vsel %vm1259, %v772, 0
      %v1285 = vsel %vm1259, %v773, 0
      %v1288 = vsel %vm1259, %v774, 0
      %v1291 = vsel %vm1259, %v775, 0
      %v1294 = vsel %vm1259, %v776, 0
      %v1297 = vsel %vm1259, %v777, 0
      %v1300 = vsel %vm1259, %v778, 0
      %v1303 = vsel %vm1259, %v779, 0
      %v1306 = vsel %vm1259, %v780, 0
      %1308 = vmatpush.bf16.msra.mxu0 0
      %1309 = vmatpush.bf16.msra.mxu0 0
      %1310 = vmatpush.bf16.msra.mxu0 0
      %1311 = vmatpush.bf16.msra.mxu0 0
      %1312 = vmatpush.bf16.msra.mxu0 0
      %1313 = vmatpush.bf16.msra.mxu0 0
      %1314 = vmatpush.bf16.msra.mxu0 %v1256
      %1315 = vmatpush.bf16.msra.mxu0 %v1255
      %1316 = vmatmul.bf16.gmra.mxu0 %v1261
      %v1317 = vpop.f32.mrf.mxu0
      %v1318 = vadd.f32 %v1168, %v1317
      %v1319 = vpop.f32.mrf.mxu0
      %v1320 = vadd.f32 %v1170, %v1319
      %1321 = vmatmul.bf16.gmra.mxu0 %v1264
      %v1322 = vpop.f32.mrf.mxu0
      %v1323 = vadd.f32 %v1173, %v1322
      %v1324 = vpop.f32.mrf.mxu0
      %v1325 = vadd.f32 %v1175, %v1324
      %1326 = vmatmul.bf16.gmra.mxu0 %v1267
      %v1327 = vpop.f32.mrf.mxu0
      %v1328 = vadd.f32 %v1178, %v1327
      %v1329 = vpop.f32.mrf.mxu0
      %v1330 = vadd.f32 %v1180, %v1329
      %1331 = vmatmul.bf16.gmra.mxu0 %v1270
      %v1332 = vpop.f32.mrf.mxu0
      %v1333 = vadd.f32 %v1183, %v1332
      %v1334 = vpop.f32.mrf.mxu0
      %v1335 = vadd.f32 %v1185, %v1334
      %1336 = vmatmul.bf16.gmra.mxu0 %v1273
      %v1337 = vpop.f32.mrf.mxu0
      %v1338 = vadd.f32 %v1188, %v1337
      %v1339 = vpop.f32.mrf.mxu0
      %v1340 = vadd.f32 %v1190, %v1339
      %1341 = vmatmul.bf16.gmra.mxu0 %v1276
      %v1342 = vpop.f32.mrf.mxu0
      %v1343 = vadd.f32 %v1193, %v1342
      %v1344 = vpop.f32.mrf.mxu0
      %v1345 = vadd.f32 %v1195, %v1344
      %1346 = vmatmul.bf16.gmra.mxu0 %v1279
      %v1347 = vpop.f32.mrf.mxu0
      %v1348 = vadd.f32 %v1198, %v1347
      %v1349 = vpop.f32.mrf.mxu0
      %v1350 = vadd.f32 %v1200, %v1349
      %1351 = vmatmul.bf16.gmra.mxu0 %v1282
      %v1352 = vpop.f32.mrf.mxu0
      %v1353 = vadd.f32 %v1203, %v1352
      %v1354 = vpop.f32.mrf.mxu0
      %v1355 = vadd.f32 %v1205, %v1354
      %1356 = vmatmul.bf16.gmra.mxu0 %v1285
      %v1357 = vpop.f32.mrf.mxu0
      %v1358 = vadd.f32 %v1208, %v1357
      %v1359 = vpop.f32.mrf.mxu0
      %v1360 = vadd.f32 %v1210, %v1359
      %1361 = vmatmul.bf16.gmra.mxu0 %v1288
      %v1362 = vpop.f32.mrf.mxu0
      %v1363 = vadd.f32 %v1213, %v1362
      %v1364 = vpop.f32.mrf.mxu0
      %v1365 = vadd.f32 %v1215, %v1364
      %1366 = vmatmul.bf16.gmra.mxu0 %v1291
      %v1367 = vpop.f32.mrf.mxu0
      %v1368 = vadd.f32 %v1218, %v1367
      %v1369 = vpop.f32.mrf.mxu0
      %v1370 = vadd.f32 %v1220, %v1369
      %1371 = vmatmul.bf16.gmra.mxu0 %v1294
      %v1372 = vpop.f32.mrf.mxu0
      %v1373 = vadd.f32 %v1223, %v1372
      %v1374 = vpop.f32.mrf.mxu0
      %v1375 = vadd.f32 %v1225, %v1374
      %1376 = vmatmul.bf16.gmra.mxu0 %v1297
      %v1377 = vpop.f32.mrf.mxu0
      %v1378 = vadd.f32 %v1228, %v1377
      %v1379 = vpop.f32.mrf.mxu0
      %v1380 = vadd.f32 %v1230, %v1379
      %1381 = vmatmul.bf16.gmra.mxu0 %v1300
      %v1382 = vpop.f32.mrf.mxu0
      %v1383 = vadd.f32 %v1233, %v1382
      %v1384 = vpop.f32.mrf.mxu0
      %v1385 = vadd.f32 %v1235, %v1384
      %1386 = vmatmul.bf16.gmra.mxu0 %v1303
      %v1387 = vpop.f32.mrf.mxu0
      %v1388 = vadd.f32 %v1238, %v1387
      %v1389 = vpop.f32.mrf.mxu0
      %v1390 = vadd.f32 %v1240, %v1389
      %1391 = vmatmul.bf16.gmra.mxu0 %v1306
      %v1392 = vpop.f32.mrf.mxu0
      %v1393 = vadd.f32 %v1243, %v1392
      %v1394 = vpop.f32.mrf.mxu0
      %v1395 = vadd.f32 %v1245, %v1394
      %1396 = vdwg.mxu0
      %v1397 = vld [vmem:[%s8] sm:$0x1]
      %v1399 = vperm.slane %v1397, 0
      %v1401 = vadd.f32 %v1318, %v1399
      %v1402 = vadd.f32 %v1320, %v1399
      %v1403 = vadd.f32 %v1323, %v1399
      %v1404 = vadd.f32 %v1325, %v1399
      %v1405 = vadd.f32 %v1328, %v1399
      %v1406 = vadd.f32 %v1330, %v1399
      %v1407 = vadd.f32 %v1333, %v1399
      %v1408 = vadd.f32 %v1335, %v1399
      %v1409 = vadd.f32 %v1338, %v1399
      %v1410 = vadd.f32 %v1340, %v1399
      %v1411 = vadd.f32 %v1343, %v1399
      %v1412 = vadd.f32 %v1345, %v1399
      %v1413 = vadd.f32 %v1348, %v1399
      %v1414 = vadd.f32 %v1350, %v1399
      %v1415 = vadd.f32 %v1353, %v1399
      %v1416 = vadd.f32 %v1355, %v1399
      %v1417 = vadd.f32 %v1358, %v1399
      %v1418 = vadd.f32 %v1360, %v1399
      %v1419 = vadd.f32 %v1363, %v1399
      %v1420 = vadd.f32 %v1365, %v1399
      %v1421 = vadd.f32 %v1368, %v1399
      %v1422 = vadd.f32 %v1370, %v1399
      %v1423 = vadd.f32 %v1373, %v1399
      %v1424 = vadd.f32 %v1375, %v1399
      %v1425 = vadd.f32 %v1378, %v1399
      %v1426 = vadd.f32 %v1380, %v1399
      %v1427 = vadd.f32 %v1383, %v1399
      %v1428 = vadd.f32 %v1385, %v1399
      %v1429 = vadd.f32 %v1388, %v1399
      %v1430 = vadd.f32 %v1390, %v1399
      %v1431 = vadd.f32 %v1393, %v1399
      %v1432 = vadd.f32 %v1395, %v1399
      %v1433 = vmax.f32 %v1401, 0.0
      %v1434 = vmax.f32 %v1402, 0.0
      %v1435 = vmax.f32 %v1403, 0.0
      %v1436 = vmax.f32 %v1404, 0.0
      %v1437 = vmax.f32 %v1405, 0.0
      %v1438 = vmax.f32 %v1406, 0.0
      %v1439 = vmax.f32 %v1407, 0.0
      %v1440 = vmax.f32 %v1408, 0.0
      %v1441 = vmax.f32 %v1409, 0.0
      %v1442 = vmax.f32 %v1410, 0.0
      %v1443 = vmax.f32 %v1411, 0.0
      %v1444 = vmax.f32 %v1412, 0.0
      %v1445 = vmax.f32 %v1413, 0.0
      %v1446 = vmax.f32 %v1414, 0.0
      %v1447 = vmax.f32 %v1415, 0.0
      %v1448 = vmax.f32 %v1416, 0.0
      %v1449 = vmax.f32 %v1417, 0.0
      %v1450 = vmax.f32 %v1418, 0.0
      %v1451 = vmax.f32 %v1419, 0.0
      %v1452 = vmax.f32 %v1420, 0.0
      %v1453 = vmax.f32 %v1421, 0.0
      %v1454 = vmax.f32 %v1422, 0.0
      %v1455 = vmax.f32 %v1423, 0.0
      %v1456 = vmax.f32 %v1424, 0.0
      %v1457 = vmax.f32 %v1425, 0.0
      %v1458 = vmax.f32 %v1426, 0.0
      %v1459 = vmax.f32 %v1427, 0.0
      %v1460 = vmax.f32 %v1428, 0.0
      %v1461 = vmax.f32 %v1429, 0.0
      %v1462 = vmax.f32 %v1430, 0.0
      %v1463 = vmax.f32 %v1431, 0.0
      %v1464 = vmax.f32 %v1432, 0.0
      %v1465 = vpack.c.bf16 %v1433, %v1433
      %v1466 = vpack.c.bf16 %v1434, %v1434
      %v1467 = vpack.c.bf16 %v1435, %v1435
      %v1468 = vpack.c.bf16 %v1436, %v1436
      %v1469 = vpack.c.bf16 %v1437, %v1437
      %v1470 = vpack.c.bf16 %v1438, %v1438
      %v1471 = vpack.c.bf16 %v1439, %v1439
      %v1472 = vpack.c.bf16 %v1440, %v1440
      %v1473 = vpack.c.bf16 %v1441, %v1441
      %v1474 = vpack.c.bf16 %v1442, %v1442
      %v1475 = vpack.c.bf16 %v1443, %v1443
      %v1476 = vpack.c.bf16 %v1444, %v1444
      %v1477 = vpack.c.bf16 %v1445, %v1445
      %v1478 = vpack.c.bf16 %v1446, %v1446
      %v1479 = vpack.c.bf16 %v1447, %v1447
      %v1480 = vpack.c.bf16 %v1448, %v1448
      %v1481 = vpack.c.bf16 %v1449, %v1449
      %v1482 = vpack.c.bf16 %v1450, %v1450
      %v1483 = vpack.c.bf16 %v1451, %v1451
      %v1484 = vpack.c.bf16 %v1452, %v1452
      %v1485 = vpack.c.bf16 %v1453, %v1453
      %v1486 = vpack.c.bf16 %v1454, %v1454
      %v1487 = vpack.c.bf16 %v1455, %v1455
      %v1488 = vpack.c.bf16 %v1456, %v1456
      %v1489 = vpack.c.bf16 %v1457, %v1457
      %v1490 = vpack.c.bf16 %v1458, %v1458
      %v1491 = vpack.c.bf16 %v1459, %v1459
      %v1492 = vpack.c.bf16 %v1460, %v1460
      %v1493 = vpack.c.bf16 %v1461, %v1461
      %v1494 = vpack.c.bf16 %v1462, %v1462
      %v1495 = vpack.c.bf16 %v1463, %v1463
      %v1496 = vpack.c.bf16 %v1464, %v1464
      %vm1497 = vcmask 257024
      %1498 = vst.msk [vmem:[%s462] sm:$0xf] %vm1497, %v1465
      %1499 = vst.msk [vmem:[%s462 + $0x4] sm:$0xf] %vm1497, %v1466
      %1500 = vst.msk [vmem:[%s462 + $0x8] sm:$0xf] %vm1497, %v1467
      %1501 = vst.msk [vmem:[%s462 + $0xc] sm:$0xf] %vm1497, %v1468
      %1502 = vst.msk [vmem:[%s462 + $0x10] sm:$0xf] %vm1497, %v1469
      %1503 = vst.msk [vmem:[%s462 + $0x14] sm:$0xf] %vm1497, %v1470
      %1504 = vst.msk [vmem:[%s462 + $0x18] sm:$0xf] %vm1497, %v1471
      %1505 = vst.msk [vmem:[%s462 + $0x1c] sm:$0xf] %vm1497, %v1472
      %1506 = vst.msk [vmem:[%s462 + $0x20] sm:$0xf] %vm1497, %v1473
      %1507 = vst.msk [vmem:[%s462 + $0x24] sm:$0xf] %vm1497, %v1474
      %1508 = vst.msk [vmem:[%s462 + $0x28] sm:$0xf] %vm1497, %v1475
      %1509 = vst.msk [vmem:[%s462 + $0x2c] sm:$0xf] %vm1497, %v1476
      %1510 = vst.msk [vmem:[%s462 + $0x30] sm:$0xf] %vm1497, %v1477
      %1511 = vst.msk [vmem:[%s462 + $0x34] sm:$0xf] %vm1497, %v1478
      %1512 = vst.msk [vmem:[%s462 + $0x38] sm:$0xf] %vm1497, %v1479
      %1513 = vst.msk [vmem:[%s462 + $0x3c] sm:$0xf] %vm1497, %v1480
      %1514 = vst.msk [vmem:[%s462 + $0x40] sm:$0xf] %vm1497, %v1481
      %1515 = vst.msk [vmem:[%s462 + $0x44] sm:$0xf] %vm1497, %v1482
      %1516 = vst.msk [vmem:[%s462 + $0x48] sm:$0xf] %vm1497, %v1483
      %1517 = vst.msk [vmem:[%s462 + $0x4c] sm:$0xf] %vm1497, %v1484
      %1518 = vst.msk [vmem:[%s462 + $0x50] sm:$0xf] %vm1497, %v1485
      %1519 = vst.msk [vmem:[%s462 + $0x54] sm:$0xf] %vm1497, %v1486
      %1520 = vst.msk [vmem:[%s462 + $0x58] sm:$0xf] %vm1497, %v1487
      %1521 = vst.msk [vmem:[%s462 + $0x5c] sm:$0xf] %vm1497, %v1488
      %1522 = vst.msk [vmem:[%s462 + $0x60] sm:$0xf] %vm1497, %v1489
      %1523 = vst.msk [vmem:[%s462 + $0x64] sm:$0xf] %vm1497, %v1490
      %1524 = vst.msk [vmem:[%s462 + $0x68] sm:$0xf] %vm1497, %v1491
      %1525 = vst.msk [vmem:[%s462 + $0x6c] sm:$0xf] %vm1497, %v1492
      %1526 = vst.msk [vmem:[%s462 + $0x70] sm:$0xf] %vm1497, %v1493
      %1527 = vst.msk [vmem:[%s462 + $0x74] sm:$0xf] %vm1497, %v1494
      %1528 = vst.msk [vmem:[%s462 + $0x78] sm:$0xf] %vm1497, %v1495
      %1529 = vst.msk [vmem:[%s462 + $0x7c] sm:$0xf] %vm1497, %v1496
      %s1530 = smul.u32 32, %s25
      %p1531 = scmp.lt.s32.totalorder %s24, 1
      %s1532 = scalar_select %p1531, %s24, 1
      %p1533 = scmp.lt.s32.totalorder %s1530, 31
      %s1534 = scalar_select %p1533, %s1530, 31
      %s1535 = smul.addr %s1532, 32
      %s1536 = sadd.s32 %s1534, %s1535
      %s1537 = smul.addr %s1536, 4
      %s1538 = scalar_lea.vmem %s9, %s1537
      // Predicated region
      $region57: #{model_forward.12} parent=55 // pred_check
        %p1539 = pneg %p275
      $region58: #{model_forward.12} parent=55 // pred_check_branch
        %1541 = sbr.rel (%p1539) target = $region60
      $region59: #{model_forward.12} parent=55 // pred_region
        %s1542 = smul.u32 32, %s25
      $region60: #{model_forward.12} parent=55 // pred_fallthru
        _
    $region56: #{model_forward.12} parent=5 // pred_fallthru
      _
    %p1543 = scmp.le.s32.totalorder 2, %s15
    // Predicated region
    $region61: #{model_forward.12} parent=5 // pred_check
      %p1544 = pneg %p1543
    $region62: #{model_forward.12} parent=5 // pred_check_branch
      %1546 = sbr.rel (%p1544) target = $region64
    $region63: #{model_forward.12} parent=5 // pred_region
      %s1547 = ssub.s32 %s15, 2
      // Predicated region
      $region65: #{model_forward.12} parent=63 // pred_check
        %p1548 = pneg %p281
      $region66: #{model_forward.12} parent=63 // pred_check_branch
        %1550 = sbr.rel (%p1548) target = $region68
      $region67: #{model_forward.12} parent=63 // pred_region
        %s1551 = smul.u32 32, %s27
        %p1552 = scmp.lt.s32.totalorder %s26, 1
        %s1553 = scalar_select %p1552, %s26, 1
        %p1554 = scmp.lt.s32.totalorder %s1551, 31
        %s1555 = scalar_select %p1554, %s1551, 31
        %s1556 = smul.addr %s1553, 32
        %s1557 = sadd.s32 %s1555, %s1556
        %s1558 = smul.addr %s1557, 4
        %s1559 = scalar_lea.vmem %s9, %s1558
      $region68: #{model_forward.12} parent=63 // pred_fallthru
        _
    $region64: #{model_forward.12} parent=5 // pred_fallthru
      _
  $region6: #{model_forward.12} parent=0 // loop_footer
    %s19 = sadd.s32 1, %s15
  $region7: #{model_forward.12} parent=0 // loop_footer_branch
    %14 = sbr.rel target = $region3
  $region8: #{model_forward.12} parent=0 // loop_exit
    _

// kernel: model_forward.15
$region0: #{model_forward.15}
  #allocation0 [shape = 'u32[]', space=smem, size = 0x4, offset = 0x4, fixed_abs, tag = 'smem constant byte address 0x4 - core index']
  #allocation1 [shape = 'u32[72,128]{1,0:T(1,128)}', space=vmem, size = 0x9000, scoped, tag = 'internal scratch']
  %s0 = inlined_call_operand.vmem [shape: bf16[2,64,32], index: 0, kind: input, shape index: {}]
  %s1 = inlined_call_operand.vmem [shape: bf16[2,1,32], index: 1, kind: input, shape index: {}]
  %s2 = inlined_call_operand.vmem [shape: bf16[2,1,32], index: 2, kind: input, shape index: {}]
  %s3 = inlined_call_operand.vmem [shape: bf16[32,32], index: 3, kind: input, shape index: {}]
  %s4 = inlined_call_operand.vmem [shape: f32[1,32], index: 4, kind: input, shape index: {}]
  %s5 = inlined_call_operand.vmem [shape: bf16[2,64,32], index: 5, kind: output, shape index: {}]
  %s6 = sld [smem:[#allocation0]]
  $region53: #{model_forward.15} parent=0
    _
  %s8 = ssub.s32 1, %s6
  %s9 = scalar_select 0, %s8, %s6
  loop: start=0, step=1, limit=4
  $region2: #{model_forward.15} parent=0 // loop_pre_header
    _
  $region3: #{model_forward.15} parent=0 // loop_header
    %s11 = sphi 0, %s15
    %p12 = scmp.ge.s32.totalorder %s11, 4
    %s18 = sphi 0, %s30
    %s19 = sphi 0, %s26
    %s20 = sphi 0, %s18
    %s21 = sphi 0, %s19
    %s22 = sphi 0, %s20
    %s23 = sphi 0, %s21
    %s35 = sphi 0, %s37
    %s38 = sphi 0, %s35
    %s39 = sphi 0, %s38
    %s55 = sphi 0, %s39
    %s61 = sphi 0, %s63
    %s64 = sphi 0, %s61
    %s65 = sphi 0, %s64
    %s81 = sphi 0, %s65
    %s87 = sphi 0, %s89
    %s90 = sphi 0, %s87
    %s91 = sphi 0, %s90
    %s107 = sphi 0, %s91
    %s111 = sphi 0, %s111
    %s113 = sphi 0, %s111
    %s114 = sphi 0, %s113
    %s128 = sphi 0, %s114
    %s132 = sphi 0, %s132
    %s134 = sphi 0, %s132
    %s135 = sphi 0, %s134
    %s149 = sphi 0, %s135
    %s157 = sphi 0, %s159
    %s160 = sphi 0, %s157
    %s161 = sphi 0, %s160
    %s177 = sphi 0, %s161
  $region4: #{model_forward.15} parent=0 // loop_header_branch
    %14 = sbr.rel (%p12) target = $region8
  $region5: #{model_forward.15} parent=0 // loop_body
    %s16 = ssub.s32 %s11, 1
    %s17 = ssub.s32 %s11, 2
    %s24 = sadd.s32 1, %s19
    %p25 = scmp.ge.s32.totalorder %s24, 1
    %s26 = scalar_select %p25, 0, %s24
    %s27 = sadd.s32 1, %s18
    %s28 = scalar_select %p25, %s27, %s18
    %p29 = scmp.ge.s32.totalorder %s28, 2
    %s30 = scalar_select %p29, 0, %s28
    %s31 = ssub.s32 %s18, %s30
    %s32 = ssub.s32 %s19, %s26
    %s33 = sor.u32 %s31, %s32
    %p34 = scmp.eq.s32.totalorder %s33, 0
    %s36 = sadd.s32 %s35, 1
    %s37 = scalar_select %p34, %s35, %s36
    %p40 = pneg %p34
    %p41 = scmp.eq.s32.totalorder %s11, 1
    %p42 = por %p40, %p41
    %p43 = scmp.ne.s32.totalorder %s35, %s38
    %p44 = scmp.eq.s32.totalorder %s11, 0
    %p45 = por %p43, %p44
    %p46 = scmp.ne.s32.totalorder %s35, %s38
    %p47 = scmp.eq.s32.totalorder %s16, 1
    %p48 = por %p46, %p47
    %p49 = scmp.ne.s32.totalorder %s38, %s39
    %p50 = scmp.eq.s32.totalorder %s16, 0
    %p51 = por %p49, %p50
    %p52 = scmp.ne.s32.totalorder %s38, %s39
    %p53 = scmp.eq.s32.totalorder %s17, 1
    %p54 = por %p52, %p53
    %p56 = scmp.ne.s32.totalorder %s39, %s55
    %p57 = scmp.eq.s32.totalorder %s17, 0
    %p58 = por %p56, %p57
    %s59 = ssub.s32 %s18, %s30
    %p60 = scmp.eq.s32.totalorder %s59, 0
    %s62 = sadd.s32 %s61, 1
    %s63 = scalar_select %p60, %s61, %s62
    %p66 = pneg %p60
    %p67 = scmp.eq.s32.totalorder %s11, 1
    %p68 = por %p66, %p67
    %p69 = scmp.ne.s32.totalorder %s61, %s64
    %p70 = scmp.eq.s32.totalorder %s11, 0
    %p71 = por %p69, %p70
    %p72 = scmp.ne.s32.totalorder %s61, %s64
    %p73 = scmp.eq.s32.totalorder %s16, 1
    %p74 = por %p72, %p73
    %p75 = scmp.ne.s32.totalorder %s64, %s65
    %p76 = scmp.eq.s32.totalorder %s16, 0
    %p77 = por %p75, %p76
    %p78 = scmp.ne.s32.totalorder %s64, %s65
    %p79 = scmp.eq.s32.totalorder %s17, 1
    %p80 = por %p78, %p79
    %p82 = scmp.ne.s32.totalorder %s65, %s81
    %p83 = scmp.eq.s32.totalorder %s17, 0
    %p84 = por %p82, %p83
    %s85 = ssub.s32 %s18, %s30
    %p86 = scmp.eq.s32.totalorder %s85, 0
    %s88 = sadd.s32 %s87, 1
    %s89 = scalar_select %p86, %s87, %s88
    %p92 = pneg %p86
    %p93 = scmp.eq.s32.totalorder %s11, 1
    %p94 = por %p92, %p93
    %p95 = scmp.ne.s32.totalorder %s87, %s90
    %p96 = scmp.eq.s32.totalorder %s11, 0
    %p97 = por %p95, %p96
    %p98 = scmp.ne.s32.totalorder %s87, %s90
    %p99 = scmp.eq.s32.totalorder %s16, 1
    %p100 = por %p98, %p99
    %p101 = scmp.ne.s32.totalorder %s90, %s91
    %p102 = scmp.eq.s32.totalorder %s16, 0
    %p103 = por %p101, %p102
    %p104 = scmp.ne.s32.totalorder %s90, %s91
    %p105 = scmp.eq.s32.totalorder %s17, 1
    %p106 = por %p104, %p105
    %p108 = scmp.ne.s32.totalorder %s91, %s107
    %p109 = scmp.eq.s32.totalorder %s17, 0
    %p110 = por %p108, %p109
    %s112 = sadd.s32 %s111, 1
    %p115 = scmp.eq.s32.totalorder %s11, 1
    %p116 = scmp.ne.s32.totalorder %s111, %s113
    %p117 = scmp.eq.s32.totalorder %s11, 0
    %p118 = por %p116, %p117
    %p119 = scmp.ne.s32.totalorder %s111, %s113
    %p120 = scmp.eq.s32.totalorder %s16, 1
    %p121 = por %p119, %p120
    %p122 = scmp.ne.s32.totalorder %s113, %s114
    %p123 = scmp.eq.s32.totalorder %s16, 0
    %p124 = por %p122, %p123
    %p125 = scmp.ne.s32.totalorder %s113, %s114
    %p126 = scmp.eq.s32.totalorder %s17, 1
    %p127 = por %p125, %p126
    %p129 = scmp.ne.s32.totalorder %s114, %s128
    %p130 = scmp.eq.s32.totalorder %s17, 0
    %p131 = por %p129, %p130
    %s133 = sadd.s32 %s132, 1
    %p136 = scmp.eq.s32.totalorder %s11, 1
    %p137 = scmp.ne.s32.totalorder %s132, %s134
    %p138 = scmp.eq.s32.totalorder %s11, 0
    %p139 = por %p137, %p138
    %p140 = scmp.ne.s32.totalorder %s132, %s134
    %p141 = scmp.eq.s32.totalorder %s16, 1
    %p142 = por %p140, %p141
    %p143 = scmp.ne.s32.totalorder %s134, %s135
    %p144 = scmp.eq.s32.totalorder %s16, 0
    %p145 = por %p143, %p144
    %p146 = scmp.ne.s32.totalorder %s134, %s135
    %p147 = scmp.eq.s32.totalorder %s17, 1
    %p148 = por %p146, %p147
    %p150 = scmp.ne.s32.totalorder %s135, %s149
    %p151 = scmp.eq.s32.totalorder %s17, 0
    %p152 = por %p150, %p151
    %s153 = ssub.s32 %s18, %s30
    %s154 = ssub.s32 %s19, %s26
    %s155 = sor.u32 %s153, %s154
    %p156 = scmp.eq.s32.totalorder %s155, 0
    %s158 = sadd.s32 %s157, 1
    %s159 = scalar_select %p156, %s157, %s158
    %p162 = pneg %p156
    %p163 = scmp.eq.s32.totalorder %s11, 1
    %p164 = por %p162, %p163
    %p165 = scmp.ne.s32.totalorder %s157, %s160
    %p166 = scmp.eq.s32.totalorder %s11, 0
    %p167 = por %p165, %p166
    %p168 = scmp.ne.s32.totalorder %s157, %s160
    %p169 = scmp.eq.s32.totalorder %s16, 1
    %p170 = por %p168, %p169
    %p171 = scmp.ne.s32.totalorder %s160, %s161
    %p172 = scmp.eq.s32.totalorder %s16, 0
    %p173 = por %p171, %p172
    %p174 = scmp.ne.s32.totalorder %s160, %s161
    %p175 = scmp.eq.s32.totalorder %s17, 1
    %p176 = por %p174, %p175
    %p178 = scmp.ne.s32.totalorder %s161, %s177
    %p179 = scmp.eq.s32.totalorder %s17, 0
    %p180 = por %p178, %p179
    %p181 = scmp.le.s32.totalorder 1, %s11
    %p182 = scmp.lt.s32.totalorder %s11, 3
    %p183 = pnand %p181, %p182
    %p184 = pneg %p183
    // Predicated region
    $region9: #{model_forward.15} parent=5 // pred_check
      _
    $region10: #{model_forward.15} parent=5 // pred_check_branch
      %186 = sbr.rel (%p183) target = $region12
    $region11: #{model_forward.15} parent=5 // pred_region
      %s187 = ssub.s32 %s11, 1
      // Predicated region
      $region13: #{model_forward.15} parent=11 // pred_check
        %p188 = pneg %p124
      $region14: #{model_forward.15} parent=11 // pred_check_branch
        %190 = sbr.rel (%p188) target = $region16
      $region15: #{model_forward.15} parent=11 // pred_region
        _
      $region16: #{model_forward.15} parent=11 // pred_fallthru
        _
      // Predicated region
      $region17: #{model_forward.15} parent=11 // pred_check
        %p191 = pneg %p145
      $region18: #{model_forward.15} parent=11 // pred_check_branch
        %193 = sbr.rel (%p191) target = $region20
      $region19: #{model_forward.15} parent=11 // pred_region
        _
      $region20: #{model_forward.15} parent=11 // pred_fallthru
        _
    $region12: #{model_forward.15} parent=5 // pred_fallthru
      _
    %p194 = scmp.lt.s32.totalorder %s11, 2
    // Predicated region
    $region21: #{model_forward.15} parent=5 // pred_check
      %p195 = pneg %p194
    $region22: #{model_forward.15} parent=5 // pred_check_branch
      %197 = sbr.rel (%p195) target = $region24
    $region23: #{model_forward.15} parent=5 // pred_region
      // Predicated region
      $region25: #{model_forward.15} parent=23 // pred_check
        %p198 = pneg %p45
      $region26: #{model_forward.15} parent=23 // pred_check_branch
        %200 = sbr.rel (%p198) target = $region28
      $region27: #{model_forward.15} parent=23 // pred_region
        %s201 = smul.u32 8, %s19
        %p202 = scmp.lt.s32.totalorder %s18, 1
        %s203 = scalar_select %p202, %s18, 1
        %p204 = scmp.lt.s32.totalorder %s201, 7
        %s205 = scalar_select %p204, %s201, 7
        %s206 = smul.addr %s203, 8
        %s207 = sadd.s32 %s205, %s206
        %s208 = smul.addr %s207, 4
        %s209 = scalar_lea.vmem %s0, %s208
        %s210 = smul.u32 8, %s19
      $region28: #{model_forward.15} parent=23 // pred_fallthru
        _
      // Predicated region
      $region29: #{model_forward.15} parent=23 // pred_check
        %p211 = pneg %p71
      $region30: #{model_forward.15} parent=23 // pred_check_branch
        %213 = sbr.rel (%p211) target = $region32
      $region31: #{model_forward.15} parent=23 // pred_region
        %p214 = scmp.lt.s32.totalorder %s18, 1
        %s215 = scalar_select %p214, %s18, 1
        %s216 = scalar_lea.vmem %s1, %s215
      $region32: #{model_forward.15} parent=23 // pred_fallthru
        _
      // Predicated region
      $region33: #{model_forward.15} parent=23 // pred_check
        %p217 = pneg %p97
      $region34: #{model_forward.15} parent=23 // pred_check_branch
        %219 = sbr.rel (%p217) target = $region36
      $region35: #{model_forward.15} parent=23 // pred_region
        %p220 = scmp.lt.s32.totalorder %s18, 1
        %s221 = scalar_select %p220, %s18, 1
        %s222 = scalar_lea.vmem %s2, %s221
      $region36: #{model_forward.15} parent=23 // pred_fallthru
        _
    $region24: #{model_forward.15} parent=5 // pred_fallthru
      _
    %p223 = scmp.le.s32.totalorder 1, %s11
    %p224 = scmp.lt.s32.totalorder %s11, 3
    %p225 = pnand %p223, %p224
    %p226 = pneg %p225
    // Predicated region
    $region37: #{model_forward.15} parent=5 // pred_check
      _
    $region38: #{model_forward.15} parent=5 // pred_check_branch
      %228 = sbr.rel (%p225) target = $region40
    $region39: #{model_forward.15} parent=5 // pred_region
      %s229 = ssub.s32 %s11, 1
      %s230 = smul.u32 8, %s21
      %p231 = scmp.lt.s32.totalorder %s20, 1
      %s232 = scalar_select %p231, %s20, 1
      %p233 = scmp.lt.s32.totalorder %s230, 7
      %s234 = scalar_select %p233, %s230, 7
      %s235 = smul.addr %s232, 8
      %s236 = sadd.s32 %s234, %s235
      %s237 = smul.addr %s236, 4
      %s238 = scalar_lea.vmem %s0, %s237
      %p239 = pneg %p51
      %p240 = pneg %p48
      %p241 = scmp.lt.s32.totalorder %s20, 1
      %s242 = scalar_select %p241, %s20, 1
      %s243 = scalar_lea.vmem %s1, %s242
      %p244 = pneg %p77
      %p245 = pneg %p74
      %p246 = scmp.lt.s32.totalorder %s20, 1
      %s247 = scalar_select %p246, %s20, 1
      %s248 = scalar_lea.vmem %s2, %s247
      %p249 = pneg %p103
      %p250 = pneg %p100
      %p251 = pneg %p124
      %p252 = pneg %p121
      %p253 = pneg %p145
      %p254 = pneg %p142
      %p255 = pneg %p173
      %p256 = pneg %p170
      %s257 = smul.u32 8, %s21
      %p258 = scmp.lt.s32.totalorder %s20, 1
      %s259 = scalar_select %p258, %s20, 1
      %p260 = scmp.lt.s32.totalorder %s257, 7
      %s261 = scalar_select %p260, %s257, 7
      %s262 = smul.addr %s259, 8
      %s263 = sadd.s32 %s261, %s262
      %s264 = smul.addr %s263, 4
      %s265 = scalar_lea.vmem %s5, %s264
      %s266 = smul.u32 8, %s21
      %p267 = scmp.lt.s32.totalorder %s20, 1
      %s268 = scalar_select %p267, %s20, 1
      %p269 = scmp.lt.s32.totalorder %s266, 7
      %s270 = scalar_select %p269, %s266, 7
      %s271 = smul.addr %s268, 8
      %s272 = sadd.s32 %s270, %s271
      %s273 = smul.addr %s272, 4
      %s274 = scalar_lea.vmem %s0, %s273
      %s275 = smul.u32 8, %s21
      %p276 = scmp.lt.s32.totalorder %s20, 1
      %s277 = scalar_select %p276, %s20, 1
      %s278 = scalar_lea.vmem %s1, %s277
      %p279 = scmp.lt.s32.totalorder %s20, 1
      %s280 = scalar_select %p279, %s20, 1
      %s281 = scalar_lea.vmem %s2, %s280
      %s282 = smul.u32 8, %s21
      %p283 = scmp.lt.s32.totalorder %s20, 1
      %s284 = scalar_select %p283, %s20, 1
      %p285 = scmp.lt.s32.totalorder %s282, 7
      %s286 = scalar_select %p285, %s282, 7
      %s287 = smul.addr %s284, 8
      %s288 = sadd.s32 %s286, %s287
      %s289 = smul.addr %s288, 4
      %s290 = scalar_lea.vmem %s5, %s289
      %s291 = smul.u32 8, %s21
      %v293 = vld [vmem:[%s274] sm:$0xf]
      %v294 = vld [vmem:[%s274 + $0x4] sm:$0xf]
      %v295 = vld [vmem:[%s274 + $0x8] sm:$0xf]
      %v296 = vld [vmem:[%s274 + $0xc] sm:$0xf]
      %v297 = vld [vmem:[%s274 + $0x10] sm:$0xf]
      %v298 = vld [vmem:[%s274 + $0x14] sm:$0xf]
      %v299 = vld [vmem:[%s274 + $0x18] sm:$0xf]
      %v300 = vld [vmem:[%s274 + $0x1c] sm:$0xf]
      %v301 = vld [vmem:[%s278] sm:$0x1]
      %v303 = vpack.i.b16 %v301, %v301
      %v305 = vperm.slane %v303, 0
      %v306 = vunpack.c.l.bf16 %v293
      %v307 = vunpack.c.l.bf16 %v294
      %v308 = vunpack.c.l.bf16 %v295
      %v309 = vunpack.c.l.bf16 %v296
      %v310 = vunpack.c.l.bf16 %v297
      %v311 = vunpack.c.l.bf16 %v298
      %v312 = vunpack.c.l.bf16 %v299
      %v313 = vunpack.c.l.bf16 %v300
      %v314 = vunpack.c.l.bf16 %v305
      %v315 = vmul.f32 %v306, %v314
      %v316 = vmul.f32 %v307, %v314
      %v317 = vmul.f32 %v308, %v314
      %v318 = vmul.f32 %v309, %v314
      %v319 = vmul.f32 %v310, %v314
      %v320 = vmul.f32 %v311, %v314
      %v321 = vmul.f32 %v312, %v314
      %v322 = vmul.f32 %v313, %v314
      %v323 = vpack.c.bf16 %v315, %v315
      %v324 = vpack.c.bf16 %v316, %v316
      %v325 = vpack.c.bf16 %v317, %v317
      %v326 = vpack.c.bf16 %v318, %v318
      %v327 = vpack.c.bf16 %v319, %v319
      %v328 = vpack.c.bf16 %v320, %v320
      %v329 = vpack.c.bf16 %v321, %v321
      %v330 = vpack.c.bf16 %v322, %v322
      %v331 = vld [vmem:[%s281] sm:$0x1]
      %v333 = vpack.i.b16 %v331, %v331
      %v335 = vperm.slane %v333, 0
      %v336 = vunpack.c.l.bf16 %v323
      %v337 = vunpack.c.l.bf16 %v324
      %v338 = vunpack.c.l.bf16 %v325
      %v339 = vunpack.c.l.bf16 %v326
      %v340 = vunpack.c.l.bf16 %v327
      %v341 = vunpack.c.l.bf16 %v328
      %v342 = vunpack.c.l.bf16 %v329
      %v343 = vunpack.c.l.bf16 %v330
      %v344 = vunpack.c.l.bf16 %v335
      %v345 = vadd.f32 %v336, %v344
      %v346 = vadd.f32 %v337, %v344
      %v347 = vadd.f32 %v338, %v344
      %v348 = vadd.f32 %v339, %v344
      %v349 = vadd.f32 %v340, %v344
      %v350 = vadd.f32 %v341, %v344
      %v351 = vadd.f32 %v342, %v344
      %v352 = vadd.f32 %v343, %v344
      %v353 = vpack.c.bf16 %v345, %v345
      %v354 = vpack.c.bf16 %v346, %v346
      %v355 = vpack.c.bf16 %v347, %v347
      %v356 = vpack.c.bf16 %v348, %v348
      %v357 = vpack.c.bf16 %v349, %v349
      %v358 = vpack.c.bf16 %v350, %v350
      %v359 = vpack.c.bf16 %v351, %v351
      %v360 = vpack.c.bf16 %v352, %v352
      %v361 = vunpack.c.l.bf16 %v353
      %v362 = vunpack.c.l.bf16 %v354
      %v363 = vunpack.c.l.bf16 %v355
      %v364 = vunpack.c.l.bf16 %v356
      %v365 = vunpack.c.l.bf16 %v357
      %v366 = vunpack.c.l.bf16 %v358
      %v367 = vunpack.c.l.bf16 %v359
      %v368 = vunpack.c.l.bf16 %v360
      %v369 = vmax.f32 %v361, 0.0
      %v370 = vmax.f32 %v362, 0.0
      %v371 = vmax.f32 %v363, 0.0
      %v372 = vmax.f32 %v364, 0.0
      %v373 = vmax.f32 %v365, 0.0
      %v374 = vmax.f32 %v366, 0.0
      %v375 = vmax.f32 %v367, 0.0
      %v376 = vmax.f32 %v368, 0.0
      %v377 = vpack.c.bf16 %v370, %v369
      %v378 = vpack.c.bf16 %v372, %v371
      %v379 = vpack.c.bf16 %v374, %v373
      %v380 = vpack.c.bf16 %v376, %v375
      %v381 = vld [vmem:[%s3] sm:$0xf]
      %v382 = vld [vmem:[%s3 + $0x4] sm:$0xf]
      %v383 = vld [vmem:[%s3 + $0x8] sm:$0xf]
      %v384 = vld [vmem:[%s3 + $0xc] sm:$0xf]
      %v385 = vld [vmem:[%s4] sm:$0x1]
      %v387 = vperm.slane %v385, 0
      %v393 = vunpack.c.l.b16 %v381
      %v394 = vunpack.c.l.b16 %v382
      %v395 = vunpack.c.l.b16 %v383
      %v396 = vunpack.c.l.b16 %v384
      %v397 = vpack.c.b16 %v394, %v393
      %v398 = vpack.c.b16 %v396, %v395
      %vm401 = vcmask 261120
      %v403 = vsel %vm401, %v377, 0
      %v406 = vsel %vm401, %v378, 0
      %v409 = vsel %vm401, %v379, 0
      %v412 = vsel %vm401, %v380, 0
      %414 = vmatpush.bf16.msra.mxu0 0
      %415 = vmatpush.bf16.msra.mxu0 0
      %416 = vmatpush.bf16.msra.mxu0 0
      %417 = vmatpush.bf16.msra.mxu0 0
      %418 = vmatpush.bf16.msra.mxu0 0
      %419 = vmatpush.bf16.msra.mxu0 0
      %420 = vmatpush.bf16.msra.mxu0 %v398
      %421 = vmatpush.bf16.msra.mxu0 %v397
      %422 = vmatmul.bf16.gmra.mxu0 %v403
      %v423 = vpop.f32.mrf.mxu0
      %v424 = vadd.f32 %v387, %v423
      %v425 = vpop.f32.mrf.mxu0
      %v426 = vadd.f32 %v387, %v425
      %427 = vmatmul.bf16.gmra.mxu0 %v406
      %v428 = vpop.f32.mrf.mxu0
      %v429 = vadd.f32 %v387, %v428
      %v430 = vpop.f32.mrf.mxu0
      %v431 = vadd.f32 %v387, %v430
      %432 = vmatmul.bf16.gmra.mxu0 %v409
      %v433 = vpop.f32.mrf.mxu0
      %v434 = vadd.f32 %v387, %v433
      %v435 = vpop.f32.mrf.mxu0
      %v436 = vadd.f32 %v387, %v435
      %437 = vmatmul.bf16.gmra.mxu0 %v412
      %v438 = vpop.f32.mrf.mxu0
      %v439 = vadd.f32 %v387, %v438
      %v440 = vpop.f32.mrf.mxu0
      %v441 = vadd.f32 %v387, %v440
      %442 = vdwg.mxu0
      %v443 = vmax.f32 %v424, 0.0
      %v444 = vmax.f32 %v426, 0.0
      %v445 = vmax.f32 %v429, 0.0
      %v446 = vmax.f32 %v431, 0.0
      %v447 = vmax.f32 %v434, 0.0
      %v448 = vmax.f32 %v436, 0.0
      %v449 = vmax.f32 %v439, 0.0
      %v450 = vmax.f32 %v441, 0.0
      %v451 = vpack.c.bf16 %v443, %v443
      %v452 = vpack.c.bf16 %v444, %v444
      %v453 = vpack.c.bf16 %v445, %v445
      %v454 = vpack.c.bf16 %v446, %v446
      %v455 = vpack.c.bf16 %v447, %v447
      %v456 = vpack.c.bf16 %v448, %v448
      %v457 = vpack.c.bf16 %v449, %v449
      %v458 = vpack.c.bf16 %v450, %v450
      %vm459 = vcmask 257024
      %460 = vst.msk [vmem:[%s290] sm:$0xf] %vm459, %v451
      %461 = vst.msk [vmem:[%s290 + $0x4] sm:$0xf] %vm459, %v452
      %462 = vst.msk [vmem:[%s290 + $0x8] sm:$0xf] %vm459, %v453
      %463 = vst.msk [vmem:[%s290 + $0xc] sm:$0xf] %vm459, %v454
      %464 = vst.msk [vmem:[%s290 + $0x10] sm:$0xf] %vm459, %v455
      %465 = vst.msk [vmem:[%s290 + $0x14] sm:$0xf] %vm459, %v456
      %466 = vst.msk [vmem:[%s290 + $0x18] sm:$0xf] %vm459, %v457
      %467 = vst.msk [vmem:[%s290 + $0x1c] sm:$0xf] %vm459, %v458
      %s468 = smul.u32 8, %s21
      %p469 = scmp.lt.s32.totalorder %s20, 1
      %s470 = scalar_select %p469, %s20, 1
      %p471 = scmp.lt.s32.totalorder %s468, 7
      %s472 = scalar_select %p471, %s468, 7
      %s473 = smul.addr %s470, 8
      %s474 = sadd.s32 %s472, %s473
      %s475 = smul.addr %s474, 4
      %s476 = scalar_lea.vmem %s5, %s475
      // Predicated region
      $region41: #{model_forward.15} parent=39 // pred_check
        %p477 = pneg %p170
      $region42: #{model_forward.15} parent=39 // pred_check_branch
        %479 = sbr.rel (%p477) target = $region44
      $region43: #{model_forward.15} parent=39 // pred_region
        %s480 = smul.u32 8, %s21
      $region44: #{model_forward.15} parent=39 // pred_fallthru
        _
    $region40: #{model_forward.15} parent=5 // pred_fallthru
      _
    %p481 = scmp.le.s32.totalorder 2, %s11
    // Predicated region
    $region45: #{model_forward.15} parent=5 // pred_check
      %p482 = pneg %p481
    $region46: #{model_forward.15} parent=5 // pred_check_branch
      %484 = sbr.rel (%p482) target = $region48
    $region47: #{model_forward.15} parent=5 // pred_region
      %s485 = ssub.s32 %s11, 2
      // Predicated region
      $region49: #{model_forward.15} parent=47 // pred_check
        %p486 = pneg %p176
      $region50: #{model_forward.15} parent=47 // pred_check_branch
        %488 = sbr.rel (%p486) target = $region52
      $region51: #{model_forward.15} parent=47 // pred_region
        %s489 = smul.u32 8, %s23
        %p490 = scmp.lt.s32.totalorder %s22, 1
        %s491 = scalar_select %p490, %s22, 1
        %p492 = scmp.lt.s32.totalorder %s489, 7
        %s493 = scalar_select %p492, %s489, 7
        %s494 = smul.addr %s491, 8
        %s495 = sadd.s32 %s493, %s494
        %s496 = smul.addr %s495, 4
        %s497 = scalar_lea.vmem %s5, %s496
      $region52: #{model_forward.15} parent=47 // pred_fallthru
        _
    $region48: #{model_forward.15} parent=5 // pred_fallthru
      _
  $region6: #{model_forward.15} parent=0 // loop_footer
    %s15 = sadd.s32 1, %s11
  $region7: #{model_forward.15} parent=0 // loop_footer_branch
    %10 = sbr.rel target = $region3
  $region8: #{model_forward.15} parent=0 // loop_exit
    _

// kernel: model_forward.14
$region0: #{model_forward.14}
  #allocation0 [shape = 'u32[]', space=smem, size = 0x4, offset = 0x4, fixed_abs, tag = 'smem constant byte address 0x4 - core index']
  #allocation1 [shape = 'u32[72,128]{1,0:T(1,128)}', space=vmem, size = 0x9000, scoped, tag = 'internal scratch']
  %s0 = inlined_call_operand.vmem [shape: bf16[2,256,32], index: 0, kind: input, shape index: {}]
  %s1 = inlined_call_operand.vmem [shape: bf16[2,256,16], index: 1, kind: input, shape index: {}]
  %s2 = inlined_call_operand.vmem [shape: bf16[2,256,16], index: 2, kind: input, shape index: {}]
  %s3 = inlined_call_operand.vmem [shape: bf16[2,1,32], index: 3, kind: input, shape index: {}]
  %s4 = inlined_call_operand.vmem [shape: bf16[2,1,16], index: 4, kind: input, shape index: {}]
  %s5 = inlined_call_operand.vmem [shape: bf16[2,1,16], index: 5, kind: input, shape index: {}]
  %s6 = inlined_call_operand.vmem [shape: bf16[2,1,32], index: 6, kind: input, shape index: {}]
  %s7 = inlined_call_operand.vmem [shape: bf16[2,1,16], index: 7, kind: input, shape index: {}]
  %s8 = inlined_call_operand.vmem [shape: bf16[2,1,16], index: 8, kind: input, shape index: {}]
  %s9 = inlined_call_operand.vmem [shape: bf16[32,32], index: 9, kind: input, shape index: {}]
  %s10 = inlined_call_operand.vmem [shape: bf16[16,32], index: 10, kind: input, shape index: {}]
  %s11 = inlined_call_operand.vmem [shape: bf16[16,32], index: 11, kind: input, shape index: {}]
  %s12 = inlined_call_operand.vmem [shape: f32[1,32], index: 12, kind: input, shape index: {}]
  %s13 = inlined_call_operand.vmem [shape: bf16[2,256,32], index: 13, kind: output, shape index: {0}]
  %s14 = inlined_call_operand.vmem [shape: f32[2,1,32], index: 14, kind: output, shape index: {1}]
  %15 = xla_tuple %s13, %s14
  %s16 = sld [smem:[#allocation0]]
  $region101: #{model_forward.14} parent=0
    _
  %s18 = ssub.s32 1, %s16
  %s19 = scalar_select 0, %s18, %s16
  loop: start=0, step=1, limit=4
  $region2: #{model_forward.14} parent=0 // loop_pre_header
    _
  $region3: #{model_forward.14} parent=0 // loop_header
    %s21 = sphi 0, %s25
    %p22 = scmp.ge.s32.totalorder %s21, 4
    %s28 = sphi 0, %s40
    %s29 = sphi 0, %s36
    %s30 = sphi 0, %s28
    %s31 = sphi 0, %s29
    %s32 = sphi 0, %s30
    %s33 = sphi 0, %s31
    %s45 = sphi 0, %s47
    %s48 = sphi 0, %s45
    %s49 = sphi 0, %s48
    %s65 = sphi 0, %s49
    %s73 = sphi 0, %s75
    %s76 = sphi 0, %s73
    %s77 = sphi 0, %s76
    %s93 = sphi 0, %s77
    %s101 = sphi 0, %s103
    %s104 = sphi 0, %s101
    %s105 = sphi 0, %s104
    %s121 = sphi 0, %s105
    %s127 = sphi 0, %s129
    %s130 = sphi 0, %s127
    %s131 = sphi 0, %s130
    %s147 = sphi 0, %s131
    %s153 = sphi 0, %s155
    %s156 = sphi 0, %s153
    %s157 = sphi 0, %s156
    %s173 = sphi 0, %s157
    %s179 = sphi 0, %s181
    %s182 = sphi 0, %s179
    %s183 = sphi 0, %s182
    %s199 = sphi 0, %s183
    %s205 = sphi 0, %s207
    %s208 = sphi 0, %s205
    %s209 = sphi 0, %s208
    %s225 = sphi 0, %s209
    %s231 = sphi 0, %s233
    %s234 = sphi 0, %s231
    %s235 = sphi 0, %s234
    %s251 = sphi 0, %s235
    %s257 = sphi 0, %s259
    %s260 = sphi 0, %s257
    %s261 = sphi 0, %s260
    %s277 = sphi 0, %s261
    %s281 = sphi 0, %s281
    %s283 = sphi 0, %s281
    %s284 = sphi 0, %s283
    %s298 = sphi 0, %s284
    %s302 = sphi 0, %s302
    %s304 = sphi 0, %s302
    %s305 = sphi 0, %s304
    %s319 = sphi 0, %s305
    %s323 = sphi 0, %s323
    %s325 = sphi 0, %s323
    %s326 = sphi 0, %s325
    %s340 = sphi 0, %s326
    %s344 = sphi 0, %s344
    %s346 = sphi 0, %s344
    %s347 = sphi 0, %s346
    %s361 = sphi 0, %s347
    %s369 = sphi 0, %s371
    %s372 = sphi 0, %s369
    %s373 = sphi 0, %s372
    %s389 = sphi 0, %s373
    %s395 = sphi 0, %s397
    %s398 = sphi 0, %s395
    %s399 = sphi 0, %s398
    %s415 = sphi 0, %s399
  $region4: #{model_forward.14} parent=0 // loop_header_branch
    %24 = sbr.rel (%p22) target = $region8
  $region5: #{model_forward.14} parent=0 // loop_body
    %s26 = ssub.s32 %s21, 1
    %s27 = ssub.s32 %s21, 2
    %s34 = sadd.s32 1, %s29
    %p35 = scmp.ge.s32.totalorder %s34, 1
    %s36 = scalar_select %p35, 0, %s34
    %s37 = sadd.s32 1, %s28
    %s38 = scalar_select %p35, %s37, %s28
    %p39 = scmp.ge.s32.totalorder %s38, 2
    %s40 = scalar_select %p39, 0, %s38
    %s41 = ssub.s32 %s28, %s40
    %s42 = ssub.s32 %s29, %s36
    %s43 = sor.u32 %s41, %s42
    %p44 = scmp.eq.s32.totalorder %s43, 0
    %s46 = sadd.s32 %s45, 1
    %s47 = scalar_select %p44, %s45, %s46
    %p50 = pneg %p44
    %p51 = scmp.eq.s32.totalorder %s21, 1
    %p52 = por %p50, %p51
    %p53 = scmp.ne.s32.totalorder %s45, %s48
    %p54 = scmp.eq.s32.totalorder %s21, 0
    %p55 = por %p53, %p54
    %p56 = scmp.ne.s32.totalorder %s45, %s48
    %p57 = scmp.eq.s32.totalorder %s26, 1
    %p58 = por %p56, %p57
    %p59 = scmp.ne.s32.totalorder %s48, %s49
    %p60 = scmp.eq.s32.totalorder %s26, 0
    %p61 = por %p59, %p60
    %p62 = scmp.ne.s32.totalorder %s48, %s49
    %p63 = scmp.eq.s32.totalorder %s27, 1
    %p64 = por %p62, %p63
    %p66 = scmp.ne.s32.totalorder %s49, %s65
    %p67 = scmp.eq.s32.totalorder %s27, 0
    %p68 = por %p66, %p67
    %s69 = ssub.s32 %s28, %s40
    %s70 = ssub.s32 %s29, %s36
    %s71 = sor.u32 %s69, %s70
    %p72 = scmp.eq.s32.totalorder %s71, 0
    %s74 = sadd.s32 %s73, 1
    %s75 = scalar_select %p72, %s73, %s74
    %p78 = pneg %p72
    %p79 = scmp.eq.s32.totalorder %s21, 1
    %p80 = por %p78, %p79
    %p81 = scmp.ne.s32.totalorder %s73, %s76
    %p82 = scmp.eq.s32.totalorder %s21, 0
    %p83 = por %p81, %p82
    %p84 = scmp.ne.s32.totalorder %s73, %s76
    %p85 = scmp.eq.s32.totalorder %s26, 1
    %p86 = por %p84, %p85
    %p87 = scmp.ne.s32.totalorder %s76, %s77
    %p88 = scmp.eq.s32.totalorder %s26, 0
    %p89 = por %p87, %p88
    %p90 = scmp.ne.s32.totalorder %s76, %s77
    %p91 = scmp.eq.s32.totalorder %s27, 1
    %p92 = por %p90, %p91
    %p94 = scmp.ne.s32.totalorder %s77, %s93
    %p95 = scmp.eq.s32.totalorder %s27, 0
    %p96 = por %p94, %p95
    %s97 = ssub.s32 %s28, %s40
    %s98 = ssub.s32 %s29, %s36
    %s99 = sor.u32 %s97, %s98
    %p100 = scmp.eq.s32.totalorder %s99, 0
    %s102 = sadd.s32 %s101, 1
    %s103 = scalar_select %p100, %s101, %s102
    %p106 = pneg %p100
    %p107 = scmp.eq.s32.totalorder %s21, 1
    %p108 = por %p106, %p107
    %p109 = scmp.ne.s32.totalorder %s101, %s104
    %p110 = scmp.eq.s32.totalorder %s21, 0
    %p111 = por %p109, %p110
    %p112 = scmp.ne.s32.totalorder %s101, %s104
    %p113 = scmp.eq.s32.totalorder %s26, 1
    %p114 = por %p112, %p113
    %p115 = scmp.ne.s32.totalorder %s104, %s105
    %p116 = scmp.eq.s32.totalorder %s26, 0
    %p117 = por %p115, %p116
    %p118 = scmp.ne.s32.totalorder %s104, %s105
    %p119 = scmp.eq.s32.totalorder %s27, 1
    %p120 = por %p118, %p119
    %p122 = scmp.ne.s32.totalorder %s105, %s121
    %p123 = scmp.eq.s32.totalorder %s27, 0
    %p124 = por %p122, %p123
    %s125 = ssub.s32 %s28, %s40
    %p126 = scmp.eq.s32.totalorder %s125, 0
    %s128 = sadd.s32 %s127, 1
    %s129 = scalar_select %p126, %s127, %s128
    %p132 = pneg %p126
    %p133 = scmp.eq.s32.totalorder %s21, 1
    %p134 = por %p132, %p133
    %p135 = scmp.ne.s32.totalorder %s127, %s130
    %p136 = scmp.eq.s32.totalorder %s21, 0
    %p137 = por %p135, %p136
    %p138 = scmp.ne.s32.totalorder %s127, %s130
    %p139 = scmp.eq.s32.totalorder %s26, 1
    %p140 = por %p138, %p139
    %p141 = scmp.ne.s32.totalorder %s130, %s131
    %p142 = scmp.eq.s32.totalorder %s26, 0
    %p143 = por %p141, %p142
    %p144 = scmp.ne.s32.totalorder %s130, %s131
    %p145 = scmp.eq.s32.totalorder %s27, 1
    %p146 = por %p144, %p145
    %p148 = scmp.ne.s32.totalorder %s131, %s147
    %p149 = scmp.eq.s32.totalorder %s27, 0
    %p150 = por %p148, %p149
    %s151 = ssub.s32 %s28, %s40
    %p152 = scmp.eq.s32.totalorder %s151, 0
    %s154 = sadd.s32 %s153, 1
    %s155 = scalar_select %p152, %s153, %s154
    %p158 = pneg %p152
    %p159 = scmp.eq.s32.totalorder %s21, 1
    %p160 = por %p158, %p159
    %p161 = scmp.ne.s32.totalorder %s153, %s156
    %p162 = scmp.eq.s32.totalorder %s21, 0
    %p163 = por %p161, %p162
    %p164 = scmp.ne.s32.totalorder %s153, %s156
    %p165 = scmp.eq.s32.totalorder %s26, 1
    %p166 = por %p164, %p165
    %p167 = scmp.ne.s32.totalorder %s156, %s157
    %p168 = scmp.eq.s32.totalorder %s26, 0
    %p169 = por %p167, %p168
    %p170 = scmp.ne.s32.totalorder %s156, %s157
    %p171 = scmp.eq.s32.totalorder %s27, 1
    %p172 = por %p170, %p171
    %p174 = scmp.ne.s32.totalorder %s157, %s173
    %p175 = scmp.eq.s32.totalorder %s27, 0
    %p176 = por %p174, %p175
    %s177 = ssub.s32 %s28, %s40
    %p178 = scmp.eq.s32.totalorder %s177, 0
    %s180 = sadd.s32 %s179, 1
    %s181 = scalar_select %p178, %s179, %s180
    %p184 = pneg %p178
    %p185 = scmp.eq.s32.totalorder %s21, 1
    %p186 = por %p184, %p185
    %p187 = scmp.ne.s32.totalorder %s179, %s182
    %p188 = scmp.eq.s32.totalorder %s21, 0
    %p189 = por %p187, %p188
    %p190 = scmp.ne.s32.totalorder %s179, %s182
    %p191 = scmp.eq.s32.totalorder %s26, 1
    %p192 = por %p190, %p191
    %p193 = scmp.ne.s32.totalorder %s182, %s183
    %p194 = scmp.eq.s32.totalorder %s26, 0
    %p195 = por %p193, %p194
    %p196 = scmp.ne.s32.totalorder %s182, %s183
    %p197 = scmp.eq.s32.totalorder %s27, 1
    %p198 = por %p196, %p197
    %p200 = scmp.ne.s32.totalorder %s183, %s199
    %p201 = scmp.eq.s32.totalorder %s27, 0
    %p202 = por %p200, %p201
    %s203 = ssub.s32 %s28, %s40
    %p204 = scmp.eq.s32.totalorder %s203, 0
    %s206 = sadd.s32 %s205, 1
    %s207 = scalar_select %p204, %s205, %s206
    %p210 = pneg %p204
    %p211 = scmp.eq.s32.totalorder %s21, 1
    %p212 = por %p210, %p211
    %p213 = scmp.ne.s32.totalorder %s205, %s208
    %p214 = scmp.eq.s32.totalorder %s21, 0
    %p215 = por %p213, %p214
    %p216 = scmp.ne.s32.totalorder %s205, %s208
    %p217 = scmp.eq.s32.totalorder %s26, 1
    %p218 = por %p216, %p217
    %p219 = scmp.ne.s32.totalorder %s208, %s209
    %p220 = scmp.eq.s32.totalorder %s26, 0
    %p221 = por %p219, %p220
    %p222 = scmp.ne.s32.totalorder %s208, %s209
    %p223 = scmp.eq.s32.totalorder %s27, 1
    %p224 = por %p222, %p223
    %p226 = scmp.ne.s32.totalorder %s209, %s225
    %p227 = scmp.eq.s32.totalorder %s27, 0
    %p228 = por %p226, %p227
    %s229 = ssub.s32 %s28, %s40
    %p230 = scmp.eq.s32.totalorder %s229, 0
    %s232 = sadd.s32 %s231, 1
    %s233 = scalar_select %p230, %s231, %s232
    %p236 = pneg %p230
    %p237 = scmp.eq.s32.totalorder %s21, 1
    %p238 = por %p236, %p237
    %p239 = scmp.ne.s32.totalorder %s231, %s234
    %p240 = scmp.eq.s32.totalorder %s21, 0
    %p241 = por %p239, %p240
    %p242 = scmp.ne.s32.totalorder %s231, %s234
    %p243 = scmp.eq.s32.totalorder %s26, 1
    %p244 = por %p242, %p243
    %p245 = scmp.ne.s32.totalorder %s234, %s235
    %p246 = scmp.eq.s32.totalorder %s26, 0
    %p247 = por %p245, %p246
    %p248 = scmp.ne.s32.totalorder %s234, %s235
    %p249 = scmp.eq.s32.totalorder %s27, 1
    %p250 = por %p248, %p249
    %p252 = scmp.ne.s32.totalorder %s235, %s251
    %p253 = scmp.eq.s32.totalorder %s27, 0
    %p254 = por %p252, %p253
    %s255 = ssub.s32 %s28, %s40
    %p256 = scmp.eq.s32.totalorder %s255, 0
    %s258 = sadd.s32 %s257, 1
    %s259 = scalar_select %p256, %s257, %s258
    %p262 = pneg %p256
    %p263 = scmp.eq.s32.totalorder %s21, 1
    %p264 = por %p262, %p263
    %p265 = scmp.ne.s32.totalorder %s257, %s260
    %p266 = scmp.eq.s32.totalorder %s21, 0
    %p267 = por %p265, %p266
    %p268 = scmp.ne.s32.totalorder %s257, %s260
    %p269 = scmp.eq.s32.totalorder %s26, 1
    %p270 = por %p268, %p269
    %p271 = scmp.ne.s32.totalorder %s260, %s261
    %p272 = scmp.eq.s32.totalorder %s26, 0
    %p273 = por %p271, %p272
    %p274 = scmp.ne.s32.totalorder %s260, %s261
    %p275 = scmp.eq.s32.totalorder %s27, 1
    %p276 = por %p274, %p275
    %p278 = scmp.ne.s32.totalorder %s261, %s277
    %p279 = scmp.eq.s32.totalorder %s27, 0
    %p280 = por %p278, %p279
    %s282 = sadd.s32 %s281, 1
    %p285 = scmp.eq.s32.totalorder %s21, 1
    %p286 = scmp.ne.s32.totalorder %s281, %s283
    %p287 = scmp.eq.s32.totalorder %s21, 0
    %p288 = por %p286, %p287
    %p289 = scmp.ne.s32.totalorder %s281, %s283
    %p290 = scmp.eq.s32.totalorder %s26, 1
    %p291 = por %p289, %p290
    %p292 = scmp.ne.s32.totalorder %s283, %s284
    %p293 = scmp.eq.s32.totalorder %s26, 0
    %p294 = por %p292, %p293
    %p295 = scmp.ne.s32.totalorder %s283, %s284
    %p296 = scmp.eq.s32.totalorder %s27, 1
    %p297 = por %p295, %p296
    %p299 = scmp.ne.s32.totalorder %s284, %s298
    %p300 = scmp.eq.s32.totalorder %s27, 0
    %p301 = por %p299, %p300
    %s303 = sadd.s32 %s302, 1
    %p306 = scmp.eq.s32.totalorder %s21, 1
    %p307 = scmp.ne.s32.totalorder %s302, %s304
    %p308 = scmp.eq.s32.totalorder %s21, 0
    %p309 = por %p307, %p308
    %p310 = scmp.ne.s32.totalorder %s302, %s304
    %p311 = scmp.eq.s32.totalorder %s26, 1
    %p312 = por %p310, %p311
    %p313 = scmp.ne.s32.totalorder %s304, %s305
    %p314 = scmp.eq.s32.totalorder %s26, 0
    %p315 = por %p313, %p314
    %p316 = scmp.ne.s32.totalorder %s304, %s305
    %p317 = scmp.eq.s32.totalorder %s27, 1
    %p318 = por %p316, %p317
    %p320 = scmp.ne.s32.totalorder %s305, %s319
    %p321 = scmp.eq.s32.totalorder %s27, 0
    %p322 = por %p320, %p321
    %s324 = sadd.s32 %s323, 1
    %p327 = scmp.eq.s32.totalorder %s21, 1
    %p328 = scmp.ne.s32.totalorder %s323, %s325
    %p329 = scmp.eq.s32.totalorder %s21, 0
    %p330 = por %p328, %p329
    %p331 = scmp.ne.s32.totalorder %s323, %s325
    %p332 = scmp.eq.s32.totalorder %s26, 1
    %p333 = por %p331, %p332
    %p334 = scmp.ne.s32.totalorder %s325, %s326
    %p335 = scmp.eq.s32.totalorder %s26, 0
    %p336 = por %p334, %p335
    %p337 = scmp.ne.s32.totalorder %s325, %s326
    %p338 = scmp.eq.s32.totalorder %s27, 1
    %p339 = por %p337, %p338
    %p341 = scmp.ne.s32.totalorder %s326, %s340
    %p342 = scmp.eq.s32.totalorder %s27, 0
    %p343 = por %p341, %p342
    %s345 = sadd.s32 %s344, 1
    %p348 = scmp.eq.s32.totalorder %s21, 1
    %p349 = scmp.ne.s32.totalorder %s344, %s346
    %p350 = scmp.eq.s32.totalorder %s21, 0
    %p351 = por %p349, %p350
    %p352 = scmp.ne.s32.totalorder %s344, %s346
    %p353 = scmp.eq.s32.totalorder %s26, 1
    %p354 = por %p352, %p353
    %p355 = scmp.ne.s32.totalorder %s346, %s347
    %p356 = scmp.eq.s32.totalorder %s26, 0
    %p357 = por %p355, %p356
    %p358 = scmp.ne.s32.totalorder %s346, %s347
    %p359 = scmp.eq.s32.totalorder %s27, 1
    %p360 = por %p358, %p359
    %p362 = scmp.ne.s32.totalorder %s347, %s361
    %p363 = scmp.eq.s32.totalorder %s27, 0
    %p364 = por %p362, %p363
    %s365 = ssub.s32 %s28, %s40
    %s366 = ssub.s32 %s29, %s36
    %s367 = sor.u32 %s365, %s366
    %p368 = scmp.eq.s32.totalorder %s367, 0
    %s370 = sadd.s32 %s369, 1
    %s371 = scalar_select %p368, %s369, %s370
    %p374 = pneg %p368
    %p375 = scmp.eq.s32.totalorder %s21, 1
    %p376 = por %p374, %p375
    %p377 = scmp.ne.s32.totalorder %s369, %s372
    %p378 = scmp.eq.s32.totalorder %s21, 0
    %p379 = por %p377, %p378
    %p380 = scmp.ne.s32.totalorder %s369, %s372
    %p381 = scmp.eq.s32.totalorder %s26, 1
    %p382 = por %p380, %p381
    %p383 = scmp.ne.s32.totalorder %s372, %s373
    %p384 = scmp.eq.s32.totalorder %s26, 0
    %p385 = por %p383, %p384
    %p386 = scmp.ne.s32.totalorder %s372, %s373
    %p387 = scmp.eq.s32.totalorder %s27, 1
    %p388 = por %p386, %p387
    %p390 = scmp.ne.s32.totalorder %s373, %s389
    %p391 = scmp.eq.s32.totalorder %s27, 0
    %p392 = por %p390, %p391
    %s393 = ssub.s32 %s28, %s40
    %p394 = scmp.eq.s32.totalorder %s393, 0
    %s396 = sadd.s32 %s395, 1
    %s397 = scalar_select %p394, %s395, %s396
    %p400 = pneg %p394
    %p401 = scmp.eq.s32.totalorder %s21, 1
    %p402 = por %p400, %p401
    %p403 = scmp.ne.s32.totalorder %s395, %s398
    %p404 = scmp.eq.s32.totalorder %s21, 0
    %p405 = por %p403, %p404
    %p406 = scmp.ne.s32.totalorder %s395, %s398
    %p407 = scmp.eq.s32.totalorder %s26, 1
    %p408 = por %p406, %p407
    %p409 = scmp.ne.s32.totalorder %s398, %s399
    %p410 = scmp.eq.s32.totalorder %s26, 0
    %p411 = por %p409, %p410
    %p412 = scmp.ne.s32.totalorder %s398, %s399
    %p413 = scmp.eq.s32.totalorder %s27, 1
    %p414 = por %p412, %p413
    %p416 = scmp.ne.s32.totalorder %s399, %s415
    %p417 = scmp.eq.s32.totalorder %s27, 0
    %p418 = por %p416, %p417
    %p419 = scmp.le.s32.totalorder 1, %s21
    %p420 = scmp.lt.s32.totalorder %s21, 3
    %p421 = pnand %p419, %p420
    %p422 = pneg %p421
    // Predicated region
    $region9: #{model_forward.14} parent=5 // pred_check
      _
    $region10: #{model_forward.14} parent=5 // pred_check_branch
      %424 = sbr.rel (%p421) target = $region12
    $region11: #{model_forward.14} parent=5 // pred_region
      %s425 = ssub.s32 %s21, 1
      // Predicated region
      $region13: #{model_forward.14} parent=11 // pred_check
        %p426 = pneg %p294
      $region14: #{model_forward.14} parent=11 // pred_check_branch
        %428 = sbr.rel (%p426) target = $region16
      $region15: #{model_forward.14} parent=11 // pred_region
        _
      $region16: #{model_forward.14} parent=11 // pred_fallthru
        _
      // Predicated region
      $region17: #{model_forward.14} parent=11 // pred_check
        %p429 = pneg %p315
      $region18: #{model_forward.14} parent=11 // pred_check_branch
        %431 = sbr.rel (%p429) target = $region20
      $region19: #{model_forward.14} parent=11 // pred_region
        _
      $region20: #{model_forward.14} parent=11 // pred_fallthru
        _
      // Predicated region
      $region21: #{model_forward.14} parent=11 // pred_check
        %p432 = pneg %p336
      $region22: #{model_forward.14} parent=11 // pred_check_branch
        %434 = sbr.rel (%p432) target = $region24
      $region23: #{model_forward.14} parent=11 // pred_region
        _
      $region24: #{model_forward.14} parent=11 // pred_fallthru
        _
      // Predicated region
      $region25: #{model_forward.14} parent=11 // pred_check
        %p435 = pneg %p357
      $region26: #{model_forward.14} parent=11 // pred_check_branch
        %437 = sbr.rel (%p435) target = $region28
      $region27: #{model_forward.14} parent=11 // pred_region
        _
      $region28: #{model_forward.14} parent=11 // pred_fallthru
        _
    $region12: #{model_forward.14} parent=5 // pred_fallthru
      _
    %p438 = scmp.lt.s32.totalorder %s21, 2
    // Predicated region
    $region29: #{model_forward.14} parent=5 // pred_check
      %p439 = pneg %p438
    $region30: #{model_forward.14} parent=5 // pred_check_branch
      %441 = sbr.rel (%p439) target = $region32
    $region31: #{model_forward.14} parent=5 // pred_region
      // Predicated region
      $region33: #{model_forward.14} parent=31 // pred_check
        %p442 = pneg %p55
      $region34: #{model_forward.14} parent=31 // pred_check_branch
        %444 = sbr.rel (%p442) target = $region36
      $region35: #{model_forward.14} parent=31 // pred_region
        %s445 = smul.u32 32, %s29
        %p446 = scmp.lt.s32.totalorder %s28, 1
        %s447 = scalar_select %p446, %s28, 1
        %p448 = scmp.lt.s32.totalorder %s445, 31
        %s449 = scalar_select %p448, %s445, 31
        %s450 = smul.addr %s447, 32
        %s451 = sadd.s32 %s449, %s450
        %s452 = smul.addr %s451, 4
        %s453 = scalar_lea.vmem %s0, %s452
        %s454 = smul.u32 32, %s29
      $region36: #{model_forward.14} parent=31 // pred_fallthru
        _
      // Predicated region
      $region37: #{model_forward.14} parent=31 // pred_check
        %p455 = pneg %p83
      $region38: #{model_forward.14} parent=31 // pred_check_branch
        %457 = sbr.rel (%p455) target = $region40
      $region39: #{model_forward.14} parent=31 // pred_region
        %s458 = smul.u32 32, %s29
        %p459 = scmp.lt.s32.totalorder %s28, 1
        %s460 = scalar_select %p459, %s28, 1
        %p461 = scmp.lt.s32.totalorder %s458, 31
        %s462 = scalar_select %p461, %s458, 31
        %s463 = smul.addr %s460, 32
        %s464 = sadd.s32 %s462, %s463
        %s465 = smul.addr %s464, 4
        %s466 = scalar_lea.vmem %s1, %s465
        %s467 = smul.u32 32, %s29
      $region40: #{model_forward.14} parent=31 // pred_fallthru
        _
      // Predicated region
      $region41: #{model_forward.14} parent=31 // pred_check
        %p468 = pneg %p111
      $region42: #{model_forward.14} parent=31 // pred_check_branch
        %470 = sbr.rel (%p468) target = $region44
      $region43: #{model_forward.14} parent=31 // pred_region
        %s471 = smul.u32 32, %s29
        %p472 = scmp.lt.s32.totalorder %s28, 1
        %s473 = scalar_select %p472, %s28, 1
        %p474 = scmp.lt.s32.totalorder %s471, 31
        %s475 = scalar_select %p474, %s471, 31
        %s476 = smul.addr %s473, 32
        %s477 = sadd.s32 %s475, %s476
        %s478 = smul.addr %s477, 4
        %s479 = scalar_lea.vmem %s2, %s478
        %s480 = smul.u32 32, %s29
      $region44: #{model_forward.14} parent=31 // pred_fallthru
        _
      // Predicated region
      $region45: #{model_forward.14} parent=31 // pred_check
        %p481 = pneg %p137
      $region46: #{model_forward.14} parent=31 // pred_check_branch
        %483 = sbr.rel (%p481) target = $region48
      $region47: #{model_forward.14} parent=31 // pred_region
        %p484 = scmp.lt.s32.totalorder %s28, 1
        %s485 = scalar_select %p484, %s28, 1
        %s486 = scalar_lea.vmem %s3, %s485
      $region48: #{model_forward.14} parent=31 // pred_fallthru
        _
      // Predicated region
      $region49: #{model_forward.14} parent=31 // pred_check
        %p487 = pneg %p163
      $region50: #{model_forward.14} parent=31 // pred_check_branch
        %489 = sbr.rel (%p487) target = $region52
      $region51: #{model_forward.14} parent=31 // pred_region
        %p490 = scmp.lt.s32.totalorder %s28, 1
        %s491 = scalar_select %p490, %s28, 1
        %s492 = scalar_lea.vmem %s4, %s491
      $region52: #{model_forward.14} parent=31 // pred_fallthru
        _
      // Predicated region
      $region53: #{model_forward.14} parent=31 // pred_check
        %p493 = pneg %p189
      $region54: #{model_forward.14} parent=31 // pred_check_branch
        %495 = sbr.rel (%p493) target = $region56
      $region55: #{model_forward.14} parent=31 // pred_region
        %p496 = scmp.lt.s32.totalorder %s28, 1
        %s497 = scalar_select %p496, %s28, 1
        %s498 = scalar_lea.vmem %s5, %s497
      $region56: #{model_forward.14} parent=31 // pred_fallthru
        _
      // Predicated region
      $region57: #{model_forward.14} parent=31 // pred_check
        %p499 = pneg %p215
      $region58: #{model_forward.14} parent=31 // pred_check_branch
        %501 = sbr.rel (%p499) target = $region60
      $region59: #{model_forward.14} parent=31 // pred_region
        %p502 = scmp.lt.s32.totalorder %s28, 1
        %s503 = scalar_select %p502, %s28, 1
        %s504 = scalar_lea.vmem %s6, %s503
      $region60: #{model_forward.14} parent=31 // pred_fallthru
        _
      // Predicated region
      $region61: #{model_forward.14} parent=31 // pred_check
        %p505 = pneg %p241
      $region62: #{model_forward.14} parent=31 // pred_check_branch
        %507 = sbr.rel (%p505) target = $region64
      $region63: #{model_forward.14} parent=31 // pred_region
        %p508 = scmp.lt.s32.totalorder %s28, 1
        %s509 = scalar_select %p508, %s28, 1
        %s510 = scalar_lea.vmem %s7, %s509
      $region64: #{model_forward.14} parent=31 // pred_fallthru
        _
      // Predicated region
      $region65: #{model_forward.14} parent=31 // pred_check
        %p511 = pneg %p267
      $region66: #{model_forward.14} parent=31 // pred_check_branch
        %513 = sbr.rel (%p511) target = $region68
      $region67: #{model_forward.14} parent=31 // pred_region
        %p514 = scmp.lt.s32.totalorder %s28, 1
        %s515 = scalar_select %p514, %s28, 1
        %s516 = scalar_lea.vmem %s8, %s515
      $region68: #{model_forward.14} parent=31 // pred_fallthru
        _
    $region32: #{model_forward.14} parent=5 // pred_fallthru
      _
    %p517 = scmp.le.s32.totalorder 1, %s21
    %p518 = scmp.lt.s32.totalorder %s21, 3
    %p519 = pnand %p517, %p518
    %p520 = pneg %p519
    // Predicated region
    $region69: #{model_forward.14} parent=5 // pred_check
      _
    $region70: #{model_forward.14} parent=5 // pred_check_branch
      %522 = sbr.rel (%p519) target = $region72
    $region71: #{model_forward.14} parent=5 // pred_region
      %s523 = ssub.s32 %s21, 1
      %s524 = smul.u32 32, %s31
      %p525 = scmp.lt.s32.totalorder %s30, 1
      %s526 = scalar_select %p525, %s30, 1
      %p527 = scmp.lt.s32.totalorder %s524, 31
      %s528 = scalar_select %p527, %s524, 31
      %s529 = smul.addr %s526, 32
      %s530 = sadd.s32 %s528, %s529
      %s531 = smul.addr %s530, 4
      %s532 = scalar_lea.vmem %s0, %s531
      %p533 = pneg %p61
      %p534 = pneg %p58
      %s535 = smul.u32 32, %s31
      %p536 = scmp.lt.s32.totalorder %s30, 1
      %s537 = scalar_select %p536, %s30, 1
      %p538 = scmp.lt.s32.totalorder %s535, 31
      %s539 = scalar_select %p538, %s535, 31
      %s540 = smul.addr %s537, 32
      %s541 = sadd.s32 %s539, %s540
      %s542 = smul.addr %s541, 4
      %s543 = scalar_lea.vmem %s1, %s542
      %p544 = pneg %p89
      %p545 = pneg %p86
      %s546 = smul.u32 32, %s31
      %p547 = scmp.lt.s32.totalorder %s30, 1
      %s548 = scalar_select %p547, %s30, 1
      %p549 = scmp.lt.s32.totalorder %s546, 31
      %s550 = scalar_select %p549, %s546, 31
      %s551 = smul.addr %s548, 32
      %s552 = sadd.s32 %s550, %s551
      %s553 = smul.addr %s552, 4
      %s554 = scalar_lea.vmem %s2, %s553
      %p555 = pneg %p117
      %p556 = pneg %p114
      %p557 = scmp.lt.s32.totalorder %s30, 1
      %s558 = scalar_select %p557, %s30, 1
      %s559 = scalar_lea.vmem %s3, %s558
      %p560 = pneg %p143
      %p561 = pneg %p140
      %p562 = scmp.lt.s32.totalorder %s30, 1
      %s563 = scalar_select %p562, %s30, 1
      %s564 = scalar_lea.vmem %s4, %s563
      %p565 = pneg %p169
      %p566 = pneg %p166
      %p567 = scmp.lt.s32.totalorder %s30, 1
      %s568 = scalar_select %p567, %s30, 1
      %s569 = scalar_lea.vmem %s5, %s568
      %p570 = pneg %p195
      %p571 = pneg %p192
      %p572 = scmp.lt.s32.totalorder %s30, 1
      %s573 = scalar_select %p572, %s30, 1
      %s574 = scalar_lea.vmem %s6, %s573
      %p575 = pneg %p221
      %p576 = pneg %p218
      %p577 = scmp.lt.s32.totalorder %s30, 1
      %s578 = scalar_select %p577, %s30, 1
      %s579 = scalar_lea.vmem %s7, %s578
      %p580 = pneg %p247
      %p581 = pneg %p244
      %p582 = scmp.lt.s32.totalorder %s30, 1
      %s583 = scalar_select %p582, %s30, 1
      %s584 = scalar_lea.vmem %s8, %s583
      %p585 = pneg %p273
      %p586 = pneg %p270
      %p587 = pneg %p294
      %p588 = pneg %p291
      %p589 = pneg %p315
      %p590 = pneg %p312
      %p591 = pneg %p336
      %p592 = pneg %p333
      %p593 = pneg %p357
      %p594 = pneg %p354
      %p595 = pneg %p385
      %p596 = pneg %p382
      %s597 = smul.u32 32, %s31
      %p598 = scmp.lt.s32.totalorder %s30, 1
      %s599 = scalar_select %p598, %s30, 1
      %p600 = scmp.lt.s32.totalorder %s597, 31
      %s601 = scalar_select %p600, %s597, 31
      %s602 = smul.addr %s599, 32
      %s603 = sadd.s32 %s601, %s602
      %s604 = smul.addr %s603, 4
      %s605 = scalar_lea.vmem %s13, %s604
      %p606 = pneg %p411
      %p607 = pneg %p408
      %p608 = scmp.lt.s32.totalorder %s30, 1
      %s609 = scalar_select %p608, %s30, 1
      %s610 = scalar_lea.vmem %s14, %s609
      %s611 = smul.u32 32, %s31
      %p612 = scmp.lt.s32.totalorder %s30, 1
      %s613 = scalar_select %p612, %s30, 1
      %p614 = scmp.lt.s32.totalorder %s611, 31
      %s615 = scalar_select %p614, %s611, 31
      %s616 = smul.addr %s613, 32
      %s617 = sadd.s32 %s615, %s616
      %s618 = smul.addr %s617, 4
      %s619 = scalar_lea.vmem %s0, %s618
      %s620 = smul.u32 32, %s31
      %s621 = smul.u32 32, %s31
      %p622 = scmp.lt.s32.totalorder %s30, 1
      %s623 = scalar_select %p622, %s30, 1
      %p624 = scmp.lt.s32.totalorder %s621, 31
      %s625 = scalar_select %p624, %s621, 31
      %s626 = smul.addr %s623, 32
      %s627 = sadd.s32 %s625, %s626
      %s628 = smul.addr %s627, 4
      %s629 = scalar_lea.vmem %s1, %s628
      %s630 = smul.u32 32, %s31
      %s631 = smul.u32 32, %s31
      %p632 = scmp.lt.s32.totalorder %s30, 1
      %s633 = scalar_select %p632, %s30, 1
      %p634 = scmp.lt.s32.totalorder %s631, 31
      %s635 = scalar_select %p634, %s631, 31
      %s636 = smul.addr %s633, 32
      %s637 = sadd.s32 %s635, %s636
      %s638 = smul.addr %s637, 4
      %s639 = scalar_lea.vmem %s2, %s638
      %s640 = smul.u32 32, %s31
      %p641 = scmp.lt.s32.totalorder %s30, 1
      %s642 = scalar_select %p641, %s30, 1
      %s643 = scalar_lea.vmem %s3, %s642
      %p644 = scmp.lt.s32.totalorder %s30, 1
      %s645 = scalar_select %p644, %s30, 1
      %s646 = scalar_lea.vmem %s4, %s645
      %p647 = scmp.lt.s32.totalorder %s30, 1
      %s648 = scalar_select %p647, %s30, 1
      %s649 = scalar_lea.vmem %s5, %s648
      %p650 = scmp.lt.s32.totalorder %s30, 1
      %s651 = scalar_select %p650, %s30, 1
      %s652 = scalar_lea.vmem %s6, %s651
      %p653 = scmp.lt.s32.totalorder %s30, 1
      %s654 = scalar_select %p653, %s30, 1
      %s655 = scalar_lea.vmem %s7, %s654
      %p656 = scmp.lt.s32.totalorder %s30, 1
      %s657 = scalar_select %p656, %s30, 1
      %s658 = scalar_lea.vmem %s8, %s657
      %s659 = smul.u32 32, %s31
      %p660 = scmp.lt.s32.totalorder %s30, 1
      %s661 = scalar_select %p660, %s30, 1
      %p662 = scmp.lt.s32.totalorder %s659, 31
      %s663 = scalar_select %p662, %s659, 31
      %s664 = smul.addr %s661, 32
      %s665 = sadd.s32 %s663, %s664
      %s666 = smul.addr %s665, 4
      %s667 = scalar_lea.vmem %s13, %s666
      %s668 = smul.u32 32, %s31
      %p669 = scmp.lt.s32.totalorder %s30, 1
      %s670 = scalar_select %p669, %s30, 1
      %s671 = scalar_lea.vmem %s14, %s670
      %v673 = vld [vmem:[%s619] sm:$0xf]
      %v674 = vld [vmem:[%s619 + $0x4] sm:$0xf]
      %v675 = vld [vmem:[%s619 + $0x8] sm:$0xf]
      %v676 = vld [vmem:[%s619 + $0xc] sm:$0xf]
      %v677 = vld [vmem:[%s619 + $0x10] sm:$0xf]
      %v678 = vld [vmem:[%s619 + $0x14] sm:$0xf]
      %v679 = vld [vmem:[%s619 + $0x18] sm:$0xf]
      %v680 = vld [vmem:[%s619 + $0x1c] sm:$0xf]
      %v681 = vld [vmem:[%s619 + $0x20] sm:$0xf]
      %v682 = vld [vmem:[%s619 + $0x24] sm:$0xf]
      %v683 = vld [vmem:[%s619 + $0x28] sm:$0xf]
      %v684 = vld [vmem:[%s619 + $0x2c] sm:$0xf]
      %v685 = vld [vmem:[%s619 + $0x30] sm:$0xf]
      %v686 = vld [vmem:[%s619 + $0x34] sm:$0xf]
      %v687 = vld [vmem:[%s619 + $0x38] sm:$0xf]
      %v688 = vld [vmem:[%s619 + $0x3c] sm:$0xf]
      %v689 = vld [vmem:[%s619 + $0x40] sm:$0xf]
      %v690 = vld [vmem:[%s619 + $0x44] sm:$0xf]
      %v691 = vld [vmem:[%s619 + $0x48] sm:$0xf]
      %v692 = vld [vmem:[%s619 + $0x4c] sm:$0xf]
      %v693 = vld [vmem:[%s619 + $0x50] sm:$0xf]
      %v694 = vld [vmem:[%s619 + $0x54] sm:$0xf]
      %v695 = vld [vmem:[%s619 + $0x58] sm:$0xf]
      %v696 = vld [vmem:[%s619 + $0x5c] sm:$0xf]
      %v697 = vld [vmem:[%s619 + $0x60] sm:$0xf]
      %v698 = vld [vmem:[%s619 + $0x64] sm:$0xf]
      %v699 = vld [vmem:[%s619 + $0x68] sm:$0xf]
      %v700 = vld [vmem:[%s619 + $0x6c] sm:$0xf]
      %v701 = vld [vmem:[%s619 + $0x70] sm:$0xf]
      %v702 = vld [vmem:[%s619 + $0x74] sm:$0xf]
      %v703 = vld [vmem:[%s619 + $0x78] sm:$0xf]
      %v704 = vld [vmem:[%s619 + $0x7c] sm:$0xf]
      %v705 = vld [vmem:[%s643] sm:$0x1]
      %v707 = vpack.i.b16 %v705, %v705
      %v709 = vperm.slane %v707, 0
      %v710 = vunpack.c.l.bf16 %v673
      %v711 = vunpack.c.l.bf16 %v674
      %v712 = vunpack.c.l.bf16 %v675
      %v713 = vunpack.c.l.bf16 %v676
      %v714 = vunpack.c.l.bf16 %v677
      %v715 = vunpack.c.l.bf16 %v678
      %v716 = vunpack.c.l.bf16 %v679
      %v717 = vunpack.c.l.bf16 %v680
      %v718 = vunpack.c.l.bf16 %v681
      %v719 = vunpack.c.l.bf16 %v682
      %v720 = vunpack.c.l.bf16 %v683
      %v721 = vunpack.c.l.bf16 %v684
      %v722 = vunpack.c.l.bf16 %v685
      %v723 = vunpack.c.l.bf16 %v686
      %v724 = vunpack.c.l.bf16 %v687
      %v725 = vunpack.c.l.bf16 %v688
      %v726 = vunpack.c.l.bf16 %v689
      %v727 = vunpack.c.l.bf16 %v690
      %v728 = vunpack.c.l.bf16 %v691
      %v729 = vunpack.c.l.bf16 %v692
      %v730 = vunpack.c.l.bf16 %v693
      %v731 = vunpack.c.l.bf16 %v694
      %v732 = vunpack.c.l.bf16 %v695
      %v733 = vunpack.c.l.bf16 %v696
      %v734 = vunpack.c.l.bf16 %v697
      %v735 = vunpack.c.l.bf16 %v698
      %v736 = vunpack.c.l.bf16 %v699
      %v737 = vunpack.c.l.bf16 %v700
      %v738 = vunpack.c.l.bf16 %v701
      %v739 = vunpack.c.l.bf16 %v702
      %v740 = vunpack.c.l.bf16 %v703
      %v741 = vunpack.c.l.bf16 %v704
      %v742 = vunpack.c.l.bf16 %v709
      %v743 = vmul.f32 %v710, %v742
      %v744 = vmul.f32 %v711, %v742
      %v745 = vmul.f32 %v712, %v742
      %v746 = vmul.f32 %v713, %v742
      %v747 = vmul.f32 %v714, %v742
      %v748 = vmul.f32 %v715, %v742
      %v749 = vmul.f32 %v716, %v742
      %v750 = vmul.f32 %v717, %v742
      %v751 = vmul.f32 %v718, %v742
      %v752 = vmul.f32 %v719, %v742
      %v753 = vmul.f32 %v720, %v742
      %v754 = vmul.f32 %v721, %v742
      %v755 = vmul.f32 %v722, %v742
      %v756 = vmul.f32 %v723, %v742
      %v757 = vmul.f32 %v724, %v742
      %v758 = vmul.f32 %v725, %v742
      %v759 = vmul.f32 %v726, %v742
      %v760 = vmul.f32 %v727, %v742
      %v761 = vmul.f32 %v728, %v742
      %v762 = vmul.f32 %v729, %v742
      %v763 = vmul.f32 %v730, %v742
      %v764 = vmul.f32 %v731, %v742
      %v765 = vmul.f32 %v732, %v742
      %v766 = vmul.f32 %v733, %v742
      %v767 = vmul.f32 %v734, %v742
      %v768 = vmul.f32 %v735, %v742
      %v769 = vmul.f32 %v736, %v742
      %v770 = vmul.f32 %v737, %v742
      %v771 = vmul.f32 %v738, %v742
      %v772 = vmul.f32 %v739, %v742
      %v773 = vmul.f32 %v740, %v742
      %v774 = vmul.f32 %v741, %v742
      %v775 = vpack.c.bf16 %v743, %v743
      %v776 = vpack.c.bf16 %v744, %v744
      %v777 = vpack.c.bf16 %v745, %v745
      %v778 = vpack.c.bf16 %v746, %v746
      %v779 = vpack.c.bf16 %v747, %v747
      %v780 = vpack.c.bf16 %v748, %v748
      %v781 = vpack.c.bf16 %v749, %v749
      %v782 = vpack.c.bf16 %v750, %v750
      %v783 = vpack.c.bf16 %v751, %v751
      %v784 = vpack.c.bf16 %v752, %v752
      %v785 = vpack.c.bf16 %v753, %v753
      %v786 = vpack.c.bf16 %v754, %v754
      %v787 = vpack.c.bf16 %v755, %v755
      %v788 = vpack.c.bf16 %v756, %v756
      %v789 = vpack.c.bf16 %v757, %v757
      %v790 = vpack.c.bf16 %v758, %v758
      %v791 = vpack.c.bf16 %v759, %v759
      %v792 = vpack.c.bf16 %v760, %v760
      %v793 = vpack.c.bf16 %v761, %v761
      %v794 = vpack.c.bf16 %v762, %v762
      %v795 = vpack.c.bf16 %v763, %v763
      %v796 = vpack.c.bf16 %v764, %v764
      %v797 = vpack.c.bf16 %v765, %v765
      %v798 = vpack.c.bf16 %v766, %v766
      %v799 = vpack.c.bf16 %v767, %v767
      %v800 = vpack.c.bf16 %v768, %v768
      %v801 = vpack.c.bf16 %v769, %v769
      %v802 = vpack.c.bf16 %v770, %v770
      %v803 = vpack.c.bf16 %v771, %v771
      %v804 = vpack.c.bf16 %v772, %v772
      %v805 = vpack.c.bf16 %v773, %v773
      %v806 = vpack.c.bf16 %v774, %v774
      %v807 = vld [vmem:[%s652] sm:$0x1]
      %v809 = vpack.i.b16 %v807, %v807
      %v811 = vperm.slane %v809, 0
      %v812 = vunpack.c.l.bf16 %v775
      %v813 = vunpack.c.l.bf16 %v776
      %v814 = vunpack.c.l.bf16 %v777
      %v815 = vunpack.c.l.bf16 %v778
      %v816 = vunpack.c.l.bf16 %v779
      %v817 = vunpack.c.l.bf16 %v780
      %v818 = vunpack.c.l.bf16 %v781
      %v819 = vunpack.c.l.bf16 %v782
      %v820 = vunpack.c.l.bf16 %v783
      %v821 = vunpack.c.l.bf16 %v784
      %v822 = vunpack.c.l.bf16 %v785
      %v823 = vunpack.c.l.bf16 %v786
      %v824 = vunpack.c.l.bf16 %v787
      %v825 = vunpack.c.l.bf16 %v788
      %v826 = vunpack.c.l.bf16 %v789
      %v827 = vunpack.c.l.bf16 %v790
      %v828 = vunpack.c.l.bf16 %v791
      %v829 = vunpack.c.l.bf16 %v792
      %v830 = vunpack.c.l.bf16 %v793
      %v831 = vunpack.c.l.bf16 %v794
      %v832 = vunpack.c.l.bf16 %v795
      %v833 = vunpack.c.l.bf16 %v796
      %v834 = vunpack.c.l.bf16 %v797
      %v835 = vunpack.c.l.bf16 %v798
      %v836 = vunpack.c.l.bf16 %v799
      %v837 = vunpack.c.l.bf16 %v800
      %v838 = vunpack.c.l.bf16 %v801
      %v839 = vunpack.c.l.bf16 %v802
      %v840 = vunpack.c.l.bf16 %v803
      %v841 = vunpack.c.l.bf16 %v804
      %v842 = vunpack.c.l.bf16 %v805
      %v843 = vunpack.c.l.bf16 %v806
      %v844 = vunpack.c.l.bf16 %v811
      %v845 = vadd.f32 %v812, %v844
      %v846 = vadd.f32 %v813, %v844
      %v847 = vadd.f32 %v814, %v844
      %v848 = vadd.f32 %v815, %v844
      %v849 = vadd.f32 %v816, %v844
      %v850 = vadd.f32 %v817, %v844
      %v851 = vadd.f32 %v818, %v844
      %v852 = vadd.f32 %v819, %v844
      %v853 = vadd.f32 %v820, %v844
      %v854 = vadd.f32 %v821, %v844
      %v855 = vadd.f32 %v822, %v844
      %v856 = vadd.f32 %v823, %v844
      %v857 = vadd.f32 %v824, %v844
      %v858 = vadd.f32 %v825, %v844
      %v859 = vadd.f32 %v826, %v844
      %v860 = vadd.f32 %v827, %v844
      %v861 = vadd.f32 %v828, %v844
      %v862 = vadd.f32 %v829, %v844
      %v863 = vadd.f32 %v830, %v844
      %v864 = vadd.f32 %v831, %v844
      %v865 = vadd.f32 %v832, %v844
      %v866 = vadd.f32 %v833, %v844
      %v867 = vadd.f32 %v834, %v844
      %v868 = vadd.f32 %v835, %v844
      %v869 = vadd.f32 %v836, %v844
      %v870 = vadd.f32 %v837, %v844
      %v871 = vadd.f32 %v838, %v844
      %v872 = vadd.f32 %v839, %v844
      %v873 = vadd.f32 %v840, %v844
      %v874 = vadd.f32 %v841, %v844
      %v875 = vadd.f32 %v842, %v844
      %v876 = vadd.f32 %v843, %v844
      %v877 = vpack.c.bf16 %v845, %v845
      %v878 = vpack.c.bf16 %v846, %v846
      %v879 = vpack.c.bf16 %v847, %v847
      %v880 = vpack.c.bf16 %v848, %v848
      %v881 = vpack.c.bf16 %v849, %v849
      %v882 = vpack.c.bf16 %v850, %v850
      %v883 = vpack.c.bf16 %v851, %v851
      %v884 = vpack.c.bf16 %v852, %v852
      %v885 = vpack.c.bf16 %v853, %v853
      %v886 = vpack.c.bf16 %v854, %v854
      %v887 = vpack.c.bf16 %v855, %v855
      %v888 = vpack.c.bf16 %v856, %v856
      %v889 = vpack.c.bf16 %v857, %v857
      %v890 = vpack.c.bf16 %v858, %v858
      %v891 = vpack.c.bf16 %v859, %v859
      %v892 = vpack.c.bf16 %v860, %v860
      %v893 = vpack.c.bf16 %v861, %v861
      %v894 = vpack.c.bf16 %v862, %v862
      %v895 = vpack.c.bf16 %v863, %v863
      %v896 = vpack.c.bf16 %v864, %v864
      %v897 = vpack.c.bf16 %v865, %v865
      %v898 = vpack.c.bf16 %v866, %v866
      %v899 = vpack.c.bf16 %v867, %v867
      %v900 = vpack.c.bf16 %v868, %v868
      %v901 = vpack.c.bf16 %v869, %v869
      %v902 = vpack.c.bf16 %v870, %v870
      %v903 = vpack.c.bf16 %v871, %v871
      %v904 = vpack.c.bf16 %v872, %v872
      %v905 = vpack.c.bf16 %v873, %v873
      %v906 = vpack.c.bf16 %v874, %v874
      %v907 = vpack.c.bf16 %v875, %v875
      %v908 = vpack.c.bf16 %v876, %v876
      %v909 = vunpack.c.l.bf16 %v877
      %v910 = vunpack.c.l.bf16 %v878
      %v911 = vunpack.c.l.bf16 %v879
      %v912 = vunpack.c.l.bf16 %v880
      %v913 = vunpack.c.l.bf16 %v881
      %v914 = vunpack.c.l.bf16 %v882
      %v915 = vunpack.c.l.bf16 %v883
      %v916 = vunpack.c.l.bf16 %v884
      %v917 = vunpack.c.l.bf16 %v885
      %v918 = vunpack.c.l.bf16 %v886
      %v919 = vunpack.c.l.bf16 %v887
      %v920 = vunpack.c.l.bf16 %v888
      %v921 = vunpack.c.l.bf16 %v889
      %v922 = vunpack.c.l.bf16 %v890
      %v923 = vunpack.c.l.bf16 %v891
      %v924 = vunpack.c.l.bf16 %v892
      %v925 = vunpack.c.l.bf16 %v893
      %v926 = vunpack.c.l.bf16 %v894
      %v927 = vunpack.c.l.bf16 %v895
      %v928 = vunpack.c.l.bf16 %v896
      %v929 = vunpack.c.l.bf16 %v897
      %v930 = vunpack.c.l.bf16 %v898
      %v931 = vunpack.c.l.bf16 %v899
      %v932 = vunpack.c.l.bf16 %v900
      %v933 = vunpack.c.l.bf16 %v901
      %v934 = vunpack.c.l.bf16 %v902
      %v935 = vunpack.c.l.bf16 %v903
      %v936 = vunpack.c.l.bf16 %v904
      %v937 = vunpack.c.l.bf16 %v905
      %v938 = vunpack.c.l.bf16 %v906
      %v939 = vunpack.c.l.bf16 %v907
      %v940 = vunpack.c.l.bf16 %v908
      %v941 = vmax.f32 %v909, 0.0
      %v942 = vmax.f32 %v910, 0.0
      %v943 = vmax.f32 %v911, 0.0
      %v944 = vmax.f32 %v912, 0.0
      %v945 = vmax.f32 %v913, 0.0
      %v946 = vmax.f32 %v914, 0.0
      %v947 = vmax.f32 %v915, 0.0
      %v948 = vmax.f32 %v916, 0.0
      %v949 = vmax.f32 %v917, 0.0
      %v950 = vmax.f32 %v918, 0.0
      %v951 = vmax.f32 %v919, 0.0
      %v952 = vmax.f32 %v920, 0.0
      %v953 = vmax.f32 %v921, 0.0
      %v954 = vmax.f32 %v922, 0.0
      %v955 = vmax.f32 %v923, 0.0
      %v956 = vmax.f32 %v924, 0.0
      %v957 = vmax.f32 %v925, 0.0
      %v958 = vmax.f32 %v926, 0.0
      %v959 = vmax.f32 %v927, 0.0
      %v960 = vmax.f32 %v928, 0.0
      %v961 = vmax.f32 %v929, 0.0
      %v962 = vmax.f32 %v930, 0.0
      %v963 = vmax.f32 %v931, 0.0
      %v964 = vmax.f32 %v932, 0.0
      %v965 = vmax.f32 %v933, 0.0
      %v966 = vmax.f32 %v934, 0.0
      %v967 = vmax.f32 %v935, 0.0
      %v968 = vmax.f32 %v936, 0.0
      %v969 = vmax.f32 %v937, 0.0
      %v970 = vmax.f32 %v938, 0.0
      %v971 = vmax.f32 %v939, 0.0
      %v972 = vmax.f32 %v940, 0.0
      %v973 = vpack.c.bf16 %v942, %v941
      %v974 = vpack.c.bf16 %v944, %v943
      %v975 = vpack.c.bf16 %v946, %v945
      %v976 = vpack.c.bf16 %v948, %v947
      %v977 = vpack.c.bf16 %v950, %v949
      %v978 = vpack.c.bf16 %v952, %v951
      %v979 = vpack.c.bf16 %v954, %v953
      %v980 = vpack.c.bf16 %v956, %v955
      %v981 = vpack.c.bf16 %v958, %v957
      %v982 = vpack.c.bf16 %v960, %v959
      %v983 = vpack.c.bf16 %v962, %v961
      %v984 = vpack.c.bf16 %v964, %v963
      %v985 = vpack.c.bf16 %v966, %v965
      %v986 = vpack.c.bf16 %v968, %v967
      %v987 = vpack.c.bf16 %v970, %v969
      %v988 = vpack.c.bf16 %v972, %v971
      %v989 = vld [vmem:[%s9] sm:$0xf]
      %v990 = vld [vmem:[%s9 + $0x4] sm:$0xf]
      %v991 = vld [vmem:[%s9 + $0x8] sm:$0xf]
      %v992 = vld [vmem:[%s9 + $0xc] sm:$0xf]
      %v993 = vld [vmem:[%s629] sm:$0xf]
      %v994 = vld [vmem:[%s629 + $0x4] sm:$0xf]
      %v995 = vld [vmem:[%s629 + $0x8] sm:$0xf]
      %v996 = vld [vmem:[%s629 + $0xc] sm:$0xf]
      %v997 = vld [vmem:[%s629 + $0x10] sm:$0xf]
      %v998 = vld [vmem:[%s629 + $0x14] sm:$0xf]
      %v999 = vld [vmem:[%s629 + $0x18] sm:$0xf]
      %v1000 = vld [vmem:[%s629 + $0x1c] sm:$0xf]
      %v1001 = vld [vmem:[%s629 + $0x20] sm:$0xf]
      %v1002 = vld [vmem:[%s629 + $0x24] sm:$0xf]
      %v1003 = vld [vmem:[%s629 + $0x28] sm:$0xf]
      %v1004 = vld [vmem:[%s629 + $0x2c] sm:$0xf]
      %v1005 = vld [vmem:[%s629 + $0x30] sm:$0xf]
      %v1006 = vld [vmem:[%s629 + $0x34] sm:$0xf]
      %v1007 = vld [vmem:[%s629 + $0x38] sm:$0xf]
      %v1008 = vld [vmem:[%s629 + $0x3c] sm:$0xf]
      %v1009 = vld [vmem:[%s629 + $0x40] sm:$0xf]
      %v1010 = vld [vmem:[%s629 + $0x44] sm:$0xf]
      %v1011 = vld [vmem:[%s629 + $0x48] sm:$0xf]
      %v1012 = vld [vmem:[%s629 + $0x4c] sm:$0xf]
      %v1013 = vld [vmem:[%s629 + $0x50] sm:$0xf]
      %v1014 = vld [vmem:[%s629 + $0x54] sm:$0xf]
      %v1015 = vld [vmem:[%s629 + $0x58] sm:$0xf]
      %v1016 = vld [vmem:[%s629 + $0x5c] sm:$0xf]
      %v1017 = vld [vmem:[%s629 + $0x60] sm:$0xf]
      %v1018 = vld [vmem:[%s629 + $0x64] sm:$0xf]
      %v1019 = vld [vmem:[%s629 + $0x68] sm:$0xf]
      %v1020 = vld [vmem:[%s629 + $0x6c] sm:$0xf]
      %v1021 = vld [vmem:[%s629 + $0x70] sm:$0xf]
      %v1022 = vld [vmem:[%s629 + $0x74] sm:$0xf]
      %v1023 = vld [vmem:[%s629 + $0x78] sm:$0xf]
      %v1024 = vld [vmem:[%s629 + $0x7c] sm:$0xf]
      %v1025 = vld [vmem:[%s646] sm:$0x1]
      %v1027 = vpack.i.b16 %v1025, %v1025
      %v1029 = vperm.slane %v1027, 0
      %v1030 = vunpack.c.l.bf16 %v993
      %v1031 = vunpack.c.l.bf16 %v994
      %v1032 = vunpack.c.l.bf16 %v995
      %v1033 = vunpack.c.l.bf16 %v996
      %v1034 = vunpack.c.l.bf16 %v997
      %v1035 = vunpack.c.l.bf16 %v998
      %v1036 = vunpack.c.l.bf16 %v999
      %v1037 = vunpack.c.l.bf16 %v1000
      %v1038 = vunpack.c.l.bf16 %v1001
      %v1039 = vunpack.c.l.bf16 %v1002
      %v1040 = vunpack.c.l.bf16 %v1003
      %v1041 = vunpack.c.l.bf16 %v1004
      %v1042 = vunpack.c.l.bf16 %v1005
      %v1043 = vunpack.c.l.bf16 %v1006
      %v1044 = vunpack.c.l.bf16 %v1007
      %v1045 = vunpack.c.l.bf16 %v1008
      %v1046 = vunpack.c.l.bf16 %v1009
      %v1047 = vunpack.c.l.bf16 %v1010
      %v1048 = vunpack.c.l.bf16 %v1011
      %v1049 = vunpack.c.l.bf16 %v1012
      %v1050 = vunpack.c.l.bf16 %v1013
      %v1051 = vunpack.c.l.bf16 %v1014
      %v1052 = vunpack.c.l.bf16 %v1015
      %v1053 = vunpack.c.l.bf16 %v1016
      %v1054 = vunpack.c.l.bf16 %v1017
      %v1055 = vunpack.c.l.bf16 %v1018
      %v1056 = vunpack.c.l.bf16 %v1019
      %v1057 = vunpack.c.l.bf16 %v1020
      %v1058 = vunpack.c.l.bf16 %v1021
      %v1059 = vunpack.c.l.bf16 %v1022
      %v1060 = vunpack.c.l.bf16 %v1023
      %v1061 = vunpack.c.l.bf16 %v1024
      %v1062 = vunpack.c.l.bf16 %v1029
      %v1063 = vmul.f32 %v1030, %v1062
      %v1064 = vmul.f32 %v1031, %v1062
      %v1065 = vmul.f32 %v1032, %v1062
      %v1066 = vmul.f32 %v1033, %v1062
      %v1067 = vmul.f32 %v1034, %v1062
      %v1068 = vmul.f32 %v1035, %v1062
      %v1069 = vmul.f32 %v1036, %v1062
      %v1070 = vmul.f32 %v1037, %v1062
      %v1071 = vmul.f32 %v1038, %v1062
      %v1072 = vmul.f32 %v1039, %v1062
      %v1073 = vmul.f32 %v1040, %v1062
      %v1074 = vmul.f32 %v1041, %v1062
      %v1075 = vmul.f32 %v1042, %v1062
      %v1076 = vmul.f32 %v1043, %v1062
      %v1077 = vmul.f32 %v1044, %v1062
      %v1078 = vmul.f32 %v1045, %v1062
      %v1079 = vmul.f32 %v1046, %v1062
      %v1080 = vmul.f32 %v1047, %v1062
      %v1081 = vmul.f32 %v1048, %v1062
      %v1082 = vmul.f32 %v1049, %v1062
      %v1083 = vmul.f32 %v1050, %v1062
      %v1084 = vmul.f32 %v1051, %v1062
      %v1085 = vmul.f32 %v1052, %v1062
      %v1086 = vmul.f32 %v1053, %v1062
      %v1087 = vmul.f32 %v1054, %v1062
      %v1088 = vmul.f32 %v1055, %v1062
      %v1089 = vmul.f32 %v1056, %v1062
      %v1090 = vmul.f32 %v1057, %v1062
      %v1091 = vmul.f32 %v1058, %v1062
      %v1092 = vmul.f32 %v1059, %v1062
      %v1093 = vmul.f32 %v1060, %v1062
      %v1094 = vmul.f32 %v1061, %v1062
      %v1095 = vpack.c.bf16 %v1063, %v1063
      %v1096 = vpack.c.bf16 %v1064, %v1064
      %v1097 = vpack.c.bf16 %v1065, %v1065
      %v1098 = vpack.c.bf16 %v1066, %v1066
      %v1099 = vpack.c.bf16 %v1067, %v1067
      %v1100 = vpack.c.bf16 %v1068, %v1068
      %v1101 = vpack.c.bf16 %v1069, %v1069
      %v1102 = vpack.c.bf16 %v1070, %v1070
      %v1103 = vpack.c.bf16 %v1071, %v1071
      %v1104 = vpack.c.bf16 %v1072, %v1072
      %v1105 = vpack.c.bf16 %v1073, %v1073
      %v1106 = vpack.c.bf16 %v1074, %v1074
      %v1107 = vpack.c.bf16 %v1075, %v1075
      %v1108 = vpack.c.bf16 %v1076, %v1076
      %v1109 = vpack.c.bf16 %v1077, %v1077
      %v1110 = vpack.c.bf16 %v1078, %v1078
      %v1111 = vpack.c.bf16 %v1079, %v1079
      %v1112 = vpack.c.bf16 %v1080, %v1080
      %v1113 = vpack.c.bf16 %v1081, %v1081
      %v1114 = vpack.c.bf16 %v1082, %v1082
      %v1115 = vpack.c.bf16 %v1083, %v1083
      %v1116 = vpack.c.bf16 %v1084, %v1084
      %v1117 = vpack.c.bf16 %v1085, %v1085
      %v1118 = vpack.c.bf16 %v1086, %v1086
      %v1119 = vpack.c.bf16 %v1087, %v1087
      %v1120 = vpack.c.bf16 %v1088, %v1088
      %v1121 = vpack.c.bf16 %v1089, %v1089
      %v1122 = vpack.c.bf16 %v1090, %v1090
      %v1123 = vpack.c.bf16 %v1091, %v1091
      %v1124 = vpack.c.bf16 %v1092, %v1092
      %v1125 = vpack.c.bf16 %v1093, %v1093
      %v1126 = vpack.c.bf16 %v1094, %v1094
      %v1127 = vld [vmem:[%s655] sm:$0x1]
      %v1129 = vpack.i.b16 %v1127, %v1127
      %v1131 = vperm.slane %v1129, 0
      %v1132 = vunpack.c.l.bf16 %v1095
      %v1133 = vunpack.c.l.bf16 %v1096
      %v1134 = vunpack.c.l.bf16 %v1097
      %v1135 = vunpack.c.l.bf16 %v1098
      %v1136 = vunpack.c.l.bf16 %v1099
      %v1137 = vunpack.c.l.bf16 %v1100
      %v1138 = vunpack.c.l.bf16 %v1101
      %v1139 = vunpack.c.l.bf16 %v1102
      %v1140 = vunpack.c.l.bf16 %v1103
      %v1141 = vunpack.c.l.bf16 %v1104
      %v1142 = vunpack.c.l.bf16 %v1105
      %v1143 = vunpack.c.l.bf16 %v1106
      %v1144 = vunpack.c.l.bf16 %v1107
      %v1145 = vunpack.c.l.bf16 %v1108
      %v1146 = vunpack.c.l.bf16 %v1109
      %v1147 = vunpack.c.l.bf16 %v1110
      %v1148 = vunpack.c.l.bf16 %v1111
      %v1149 = vunpack.c.l.bf16 %v1112
      %v1150 = vunpack.c.l.bf16 %v1113
      %v1151 = vunpack.c.l.bf16 %v1114
      %v1152 = vunpack.c.l.bf16 %v1115
      %v1153 = vunpack.c.l.bf16 %v1116
      %v1154 = vunpack.c.l.bf16 %v1117
      %v1155 = vunpack.c.l.bf16 %v1118
      %v1156 = vunpack.c.l.bf16 %v1119
      %v1157 = vunpack.c.l.bf16 %v1120
      %v1158 = vunpack.c.l.bf16 %v1121
      %v1159 = vunpack.c.l.bf16 %v1122
      %v1160 = vunpack.c.l.bf16 %v1123
      %v1161 = vunpack.c.l.bf16 %v1124
      %v1162 = vunpack.c.l.bf16 %v1125
      %v1163 = vunpack.c.l.bf16 %v1126
      %v1164 = vunpack.c.l.bf16 %v1131
      %v1165 = vadd.f32 %v1132, %v1164
      %v1166 = vadd.f32 %v1133, %v1164
      %v1167 = vadd.f32 %v1134, %v1164
      %v1168 = vadd.f32 %v1135, %v1164
      %v1169 = vadd.f32 %v1136, %v1164
      %v1170 = vadd.f32 %v1137, %v1164
      %v1171 = vadd.f32 %v1138, %v1164
      %v1172 = vadd.f32 %v1139, %v1164
      %v1173 = vadd.f32 %v1140, %v1164
      %v1174 = vadd.f32 %v1141, %v1164
      %v1175 = vadd.f32 %v1142, %v1164
      %v1176 = vadd.f32 %v1143, %v1164
      %v1177 = vadd.f32 %v1144, %v1164
      %v1178 = vadd.f32 %v1145, %v1164
      %v1179 = vadd.f32 %v1146, %v1164
      %v1180 = vadd.f32 %v1147, %v1164
      %v1181 = vadd.f32 %v1148, %v1164
      %v1182 = vadd.f32 %v1149, %v1164
      %v1183 = vadd.f32 %v1150, %v1164
      %v1184 = vadd.f32 %v1151, %v1164
      %v1185 = vadd.f32 %v1152, %v1164
      %v1186 = vadd.f32 %v1153, %v1164
      %v1187 = vadd.f32 %v1154, %v1164
      %v1188 = vadd.f32 %v1155, %v1164
      %v1189 = vadd.f32 %v1156, %v1164
      %v1190 = vadd.f32 %v1157, %v1164
      %v1191 = vadd.f32 %v1158, %v1164
      %v1192 = vadd.f32 %v1159, %v1164
      %v1193 = vadd.f32 %v1160, %v1164
      %v1194 = vadd.f32 %v1161, %v1164
      %v1195 = vadd.f32 %v1162, %v1164
      %v1196 = vadd.f32 %v1163, %v1164
      %v1197 = vpack.c.bf16 %v1165, %v1165
      %v1198 = vpack.c.bf16 %v1166, %v1166
      %v1199 = vpack.c.bf16 %v1167, %v1167
      %v1200 = vpack.c.bf16 %v1168, %v1168
      %v1201 = vpack.c.bf16 %v1169, %v1169
      %v1202 = vpack.c.bf16 %v1170, %v1170
      %v1203 = vpack.c.bf16 %v1171, %v1171
      %v1204 = vpack.c.bf16 %v1172, %v1172
      %v1205 = vpack.c.bf16 %v1173, %v1173
      %v1206 = vpack.c.bf16 %v1174, %v1174
      %v1207 = vpack.c.bf16 %v1175, %v1175
      %v1208 = vpack.c.bf16 %v1176, %v1176
      %v1209 = vpack.c.bf16 %v1177, %v1177
      %v1210 = vpack.c.bf16 %v1178, %v1178
      %v1211 = vpack.c.bf16 %v1179, %v1179
      %v1212 = vpack.c.bf16 %v1180, %v1180
      %v1213 = vpack.c.bf16 %v1181, %v1181
      %v1214 = vpack.c.bf16 %v1182, %v1182
      %v1215 = vpack.c.bf16 %v1183, %v1183
      %v1216 = vpack.c.bf16 %v1184, %v1184
      %v1217 = vpack.c.bf16 %v1185, %v1185
      %v1218 = vpack.c.bf16 %v1186, %v1186
      %v1219 = vpack.c.bf16 %v1187, %v1187
      %v1220 = vpack.c.bf16 %v1188, %v1188
      %v1221 = vpack.c.bf16 %v1189, %v1189
      %v1222 = vpack.c.bf16 %v1190, %v1190
      %v1223 = vpack.c.bf16 %v1191, %v1191
      %v1224 = vpack.c.bf16 %v1192, %v1192
      %v1225 = vpack.c.bf16 %v1193, %v1193
      %v1226 = vpack.c.bf16 %v1194, %v1194
      %v1227 = vpack.c.bf16 %v1195, %v1195
      %v1228 = vpack.c.bf16 %v1196, %v1196
      %v1229 = vunpack.c.l.bf16 %v1197
      %v1230 = vunpack.c.l.bf16 %v1198
      %v1231 = vunpack.c.l.bf16 %v1199
      %v1232 = vunpack.c.l.bf16 %v1200
      %v1233 = vunpack.c.l.bf16 %v1201
      %v1234 = vunpack.c.l.bf16 %v1202
      %v1235 = vunpack.c.l.bf16 %v1203
      %v1236 = vunpack.c.l.bf16 %v1204
      %v1237 = vunpack.c.l.bf16 %v1205
      %v1238 = vunpack.c.l.bf16 %v1206
      %v1239 = vunpack.c.l.bf16 %v1207
      %v1240 = vunpack.c.l.bf16 %v1208
      %v1241 = vunpack.c.l.bf16 %v1209
      %v1242 = vunpack.c.l.bf16 %v1210
      %v1243 = vunpack.c.l.bf16 %v1211
      %v1244 = vunpack.c.l.bf16 %v1212
      %v1245 = vunpack.c.l.bf16 %v1213
      %v1246 = vunpack.c.l.bf16 %v1214
      %v1247 = vunpack.c.l.bf16 %v1215
      %v1248 = vunpack.c.l.bf16 %v1216
      %v1249 = vunpack.c.l.bf16 %v1217
      %v1250 = vunpack.c.l.bf16 %v1218
      %v1251 = vunpack.c.l.bf16 %v1219
      %v1252 = vunpack.c.l.bf16 %v1220
      %v1253 = vunpack.c.l.bf16 %v1221
      %v1254 = vunpack.c.l.bf16 %v1222
      %v1255 = vunpack.c.l.bf16 %v1223
      %v1256 = vunpack.c.l.bf16 %v1224
      %v1257 = vunpack.c.l.bf16 %v1225
      %v1258 = vunpack.c.l.bf16 %v1226
      %v1259 = vunpack.c.l.bf16 %v1227
      %v1260 = vunpack.c.l.bf16 %v1228
      %v1261 = vmax.f32 %v1229, 0.0
      %v1262 = vmax.f32 %v1230, 0.0
      %v1263 = vmax.f32 %v1231, 0.0
      %v1264 = vmax.f32 %v1232, 0.0
      %v1265 = vmax.f32 %v1233, 0.0
      %v1266 = vmax.f32 %v1234, 0.0
      %v1267 = vmax.f32 %v1235, 0.0
      %v1268 = vmax.f32 %v1236, 0.0
      %v1269 = vmax.f32 %v1237, 0.0
      %v1270 = vmax.f32 %v1238, 0.0
      %v1271 = vmax.f32 %v1239, 0.0
      %v1272 = vmax.f32 %v1240, 0.0
      %v1273 = vmax.f32 %v1241, 0.0
      %v1274 = vmax.f32 %v1242, 0.0
      %v1275 = vmax.f32 %v1243, 0.0
      %v1276 = vmax.f32 %v1244, 0.0
      %v1277 = vmax.f32 %v1245, 0.0
      %v1278 = vmax.f32 %v1246, 0.0
      %v1279 = vmax.f32 %v1247, 0.0
      %v1280 = vmax.f32 %v1248, 0.0
      %v1281 = vmax.f32 %v1249, 0.0
      %v1282 = vmax.f32 %v1250, 0.0
      %v1283 = vmax.f32 %v1251, 0.0
      %v1284 = vmax.f32 %v1252, 0.0
      %v1285 = vmax.f32 %v1253, 0.0
      %v1286 = vmax.f32 %v1254, 0.0
      %v1287 = vmax.f32 %v1255, 0.0
      %v1288 = vmax.f32 %v1256, 0.0
      %v1289 = vmax.f32 %v1257, 0.0
      %v1290 = vmax.f32 %v1258, 0.0
      %v1291 = vmax.f32 %v1259, 0.0
      %v1292 = vmax.f32 %v1260, 0.0
      %v1293 = vpack.c.bf16 %v1262, %v1261
      %v1294 = vpack.c.bf16 %v1264, %v1263
      %v1295 = vpack.c.bf16 %v1266, %v1265
      %v1296 = vpack.c.bf16 %v1268, %v1267
      %v1297 = vpack.c.bf16 %v1270, %v1269
      %v1298 = vpack.c.bf16 %v1272, %v1271
      %v1299 = vpack.c.bf16 %v1274, %v1273
      %v1300 = vpack.c.bf16 %v1276, %v1275
      %v1301 = vpack.c.bf16 %v1278, %v1277
      %v1302 = vpack.c.bf16 %v1280, %v1279
      %v1303 = vpack.c.bf16 %v1282, %v1281
      %v1304 = vpack.c.bf16 %v1284, %v1283
      %v1305 = vpack.c.bf16 %v1286, %v1285
      %v1306 = vpack.c.bf16 %v1288, %v1287
      %v1307 = vpack.c.bf16 %v1290, %v1289
      %v1308 = vpack.c.bf16 %v1292, %v1291
      %v1309 = vld [vmem:[%s10] sm:$0xf]
      %v1310 = vld [vmem:[%s10 + $0x4] sm:$0xf]
      %v1313 = vunpack.c.l.b16 %v1309
      %v1314 = vunpack.c.l.b16 %v1310
      %v1315 = vpack.c.b16 %v1314, %v1313
      %vm1317 = vcmask 130048
      %v1319 = vsel %vm1317, %v1293, 0
      %v1322 = vsel %vm1317, %v1294, 0
      %v1325 = vsel %vm1317, %v1295, 0
      %v1328 = vsel %vm1317, %v1296, 0
      %v1331 = vsel %vm1317, %v1297, 0
      %v1334 = vsel %vm1317, %v1298, 0
      %v1337 = vsel %vm1317, %v1299, 0
      %v1340 = vsel %vm1317, %v1300, 0
      %v1343 = vsel %vm1317, %v1301, 0
      %v1346 = vsel %vm1317, %v1302, 0
      %v1349 = vsel %vm1317, %v1303, 0
      %v1352 = vsel %vm1317, %v1304, 0
      %v1355 = vsel %vm1317, %v1305, 0
      %v1358 = vsel %vm1317, %v1306, 0
      %v1361 = vsel %vm1317, %v1307, 0
      %v1364 = vsel %vm1317, %v1308, 0
      %1366 = vmatpush.bf16.msra.mxu0 0
      %1367 = vmatpush.bf16.msra.mxu0 0
      %1368 = vmatpush.bf16.msra.mxu0 0
      %1369 = vmatpush.bf16.msra.mxu0 0
      %1370 = vmatpush.bf16.msra.mxu0 0
      %1371 = vmatpush.bf16.msra.mxu0 0
      %1372 = vmatpush.bf16.msra.mxu0 0
      %1373 = vmatpush.bf16.msra.mxu0 %v1315
      %1374 = vmatmul.bf16.gmra.mxu0 %v1319
      %v1375 = vpop.f32.mrf.mxu0
      %v1376 = vadd.f32 0.0, %v1375
      %v1377 = vpop.f32.mrf.mxu0
      %v1378 = vadd.f32 0.0, %v1377
      %1379 = vmatmul.bf16.gmra.mxu0 %v1322
      %v1380 = vpop.f32.mrf.mxu0
      %v1381 = vadd.f32 0.0, %v1380
      %v1382 = vpop.f32.mrf.mxu0
      %v1383 = vadd.f32 0.0, %v1382
      %1384 = vmatmul.bf16.gmra.mxu0 %v1325
      %v1385 = vpop.f32.mrf.mxu0
      %v1386 = vadd.f32 0.0, %v1385
      %v1387 = vpop.f32.mrf.mxu0
      %v1388 = vadd.f32 0.0, %v1387
      %1389 = vmatmul.bf16.gmra.mxu0 %v1328
      %v1390 = vpop.f32.mrf.mxu0
      %v1391 = vadd.f32 0.0, %v1390
      %v1392 = vpop.f32.mrf.mxu0
      %v1393 = vadd.f32 0.0, %v1392
      %1394 = vmatmul.bf16.gmra.mxu0 %v1331
      %v1395 = vpop.f32.mrf.mxu0
      %v1396 = vadd.f32 0.0, %v1395
      %v1397 = vpop.f32.mrf.mxu0
      %v1398 = vadd.f32 0.0, %v1397
      %1399 = vmatmul.bf16.gmra.mxu0 %v1334
      %v1400 = vpop.f32.mrf.mxu0
      %v1401 = vadd.f32 0.0, %v1400
      %v1402 = vpop.f32.mrf.mxu0
      %v1403 = vadd.f32 0.0, %v1402
      %1404 = vmatmul.bf16.gmra.mxu0 %v1337
      %v1405 = vpop.f32.mrf.mxu0
      %v1406 = vadd.f32 0.0, %v1405
      %v1407 = vpop.f32.mrf.mxu0
      %v1408 = vadd.f32 0.0, %v1407
      %1409 = vmatmul.bf16.gmra.mxu0 %v1340
      %v1410 = vpop.f32.mrf.mxu0
      %v1411 = vadd.f32 0.0, %v1410
      %v1412 = vpop.f32.mrf.mxu0
      %v1413 = vadd.f32 0.0, %v1412
      %1414 = vmatmul.bf16.gmra.mxu0 %v1343
      %v1415 = vpop.f32.mrf.mxu0
      %v1416 = vadd.f32 0.0, %v1415
      %v1417 = vpop.f32.mrf.mxu0
      %v1418 = vadd.f32 0.0, %v1417
      %1419 = vmatmul.bf16.gmra.mxu0 %v1346
      %v1420 = vpop.f32.mrf.mxu0
      %v1421 = vadd.f32 0.0, %v1420
      %v1422 = vpop.f32.mrf.mxu0
      %v1423 = vadd.f32 0.0, %v1422
      %1424 = vmatmul.bf16.gmra.mxu0 %v1349
      %v1425 = vpop.f32.mrf.mxu0
      %v1426 = vadd.f32 0.0, %v1425
      %v1427 = vpop.f32.mrf.mxu0
      %v1428 = vadd.f32 0.0, %v1427
      %1429 = vmatmul.bf16.gmra.mxu0 %v1352
      %v1430 = vpop.f32.mrf.mxu0
      %v1431 = vadd.f32 0.0, %v1430
      %v1432 = vpop.f32.mrf.mxu0
      %v1433 = vadd.f32 0.0, %v1432
      %1434 = vmatmul.bf16.gmra.mxu0 %v1355
      %v1435 = vpop.f32.mrf.mxu0
      %v1436 = vadd.f32 0.0, %v1435
      %v1437 = vpop.f32.mrf.mxu0
      %v1438 = vadd.f32 0.0, %v1437
      %1439 = vmatmul.bf16.gmra.mxu0 %v1358
      %v1440 = vpop.f32.mrf.mxu0
      %v1441 = vadd.f32 0.0, %v1440
      %v1442 = vpop.f32.mrf.mxu0
      %v1443 = vadd.f32 0.0, %v1442
      %1444 = vmatmul.bf16.gmra.mxu0 %v1361
      %v1445 = vpop.f32.mrf.mxu0
      %v1446 = vadd.f32 0.0, %v1445
      %v1447 = vpop.f32.mrf.mxu0
      %v1448 = vadd.f32 0.0, %v1447
      %1449 = vmatmul.bf16.gmra.mxu0 %v1364
      %v1450 = vpop.f32.mrf.mxu0
      %v1451 = vadd.f32 0.0, %v1450
      %v1452 = vpop.f32.mrf.mxu0
      %v1453 = vadd.f32 0.0, %v1452
      %1454 = vdwg.mxu0
      %v1459 = vunpack.c.l.b16 %v989
      %v1460 = vunpack.c.l.b16 %v990
      %v1461 = vunpack.c.l.b16 %v991
      %v1462 = vunpack.c.l.b16 %v992
      %v1463 = vpack.c.b16 %v1460, %v1459
      %v1464 = vpack.c.b16 %v1462, %v1461
      %vm1467 = vcmask 261120
      %v1469 = vsel %vm1467, %v973, 0
      %v1472 = vsel %vm1467, %v974, 0
      %v1475 = vsel %vm1467, %v975, 0
      %v1478 = vsel %vm1467, %v976, 0
      %v1481 = vsel %vm1467, %v977, 0
      %v1484 = vsel %vm1467, %v978, 0
      %v1487 = vsel %vm1467, %v979, 0
      %v1490 = vsel %vm1467, %v980, 0
      %v1493 = vsel %vm1467, %v981, 0
      %v1496 = vsel %vm1467, %v982, 0
      %v1499 = vsel %vm1467, %v983, 0
      %v1502 = vsel %vm1467, %v984, 0
      %v1505 = vsel %vm1467, %v985, 0
      %v1508 = vsel %vm1467, %v986, 0
      %v1511 = vsel %vm1467, %v987, 0
      %v1514 = vsel %vm1467, %v988, 0
      %1516 = vmatpush.bf16.msra.mxu0 0
      %1517 = vmatpush.bf16.msra.mxu0 0
      %1518 = vmatpush.bf16.msra.mxu0 0
      %1519 = vmatpush.bf16.msra.mxu0 0
      %1520 = vmatpush.bf16.msra.mxu0 0
      %1521 = vmatpush.bf16.msra.mxu0 0
      %1522 = vmatpush.bf16.msra.mxu0 %v1464
      %1523 = vmatpush.bf16.msra.mxu0 %v1463
      %1524 = vmatmul.bf16.gmra.mxu0 %v1469
      %v1525 = vpop.f32.mrf.mxu0
      %v1526 = vadd.f32 %v1376, %v1525
      %v1527 = vpop.f32.mrf.mxu0
      %v1528 = vadd.f32 %v1378, %v1527
      %1529 = vmatmul.bf16.gmra.mxu0 %v1472
      %v1530 = vpop.f32.mrf.mxu0
      %v1531 = vadd.f32 %v1381, %v1530
      %v1532 = vpop.f32.mrf.mxu0
      %v1533 = vadd.f32 %v1383, %v1532
      %1534 = vmatmul.bf16.gmra.mxu0 %v1475
      %v1535 = vpop.f32.mrf.mxu0
      %v1536 = vadd.f32 %v1386, %v1535
      %v1537 = vpop.f32.mrf.mxu0
      %v1538 = vadd.f32 %v1388, %v1537
      %1539 = vmatmul.bf16.gmra.mxu0 %v1478
      %v1540 = vpop.f32.mrf.mxu0
      %v1541 = vadd.f32 %v1391, %v1540
      %v1542 = vpop.f32.mrf.mxu0
      %v1543 = vadd.f32 %v1393, %v1542
      %1544 = vmatmul.bf16.gmra.mxu0 %v1481
      %v1545 = vpop.f32.mrf.mxu0
      %v1546 = vadd.f32 %v1396, %v1545
      %v1547 = vpop.f32.mrf.mxu0
      %v1548 = vadd.f32 %v1398, %v1547
      %1549 = vmatmul.bf16.gmra.mxu0 %v1484
      %v1550 = vpop.f32.mrf.mxu0
      %v1551 = vadd.f32 %v1401, %v1550
      %v1552 = vpop.f32.mrf.mxu0
      %v1553 = vadd.f32 %v1403, %v1552
      %1554 = vmatmul.bf16.gmra.mxu0 %v1487
      %v1555 = vpop.f32.mrf.mxu0
      %v1556 = vadd.f32 %v1406, %v1555
      %v1557 = vpop.f32.mrf.mxu0
      %v1558 = vadd.f32 %v1408, %v1557
      %1559 = vmatmul.bf16.gmra.mxu0 %v1490
      %v1560 = vpop.f32.mrf.mxu0
      %v1561 = vadd.f32 %v1411, %v1560
      %v1562 = vpop.f32.mrf.mxu0
      %v1563 = vadd.f32 %v1413, %v1562
      %1564 = vmatmul.bf16.gmra.mxu0 %v1493
      %v1565 = vpop.f32.mrf.mxu0
      %v1566 = vadd.f32 %v1416, %v1565
      %v1567 = vpop.f32.mrf.mxu0
      %v1568 = vadd.f32 %v1418, %v1567
      %1569 = vmatmul.bf16.gmra.mxu0 %v1496
      %v1570 = vpop.f32.mrf.mxu0
      %v1571 = vadd.f32 %v1421, %v1570
      %v1572 = vpop.f32.mrf.mxu0
      %v1573 = vadd.f32 %v1423, %v1572
      %1574 = vmatmul.bf16.gmra.mxu0 %v1499
      %v1575 = vpop.f32.mrf.mxu0
      %v1576 = vadd.f32 %v1426, %v1575
      %v1577 = vpop.f32.mrf.mxu0
      %v1578 = vadd.f32 %v1428, %v1577
      %1579 = vmatmul.bf16.gmra.mxu0 %v1502
      %v1580 = vpop.f32.mrf.mxu0
      %v1581 = vadd.f32 %v1431, %v1580
      %v1582 = vpop.f32.mrf.mxu0
      %v1583 = vadd.f32 %v1433, %v1582
      %1584 = vmatmul.bf16.gmra.mxu0 %v1505
      %v1585 = vpop.f32.mrf.mxu0
      %v1586 = vadd.f32 %v1436, %v1585
      %v1587 = vpop.f32.mrf.mxu0
      %v1588 = vadd.f32 %v1438, %v1587
      %1589 = vmatmul.bf16.gmra.mxu0 %v1508
      %v1590 = vpop.f32.mrf.mxu0
      %v1591 = vadd.f32 %v1441, %v1590
      %v1592 = vpop.f32.mrf.mxu0
      %v1593 = vadd.f32 %v1443, %v1592
      %1594 = vmatmul.bf16.gmra.mxu0 %v1511
      %v1595 = vpop.f32.mrf.mxu0
      %v1596 = vadd.f32 %v1446, %v1595
      %v1597 = vpop.f32.mrf.mxu0
      %v1598 = vadd.f32 %v1448, %v1597
      %1599 = vmatmul.bf16.gmra.mxu0 %v1514
      %v1600 = vpop.f32.mrf.mxu0
      %v1601 = vadd.f32 %v1451, %v1600
      %v1602 = vpop.f32.mrf.mxu0
      %v1603 = vadd.f32 %v1453, %v1602
      %1604 = vdwg.mxu0
      %v1605 = vld [vmem:[%s639] sm:$0xf]
      %v1606 = vld [vmem:[%s639 + $0x4] sm:$0xf]
      %v1607 = vld [vmem:[%s639 + $0x8] sm:$0xf]
      %v1608 = vld [vmem:[%s639 + $0xc] sm:$0xf]
      %v1609 = vld [vmem:[%s639 + $0x10] sm:$0xf]
      %v1610 = vld [vmem:[%s639 + $0x14] sm:$0xf]
      %v1611 = vld [vmem:[%s639 + $0x18] sm:$0xf]
      %v1612 = vld [vmem:[%s639 + $0x1c] sm:$0xf]
      %v1613 = vld [vmem:[%s639 + $0x20] sm:$0xf]
      %v1614 = vld [vmem:[%s639 + $0x24] sm:$0xf]
      %v1615 = vld [vmem:[%s639 + $0x28] sm:$0xf]
      %v1616 = vld [vmem:[%s639 + $0x2c] sm:$0xf]
      %v1617 = vld [vmem:[%s639 + $0x30] sm:$0xf]
      %v1618 = vld [vmem:[%s639 + $0x34] sm:$0xf]
      %v1619 = vld [vmem:[%s639 + $0x38] sm:$0xf]
      %v1620 = vld [vmem:[%s639 + $0x3c] sm:$0xf]
      %v1621 = vld [vmem:[%s639 + $0x40] sm:$0xf]
      %v1622 = vld [vmem:[%s639 + $0x44] sm:$0xf]
      %v1623 = vld [vmem:[%s639 + $0x48] sm:$0xf]
      %v1624 = vld [vmem:[%s639 + $0x4c] sm:$0xf]
      %v1625 = vld [vmem:[%s639 + $0x50] sm:$0xf]
      %v1626 = vld [vmem:[%s639 + $0x54] sm:$0xf]
      %v1627 = vld [vmem:[%s639 + $0x58] sm:$0xf]
      %v1628 = vld [vmem:[%s639 + $0x5c] sm:$0xf]
      %v1629 = vld [vmem:[%s639 + $0x60] sm:$0xf]
      %v1630 = vld [vmem:[%s639 + $0x64] sm:$0xf]
      %v1631 = vld [vmem:[%s639 + $0x68] sm:$0xf]
      %v1632 = vld [vmem:[%s639 + $0x6c] sm:$0xf]
      %v1633 = vld [vmem:[%s639 + $0x70] sm:$0xf]
      %v1634 = vld [vmem:[%s639 + $0x74] sm:$0xf]
      %v1635 = vld [vmem:[%s639 + $0x78] sm:$0xf]
      %v1636 = vld [vmem:[%s639 + $0x7c] sm:$0xf]
      %v1637 = vld [vmem:[%s649] sm:$0x1]
      %v1639 = vpack.i.b16 %v1637, %v1637
      %v1641 = vperm.slane %v1639, 0
      %v1642 = vunpack.c.l.bf16 %v1605
      %v1643 = vunpack.c.l.bf16 %v1606
      %v1644 = vunpack.c.l.bf16 %v1607
      %v1645 = vunpack.c.l.bf16 %v1608
      %v1646 = vunpack.c.l.bf16 %v1609
      %v1647 = vunpack.c.l.bf16 %v1610
      %v1648 = vunpack.c.l.bf16 %v1611
      %v1649 = vunpack.c.l.bf16 %v1612
      %v1650 = vunpack.c.l.bf16 %v1613
      %v1651 = vunpack.c.l.bf16 %v1614
      %v1652 = vunpack.c.l.bf16 %v1615
      %v1653 = vunpack.c.l.bf16 %v1616
      %v1654 = vunpack.c.l.bf16 %v1617
      %v1655 = vunpack.c.l.bf16 %v1618
      %v1656 = vunpack.c.l.bf16 %v1619
      %v1657 = vunpack.c.l.bf16 %v1620
      %v1658 = vunpack.c.l.bf16 %v1621
      %v1659 = vunpack.c.l.bf16 %v1622
      %v1660 = vunpack.c.l.bf16 %v1623
      %v1661 = vunpack.c.l.bf16 %v1624
      %v1662 = vunpack.c.l.bf16 %v1625
      %v1663 = vunpack.c.l.bf16 %v1626
      %v1664 = vunpack.c.l.bf16 %v1627
      %v1665 = vunpack.c.l.bf16 %v1628
      %v1666 = vunpack.c.l.bf16 %v1629
      %v1667 = vunpack.c.l.bf16 %v1630
      %v1668 = vunpack.c.l.bf16 %v1631
      %v1669 = vunpack.c.l.bf16 %v1632
      %v1670 = vunpack.c.l.bf16 %v1633
      %v1671 = vunpack.c.l.bf16 %v1634
      %v1672 = vunpack.c.l.bf16 %v1635
      %v1673 = vunpack.c.l.bf16 %v1636
      %v1674 = vunpack.c.l.bf16 %v1641
      %v1675 = vmul.f32 %v1642, %v1674
      %v1676 = vmul.f32 %v1643, %v1674
      %v1677 = vmul.f32 %v1644, %v1674
      %v1678 = vmul.f32 %v1645, %v1674
      %v1679 = vmul.f32 %v1646, %v1674
      %v1680 = vmul.f32 %v1647, %v1674
      %v1681 = vmul.f32 %v1648, %v1674
      %v1682 = vmul.f32 %v1649, %v1674
      %v1683 = vmul.f32 %v1650, %v1674
      %v1684 = vmul.f32 %v1651, %v1674
      %v1685 = vmul.f32 %v1652, %v1674
      %v1686 = vmul.f32 %v1653, %v1674
      %v1687 = vmul.f32 %v1654, %v1674
      %v1688 = vmul.f32 %v1655, %v1674
      %v1689 = vmul.f32 %v1656, %v1674
      %v1690 = vmul.f32 %v1657, %v1674
      %v1691 = vmul.f32 %v1658, %v1674
      %v1692 = vmul.f32 %v1659, %v1674
      %v1693 = vmul.f32 %v1660, %v1674
      %v1694 = vmul.f32 %v1661, %v1674
      %v1695 = vmul.f32 %v1662, %v1674
      %v1696 = vmul.f32 %v1663, %v1674
      %v1697 = vmul.f32 %v1664, %v1674
      %v1698 = vmul.f32 %v1665, %v1674
      %v1699 = vmul.f32 %v1666, %v1674
      %v1700 = vmul.f32 %v1667, %v1674
      %v1701 = vmul.f32 %v1668, %v1674
      %v1702 = vmul.f32 %v1669, %v1674
      %v1703 = vmul.f32 %v1670, %v1674
      %v1704 = vmul.f32 %v1671, %v1674
      %v1705 = vmul.f32 %v1672, %v1674
      %v1706 = vmul.f32 %v1673, %v1674
      %v1707 = vpack.c.bf16 %v1675, %v1675
      %v1708 = vpack.c.bf16 %v1676, %v1676
      %v1709 = vpack.c.bf16 %v1677, %v1677
      %v1710 = vpack.c.bf16 %v1678, %v1678
      %v1711 = vpack.c.bf16 %v1679, %v1679
      %v1712 = vpack.c.bf16 %v1680, %v1680
      %v1713 = vpack.c.bf16 %v1681, %v1681
      %v1714 = vpack.c.bf16 %v1682, %v1682
      %v1715 = vpack.c.bf16 %v1683, %v1683
      %v1716 = vpack.c.bf16 %v1684, %v1684
      %v1717 = vpack.c.bf16 %v1685, %v1685
      %v1718 = vpack.c.bf16 %v1686, %v1686
      %v1719 = vpack.c.bf16 %v1687, %v1687
      %v1720 = vpack.c.bf16 %v1688, %v1688
      %v1721 = vpack.c.bf16 %v1689, %v1689
      %v1722 = vpack.c.bf16 %v1690, %v1690
      %v1723 = vpack.c.bf16 %v1691, %v1691
      %v1724 = vpack.c.bf16 %v1692, %v1692
      %v1725 = vpack.c.bf16 %v1693, %v1693
      %v1726 = vpack.c.bf16 %v1694, %v1694
      %v1727 = vpack.c.bf16 %v1695, %v1695
      %v1728 = vpack.c.bf16 %v1696, %v1696
      %v1729 = vpack.c.bf16 %v1697, %v1697
      %v1730 = vpack.c.bf16 %v1698, %v1698
      %v1731 = vpack.c.bf16 %v1699, %v1699
      %v1732 = vpack.c.bf16 %v1700, %v1700
      %v1733 = vpack.c.bf16 %v1701, %v1701
      %v1734 = vpack.c.bf16 %v1702, %v1702
      %v1735 = vpack.c.bf16 %v1703, %v1703
      %v1736 = vpack.c.bf16 %v1704, %v1704
      %v1737 = vpack.c.bf16 %v1705, %v1705
      %v1738 = vpack.c.bf16 %v1706, %v1706
      %v1739 = vld [vmem:[%s658] sm:$0x1]
      %v1741 = vpack.i.b16 %v1739, %v1739
      %v1743 = vperm.slane %v1741, 0
      %v1744 = vunpack.c.l.bf16 %v1707
      %v1745 = vunpack.c.l.bf16 %v1708
      %v1746 = vunpack.c.l.bf16 %v1709
      %v1747 = vunpack.c.l.bf16 %v1710
      %v1748 = vunpack.c.l.bf16 %v1711
      %v1749 = vunpack.c.l.bf16 %v1712
      %v1750 = vunpack.c.l.bf16 %v1713
      %v1751 = vunpack.c.l.bf16 %v1714
      %v1752 = vunpack.c.l.bf16 %v1715
      %v1753 = vunpack.c.l.bf16 %v1716
      %v1754 = vunpack.c.l.bf16 %v1717
      %v1755 = vunpack.c.l.bf16 %v1718
      %v1756 = vunpack.c.l.bf16 %v1719
      %v1757 = vunpack.c.l.bf16 %v1720
      %v1758 = vunpack.c.l.bf16 %v1721
      %v1759 = vunpack.c.l.bf16 %v1722
      %v1760 = vunpack.c.l.bf16 %v1723
      %v1761 = vunpack.c.l.bf16 %v1724
      %v1762 = vunpack.c.l.bf16 %v1725
      %v1763 = vunpack.c.l.bf16 %v1726
      %v1764 = vunpack.c.l.bf16 %v1727
      %v1765 = vunpack.c.l.bf16 %v1728
      %v1766 = vunpack.c.l.bf16 %v1729
      %v1767 = vunpack.c.l.bf16 %v1730
      %v1768 = vunpack.c.l.bf16 %v1731
      %v1769 = vunpack.c.l.bf16 %v1732
      %v1770 = vunpack.c.l.bf16 %v1733
      %v1771 = vunpack.c.l.bf16 %v1734
      %v1772 = vunpack.c.l.bf16 %v1735
      %v1773 = vunpack.c.l.bf16 %v1736
      %v1774 = vunpack.c.l.bf16 %v1737
      %v1775 = vunpack.c.l.bf16 %v1738
      %v1776 = vunpack.c.l.bf16 %v1743
      %v1777 = vadd.f32 %v1744, %v1776
      %v1778 = vadd.f32 %v1745, %v1776
      %v1779 = vadd.f32 %v1746, %v1776
      %v1780 = vadd.f32 %v1747, %v1776
      %v1781 = vadd.f32 %v1748, %v1776
      %v1782 = vadd.f32 %v1749, %v1776
      %v1783 = vadd.f32 %v1750, %v1776
      %v1784 = vadd.f32 %v1751, %v1776
      %v1785 = vadd.f32 %v1752, %v1776
      %v1786 = vadd.f32 %v1753, %v1776
      %v1787 = vadd.f32 %v1754, %v1776
      %v1788 = vadd.f32 %v1755, %v1776
      %v1789 = vadd.f32 %v1756, %v1776
      %v1790 = vadd.f32 %v1757, %v1776
      %v1791 = vadd.f32 %v1758, %v1776
      %v1792 = vadd.f32 %v1759, %v1776
      %v1793 = vadd.f32 %v1760, %v1776
      %v1794 = vadd.f32 %v1761, %v1776
      %v1795 = vadd.f32 %v1762, %v1776
      %v1796 = vadd.f32 %v1763, %v1776
      %v1797 = vadd.f32 %v1764, %v1776
      %v1798 = vadd.f32 %v1765, %v1776
      %v1799 = vadd.f32 %v1766, %v1776
      %v1800 = vadd.f32 %v1767, %v1776
      %v1801 = vadd.f32 %v1768, %v1776
      %v1802 = vadd.f32 %v1769, %v1776
      %v1803 = vadd.f32 %v1770, %v1776
      %v1804 = vadd.f32 %v1771, %v1776
      %v1805 = vadd.f32 %v1772, %v1776
      %v1806 = vadd.f32 %v1773, %v1776
      %v1807 = vadd.f32 %v1774, %v1776
      %v1808 = vadd.f32 %v1775, %v1776
      %v1809 = vpack.c.bf16 %v1777, %v1777
      %v1810 = vpack.c.bf16 %v1778, %v1778
      %v1811 = vpack.c.bf16 %v1779, %v1779
      %v1812 = vpack.c.bf16 %v1780, %v1780
      %v1813 = vpack.c.bf16 %v1781, %v1781
      %v1814 = vpack.c.bf16 %v1782, %v1782
      %v1815 = vpack.c.bf16 %v1783, %v1783
      %v1816 = vpack.c.bf16 %v1784, %v1784
      %v1817 = vpack.c.bf16 %v1785, %v1785
      %v1818 = vpack.c.bf16 %v1786, %v1786
      %v1819 = vpack.c.bf16 %v1787, %v1787
      %v1820 = vpack.c.bf16 %v1788, %v1788
      %v1821 = vpack.c.bf16 %v1789, %v1789
      %v1822 = vpack.c.bf16 %v1790, %v1790
      %v1823 = vpack.c.bf16 %v1791, %v1791
      %v1824 = vpack.c.bf16 %v1792, %v1792
      %v1825 = vpack.c.bf16 %v1793, %v1793
      %v1826 = vpack.c.bf16 %v1794, %v1794
      %v1827 = vpack.c.bf16 %v1795, %v1795
      %v1828 = vpack.c.bf16 %v1796, %v1796
      %v1829 = vpack.c.bf16 %v1797, %v1797
      %v1830 = vpack.c.bf16 %v1798, %v1798
      %v1831 = vpack.c.bf16 %v1799, %v1799
      %v1832 = vpack.c.bf16 %v1800, %v1800
      %v1833 = vpack.c.bf16 %v1801, %v1801
      %v1834 = vpack.c.bf16 %v1802, %v1802
      %v1835 = vpack.c.bf16 %v1803, %v1803
      %v1836 = vpack.c.bf16 %v1804, %v1804
      %v1837 = vpack.c.bf16 %v1805, %v1805
      %v1838 = vpack.c.bf16 %v1806, %v1806
      %v1839 = vpack.c.bf16 %v1807, %v1807
      %v1840 = vpack.c.bf16 %v1808, %v1808
      %v1841 = vunpack.c.l.bf16 %v1809
      %v1842 = vunpack.c.l.bf16 %v1810
      %v1843 = vunpack.c.l.bf16 %v1811
      %v1844 = vunpack.c.l.bf16 %v1812
      %v1845 = vunpack.c.l.bf16 %v1813
      %v1846 = vunpack.c.l.bf16 %v1814
      %v1847 = vunpack.c.l.bf16 %v1815
      %v1848 = vunpack.c.l.bf16 %v1816
      %v1849 = vunpack.c.l.bf16 %v1817
      %v1850 = vunpack.c.l.bf16 %v1818
      %v1851 = vunpack.c.l.bf16 %v1819
      %v1852 = vunpack.c.l.bf16 %v1820
      %v1853 = vunpack.c.l.bf16 %v1821
      %v1854 = vunpack.c.l.bf16 %v1822
      %v1855 = vunpack.c.l.bf16 %v1823
      %v1856 = vunpack.c.l.bf16 %v1824
      %v1857 = vunpack.c.l.bf16 %v1825
      %v1858 = vunpack.c.l.bf16 %v1826
      %v1859 = vunpack.c.l.bf16 %v1827
      %v1860 = vunpack.c.l.bf16 %v1828
      %v1861 = vunpack.c.l.bf16 %v1829
      %v1862 = vunpack.c.l.bf16 %v1830
      %v1863 = vunpack.c.l.bf16 %v1831
      %v1864 = vunpack.c.l.bf16 %v1832
      %v1865 = vunpack.c.l.bf16 %v1833
      %v1866 = vunpack.c.l.bf16 %v1834
      %v1867 = vunpack.c.l.bf16 %v1835
      %v1868 = vunpack.c.l.bf16 %v1836
      %v1869 = vunpack.c.l.bf16 %v1837
      %v1870 = vunpack.c.l.bf16 %v1838
      %v1871 = vunpack.c.l.bf16 %v1839
      %v1872 = vunpack.c.l.bf16 %v1840
      %v1873 = vmax.f32 %v1841, 0.0
      %v1874 = vmax.f32 %v1842, 0.0
      %v1875 = vmax.f32 %v1843, 0.0
      %v1876 = vmax.f32 %v1844, 0.0
      %v1877 = vmax.f32 %v1845, 0.0
      %v1878 = vmax.f32 %v1846, 0.0
      %v1879 = vmax.f32 %v1847, 0.0
      %v1880 = vmax.f32 %v1848, 0.0
      %v1881 = vmax.f32 %v1849, 0.0
      %v1882 = vmax.f32 %v1850, 0.0
      %v1883 = vmax.f32 %v1851, 0.0
      %v1884 = vmax.f32 %v1852, 0.0
      %v1885 = vmax.f32 %v1853, 0.0
      %v1886 = vmax.f32 %v1854, 0.0
      %v1887 = vmax.f32 %v1855, 0.0
      %v1888 = vmax.f32 %v1856, 0.0
      %v1889 = vmax.f32 %v1857, 0.0
      %v1890 = vmax.f32 %v1858, 0.0
      %v1891 = vmax.f32 %v1859, 0.0
      %v1892 = vmax.f32 %v1860, 0.0
      %v1893 = vmax.f32 %v1861, 0.0
      %v1894 = vmax.f32 %v1862, 0.0
      %v1895 = vmax.f32 %v1863, 0.0
      %v1896 = vmax.f32 %v1864, 0.0
      %v1897 = vmax.f32 %v1865, 0.0
      %v1898 = vmax.f32 %v1866, 0.0
      %v1899 = vmax.f32 %v1867, 0.0
      %v1900 = vmax.f32 %v1868, 0.0
      %v1901 = vmax.f32 %v1869, 0.0
      %v1902 = vmax.f32 %v1870, 0.0
      %v1903 = vmax.f32 %v1871, 0.0
      %v1904 = vmax.f32 %v1872, 0.0
      %v1905 = vpack.c.bf16 %v1874, %v1873
      %v1906 = vpack.c.bf16 %v1876, %v1875
      %v1907 = vpack.c.bf16 %v1878, %v1877
      %v1908 = vpack.c.bf16 %v1880, %v1879
      %v1909 = vpack.c.bf16 %v1882, %v1881
      %v1910 = vpack.c.bf16 %v1884, %v1883
      %v1911 = vpack.c.bf16 %v1886, %v1885
      %v1912 = vpack.c.bf16 %v1888, %v1887
      %v1913 = vpack.c.bf16 %v1890, %v1889
      %v1914 = vpack.c.bf16 %v1892, %v1891
      %v1915 = vpack.c.bf16 %v1894, %v1893
      %v1916 = vpack.c.bf16 %v1896, %v1895
      %v1917 = vpack.c.bf16 %v1898, %v1897
      %v1918 = vpack.c.bf16 %v1900, %v1899
      %v1919 = vpack.c.bf16 %v1902, %v1901
      %v1920 = vpack.c.bf16 %v1904, %v1903
      %v1921 = vld [vmem:[%s11] sm:$0xf]
      %v1922 = vld [vmem:[%s11 + $0x4] sm:$0xf]
      %v1925 = vunpack.c.l.b16 %v1921
      %v1926 = vunpack.c.l.b16 %v1922
      %v1927 = vpack.c.b16 %v1926, %v1925
      %v1930 = vsel %vm1317, %v1905, 0
      %v1933 = vsel %vm1317, %v1906, 0
      %v1936 = vsel %vm1317, %v1907, 0
      %v1939 = vsel %vm1317, %v1908, 0
      %v1942 = vsel %vm1317, %v1909, 0
      %v1945 = vsel %vm1317, %v1910, 0
      %v1948 = vsel %vm1317, %v1911, 0
      %v1951 = vsel %vm1317, %v1912, 0
      %v1954 = vsel %vm1317, %v1913, 0
      %v1957 = vsel %vm1317, %v1914, 0
      %v1960 = vsel %vm1317, %v1915, 0
      %v1963 = vsel %vm1317, %v1916, 0
      %v1966 = vsel %vm1317, %v1917, 0
      %v1969 = vsel %vm1317, %v1918, 0
      %v1972 = vsel %vm1317, %v1919, 0
      %v1975 = vsel %vm1317, %v1920, 0
      %1977 = vmatpush.bf16.msra.mxu0 0
      %1978 = vmatpush.bf16.msra.mxu0 0
      %1979 = vmatpush.bf16.msra.mxu0 0
      %1980 = vmatpush.bf16.msra.mxu0 0
      %1981 = vmatpush.bf16.msra.mxu0 0
      %1982 = vmatpush.bf16.msra.mxu0 0
      %1983 = vmatpush.bf16.msra.mxu0 0
      %1984 = vmatpush.bf16.msra.mxu0 %v1927
      %1985 = vmatmul.bf16.gmra.mxu0 %v1930
      %v1986 = vpop.f32.mrf.mxu0
      %v1987 = vadd.f32 0.0, %v1986
      %v1988 = vpop.f32.mrf.mxu0
      %v1989 = vadd.f32 0.0, %v1988
      %1990 = vmatmul.bf16.gmra.mxu0 %v1933
      %v1991 = vpop.f32.mrf.mxu0
      %v1992 = vadd.f32 0.0, %v1991
      %v1993 = vpop.f32.mrf.mxu0
      %v1994 = vadd.f32 0.0, %v1993
      %1995 = vmatmul.bf16.gmra.mxu0 %v1936
      %v1996 = vpop.f32.mrf.mxu0
      %v1997 = vadd.f32 0.0, %v1996
      %v1998 = vpop.f32.mrf.mxu0
      %v1999 = vadd.f32 0.0, %v1998
      %2000 = vmatmul.bf16.gmra.mxu0 %v1939
      %v2001 = vpop.f32.mrf.mxu0
      %v2002 = vadd.f32 0.0, %v2001
      %v2003 = vpop.f32.mrf.mxu0
      %v2004 = vadd.f32 0.0, %v2003
      %2005 = vmatmul.bf16.gmra.mxu0 %v1942
      %v2006 = vpop.f32.mrf.mxu0
      %v2007 = vadd.f32 0.0, %v2006
      %v2008 = vpop.f32.mrf.mxu0
      %v2009 = vadd.f32 0.0, %v2008
      %2010 = vmatmul.bf16.gmra.mxu0 %v1945
      %v2011 = vpop.f32.mrf.mxu0
      %v2012 = vadd.f32 0.0, %v2011
      %v2013 = vpop.f32.mrf.mxu0
      %v2014 = vadd.f32 0.0, %v2013
      %2015 = vmatmul.bf16.gmra.mxu0 %v1948
      %v2016 = vpop.f32.mrf.mxu0
      %v2017 = vadd.f32 0.0, %v2016
      %v2018 = vpop.f32.mrf.mxu0
      %v2019 = vadd.f32 0.0, %v2018
      %2020 = vmatmul.bf16.gmra.mxu0 %v1951
      %v2021 = vpop.f32.mrf.mxu0
      %v2022 = vadd.f32 0.0, %v2021
      %v2023 = vpop.f32.mrf.mxu0
      %v2024 = vadd.f32 0.0, %v2023
      %2025 = vmatmul.bf16.gmra.mxu0 %v1954
      %v2026 = vpop.f32.mrf.mxu0
      %v2027 = vadd.f32 0.0, %v2026
      %v2028 = vpop.f32.mrf.mxu0
      %v2029 = vadd.f32 0.0, %v2028
      %2030 = vmatmul.bf16.gmra.mxu0 %v1957
      %v2031 = vpop.f32.mrf.mxu0
      %v2032 = vadd.f32 0.0, %v2031
      %v2033 = vpop.f32.mrf.mxu0
      %v2034 = vadd.f32 0.0, %v2033
      %2035 = vmatmul.bf16.gmra.mxu0 %v1960
      %v2036 = vpop.f32.mrf.mxu0
      %v2037 = vadd.f32 0.0, %v2036
      %v2038 = vpop.f32.mrf.mxu0
      %v2039 = vadd.f32 0.0, %v2038
      %2040 = vmatmul.bf16.gmra.mxu0 %v1963
      %v2041 = vpop.f32.mrf.mxu0
      %v2042 = vadd.f32 0.0, %v2041
      %v2043 = vpop.f32.mrf.mxu0
      %v2044 = vadd.f32 0.0, %v2043
      %2045 = vmatmul.bf16.gmra.mxu0 %v1966
      %v2046 = vpop.f32.mrf.mxu0
      %v2047 = vadd.f32 0.0, %v2046
      %v2048 = vpop.f32.mrf.mxu0
      %v2049 = vadd.f32 0.0, %v2048
      %2050 = vmatmul.bf16.gmra.mxu0 %v1969
      %v2051 = vpop.f32.mrf.mxu0
      %v2052 = vadd.f32 0.0, %v2051
      %v2053 = vpop.f32.mrf.mxu0
      %v2054 = vadd.f32 0.0, %v2053
      %2055 = vmatmul.bf16.gmra.mxu0 %v1972
      %v2056 = vpop.f32.mrf.mxu0
      %v2057 = vadd.f32 0.0, %v2056
      %v2058 = vpop.f32.mrf.mxu0
      %v2059 = vadd.f32 0.0, %v2058
      %2060 = vmatmul.bf16.gmra.mxu0 %v1975
      %v2061 = vpop.f32.mrf.mxu0
      %v2062 = vadd.f32 0.0, %v2061
      %v2063 = vpop.f32.mrf.mxu0
      %v2064 = vadd.f32 0.0, %v2063
      %2065 = vdwg.mxu0
      %v2066 = vadd.f32 %v1526, %v1987
      %v2067 = vadd.f32 %v1528, %v1989
      %v2068 = vadd.f32 %v1531, %v1992
      %v2069 = vadd.f32 %v1533, %v1994
      %v2070 = vadd.f32 %v1536, %v1997
      %v2071 = vadd.f32 %v1538, %v1999
      %v2072 = vadd.f32 %v1541, %v2002
      %v2073 = vadd.f32 %v1543, %v2004
      %v2074 = vadd.f32 %v1546, %v2007
      %v2075 = vadd.f32 %v1548, %v2009
      %v2076 = vadd.f32 %v1551, %v2012
      %v2077 = vadd.f32 %v1553, %v2014
      %v2078 = vadd.f32 %v1556, %v2017
      %v2079 = vadd.f32 %v1558, %v2019
      %v2080 = vadd.f32 %v1561, %v2022
      %v2081 = vadd.f32 %v1563, %v2024
      %v2082 = vadd.f32 %v1566, %v2027
      %v2083 = vadd.f32 %v1568, %v2029
      %v2084 = vadd.f32 %v1571, %v2032
      %v2085 = vadd.f32 %v1573, %v2034
      %v2086 = vadd.f32 %v1576, %v2037
      %v2087 = vadd.f32 %v1578, %v2039
      %v2088 = vadd.f32 %v1581, %v2042
      %v2089 = vadd.f32 %v1583, %v2044
      %v2090 = vadd.f32 %v1586, %v2047
      %v2091 = vadd.f32 %v1588, %v2049
      %v2092 = vadd.f32 %v1591, %v2052
      %v2093 = vadd.f32 %v1593, %v2054
      %v2094 = vadd.f32 %v1596, %v2057
      %v2095 = vadd.f32 %v1598, %v2059
      %v2096 = vadd.f32 %v1601, %v2062
      %v2097 = vadd.f32 %v1603, %v2064
      %v2098 = vld [vmem:[%s12] sm:$0x1]
      %v2100 = vperm.slane %v2098, 0
      %v2102 = vadd.f32 %v2066, %v2100
      %v2103 = vadd.f32 %v2067, %v2100
      %v2104 = vadd.f32 %v2068, %v2100
      %v2105 = vadd.f32 %v2069, %v2100
      %v2106 = vadd.f32 %v2070, %v2100
      %v2107 = vadd.f32 %v2071, %v2100
      %v2108 = vadd.f32 %v2072, %v2100
      %v2109 = vadd.f32 %v2073, %v2100
      %v2110 = vadd.f32 %v2074, %v2100
      %v2111 = vadd.f32 %v2075, %v2100
      %v2112 = vadd.f32 %v2076, %v2100
      %v2113 = vadd.f32 %v2077, %v2100
      %v2114 = vadd.f32 %v2078, %v2100
      %v2115 = vadd.f32 %v2079, %v2100
      %v2116 = vadd.f32 %v2080, %v2100
      %v2117 = vadd.f32 %v2081, %v2100
      %v2118 = vadd.f32 %v2082, %v2100
      %v2119 = vadd.f32 %v2083, %v2100
      %v2120 = vadd.f32 %v2084, %v2100
      %v2121 = vadd.f32 %v2085, %v2100
      %v2122 = vadd.f32 %v2086, %v2100
      %v2123 = vadd.f32 %v2087, %v2100
      %v2124 = vadd.f32 %v2088, %v2100
      %v2125 = vadd.f32 %v2089, %v2100
      %v2126 = vadd.f32 %v2090, %v2100
      %v2127 = vadd.f32 %v2091, %v2100
      %v2128 = vadd.f32 %v2092, %v2100
      %v2129 = vadd.f32 %v2093, %v2100
      %v2130 = vadd.f32 %v2094, %v2100
      %v2131 = vadd.f32 %v2095, %v2100
      %v2132 = vadd.f32 %v2096, %v2100
      %v2133 = vadd.f32 %v2097, %v2100
      %v2134 = vpack.c.bf16 %v2102, %v2102
      %v2135 = vpack.c.bf16 %v2103, %v2103
      %v2136 = vpack.c.bf16 %v2104, %v2104
      %v2137 = vpack.c.bf16 %v2105, %v2105
      %v2138 = vpack.c.bf16 %v2106, %v2106
      %v2139 = vpack.c.bf16 %v2107, %v2107
      %v2140 = vpack.c.bf16 %v2108, %v2108
      %v2141 = vpack.c.bf16 %v2109, %v2109
      %v2142 = vpack.c.bf16 %v2110, %v2110
      %v2143 = vpack.c.bf16 %v2111, %v2111
      %v2144 = vpack.c.bf16 %v2112, %v2112
      %v2145 = vpack.c.bf16 %v2113, %v2113
      %v2146 = vpack.c.bf16 %v2114, %v2114
      %v2147 = vpack.c.bf16 %v2115, %v2115
      %v2148 = vpack.c.bf16 %v2116, %v2116
      %v2149 = vpack.c.bf16 %v2117, %v2117
      %v2150 = vpack.c.bf16 %v2118, %v2118
      %v2151 = vpack.c.bf16 %v2119, %v2119
      %v2152 = vpack.c.bf16 %v2120, %v2120
      %v2153 = vpack.c.bf16 %v2121, %v2121
      %v2154 = vpack.c.bf16 %v2122, %v2122
      %v2155 = vpack.c.bf16 %v2123, %v2123
      %v2156 = vpack.c.bf16 %v2124, %v2124
      %v2157 = vpack.c.bf16 %v2125, %v2125
      %v2158 = vpack.c.bf16 %v2126, %v2126
      %v2159 = vpack.c.bf16 %v2127, %v2127
      %v2160 = vpack.c.bf16 %v2128, %v2128
      %v2161 = vpack.c.bf16 %v2129, %v2129
      %v2162 = vpack.c.bf16 %v2130, %v2130
      %v2163 = vpack.c.bf16 %v2131, %v2131
      %v2164 = vpack.c.bf16 %v2132, %v2132
      %v2165 = vpack.c.bf16 %v2133, %v2133
      %vm2166 = vcmask 257024
      %2167 = vst.msk [vmem:[%s667] sm:$0xf] %vm2166, %v2134
      %2168 = vst.msk [vmem:[%s667 + $0x4] sm:$0xf] %vm2166, %v2135
      %2169 = vst.msk [vmem:[%s667 + $0x8] sm:$0xf] %vm2166, %v2136
      %2170 = vst.msk [vmem:[%s667 + $0xc] sm:$0xf] %vm2166, %v2137
      %2171 = vst.msk [vmem:[%s667 + $0x10] sm:$0xf] %vm2166, %v2138
      %2172 = vst.msk [vmem:[%s667 + $0x14] sm:$0xf] %vm2166, %v2139
      %2173 = vst.msk [vmem:[%s667 + $0x18] sm:$0xf] %vm2166, %v2140
      %2174 = vst.msk [vmem:[%s667 + $0x1c] sm:$0xf] %vm2166, %v2141
      %2175 = vst.msk [vmem:[%s667 + $0x20] sm:$0xf] %vm2166, %v2142
      %2176 = vst.msk [vmem:[%s667 + $0x24] sm:$0xf] %vm2166, %v2143
      %2177 = vst.msk [vmem:[%s667 + $0x28] sm:$0xf] %vm2166, %v2144
      %2178 = vst.msk [vmem:[%s667 + $0x2c] sm:$0xf] %vm2166, %v2145
      %2179 = vst.msk [vmem:[%s667 + $0x30] sm:$0xf] %vm2166, %v2146
      %2180 = vst.msk [vmem:[%s667 + $0x34] sm:$0xf] %vm2166, %v2147
      %2181 = vst.msk [vmem:[%s667 + $0x38] sm:$0xf] %vm2166, %v2148
      %2182 = vst.msk [vmem:[%s667 + $0x3c] sm:$0xf] %vm2166, %v2149
      %2183 = vst.msk [vmem:[%s667 + $0x40] sm:$0xf] %vm2166, %v2150
      %2184 = vst.msk [vmem:[%s667 + $0x44] sm:$0xf] %vm2166, %v2151
      %2185 = vst.msk [vmem:[%s667 + $0x48] sm:$0xf] %vm2166, %v2152
      %2186 = vst.msk [vmem:[%s667 + $0x4c] sm:$0xf] %vm2166, %v2153
      %2187 = vst.msk [vmem:[%s667 + $0x50] sm:$0xf] %vm2166, %v2154
      %2188 = vst.msk [vmem:[%s667 + $0x54] sm:$0xf] %vm2166, %v2155
      %2189 = vst.msk [vmem:[%s667 + $0x58] sm:$0xf] %vm2166, %v2156
      %2190 = vst.msk [vmem:[%s667 + $0x5c] sm:$0xf] %vm2166, %v2157
      %2191 = vst.msk [vmem:[%s667 + $0x60] sm:$0xf] %vm2166, %v2158
      %2192 = vst.msk [vmem:[%s667 + $0x64] sm:$0xf] %vm2166, %v2159
      %2193 = vst.msk [vmem:[%s667 + $0x68] sm:$0xf] %vm2166, %v2160
      %2194 = vst.msk [vmem:[%s667 + $0x6c] sm:$0xf] %vm2166, %v2161
      %2195 = vst.msk [vmem:[%s667 + $0x70] sm:$0xf] %vm2166, %v2162
      %2196 = vst.msk [vmem:[%s667 + $0x74] sm:$0xf] %vm2166, %v2163
      %2197 = vst.msk [vmem:[%s667 + $0x78] sm:$0xf] %vm2166, %v2164
      %2198 = vst.msk [vmem:[%s667 + $0x7c] sm:$0xf] %vm2166, %v2165
      %v2199 = vsel %vm1467, %v2102, 0.0
      %v2200 = vsel %vm1467, %v2103, 0.0
      %v2201 = vadd.f32 %v2199, %v2200
      %v2202 = vsel %vm1467, %v2104, 0.0
      %v2203 = vadd.f32 %v2201, %v2202
      %v2204 = vsel %vm1467, %v2105, 0.0
      %v2205 = vadd.f32 %v2203, %v2204
      %v2206 = vsel %vm1467, %v2106, 0.0
      %v2207 = vadd.f32 %v2205, %v2206
      %v2208 = vsel %vm1467, %v2107, 0.0
      %v2209 = vadd.f32 %v2207, %v2208
      %v2210 = vsel %vm1467, %v2108, 0.0
      %v2211 = vadd.f32 %v2209, %v2210
      %v2212 = vsel %vm1467, %v2109, 0.0
      %v2213 = vadd.f32 %v2211, %v2212
      %v2214 = vsel %vm1467, %v2110, 0.0
      %v2215 = vadd.f32 %v2213, %v2214
      %v2216 = vsel %vm1467, %v2111, 0.0
      %v2217 = vadd.f32 %v2215, %v2216
      %v2218 = vsel %vm1467, %v2112, 0.0
      %v2219 = vadd.f32 %v2217, %v2218
      %v2220 = vsel %vm1467, %v2113, 0.0
      %v2221 = vadd.f32 %v2219, %v2220
      %v2222 = vsel %vm1467, %v2114, 0.0
      %v2223 = vadd.f32 %v2221, %v2222
      %v2224 = vsel %vm1467, %v2115, 0.0
      %v2225 = vadd.f32 %v2223, %v2224
      %v2226 = vsel %vm1467, %v2116, 0.0
      %v2227 = vadd.f32 %v2225, %v2226
      %v2228 = vsel %vm1467, %v2117, 0.0
      %v2229 = vadd.f32 %v2227, %v2228
      %v2230 = vsel %vm1467, %v2118, 0.0
      %v2231 = vadd.f32 %v2229, %v2230
      %v2232 = vsel %vm1467, %v2119, 0.0
      %v2233 = vadd.f32 %v2231, %v2232
      %v2234 = vsel %vm1467, %v2120, 0.0
      %v2235 = vadd.f32 %v2233, %v2234
      %v2236 = vsel %vm1467, %v2121, 0.0
      %v2237 = vadd.f32 %v2235, %v2236
      %v2238 = vsel %vm1467, %v2122, 0.0
      %v2239 = vadd.f32 %v2237, %v2238
      %v2240 = vsel %vm1467, %v2123, 0.0
      %v2241 = vadd.f32 %v2239, %v2240
      %v2242 = vsel %vm1467, %v2124, 0.0
      %v2243 = vadd.f32 %v2241, %v2242
      %v2244 = vsel %vm1467, %v2125, 0.0
      %v2245 = vadd.f32 %v2243, %v2244
      %v2246 = vsel %vm1467, %v2126, 0.0
      %v2247 = vadd.f32 %v2245, %v2246
      %v2248 = vsel %vm1467, %v2127, 0.0
      %v2249 = vadd.f32 %v2247, %v2248
      %v2250 = vsel %vm1467, %v2128, 0.0
      %v2251 = vadd.f32 %v2249, %v2250
      %v2252 = vsel %vm1467, %v2129, 0.0
      %v2253 = vadd.f32 %v2251, %v2252
      %v2254 = vsel %vm1467, %v2130, 0.0
      %v2255 = vadd.f32 %v2253, %v2254
      %v2256 = vsel %vm1467, %v2131, 0.0
      %v2257 = vadd.f32 %v2255, %v2256
      %v2258 = vsel %vm1467, %v2132, 0.0
      %v2259 = vadd.f32 %v2257, %v2258
      %v2260 = vsel %vm1467, %v2133, 0.0
      %v2261 = vadd.f32 %v2259, %v2260
      %v2262 = vrot.slane %v2261, 4
      %v2263 = vadd.f32 %v2261, %v2262
      %v2264 = vrot.slane %v2263, 2
      %v2265 = vadd.f32 %v2263, %v2264
      %v2266 = vrot.slane %v2265, 1
      %v2267 = vadd.f32 %v2265, %v2266
      %v2268 = vmul.f32 %v2267, 0.00390625
      %p2269 = scmp.eq.s32.totalorder %s31, 0
      // Predicated region
      $region73: #{model_forward.14} parent=71 // pred_check
        %p2270 = pneg %p2269
      $region74: #{model_forward.14} parent=71 // pred_check_branch
        %2272 = sbr.rel (%p2270) target = $region76
      $region75: #{model_forward.14} parent=71 // pred_region
        %vm2273 = vcmask 253952
        %2274 = vst.msk [vmem:[%s671] sm:$0x1] %vm2273, %v2268
      $region76: #{model_forward.14} parent=71 // pred_fallthru
        _
      %p2275 = scmp.ne.s32.totalorder %s31, 0
      // Predicated region
      $region77: #{model_forward.14} parent=71 // pred_check
        %p2276 = pneg %p2275
      $region78: #{model_forward.14} parent=71 // pred_check_branch
        %2278 = sbr.rel (%p2276) target = $region80
      $region79: #{model_forward.14} parent=71 // pred_region
        %v2279 = vld [vmem:[%s671] sm:$0x1]
        %v2280 = vadd.f32 %v2279, %v2268
        %vm2281 = vcmask 253952
        %2282 = vst.msk [vmem:[%s671] sm:$0x1] %vm2281, %v2280
      $region80: #{model_forward.14} parent=71 // pred_fallthru
        _
      %s2283 = smul.u32 32, %s31
      %p2284 = scmp.lt.s32.totalorder %s30, 1
      %s2285 = scalar_select %p2284, %s30, 1
      %p2286 = scmp.lt.s32.totalorder %s2283, 31
      %s2287 = scalar_select %p2286, %s2283, 31
      %s2288 = smul.addr %s2285, 32
      %s2289 = sadd.s32 %s2287, %s2288
      %s2290 = smul.addr %s2289, 4
      %s2291 = scalar_lea.vmem %s13, %s2290
      %p2292 = scmp.lt.s32.totalorder %s30, 1
      %s2293 = scalar_select %p2292, %s30, 1
      %s2294 = scalar_lea.vmem %s14, %s2293
      // Predicated region
      $region81: #{model_forward.14} parent=71 // pred_check
        %p2295 = pneg %p382
      $region82: #{model_forward.14} parent=71 // pred_check_branch
        %2297 = sbr.rel (%p2295) target = $region84
      $region83: #{model_forward.14} parent=71 // pred_region
        %s2298 = smul.u32 32, %s31
      $region84: #{model_forward.14} parent=71 // pred_fallthru
        _
      // Predicated region
      $region85: #{model_forward.14} parent=71 // pred_check
        %p2299 = pneg %p408
      $region86: #{model_forward.14} parent=71 // pred_check_branch
        %2301 = sbr.rel (%p2299) target = $region88
      $region87: #{model_forward.14} parent=71 // pred_region
        _
      $region88: #{model_forward.14} parent=71 // pred_fallthru
        _
    $region72: #{model_forward.14} parent=5 // pred_fallthru
      _
    %p2302 = scmp.le.s32.totalorder 2, %s21
    // Predicated region
    $region89: #{model_forward.14} parent=5 // pred_check
      %p2303 = pneg %p2302
    $region90: #{model_forward.14} parent=5 // pred_check_branch
      %2305 = sbr.rel (%p2303) target = $region92
    $region91: #{model_forward.14} parent=5 // pred_region
      %s2306 = ssub.s32 %s21, 2
      // Predicated region
      $region93: #{model_forward.14} parent=91 // pred_check
        %p2307 = pneg %p388
      $region94: #{model_forward.14} parent=91 // pred_check_branch
        %2309 = sbr.rel (%p2307) target = $region96
      $region95: #{model_forward.14} parent=91 // pred_region
        %s2310 = smul.u32 32, %s33
        %p2311 = scmp.lt.s32.totalorder %s32, 1
        %s2312 = scalar_select %p2311, %s32, 1
        %p2313 = scmp.lt.s32.totalorder %s2310, 31
        %s2314 = scalar_select %p2313, %s2310, 31
        %s2315 = smul.addr %s2312, 32
        %s2316 = sadd.s32 %s2314, %s2315
        %s2317 = smul.addr %s2316, 4
        %s2318 = scalar_lea.vmem %s13, %s2317
      $region96: #{model_forward.14} parent=91 // pred_fallthru
        _
      // Predicated region
      $region97: #{model_forward.14} parent=91 // pred_check
        %p2319 = pneg %p414
      $region98: #{model_forward.14} parent=91 // pred_check_branch
        %2321 = sbr.rel (%p2319) target = $region100
      $region99: #{model_forward.14} parent=91 // pred_region
        %p2322 = scmp.lt.s32.totalorder %s32, 1
        %s2323 = scalar_select %p2322, %s32, 1
        %s2324 = scalar_lea.vmem %s14, %s2323
      $region100: #{model_forward.14} parent=91 // pred_fallthru
        _
    $region92: #{model_forward.14} parent=5 // pred_fallthru
      _
  $region6: #{model_forward.14} parent=0 // loop_footer
    %s25 = sadd.s32 1, %s21
  $region7: #{model_forward.14} parent=0 // loop_footer_branch
    %20 = sbr.rel target = $region3
  $region8: #{model_forward.14} parent=0 // loop_exit
    _

// kernel: model_forward.16
$region0: #{model_forward.16}
  #allocation0 [shape = 'u32[]', space=smem, size = 0x4, offset = 0x4, fixed_abs, tag = 'smem constant byte address 0x4 - core index']
  #allocation1 [shape = 'u32[72,128]{1,0:T(1,128)}', space=vmem, size = 0x9000, scoped, tag = 'internal scratch']
  %s0 = inlined_call_operand.vmem [shape: bf16[2,80,96], index: 0, kind: input, shape index: {}]
  %s1 = inlined_call_operand.vmem [shape: bf16[3,96,16], index: 1, kind: input, shape index: {}]
  %s2 = inlined_call_operand.vmem [shape: bf16[2,64,16], index: 2, kind: output, shape index: {0}]
  %s3 = inlined_call_operand.vmem [shape: f32[2,1,16], index: 3, kind: output, shape index: {1}]
  %4 = xla_tuple %s2, %s3
  %s5 = sld [smem:[#allocation0]]
  $region49: #{model_forward.16} parent=0
    _
  %s7 = ssub.s32 1, %s5
  %s8 = scalar_select 0, %s7, %s5
  loop: start=0, step=1, limit=4
  $region2: #{model_forward.16} parent=0 // loop_pre_header
    _
  $region3: #{model_forward.16} parent=0 // loop_header
    %s10 = sphi 0, %s14
    %p11 = scmp.ge.s32.totalorder %s10, 4
    %s20 = sphi 0, %s22
    %s23 = sphi 0, %s20
    %s24 = sphi 0, %s23
    %s40 = sphi 0, %s24
    %s44 = sphi 0, %s44
    %s46 = sphi 0, %s44
    %s47 = sphi 0, %s46
    %s61 = sphi 0, %s47
    %s67 = sphi 0, %s69
    %s70 = sphi 0, %s67
    %s71 = sphi 0, %s70
    %s87 = sphi 0, %s71
    %s93 = sphi 0, %s95
    %s96 = sphi 0, %s93
    %s97 = sphi 0, %s96
    %s113 = sphi 0, %s97
  $region4: #{model_forward.16} parent=0 // loop_header_branch
    %13 = sbr.rel (%p11) target = $region8
  $region5: #{model_forward.16} parent=0 // loop_body
    %s15 = ssub.s32 %s10, 1
    %s16 = ssub.s32 %s10, 2
    %s17 = sadd.s32 %s10, 1
    %s18 = ssub.s32 %s10, %s17
    %p19 = scmp.eq.s32.totalorder %s18, 0
    %s21 = sadd.s32 %s20, 1
    %s22 = scalar_select %p19, %s20, %s21
    %p25 = pneg %p19
    %p26 = scmp.eq.s32.totalorder %s10, 1
    %p27 = por %p25, %p26
    %p28 = scmp.ne.s32.totalorder %s20, %s23
    %p29 = scmp.eq.s32.totalorder %s10, 0
    %p30 = por %p28, %p29
    %p31 = scmp.ne.s32.totalorder %s20, %s23
    %p32 = scmp.eq.s32.totalorder %s15, 1
    %p33 = por %p31, %p32
    %p34 = scmp.ne.s32.totalorder %s23, %s24
    %p35 = scmp.eq.s32.totalorder %s15, 0
    %p36 = por %p34, %p35
    %p37 = scmp.ne.s32.totalorder %s23, %s24
    %p38 = scmp.eq.s32.totalorder %s16, 1
    %p39 = por %p37, %p38
    %p41 = scmp.ne.s32.totalorder %s24, %s40
    %p42 = scmp.eq.s32.totalorder %s16, 0
    %p43 = por %p41, %p42
    %s45 = sadd.s32 %s44, 1
    %p48 = scmp.eq.s32.totalorder %s10, 1
    %p49 = scmp.ne.s32.totalorder %s44, %s46
    %p50 = scmp.eq.s32.totalorder %s10, 0
    %p51 = por %p49, %p50
    %p52 = scmp.ne.s32.totalorder %s44, %s46
    %p53 = scmp.eq.s32.totalorder %s15, 1
    %p54 = por %p52, %p53
    %p55 = scmp.ne.s32.totalorder %s46, %s47
    %p56 = scmp.eq.s32.totalorder %s15, 0
    %p57 = por %p55, %p56
    %p58 = scmp.ne.s32.totalorder %s46, %s47
    %p59 = scmp.eq.s32.totalorder %s16, 1
    %p60 = por %p58, %p59
    %p62 = scmp.ne.s32.totalorder %s47, %s61
    %p63 = scmp.eq.s32.totalorder %s16, 0
    %p64 = por %p62, %p63
    %s65 = ssub.s32 %s10, %s17
    %p66 = scmp.eq.s32.totalorder %s65, 0
    %s68 = sadd.s32 %s67, 1
    %s69 = scalar_select %p66, %s67, %s68
    %p72 = pneg %p66
    %p73 = scmp.eq.s32.totalorder %s10, 1
    %p74 = por %p72, %p73
    %p75 = scmp.ne.s32.totalorder %s67, %s70
    %p76 = scmp.eq.s32.totalorder %s10, 0
    %p77 = por %p75, %p76
    %p78 = scmp.ne.s32.totalorder %s67, %s70
    %p79 = scmp.eq.s32.totalorder %s15, 1
    %p80 = por %p78, %p79
    %p81 = scmp.ne.s32.totalorder %s70, %s71
    %p82 = scmp.eq.s32.totalorder %s15, 0
    %p83 = por %p81, %p82
    %p84 = scmp.ne.s32.totalorder %s70, %s71
    %p85 = scmp.eq.s32.totalorder %s16, 1
    %p86 = por %p84, %p85
    %p88 = scmp.ne.s32.totalorder %s71, %s87
    %p89 = scmp.eq.s32.totalorder %s16, 0
    %p90 = por %p88, %p89
    %s91 = ssub.s32 %s10, %s17
    %p92 = scmp.eq.s32.totalorder %s91, 0
    %s94 = sadd.s32 %s93, 1
    %s95 = scalar_select %p92, %s93, %s94
    %p98 = pneg %p92
    %p99 = scmp.eq.s32.totalorder %s10, 1
    %p100 = por %p98, %p99
    %p101 = scmp.ne.s32.totalorder %s93, %s96
    %p102 = scmp.eq.s32.totalorder %s10, 0
    %p103 = por %p101, %p102
    %p104 = scmp.ne.s32.totalorder %s93, %s96
    %p105 = scmp.eq.s32.totalorder %s15, 1
    %p106 = por %p104, %p105
    %p107 = scmp.ne.s32.totalorder %s96, %s97
    %p108 = scmp.eq.s32.totalorder %s15, 0
    %p109 = por %p107, %p108
    %p110 = scmp.ne.s32.totalorder %s96, %s97
    %p111 = scmp.eq.s32.totalorder %s16, 1
    %p112 = por %p110, %p111
    %p114 = scmp.ne.s32.totalorder %s97, %s113
    %p115 = scmp.eq.s32.totalorder %s16, 0
    %p116 = por %p114, %p115
    %p117 = scmp.le.s32.totalorder 1, %s10
    %p118 = scmp.lt.s32.totalorder %s10, 3
    %p119 = pnand %p117, %p118
    %p120 = pneg %p119
    // Predicated region
    $region9: #{model_forward.16} parent=5 // pred_check
      _
    $region10: #{model_forward.16} parent=5 // pred_check_branch
      %122 = sbr.rel (%p119) target = $region12
    $region11: #{model_forward.16} parent=5 // pred_region
      %s123 = ssub.s32 %s10, 1
      // Predicated region
      $region13: #{model_forward.16} parent=11 // pred_check
        %p124 = pneg %p57
      $region14: #{model_forward.16} parent=11 // pred_check_branch
        %126 = sbr.rel (%p124) target = $region16
      $region15: #{model_forward.16} parent=11 // pred_region
        _
      $region16: #{model_forward.16} parent=11 // pred_fallthru
        _
    $region12: #{model_forward.16} parent=5 // pred_fallthru
      _
    %p127 = scmp.lt.s32.totalorder %s10, 2
    // Predicated region
    $region17: #{model_forward.16} parent=5 // pred_check
      %p128 = pneg %p127
    $region18: #{model_forward.16} parent=5 // pred_check_branch
      %130 = sbr.rel (%p128) target = $region20
    $region19: #{model_forward.16} parent=5 // pred_region
      // Predicated region
      $region21: #{model_forward.16} parent=19 // pred_check
        %p131 = pneg %p30
      $region22: #{model_forward.16} parent=19 // pred_check_branch
        %133 = sbr.rel (%p131) target = $region24
      $region23: #{model_forward.16} parent=19 // pred_region
        %p134 = scmp.lt.s32.totalorder %s10, 1
        %s135 = scalar_select %p134, %s10, 1
        %s136 = smul.addr %s135, 10
        %s137 = smul.addr %s136, 4
        %s138 = scalar_lea.vmem %s0, %s137
      $region24: #{model_forward.16} parent=19 // pred_fallthru
        _
    $region20: #{model_forward.16} parent=5 // pred_fallthru
      _
    %p139 = scmp.le.s32.totalorder 1, %s10
    %p140 = scmp.lt.s32.totalorder %s10, 3
    %p141 = pnand %p139, %p140
    %p142 = pneg %p141
    // Predicated region
    $region25: #{model_forward.16} parent=5 // pred_check
      _
    $region26: #{model_forward.16} parent=5 // pred_check_branch
      %144 = sbr.rel (%p141) target = $region28
    $region27: #{model_forward.16} parent=5 // pred_region
      %s145 = ssub.s32 %s10, 1
      %p146 = scmp.lt.s32.totalorder %s15, 1
      %s147 = scalar_select %p146, %s15, 1
      %s148 = smul.addr %s147, 10
      %s149 = smul.addr %s148, 4
      %s150 = scalar_lea.vmem %s0, %s149
      %p151 = pneg %p36
      %p152 = pneg %p33
      %p153 = pneg %p57
      %p154 = pneg %p54
      %p155 = pneg %p83
      %p156 = pneg %p80
      %p157 = scmp.lt.s32.totalorder %s15, 1
      %s158 = scalar_select %p157, %s15, 1
      %s159 = smul.addr %s158, 8
      %s160 = smul.addr %s159, 4
      %s161 = scalar_lea.vmem %s2, %s160
      %p162 = pneg %p109
      %p163 = pneg %p106
      %p164 = scmp.lt.s32.totalorder %s15, 1
      %s165 = scalar_select %p164, %s15, 1
      %s166 = scalar_lea.vmem %s3, %s165
      %p167 = scmp.lt.s32.totalorder %s15, 1
      %s168 = scalar_select %p167, %s15, 1
      %s169 = smul.addr %s168, 10
      %s170 = smul.addr %s169, 4
      %s171 = scalar_lea.vmem %s0, %s170
      %p172 = scmp.lt.s32.totalorder %s15, 1
      %s173 = scalar_select %p172, %s15, 1
      %s174 = smul.addr %s173, 8
      %s175 = smul.addr %s174, 4
      %s176 = scalar_lea.vmem %s2, %s175
      %p177 = scmp.lt.s32.totalorder %s15, 1
      %s178 = scalar_select %p177, %s15, 1
      %s179 = scalar_lea.vmem %s3, %s178
      %v181 = vld [vmem:[%s171] sm:$0xf]
      %v182 = vld [vmem:[%s171 + $0x4] sm:$0xf]
      %v183 = vld [vmem:[%s171 + $0x8] sm:$0xf]
      %v184 = vld [vmem:[%s171 + $0xc] sm:$0xf]
      %v185 = vld [vmem:[%s171 + $0x10] sm:$0xf]
      %v186 = vld [vmem:[%s171 + $0x14] sm:$0xf]
      %v187 = vld [vmem:[%s171 + $0x18] sm:$0xf]
      %v188 = vld [vmem:[%s171 + $0x1c] sm:$0xf]
      %v189 = vld [vmem:[%s1] sm:$0xf]
      %v190 = vld [vmem:[%s1 + $0x4] sm:$0xf]
      %v191 = vld [vmem:[%s1 + $0x8] sm:$0xf]
      %v192 = vld [vmem:[%s1 + $0xc] sm:$0xf]
      %v193 = vld [vmem:[%s1 + $0x10] sm:$0xf]
      %v194 = vld [vmem:[%s1 + $0x14] sm:$0xf]
      %v195 = vld [vmem:[%s1 + $0x18] sm:$0xf]
      %v196 = vld [vmem:[%s1 + $0x1c] sm:$0xf]
      %v197 = vld [vmem:[%s1 + $0x20] sm:$0xf]
      %v198 = vld [vmem:[%s1 + $0x24] sm:$0xf]
      %v199 = vld [vmem:[%s1 + $0x28] sm:$0xf]
      %v200 = vld [vmem:[%s1 + $0x2c] sm:$0xf]
      %v201 = vld [vmem:[%s171 + $0x20] sm:$0xf]
      %s202 = scalar_lea.vmem %s1, 48
      %v203 = vld [vmem:[%s202] sm:$0xf]
      %v204 = vld [vmem:[%s202 + $0x4] sm:$0xf]
      %v205 = vld [vmem:[%s202 + $0x8] sm:$0xf]
      %v206 = vld [vmem:[%s202 + $0xc] sm:$0xf]
      %v207 = vld [vmem:[%s202 + $0x10] sm:$0xf]
      %v208 = vld [vmem:[%s202 + $0x14] sm:$0xf]
      %v209 = vld [vmem:[%s202 + $0x18] sm:$0xf]
      %v210 = vld [vmem:[%s202 + $0x1c] sm:$0xf]
      %v211 = vld [vmem:[%s202 + $0x20] sm:$0xf]
      %v212 = vld [vmem:[%s202 + $0x24] sm:$0xf]
      %v213 = vld [vmem:[%s202 + $0x28] sm:$0xf]
      %v214 = vld [vmem:[%s202 + $0x2c] sm:$0xf]
      %v223 = vunpack.c.l.b16 %v182
      %v224 = vunpack.c.l.b16 %v183
      %v225 = vunpack.c.l.b16 %v184
      %v226 = vunpack.c.l.b16 %v185
      %v227 = vunpack.c.l.b16 %v186
      %v228 = vunpack.c.l.b16 %v187
      %v229 = vunpack.c.l.b16 %v188
      %v230 = vunpack.c.l.b16 %v201
      %v231 = vpack.c.b16 %v224, %v223
      %v232 = vpack.c.b16 %v226, %v225
      %v233 = vpack.c.b16 %v228, %v227
      %v234 = vpack.c.b16 %v230, %v229
      %v247 = vunpack.c.l.b16 %v203
      %v248 = vunpack.c.l.b16 %v204
      %v249 = vunpack.c.l.b16 %v205
      %v250 = vunpack.c.l.b16 %v206
      %v251 = vunpack.c.l.b16 %v207
      %v252 = vunpack.c.l.b16 %v208
      %v253 = vunpack.c.l.b16 %v209
      %v254 = vunpack.c.l.b16 %v210
      %v255 = vunpack.c.l.b16 %v211
      %v256 = vunpack.c.l.b16 %v212
      %v257 = vunpack.c.l.b16 %v213
      %v258 = vunpack.c.l.b16 %v214
      %v259 = vpack.c.b16 %v248, %v247
      %v260 = vpack.c.b16 %v250, %v249
      %v261 = vpack.c.b16 %v252, %v251
      %v262 = vpack.c.b16 %v254, %v253
      %v263 = vpack.c.b16 %v256, %v255
      %v264 = vpack.c.b16 %v258, %v257
      %vm271 = vcmask 785408
      %v273 = vsel %vm271, %v231, 0
      %v276 = vsel %vm271, %v232, 0
      %v279 = vsel %vm271, %v233, 0
      %v282 = vsel %vm271, %v234, 0
      %284 = vmatpush.bf16.msra.mxu0 0
      %285 = vmatpush.bf16.msra.mxu0 0
      %286 = vmatpush.bf16.msra.mxu0 %v264
      %287 = vmatpush.bf16.msra.mxu0 %v263
      %288 = vmatpush.bf16.msra.mxu0 %v262
      %289 = vmatpush.bf16.msra.mxu0 %v261
      %290 = vmatpush.bf16.msra.mxu0 %v260
      %291 = vmatpush.bf16.msra.mxu0 %v259
      %292 = vmatmul.bf16.gmra.mxu0 %v273
      %v293 = vpop.f32.mrf.mxu0
      %v294 = vadd.f32 0.0, %v293
      %v295 = vpop.f32.mrf.mxu0
      %v296 = vadd.f32 0.0, %v295
      %297 = vmatmul.bf16.gmra.mxu0 %v276
      %v298 = vpop.f32.mrf.mxu0
      %v299 = vadd.f32 0.0, %v298
      %v300 = vpop.f32.mrf.mxu0
      %v301 = vadd.f32 0.0, %v300
      %302 = vmatmul.bf16.gmra.mxu0 %v279
      %v303 = vpop.f32.mrf.mxu0
      %v304 = vadd.f32 0.0, %v303
      %v305 = vpop.f32.mrf.mxu0
      %v306 = vadd.f32 0.0, %v305
      %307 = vmatmul.bf16.gmra.mxu0 %v282
      %v308 = vpop.f32.mrf.mxu0
      %v309 = vadd.f32 0.0, %v308
      %v310 = vpop.f32.mrf.mxu0
      %v311 = vadd.f32 0.0, %v310
      %312 = vdwg.mxu0
      %v314 = vunpack.c.l.b16 %v181
      %v315 = vpack.c.b16 %v223, %v314
      %v316 = vpack.c.b16 %v225, %v224
      %v317 = vpack.c.b16 %v227, %v226
      %v318 = vpack.c.b16 %v229, %v228
      %v331 = vunpack.c.l.b16 %v189
      %v332 = vunpack.c.l.b16 %v190
      %v333 = vunpack.c.l.b16 %v191
      %v334 = vunpack.c.l.b16 %v192
      %v335 = vunpack.c.l.b16 %v193
      %v336 = vunpack.c.l.b16 %v194
      %v337 = vunpack.c.l.b16 %v195
      %v338 = vunpack.c.l.b16 %v196
      %v339 = vunpack.c.l.b16 %v197
      %v340 = vunpack.c.l.b16 %v198
      %v341 = vunpack.c.l.b16 %v199
      %v342 = vunpack.c.l.b16 %v200
      %v343 = vpack.c.b16 %v332, %v331
      %v344 = vpack.c.b16 %v334, %v333
      %v345 = vpack.c.b16 %v336, %v335
      %v346 = vpack.c.b16 %v338, %v337
      %v347 = vpack.c.b16 %v340, %v339
      %v348 = vpack.c.b16 %v342, %v341
      %v356 = vsel %vm271, %v315, 0
      %v359 = vsel %vm271, %v316, 0
      %v362 = vsel %vm271, %v317, 0
      %v365 = vsel %vm271, %v318, 0
      %367 = vmatpush.bf16.msra.mxu0 0
      %368 = vmatpush.bf16.msra.mxu0 0
      %369 = vmatpush.bf16.msra.mxu0 %v348
      %370 = vmatpush.bf16.msra.mxu0 %v347
      %371 = vmatpush.bf16.msra.mxu0 %v346
      %372 = vmatpush.bf16.msra.mxu0 %v345
      %373 = vmatpush.bf16.msra.mxu0 %v344
      %374 = vmatpush.bf16.msra.mxu0 %v343
      %375 = vmatmul.bf16.gmra.mxu0 %v356
      %v376 = vpop.f32.mrf.mxu0
      %v377 = vadd.f32 %v294, %v376
      %v378 = vpop.f32.mrf.mxu0
      %v379 = vadd.f32 %v296, %v378
      %380 = vmatmul.bf16.gmra.mxu0 %v359
      %v381 = vpop.f32.mrf.mxu0
      %v382 = vadd.f32 %v299, %v381
      %v383 = vpop.f32.mrf.mxu0
      %v384 = vadd.f32 %v301, %v383
      %385 = vmatmul.bf16.gmra.mxu0 %v362
      %v386 = vpop.f32.mrf.mxu0
      %v387 = vadd.f32 %v304, %v386
      %v388 = vpop.f32.mrf.mxu0
      %v389 = vadd.f32 %v306, %v388
      %390 = vmatmul.bf16.gmra.mxu0 %v365
      %v391 = vpop.f32.mrf.mxu0
      %v392 = vadd.f32 %v309, %v391
      %v393 = vpop.f32.mrf.mxu0
      %v394 = vadd.f32 %v311, %v393
      %395 = vdwg.mxu0
      %v396 = vld [vmem:[%s171 + $0x8] sm:$0xf]
      %v397 = vld [vmem:[%s171 + $0xc] sm:$0xf]
      %v398 = vld [vmem:[%s171 + $0x10] sm:$0xf]
      %v399 = vld [vmem:[%s171 + $0x14] sm:$0xf]
      %v400 = vld [vmem:[%s171 + $0x18] sm:$0xf]
      %v401 = vld [vmem:[%s171 + $0x1c] sm:$0xf]
      %v402 = vld [vmem:[%s171 + $0x20] sm:$0xf]
      %v403 = vld [vmem:[%s171 + $0x24] sm:$0xf]
      %s404 = scalar_lea.vmem %s1, 96
      %v405 = vld [vmem:[%s404] sm:$0xf]
      %v406 = vld [vmem:[%s404 + $0x4] sm:$0xf]
      %v407 = vld [vmem:[%s404 + $0x8] sm:$0xf]
      %v408 = vld [vmem:[%s404 + $0xc] sm:$0xf]
      %v409 = vld [vmem:[%s404 + $0x10] sm:$0xf]
      %v410 = vld [vmem:[%s404 + $0x14] sm:$0xf]
      %v411 = vld [vmem:[%s404 + $0x18] sm:$0xf]
      %v412 = vld [vmem:[%s404 + $0x1c] sm:$0xf]
      %v413 = vld [vmem:[%s404 + $0x20] sm:$0xf]
      %v414 = vld [vmem:[%s404 + $0x24] sm:$0xf]
      %v415 = vld [vmem:[%s404 + $0x28] sm:$0xf]
      %v416 = vld [vmem:[%s404 + $0x2c] sm:$0xf]
      %v425 = vunpack.c.l.b16 %v396
      %v426 = vunpack.c.l.b16 %v397
      %v427 = vunpack.c.l.b16 %v398
      %v428 = vunpack.c.l.b16 %v399
      %v429 = vunpack.c.l.b16 %v400
      %v430 = vunpack.c.l.b16 %v401
      %v431 = vunpack.c.l.b16 %v402
      %v432 = vunpack.c.l.b16 %v403
      %v433 = vpack.c.b16 %v426, %v425
      %v434 = vpack.c.b16 %v428, %v427
      %v435 = vpack.c.b16 %v430, %v429
      %v436 = vpack.c.b16 %v432, %v431
      %v449 = vunpack.c.l.b16 %v405
      %v450 = vunpack.c.l.b16 %v406
      %v451 = vunpack.c.l.b16 %v407
      %v452 = vunpack.c.l.b16 %v408
      %v453 = vunpack.c.l.b16 %v409
      %v454 = vunpack.c.l.b16 %v410
      %v455 = vunpack.c.l.b16 %v411
      %v456 = vunpack.c.l.b16 %v412
      %v457 = vunpack.c.l.b16 %v413
      %v458 = vunpack.c.l.b16 %v414
      %v459 = vunpack.c.l.b16 %v415
      %v460 = vunpack.c.l.b16 %v416
      %v461 = vpack.c.b16 %v450, %v449
      %v462 = vpack.c.b16 %v452, %v451
      %v463 = vpack.c.b16 %v454, %v453
      %v464 = vpack.c.b16 %v456, %v455
      %v465 = vpack.c.b16 %v458, %v457
      %v466 = vpack.c.b16 %v460, %v459
      %v474 = vsel %vm271, %v433, 0
      %v477 = vsel %vm271, %v434, 0
      %v480 = vsel %vm271, %v435, 0
      %v483 = vsel %vm271, %v436, 0
      %485 = vmatpush.bf16.msra.mxu0 0
      %486 = vmatpush.bf16.msra.mxu0 0
      %487 = vmatpush.bf16.msra.mxu0 %v466
      %488 = vmatpush.bf16.msra.mxu0 %v465
      %489 = vmatpush.bf16.msra.mxu0 %v464
      %490 = vmatpush.bf16.msra.mxu0 %v463
      %491 = vmatpush.bf16.msra.mxu0 %v462
      %492 = vmatpush.bf16.msra.mxu0 %v461
      %493 = vmatmul.bf16.gmra.mxu0 %v474
      %v494 = vpop.f32.mrf.mxu0
      %v495 = vadd.f32 0.0, %v494
      %v496 = vpop.f32.mrf.mxu0
      %v497 = vadd.f32 0.0, %v496
      %498 = vmatmul.bf16.gmra.mxu0 %v477
      %v499 = vpop.f32.mrf.mxu0
      %v500 = vadd.f32 0.0, %v499
      %v501 = vpop.f32.mrf.mxu0
      %v502 = vadd.f32 0.0, %v501
      %503 = vmatmul.bf16.gmra.mxu0 %v480
      %v504 = vpop.f32.mrf.mxu0
      %v505 = vadd.f32 0.0, %v504
      %v506 = vpop.f32.mrf.mxu0
      %v507 = vadd.f32 0.0, %v506
      %508 = vmatmul.bf16.gmra.mxu0 %v483
      %v509 = vpop.f32.mrf.mxu0
      %v510 = vadd.f32 0.0, %v509
      %v511 = vpop.f32.mrf.mxu0
      %v512 = vadd.f32 0.0, %v511
      %513 = vdwg.mxu0
      %v514 = vadd.f32 %v377, %v495
      %v515 = vadd.f32 %v379, %v497
      %v516 = vadd.f32 %v382, %v500
      %v517 = vadd.f32 %v384, %v502
      %v518 = vadd.f32 %v387, %v505
      %v519 = vadd.f32 %v389, %v507
      %v520 = vadd.f32 %v392, %v510
      %v521 = vadd.f32 %v394, %v512
      %v522 = vpack.c.bf16 %v514, %v514
      %v523 = vpack.c.bf16 %v515, %v515
      %v524 = vpack.c.bf16 %v516, %v516
      %v525 = vpack.c.bf16 %v517, %v517
      %v526 = vpack.c.bf16 %v518, %v518
      %v527 = vpack.c.bf16 %v519, %v519
      %v528 = vpack.c.bf16 %v520, %v520
      %v529 = vpack.c.bf16 %v521, %v521
      %vm530 = vcmask 125952
      %531 = vst.msk [vmem:[%s176] sm:$0xf] %vm530, %v522
      %532 = vst.msk [vmem:[%s176 + $0x4] sm:$0xf] %vm530, %v523
      %533 = vst.msk [vmem:[%s176 + $0x8] sm:$0xf] %vm530, %v524
      %534 = vst.msk [vmem:[%s176 + $0xc] sm:$0xf] %vm530, %v525
      %535 = vst.msk [vmem:[%s176 + $0x10] sm:$0xf] %vm530, %v526
      %536 = vst.msk [vmem:[%s176 + $0x14] sm:$0xf] %vm530, %v527
      %537 = vst.msk [vmem:[%s176 + $0x18] sm:$0xf] %vm530, %v528
      %538 = vst.msk [vmem:[%s176 + $0x1c] sm:$0xf] %vm530, %v529
      %vm539 = vcmask 130048
      %v540 = vsel %vm539, %v514, 0.0
      %v541 = vsel %vm539, %v515, 0.0
      %v542 = vadd.f32 %v540, %v541
      %v543 = vsel %vm539, %v516, 0.0
      %v544 = vadd.f32 %v542, %v543
      %v545 = vsel %vm539, %v517, 0.0
      %v546 = vadd.f32 %v544, %v545
      %v547 = vsel %vm539, %v518, 0.0
      %v548 = vadd.f32 %v546, %v547
      %v549 = vsel %vm539, %v519, 0.0
      %v550 = vadd.f32 %v548, %v549
      %v551 = vsel %vm539, %v520, 0.0
      %v552 = vadd.f32 %v550, %v551
      %v553 = vsel %vm539, %v521, 0.0
      %v554 = vadd.f32 %v552, %v553
      %v555 = vrot.slane %v554, 4
      %v556 = vadd.f32 %v554, %v555
      %v557 = vrot.slane %v556, 2
      %v558 = vadd.f32 %v556, %v557
      %v559 = vrot.slane %v558, 1
      %v560 = vadd.f32 %v558, %v559
      %v561 = vrcp.pop 64.0
      %v562 = vmul.f32 64.0, %v561
      %v563 = vsub.f32 1.0, %v562
      %v564 = vmul.f32 %v561, %v563
      %v565 = vadd.f32 %v561, %v564
      %vm566 = vweird.f32 %v561
      %v567 = vsel %vm566, %v561, %v565
      %v568 = vmul.f32 %v560, %v567
      %vm569 = vcmask 122880
      %570 = vst.msk [vmem:[%s179] sm:$0x1] %vm569, %v568
      %p571 = scmp.lt.s32.totalorder %s15, 1
      %s572 = scalar_select %p571, %s15, 1
      %s573 = smul.addr %s572, 8
      %s574 = smul.addr %s573, 4
      %s575 = scalar_lea.vmem %s2, %s574
      %p576 = scmp.lt.s32.totalorder %s15, 1
      %s577 = scalar_select %p576, %s15, 1
      %s578 = scalar_lea.vmem %s3, %s577
      // Predicated region
      $region29: #{model_forward.16} parent=27 // pred_check
        %p579 = pneg %p80
      $region30: #{model_forward.16} parent=27 // pred_check_branch
        %581 = sbr.rel (%p579) target = $region32
      $region31: #{model_forward.16} parent=27 // pred_region
        _
      $region32: #{model_forward.16} parent=27 // pred_fallthru
        _
      // Predicated region
      $region33: #{model_forward.16} parent=27 // pred_check
        %p582 = pneg %p106
      $region34: #{model_forward.16} parent=27 // pred_check_branch
        %584 = sbr.rel (%p582) target = $region36
      $region35: #{model_forward.16} parent=27 // pred_region
        _
      $region36: #{model_forward.16} parent=27 // pred_fallthru
        _
    $region28: #{model_forward.16} parent=5 // pred_fallthru
      _
    %p585 = scmp.le.s32.totalorder 2, %s10
    // Predicated region
    $region37: #{model_forward.16} parent=5 // pred_check
      %p586 = pneg %p585
    $region38: #{model_forward.16} parent=5 // pred_check_branch
      %588 = sbr.rel (%p586) target = $region40
    $region39: #{model_forward.16} parent=5 // pred_region
      %s589 = ssub.s32 %s10, 2
      // Predicated region
      $region41: #{model_forward.16} parent=39 // pred_check
        %p590 = pneg %p86
      $region42: #{model_forward.16} parent=39 // pred_check_branch
        %592 = sbr.rel (%p590) target = $region44
      $region43: #{model_forward.16} parent=39 // pred_region
        %p593 = scmp.lt.s32.totalorder %s16, 1
        %s594 = scalar_select %p593, %s16, 1
        %s595 = smul.addr %s594, 8
        %s596 = smul.addr %s595, 4
        %s597 = scalar_lea.vmem %s2, %s596
      $region44: #{model_forward.16} parent=39 // pred_fallthru
        _
      // Predicated region
      $region45: #{model_forward.16} parent=39 // pred_check
        %p598 = pneg %p112
      $region46: #{model_forward.16} parent=39 // pred_check_branch
        %600 = sbr.rel (%p598) target = $region48
      $region47: #{model_forward.16} parent=39 // pred_region
        %p601 = scmp.lt.s32.totalorder %s16, 1
        %s602 = scalar_select %p601, %s16, 1
        %s603 = scalar_lea.vmem %s3, %s602
      $region48: #{model_forward.16} parent=39 // pred_fallthru
        _
    $region40: #{model_forward.16} parent=5 // pred_fallthru
      _
  $region6: #{model_forward.16} parent=0 // loop_footer
    %s14 = sadd.s32 1, %s10
  $region7: #{model_forward.16} parent=0 // loop_footer_branch
    %9 = sbr.rel target = $region3
  $region8: #{model_forward.16} parent=0 // loop_exit
    _

// kernel: model_forward.17
$region0: #{model_forward.17}
  #allocation0 [shape = 'u32[]', space=smem, size = 0x4, offset = 0x4, fixed_abs, tag = 'smem constant byte address 0x4 - core index']
  #allocation1 [shape = 'u32[72,128]{1,0:T(1,128)}', space=vmem, size = 0x9000, scoped, tag = 'internal scratch']
  %s0 = inlined_call_operand.vmem [shape: bf16[2,64,32], index: 0, kind: input, shape index: {}]
  %s1 = inlined_call_operand.vmem [shape: bf16[2,64,16], index: 1, kind: input, shape index: {}]
  %s2 = inlined_call_operand.vmem [shape: bf16[2,1,32], index: 2, kind: input, shape index: {}]
  %s3 = inlined_call_operand.vmem [shape: bf16[2,1,16], index: 3, kind: input, shape index: {}]
  %s4 = inlined_call_operand.vmem [shape: bf16[2,1,32], index: 4, kind: input, shape index: {}]
  %s5 = inlined_call_operand.vmem [shape: bf16[2,1,16], index: 5, kind: input, shape index: {}]
  %s6 = inlined_call_operand.vmem [shape: bf16[32,32], index: 6, kind: input, shape index: {}]
  %s7 = inlined_call_operand.vmem [shape: bf16[16,32], index: 7, kind: input, shape index: {}]
  %s8 = inlined_call_operand.vmem [shape: f32[1,32], index: 8, kind: input, shape index: {}]
  %s9 = inlined_call_operand.vmem [shape: bf16[2,64,32], index: 9, kind: output, shape index: {}]
  %s10 = sld [smem:[#allocation0]]
  $region69: #{model_forward.17} parent=0
    _
  %s12 = ssub.s32 1, %s10
  %s13 = scalar_select 0, %s12, %s10
  loop: start=0, step=1, limit=4
  $region2: #{model_forward.17} parent=0 // loop_pre_header
    _
  $region3: #{model_forward.17} parent=0 // loop_header
    %s15 = sphi 0, %s19
    %p16 = scmp.ge.s32.totalorder %s15, 4
    %s22 = sphi 0, %s34
    %s23 = sphi 0, %s30
    %s24 = sphi 0, %s22
    %s25 = sphi 0, %s23
    %s26 = sphi 0, %s24
    %s27 = sphi 0, %s25
    %s39 = sphi 0, %s41
    %s42 = sphi 0, %s39
    %s43 = sphi 0, %s42
    %s59 = sphi 0, %s43
    %s67 = sphi 0, %s69
    %s70 = sphi 0, %s67
    %s71 = sphi 0, %s70
    %s87 = sphi 0, %s71
    %s93 = sphi 0, %s95
    %s96 = sphi 0, %s93
    %s97 = sphi 0, %s96
    %s113 = sphi 0, %s97
    %s119 = sphi 0, %s121
    %s122 = sphi 0, %s119
    %s123 = sphi 0, %s122
    %s139 = sphi 0, %s123
    %s145 = sphi 0, %s147
    %s148 = sphi 0, %s145
    %s149 = sphi 0, %s148
    %s165 = sphi 0, %s149
    %s171 = sphi 0, %s173
    %s174 = sphi 0, %s171
    %s175 = sphi 0, %s174
    %s191 = sphi 0, %s175
    %s195 = sphi 0, %s195
    %s197 = sphi 0, %s195
    %s198 = sphi 0, %s197
    %s212 = sphi 0, %s198
    %s216 = sphi 0, %s216
    %s218 = sphi 0, %s216
    %s219 = sphi 0, %s218
    %s233 = sphi 0, %s219
    %s237 = sphi 0, %s237
    %s239 = sphi 0, %s237
    %s240 = sphi 0, %s239
    %s254 = sphi 0, %s240
    %s262 = sphi 0, %s264
    %s265 = sphi 0, %s262
    %s266 = sphi 0, %s265
    %s282 = sphi 0, %s266
  $region4: #{model_forward.17} parent=0 // loop_header_branch
    %18 = sbr.rel (%p16) target = $region8
  $region5: #{model_forward.17} parent=0 // loop_body
    %s20 = ssub.s32 %s15, 1
    %s21 = ssub.s32 %s15, 2
    %s28 = sadd.s32 1, %s23
    %p29 = scmp.ge.s32.totalorder %s28, 1
    %s30 = scalar_select %p29, 0, %s28
    %s31 = sadd.s32 1, %s22
    %s32 = scalar_select %p29, %s31, %s22
    %p33 = scmp.ge.s32.totalorder %s32, 2
    %s34 = scalar_select %p33, 0, %s32
    %s35 = ssub.s32 %s22, %s34
    %s36 = ssub.s32 %s23, %s30
    %s37 = sor.u32 %s35, %s36
    %p38 = scmp.eq.s32.totalorder %s37, 0
    %s40 = sadd.s32 %s39, 1
    %s41 = scalar_select %p38, %s39, %s40
    %p44 = pneg %p38
    %p45 = scmp.eq.s32.totalorder %s15, 1
    %p46 = por %p44, %p45
    %p47 = scmp.ne.s32.totalorder %s39, %s42
    %p48 = scmp.eq.s32.totalorder %s15, 0
    %p49 = por %p47, %p48
    %p50 = scmp.ne.s32.totalorder %s39, %s42
    %p51 = scmp.eq.s32.totalorder %s20, 1
    %p52 = por %p50, %p51
    %p53 = scmp.ne.s32.totalorder %s42, %s43
    %p54 = scmp.eq.s32.totalorder %s20, 0
    %p55 = por %p53, %p54
    %p56 = scmp.ne.s32.totalorder %s42, %s43
    %p57 = scmp.eq.s32.totalorder %s21, 1
    %p58 = por %p56, %p57
    %p60 = scmp.ne.s32.totalorder %s43, %s59
    %p61 = scmp.eq.s32.totalorder %s21, 0
    %p62 = por %p60, %p61
    %s63 = ssub.s32 %s22, %s34
    %s64 = ssub.s32 %s23, %s30
    %s65 = sor.u32 %s63, %s64
    %p66 = scmp.eq.s32.totalorder %s65, 0
    %s68 = sadd.s32 %s67, 1
    %s69 = scalar_select %p66, %s67, %s68
    %p72 = pneg %p66
    %p73 = scmp.eq.s32.totalorder %s15, 1
    %p74 = por %p72, %p73
    %p75 = scmp.ne.s32.totalorder %s67, %s70
    %p76 = scmp.eq.s32.totalorder %s15, 0
    %p77 = por %p75, %p76
    %p78 = scmp.ne.s32.totalorder %s67, %s70
    %p79 = scmp.eq.s32.totalorder %s20, 1
    %p80 = por %p78, %p79
    %p81 = scmp.ne.s32.totalorder %s70, %s71
    %p82 = scmp.eq.s32.totalorder %s20, 0
    %p83 = por %p81, %p82
    %p84 = scmp.ne.s32.totalorder %s70, %s71
    %p85 = scmp.eq.s32.totalorder %s21, 1
    %p86 = por %p84, %p85
    %p88 = scmp.ne.s32.totalorder %s71, %s87
    %p89 = scmp.eq.s32.totalorder %s21, 0
    %p90 = por %p88, %p89
    %s91 = ssub.s32 %s22, %s34
    %p92 = scmp.eq.s32.totalorder %s91, 0
    %s94 = sadd.s32 %s93, 1
    %s95 = scalar_select %p92, %s93, %s94
    %p98 = pneg %p92
    %p99 = scmp.eq.s32.totalorder %s15, 1
    %p100 = por %p98, %p99
    %p101 = scmp.ne.s32.totalorder %s93, %s96
    %p102 = scmp.eq.s32.totalorder %s15, 0
    %p103 = por %p101, %p102
    %p104 = scmp.ne.s32.totalorder %s93, %s96
    %p105 = scmp.eq.s32.totalorder %s20, 1
    %p106 = por %p104, %p105
    %p107 = scmp.ne.s32.totalorder %s96, %s97
    %p108 = scmp.eq.s32.totalorder %s20, 0
    %p109 = por %p107, %p108
    %p110 = scmp.ne.s32.totalorder %s96, %s97
    %p111 = scmp.eq.s32.totalorder %s21, 1
    %p112 = por %p110, %p111
    %p114 = scmp.ne.s32.totalorder %s97, %s113
    %p115 = scmp.eq.s32.totalorder %s21, 0
    %p116 = por %p114, %p115
    %s117 = ssub.s32 %s22, %s34
    %p118 = scmp.eq.s32.totalorder %s117, 0
    %s120 = sadd.s32 %s119, 1
    %s121 = scalar_select %p118, %s119, %s120
    %p124 = pneg %p118
    %p125 = scmp.eq.s32.totalorder %s15, 1
    %p126 = por %p124, %p125
    %p127 = scmp.ne.s32.totalorder %s119, %s122
    %p128 = scmp.eq.s32.totalorder %s15, 0
    %p129 = por %p127, %p128
    %p130 = scmp.ne.s32.totalorder %s119, %s122
    %p131 = scmp.eq.s32.totalorder %s20, 1
    %p132 = por %p130, %p131
    %p133 = scmp.ne.s32.totalorder %s122, %s123
    %p134 = scmp.eq.s32.totalorder %s20, 0
    %p135 = por %p133, %p134
    %p136 = scmp.ne.s32.totalorder %s122, %s123
    %p137 = scmp.eq.s32.totalorder %s21, 1
    %p138 = por %p136, %p137
    %p140 = scmp.ne.s32.totalorder %s123, %s139
    %p141 = scmp.eq.s32.totalorder %s21, 0
    %p142 = por %p140, %p141
    %s143 = ssub.s32 %s22, %s34
    %p144 = scmp.eq.s32.totalorder %s143, 0
    %s146 = sadd.s32 %s145, 1
    %s147 = scalar_select %p144, %s145, %s146
    %p150 = pneg %p144
    %p151 = scmp.eq.s32.totalorder %s15, 1
    %p152 = por %p150, %p151
    %p153 = scmp.ne.s32.totalorder %s145, %s148
    %p154 = scmp.eq.s32.totalorder %s15, 0
    %p155 = por %p153, %p154
    %p156 = scmp.ne.s32.totalorder %s145, %s148
    %p157 = scmp.eq.s32.totalorder %s20, 1
    %p158 = por %p156, %p157
    %p159 = scmp.ne.s32.totalorder %s148, %s149
    %p160 = scmp.eq.s32.totalorder %s20, 0
    %p161 = por %p159, %p160
    %p162 = scmp.ne.s32.totalorder %s148, %s149
    %p163 = scmp.eq.s32.totalorder %s21, 1
    %p164 = por %p162, %p163
    %p166 = scmp.ne.s32.totalorder %s149, %s165
    %p167 = scmp.eq.s32.totalorder %s21, 0
    %p168 = por %p166, %p167
    %s169 = ssub.s32 %s22, %s34
    %p170 = scmp.eq.s32.totalorder %s169, 0
    %s172 = sadd.s32 %s171, 1
    %s173 = scalar_select %p170, %s171, %s172
    %p176 = pneg %p170
    %p177 = scmp.eq.s32.totalorder %s15, 1
    %p178 = por %p176, %p177
    %p179 = scmp.ne.s32.totalorder %s171, %s174
    %p180 = scmp.eq.s32.totalorder %s15, 0
    %p181 = por %p179, %p180
    %p182 = scmp.ne.s32.totalorder %s171, %s174
    %p183 = scmp.eq.s32.totalorder %s20, 1
    %p184 = por %p182, %p183
    %p185 = scmp.ne.s32.totalorder %s174, %s175
    %p186 = scmp.eq.s32.totalorder %s20, 0
    %p187 = por %p185, %p186
    %p188 = scmp.ne.s32.totalorder %s174, %s175
    %p189 = scmp.eq.s32.totalorder %s21, 1
    %p190 = por %p188, %p189
    %p192 = scmp.ne.s32.totalorder %s175, %s191
    %p193 = scmp.eq.s32.totalorder %s21, 0
    %p194 = por %p192, %p193
    %s196 = sadd.s32 %s195, 1
    %p199 = scmp.eq.s32.totalorder %s15, 1
    %p200 = scmp.ne.s32.totalorder %s195, %s197
    %p201 = scmp.eq.s32.totalorder %s15, 0
    %p202 = por %p200, %p201
    %p203 = scmp.ne.s32.totalorder %s195, %s197
    %p204 = scmp.eq.s32.totalorder %s20, 1
    %p205 = por %p203, %p204
    %p206 = scmp.ne.s32.totalorder %s197, %s198
    %p207 = scmp.eq.s32.totalorder %s20, 0
    %p208 = por %p206, %p207
    %p209 = scmp.ne.s32.totalorder %s197, %s198
    %p210 = scmp.eq.s32.totalorder %s21, 1
    %p211 = por %p209, %p210
    %p213 = scmp.ne.s32.totalorder %s198, %s212
    %p214 = scmp.eq.s32.totalorder %s21, 0
    %p215 = por %p213, %p214
    %s217 = sadd.s32 %s216, 1
    %p220 = scmp.eq.s32.totalorder %s15, 1
    %p221 = scmp.ne.s32.totalorder %s216, %s218
    %p222 = scmp.eq.s32.totalorder %s15, 0
    %p223 = por %p221, %p222
    %p224 = scmp.ne.s32.totalorder %s216, %s218
    %p225 = scmp.eq.s32.totalorder %s20, 1
    %p226 = por %p224, %p225
    %p227 = scmp.ne.s32.totalorder %s218, %s219
    %p228 = scmp.eq.s32.totalorder %s20, 0
    %p229 = por %p227, %p228
    %p230 = scmp.ne.s32.totalorder %s218, %s219
    %p231 = scmp.eq.s32.totalorder %s21, 1
    %p232 = por %p230, %p231
    %p234 = scmp.ne.s32.totalorder %s219, %s233
    %p235 = scmp.eq.s32.totalorder %s21, 0
    %p236 = por %p234, %p235
    %s238 = sadd.s32 %s237, 1
    %p241 = scmp.eq.s32.totalorder %s15, 1
    %p242 = scmp.ne.s32.totalorder %s237, %s239
    %p243 = scmp.eq.s32.totalorder %s15, 0
    %p244 = por %p242, %p243
    %p245 = scmp.ne.s32.totalorder %s237, %s239
    %p246 = scmp.eq.s32.totalorder %s20, 1
    %p247 = por %p245, %p246
    %p248 = scmp.ne.s32.totalorder %s239, %s240
    %p249 = scmp.eq.s32.totalorder %s20, 0
    %p250 = por %p248, %p249
    %p251 = scmp.ne.s32.totalorder %s239, %s240
    %p252 = scmp.eq.s32.totalorder %s21, 1
    %p253 = por %p251, %p252
    %p255 = scmp.ne.s32.totalorder %s240, %s254
    %p256 = scmp.eq.s32.totalorder %s21, 0
    %p257 = por %p255, %p256
    %s258 = ssub.s32 %s22, %s34
    %s259 = ssub.s32 %s23, %s30
    %s260 = sor.u32 %s258, %s259
    %p261 = scmp.eq.s32.totalorder %s260, 0
    %s263 = sadd.s32 %s262, 1
    %s264 = scalar_select %p261, %s262, %s263
    %p267 = pneg %p261
    %p268 = scmp.eq.s32.totalorder %s15, 1
    %p269 = por %p267, %p268
    %p270 = scmp.ne.s32.totalorder %s262, %s265
    %p271 = scmp.eq.s32.totalorder %s15, 0
    %p272 = por %p270, %p271
    %p273 = scmp.ne.s32.totalorder %s262, %s265
    %p274 = scmp.eq.s32.totalorder %s20, 1
    %p275 = por %p273, %p274
    %p276 = scmp.ne.s32.totalorder %s265, %s266
    %p277 = scmp.eq.s32.totalorder %s20, 0
    %p278 = por %p276, %p277
    %p279 = scmp.ne.s32.totalorder %s265, %s266
    %p280 = scmp.eq.s32.totalorder %s21, 1
    %p281 = por %p279, %p280
    %p283 = scmp.ne.s32.totalorder %s266, %s282
    %p284 = scmp.eq.s32.totalorder %s21, 0
    %p285 = por %p283, %p284
    %p286 = scmp.le.s32.totalorder 1, %s15
    %p287 = scmp.lt.s32.totalorder %s15, 3
    %p288 = pnand %p286, %p287
    %p289 = pneg %p288
    // Predicated region
    $region9: #{model_forward.17} parent=5 // pred_check
      _
    $region10: #{model_forward.17} parent=5 // pred_check_branch
      %291 = sbr.rel (%p288) target = $region12
    $region11: #{model_forward.17} parent=5 // pred_region
      %s292 = ssub.s32 %s15, 1
      // Predicated region
      $region13: #{model_forward.17} parent=11 // pred_check
        %p293 = pneg %p208
      $region14: #{model_forward.17} parent=11 // pred_check_branch
        %295 = sbr.rel (%p293) target = $region16
      $region15: #{model_forward.17} parent=11 // pred_region
        _
      $region16: #{model_forward.17} parent=11 // pred_fallthru
        _
      // Predicated region
      $region17: #{model_forward.17} parent=11 // pred_check
        %p296 = pneg %p229
      $region18: #{model_forward.17} parent=11 // pred_check_branch
        %298 = sbr.rel (%p296) target = $region20
      $region19: #{model_forward.17} parent=11 // pred_region
        _
      $region20: #{model_forward.17} parent=11 // pred_fallthru
        _
      // Predicated region
      $region21: #{model_forward.17} parent=11 // pred_check
        %p299 = pneg %p250
      $region22: #{model_forward.17} parent=11 // pred_check_branch
        %301 = sbr.rel (%p299) target = $region24
      $region23: #{model_forward.17} parent=11 // pred_region
        _
      $region24: #{model_forward.17} parent=11 // pred_fallthru
        _
    $region12: #{model_forward.17} parent=5 // pred_fallthru
      _
    %p302 = scmp.lt.s32.totalorder %s15, 2
    // Predicated region
    $region25: #{model_forward.17} parent=5 // pred_check
      %p303 = pneg %p302
    $region26: #{model_forward.17} parent=5 // pred_check_branch
      %305 = sbr.rel (%p303) target = $region28
    $region27: #{model_forward.17} parent=5 // pred_region
      // Predicated region
      $region29: #{model_forward.17} parent=27 // pred_check
        %p306 = pneg %p49
      $region30: #{model_forward.17} parent=27 // pred_check_branch
        %308 = sbr.rel (%p306) target = $region32
      $region31: #{model_forward.17} parent=27 // pred_region
        %s309 = smul.u32 8, %s23
        %p310 = scmp.lt.s32.totalorder %s22, 1
        %s311 = scalar_select %p310, %s22, 1
        %p312 = scmp.lt.s32.totalorder %s309, 7
        %s313 = scalar_select %p312, %s309, 7
        %s314 = smul.addr %s311, 8
        %s315 = sadd.s32 %s313, %s314
        %s316 = smul.addr %s315, 4
        %s317 = scalar_lea.vmem %s0, %s316
        %s318 = smul.u32 8, %s23
      $region32: #{model_forward.17} parent=27 // pred_fallthru
        _
      // Predicated region
      $region33: #{model_forward.17} parent=27 // pred_check
        %p319 = pneg %p77
      $region34: #{model_forward.17} parent=27 // pred_check_branch
        %321 = sbr.rel (%p319) target = $region36
      $region35: #{model_forward.17} parent=27 // pred_region
        %s322 = smul.u32 8, %s23
        %p323 = scmp.lt.s32.totalorder %s22, 1
        %s324 = scalar_select %p323, %s22, 1
        %p325 = scmp.lt.s32.totalorder %s322, 7
        %s326 = scalar_select %p325, %s322, 7
        %s327 = smul.addr %s324, 8
        %s328 = sadd.s32 %s326, %s327
        %s329 = smul.addr %s328, 4
        %s330 = scalar_lea.vmem %s1, %s329
        %s331 = smul.u32 8, %s23
      $region36: #{model_forward.17} parent=27 // pred_fallthru
        _
      // Predicated region
      $region37: #{model_forward.17} parent=27 // pred_check
        %p332 = pneg %p103
      $region38: #{model_forward.17} parent=27 // pred_check_branch
        %334 = sbr.rel (%p332) target = $region40
      $region39: #{model_forward.17} parent=27 // pred_region
        %p335 = scmp.lt.s32.totalorder %s22, 1
        %s336 = scalar_select %p335, %s22, 1
        %s337 = scalar_lea.vmem %s2, %s336
      $region40: #{model_forward.17} parent=27 // pred_fallthru
        _
      // Predicated region
      $region41: #{model_forward.17} parent=27 // pred_check
        %p338 = pneg %p129
      $region42: #{model_forward.17} parent=27 // pred_check_branch
        %340 = sbr.rel (%p338) target = $region44
      $region43: #{model_forward.17} parent=27 // pred_region
        %p341 = scmp.lt.s32.totalorder %s22, 1
        %s342 = scalar_select %p341, %s22, 1
        %s343 = scalar_lea.vmem %s3, %s342
      $region44: #{model_forward.17} parent=27 // pred_fallthru
        _
      // Predicated region
      $region45: #{model_forward.17} parent=27 // pred_check
        %p344 = pneg %p155
      $region46: #{model_forward.17} parent=27 // pred_check_branch
        %346 = sbr.rel (%p344) target = $region48
      $region47: #{model_forward.17} parent=27 // pred_region
        %p347 = scmp.lt.s32.totalorder %s22, 1
        %s348 = scalar_select %p347, %s22, 1
        %s349 = scalar_lea.vmem %s4, %s348
      $region48: #{model_forward.17} parent=27 // pred_fallthru
        _
      // Predicated region
      $region49: #{model_forward.17} parent=27 // pred_check
        %p350 = pneg %p181
      $region50: #{model_forward.17} parent=27 // pred_check_branch
        %352 = sbr.rel (%p350) target = $region52
      $region51: #{model_forward.17} parent=27 // pred_region
        %p353 = scmp.lt.s32.totalorder %s22, 1
        %s354 = scalar_select %p353, %s22, 1
        %s355 = scalar_lea.vmem %s5, %s354
      $region52: #{model_forward.17} parent=27 // pred_fallthru
        _
    $region28: #{model_forward.17} parent=5 // pred_fallthru
      _
    %p356 = scmp.le.s32.totalorder 1, %s15
    %p357 = scmp.lt.s32.totalorder %s15, 3
    %p358 = pnand %p356, %p357
    %p359 = pneg %p358
    // Predicated region
    $region53: #{model_forward.17} parent=5 // pred_check
      _
    $region54: #{model_forward.17} parent=5 // pred_check_branch
      %361 = sbr.rel (%p358) target = $region56
    $region55: #{model_forward.17} parent=5 // pred_region
      %s362 = ssub.s32 %s15, 1
      %s363 = smul.u32 8, %s25
      %p364 = scmp.lt.s32.totalorder %s24, 1
      %s365 = scalar_select %p364, %s24, 1
      %p366 = scmp.lt.s32.totalorder %s363, 7
      %s367 = scalar_select %p366, %s363, 7
      %s368 = smul.addr %s365, 8
      %s369 = sadd.s32 %s367, %s368
      %s370 = smul.addr %s369, 4
      %s371 = scalar_lea.vmem %s0, %s370
      %p372 = pneg %p55
      %p373 = pneg %p52
      %s374 = smul.u32 8, %s25
      %p375 = scmp.lt.s32.totalorder %s24, 1
      %s376 = scalar_select %p375, %s24, 1
      %p377 = scmp.lt.s32.totalorder %s374, 7
      %s378 = scalar_select %p377, %s374, 7
      %s379 = smul.addr %s376, 8
      %s380 = sadd.s32 %s378, %s379
      %s381 = smul.addr %s380, 4
      %s382 = scalar_lea.vmem %s1, %s381
      %p383 = pneg %p83
      %p384 = pneg %p80
      %p385 = scmp.lt.s32.totalorder %s24, 1
      %s386 = scalar_select %p385, %s24, 1
      %s387 = scalar_lea.vmem %s2, %s386
      %p388 = pneg %p109
      %p389 = pneg %p106
      %p390 = scmp.lt.s32.totalorder %s24, 1
      %s391 = scalar_select %p390, %s24, 1
      %s392 = scalar_lea.vmem %s3, %s391
      %p393 = pneg %p135
      %p394 = pneg %p132
      %p395 = scmp.lt.s32.totalorder %s24, 1
      %s396 = scalar_select %p395, %s24, 1
      %s397 = scalar_lea.vmem %s4, %s396
      %p398 = pneg %p161
      %p399 = pneg %p158
      %p400 = scmp.lt.s32.totalorder %s24, 1
      %s401 = scalar_select %p400, %s24, 1
      %s402 = scalar_lea.vmem %s5, %s401
      %p403 = pneg %p187
      %p404 = pneg %p184
      %p405 = pneg %p208
      %p406 = pneg %p205
      %p407 = pneg %p229
      %p408 = pneg %p226
      %p409 = pneg %p250
      %p410 = pneg %p247
      %p411 = pneg %p278
      %p412 = pneg %p275
      %s413 = smul.u32 8, %s25
      %p414 = scmp.lt.s32.totalorder %s24, 1
      %s415 = scalar_select %p414, %s24, 1
      %p416 = scmp.lt.s32.totalorder %s413, 7
      %s417 = scalar_select %p416, %s413, 7
      %s418 = smul.addr %s415, 8
      %s419 = sadd.s32 %s417, %s418
      %s420 = smul.addr %s419, 4
      %s421 = scalar_lea.vmem %s9, %s420
      %s422 = smul.u32 8, %s25
      %p423 = scmp.lt.s32.totalorder %s24, 1
      %s424 = scalar_select %p423, %s24, 1
      %p425 = scmp.lt.s32.totalorder %s422, 7
      %s426 = scalar_select %p425, %s422, 7
      %s427 = smul.addr %s424, 8
      %s428 = sadd.s32 %s426, %s427
      %s429 = smul.addr %s428, 4
      %s430 = scalar_lea.vmem %s0, %s429
      %s431 = smul.u32 8, %s25
      %s432 = smul.u32 8, %s25
      %p433 = scmp.lt.s32.totalorder %s24, 1
      %s434 = scalar_select %p433, %s24, 1
      %p435 = scmp.lt.s32.totalorder %s432, 7
      %s436 = scalar_select %p435, %s432, 7
      %s437 = smul.addr %s434, 8
      %s438 = sadd.s32 %s436, %s437
      %s439 = smul.addr %s438, 4
      %s440 = scalar_lea.vmem %s1, %s439
      %s441 = smul.u32 8, %s25
      %p442 = scmp.lt.s32.totalorder %s24, 1
      %s443 = scalar_select %p442, %s24, 1
      %s444 = scalar_lea.vmem %s2, %s443
      %p445 = scmp.lt.s32.totalorder %s24, 1
      %s446 = scalar_select %p445, %s24, 1
      %s447 = scalar_lea.vmem %s3, %s446
      %p448 = scmp.lt.s32.totalorder %s24, 1
      %s449 = scalar_select %p448, %s24, 1
      %s450 = scalar_lea.vmem %s4, %s449
      %p451 = scmp.lt.s32.totalorder %s24, 1
      %s452 = scalar_select %p451, %s24, 1
      %s453 = scalar_lea.vmem %s5, %s452
      %s454 = smul.u32 8, %s25
      %p455 = scmp.lt.s32.totalorder %s24, 1
      %s456 = scalar_select %p455, %s24, 1
      %p457 = scmp.lt.s32.totalorder %s454, 7
      %s458 = scalar_select %p457, %s454, 7
      %s459 = smul.addr %s456, 8
      %s460 = sadd.s32 %s458, %s459
      %s461 = smul.addr %s460, 4
      %s462 = scalar_lea.vmem %s9, %s461
      %s463 = smul.u32 8, %s25
      %v465 = vld [vmem:[%s430] sm:$0xf]
      %v466 = vld [vmem:[%s430 + $0x4] sm:$0xf]
      %v467 = vld [vmem:[%s430 + $0x8] sm:$0xf]
      %v468 = vld [vmem:[%s430 + $0xc] sm:$0xf]
      %v469 = vld [vmem:[%s430 + $0x10] sm:$0xf]
      %v470 = vld [vmem:[%s430 + $0x14] sm:$0xf]
      %v471 = vld [vmem:[%s430 + $0x18] sm:$0xf]
      %v472 = vld [vmem:[%s430 + $0x1c] sm:$0xf]
      %v473 = vld [vmem:[%s444] sm:$0x1]
      %v475 = vpack.i.b16 %v473, %v473
      %v477 = vperm.slane %v475, 0
      %v478 = vunpack.c.l.bf16 %v465
      %v479 = vunpack.c.l.bf16 %v466
      %v480 = vunpack.c.l.bf16 %v467
      %v481 = vunpack.c.l.bf16 %v468
      %v482 = vunpack.c.l.bf16 %v469
      %v483 = vunpack.c.l.bf16 %v470
      %v484 = vunpack.c.l.bf16 %v471
      %v485 = vunpack.c.l.bf16 %v472
      %v486 = vunpack.c.l.bf16 %v477
      %v487 = vmul.f32 %v478, %v486
      %v488 = vmul.f32 %v479, %v486
      %v489 = vmul.f32 %v480, %v486
      %v490 = vmul.f32 %v481, %v486
      %v491 = vmul.f32 %v482, %v486
      %v492 = vmul.f32 %v483, %v486
      %v493 = vmul.f32 %v484, %v486
      %v494 = vmul.f32 %v485, %v486
      %v495 = vpack.c.bf16 %v487, %v487
      %v496 = vpack.c.bf16 %v488, %v488
      %v497 = vpack.c.bf16 %v489, %v489
      %v498 = vpack.c.bf16 %v490, %v490
      %v499 = vpack.c.bf16 %v491, %v491
      %v500 = vpack.c.bf16 %v492, %v492
      %v501 = vpack.c.bf16 %v493, %v493
      %v502 = vpack.c.bf16 %v494, %v494
      %v503 = vld [vmem:[%s450] sm:$0x1]
      %v505 = vpack.i.b16 %v503, %v503
      %v507 = vperm.slane %v505, 0
      %v508 = vunpack.c.l.bf16 %v495
      %v509 = vunpack.c.l.bf16 %v496
      %v510 = vunpack.c.l.bf16 %v497
      %v511 = vunpack.c.l.bf16 %v498
      %v512 = vunpack.c.l.bf16 %v499
      %v513 = vunpack.c.l.bf16 %v500
      %v514 = vunpack.c.l.bf16 %v501
      %v515 = vunpack.c.l.bf16 %v502
      %v516 = vunpack.c.l.bf16 %v507
      %v517 = vadd.f32 %v508, %v516
      %v518 = vadd.f32 %v509, %v516
      %v519 = vadd.f32 %v510, %v516
      %v520 = vadd.f32 %v511, %v516
      %v521 = vadd.f32 %v512, %v516
      %v522 = vadd.f32 %v513, %v516
      %v523 = vadd.f32 %v514, %v516
      %v524 = vadd.f32 %v515, %v516
      %v525 = vpack.c.bf16 %v517, %v517
      %v526 = vpack.c.bf16 %v518, %v518
      %v527 = vpack.c.bf16 %v519, %v519
      %v528 = vpack.c.bf16 %v520, %v520
      %v529 = vpack.c.bf16 %v521, %v521
      %v530 = vpack.c.bf16 %v522, %v522
      %v531 = vpack.c.bf16 %v523, %v523
      %v532 = vpack.c.bf16 %v524, %v524
      %v533 = vunpack.c.l.bf16 %v525
      %v534 = vunpack.c.l.bf16 %v526
      %v535 = vunpack.c.l.bf16 %v527
      %v536 = vunpack.c.l.bf16 %v528
      %v537 = vunpack.c.l.bf16 %v529
      %v538 = vunpack.c.l.bf16 %v530
      %v539 = vunpack.c.l.bf16 %v531
      %v540 = vunpack.c.l.bf16 %v532
      %v541 = vmax.f32 %v533, 0.0
      %v542 = vmax.f32 %v534, 0.0
      %v543 = vmax.f32 %v535, 0.0
      %v544 = vmax.f32 %v536, 0.0
      %v545 = vmax.f32 %v537, 0.0
      %v546 = vmax.f32 %v538, 0.0
      %v547 = vmax.f32 %v539, 0.0
      %v548 = vmax.f32 %v540, 0.0
      %v549 = vpack.c.bf16 %v542, %v541
      %v550 = vpack.c.bf16 %v544, %v543
      %v551 = vpack.c.bf16 %v546, %v545
      %v552 = vpack.c.bf16 %v548, %v547
      %v553 = vld [vmem:[%s6] sm:$0xf]
      %v554 = vld [vmem:[%s6 + $0x4] sm:$0xf]
      %v555 = vld [vmem:[%s6 + $0x8] sm:$0xf]
      %v556 = vld [vmem:[%s6 + $0xc] sm:$0xf]
      %v557 = vld [vmem:[%s440] sm:$0xf]
      %v558 = vld [vmem:[%s440 + $0x4] sm:$0xf]
      %v559 = vld [vmem:[%s440 + $0x8] sm:$0xf]
      %v560 = vld [vmem:[%s440 + $0xc] sm:$0xf]
      %v561 = vld [vmem:[%s440 + $0x10] sm:$0xf]
      %v562 = vld [vmem:[%s440 + $0x14] sm:$0xf]
      %v563 = vld [vmem:[%s440 + $0x18] sm:$0xf]
      %v564 = vld [vmem:[%s440 + $0x1c] sm:$0xf]
      %v565 = vld [vmem:[%s447] sm:$0x1]
      %v567 = vpack.i.b16 %v565, %v565
      %v569 = vperm.slane %v567, 0
      %v570 = vunpack.c.l.bf16 %v557
      %v571 = vunpack.c.l.bf16 %v558
      %v572 = vunpack.c.l.bf16 %v559
      %v573 = vunpack.c.l.bf16 %v560
      %v574 = vunpack.c.l.bf16 %v561
      %v575 = vunpack.c.l.bf16 %v562
      %v576 = vunpack.c.l.bf16 %v563
      %v577 = vunpack.c.l.bf16 %v564
      %v578 = vunpack.c.l.bf16 %v569
      %v579 = vmul.f32 %v570, %v578
      %v580 = vmul.f32 %v571, %v578
      %v581 = vmul.f32 %v572, %v578
      %v582 = vmul.f32 %v573, %v578
      %v583 = vmul.f32 %v574, %v578
      %v584 = vmul.f32 %v575, %v578
      %v585 = vmul.f32 %v576, %v578
      %v586 = vmul.f32 %v577, %v578
      %v587 = vpack.c.bf16 %v579, %v579
      %v588 = vpack.c.bf16 %v580, %v580
      %v589 = vpack.c.bf16 %v581, %v581
      %v590 = vpack.c.bf16 %v582, %v582
      %v591 = vpack.c.bf16 %v583, %v583
      %v592 = vpack.c.bf16 %v584, %v584
      %v593 = vpack.c.bf16 %v585, %v585
      %v594 = vpack.c.bf16 %v586, %v586
      %v595 = vld [vmem:[%s453] sm:$0x1]
      %v597 = vpack.i.b16 %v595, %v595
      %v599 = vperm.slane %v597, 0
      %v600 = vunpack.c.l.bf16 %v587
      %v601 = vunpack.c.l.bf16 %v588
      %v602 = vunpack.c.l.bf16 %v589
      %v603 = vunpack.c.l.bf16 %v590
      %v604 = vunpack.c.l.bf16 %v591
      %v605 = vunpack.c.l.bf16 %v592
      %v606 = vunpack.c.l.bf16 %v593
      %v607 = vunpack.c.l.bf16 %v594
      %v608 = vunpack.c.l.bf16 %v599
      %v609 = vadd.f32 %v600, %v608
      %v610 = vadd.f32 %v601, %v608
      %v611 = vadd.f32 %v602, %v608
      %v612 = vadd.f32 %v603, %v608
      %v613 = vadd.f32 %v604, %v608
      %v614 = vadd.f32 %v605, %v608
      %v615 = vadd.f32 %v606, %v608
      %v616 = vadd.f32 %v607, %v608
      %v617 = vpack.c.bf16 %v609, %v609
      %v618 = vpack.c.bf16 %v610, %v610
      %v619 = vpack.c.bf16 %v611, %v611
      %v620 = vpack.c.bf16 %v612, %v612
      %v621 = vpack.c.bf16 %v613, %v613
      %v622 = vpack.c.bf16 %v614, %v614
      %v623 = vpack.c.bf16 %v615, %v615
      %v624 = vpack.c.bf16 %v616, %v616
      %v625 = vunpack.c.l.bf16 %v617
      %v626 = vunpack.c.l.bf16 %v618
      %v627 = vunpack.c.l.bf16 %v619
      %v628 = vunpack.c.l.bf16 %v620
      %v629 = vunpack.c.l.bf16 %v621
      %v630 = vunpack.c.l.bf16 %v622
      %v631 = vunpack.c.l.bf16 %v623
      %v632 = vunpack.c.l.bf16 %v624
      %v633 = vmax.f32 %v625, 0.0
      %v634 = vmax.f32 %v626, 0.0
      %v635 = vmax.f32 %v627, 0.0
      %v636 = vmax.f32 %v628, 0.0
      %v637 = vmax.f32 %v629, 0.0
      %v638 = vmax.f32 %v630, 0.0
      %v639 = vmax.f32 %v631, 0.0
      %v640 = vmax.f32 %v632, 0.0
      %v641 = vpack.c.bf16 %v634, %v633
      %v642 = vpack.c.bf16 %v636, %v635
      %v643 = vpack.c.bf16 %v638, %v637
      %v644 = vpack.c.bf16 %v640, %v639
      %v645 = vld [vmem:[%s7] sm:$0xf]
      %v646 = vld [vmem:[%s7 + $0x4] sm:$0xf]
      %v649 = vunpack.c.l.b16 %v645
      %v650 = vunpack.c.l.b16 %v646
      %v651 = vpack.c.b16 %v650, %v649
      %vm653 = vcmask 130048
      %v655 = vsel %vm653, %v641, 0
      %v658 = vsel %vm653, %v642, 0
      %v661 = vsel %vm653, %v643, 0
      %v664 = vsel %vm653, %v644, 0
      %666 = vmatpush.bf16.msra.mxu0 0
      %667 = vmatpush.bf16.msra.mxu0 0
      %668 = vmatpush.bf16.msra.mxu0 0
      %669 = vmatpush.bf16.msra.mxu0 0
      %670 = vmatpush.bf16.msra.mxu0 0
      %671 = vmatpush.bf16.msra.mxu0 0
      %672 = vmatpush.bf16.msra.mxu0 0
      %673 = vmatpush.bf16.msra.mxu0 %v651
      %674 = vmatmul.bf16.gmra.mxu0 %v655
      %v675 = vpop.f32.mrf.mxu0
      %v676 = vadd.f32 0.0, %v675
      %v677 = vpop.f32.mrf.mxu0
      %v678 = vadd.f32 0.0, %v677
      %679 = vmatmul.bf16.gmra.mxu0 %v658
      %v680 = vpop.f32.mrf.mxu0
      %v681 = vadd.f32 0.0, %v680
      %v682 = vpop.f32.mrf.mxu0
      %v683 = vadd.f32 0.0, %v682
      %684 = vmatmul.bf16.gmra.mxu0 %v661
      %v685 = vpop.f32.mrf.mxu0
      %v686 = vadd.f32 0.0, %v685
      %v687 = vpop.f32.mrf.mxu0
      %v688 = vadd.f32 0.0, %v687
      %689 = vmatmul.bf16.gmra.mxu0 %v664
      %v690 = vpop.f32.mrf.mxu0
      %v691 = vadd.f32 0.0, %v690
      %v692 = vpop.f32.mrf.mxu0
      %v693 = vadd.f32 0.0, %v692
      %694 = vdwg.mxu0
      %v699 = vunpack.c.l.b16 %v553
      %v700 = vunpack.c.l.b16 %v554
      %v701 = vunpack.c.l.b16 %v555
      %v702 = vunpack.c.l.b16 %v556
      %v703 = vpack.c.b16 %v700, %v699
      %v704 = vpack.c.b16 %v702, %v701
      %vm707 = vcmask 261120
      %v709 = vsel %vm707, %v549, 0
      %v712 = vsel %vm707, %v550, 0
      %v715 = vsel %vm707, %v551, 0
      %v718 = vsel %vm707, %v552, 0
      %720 = vmatpush.bf16.msra.mxu0 0
      %721 = vmatpush.bf16.msra.mxu0 0
      %722 = vmatpush.bf16.msra.mxu0 0
      %723 = vmatpush.bf16.msra.mxu0 0
      %724 = vmatpush.bf16.msra.mxu0 0
      %725 = vmatpush.bf16.msra.mxu0 0
      %726 = vmatpush.bf16.msra.mxu0 %v704
      %727 = vmatpush.bf16.msra.mxu0 %v703
      %728 = vmatmul.bf16.gmra.mxu0 %v709
      %v729 = vpop.f32.mrf.mxu0
      %v730 = vadd.f32 %v676, %v729
      %v731 = vpop.f32.mrf.mxu0
      %v732 = vadd.f32 %v678, %v731
      %733 = vmatmul.bf16.gmra.mxu0 %v712
      %v734 = vpop.f32.mrf.mxu0
      %v735 = vadd.f32 %v681, %v734
      %v736 = vpop.f32.mrf.mxu0
      %v737 = vadd.f32 %v683, %v736
      %738 = vmatmul.bf16.gmra.mxu0 %v715
      %v739 = vpop.f32.mrf.mxu0
      %v740 = vadd.f32 %v686, %v739
      %v741 = vpop.f32.mrf.mxu0
      %v742 = vadd.f32 %v688, %v741
      %743 = vmatmul.bf16.gmra.mxu0 %v718
      %v744 = vpop.f32.mrf.mxu0
      %v745 = vadd.f32 %v691, %v744
      %v746 = vpop.f32.mrf.mxu0
      %v747 = vadd.f32 %v693, %v746
      %748 = vdwg.mxu0
      %v749 = vld [vmem:[%s8] sm:$0x1]
      %v751 = vperm.slane %v749, 0
      %v753 = vadd.f32 %v730, %v751
      %v754 = vadd.f32 %v732, %v751
      %v755 = vadd.f32 %v735, %v751
      %v756 = vadd.f32 %v737, %v751
      %v757 = vadd.f32 %v740, %v751
      %v758 = vadd.f32 %v742, %v751
      %v759 = vadd.f32 %v745, %v751
      %v760 = vadd.f32 %v747, %v751
      %v761 = vmax.f32 %v753, 0.0
      %v762 = vmax.f32 %v754, 0.0
      %v763 = vmax.f32 %v755, 0.0
      %v764 = vmax.f32 %v756, 0.0
      %v765 = vmax.f32 %v757, 0.0
      %v766 = vmax.f32 %v758, 0.0
      %v767 = vmax.f32 %v759, 0.0
      %v768 = vmax.f32 %v760, 0.0
      %v769 = vpack.c.bf16 %v761, %v761
      %v770 = vpack.c.bf16 %v762, %v762
      %v771 = vpack.c.bf16 %v763, %v763
      %v772 = vpack.c.bf16 %v764, %v764
      %v773 = vpack.c.bf16 %v765, %v765
      %v774 = vpack.c.bf16 %v766, %v766
      %v775 = vpack.c.bf16 %v767, %v767
      %v776 = vpack.c.bf16 %v768, %v768
      %vm777 = vcmask 257024
      %778 = vst.msk [vmem:[%s462] sm:$0xf] %vm777, %v769
      %779 = vst.msk [vmem:[%s462 + $0x4] sm:$0xf] %vm777, %v770
      %780 = vst.msk [vmem:[%s462 + $0x8] sm:$0xf] %vm777, %v771
      %781 = vst.msk [vmem:[%s462 + $0xc] sm:$0xf] %vm777, %v772
      %782 = vst.msk [vmem:[%s462 + $0x10] sm:$0xf] %vm777, %v773
      %783 = vst.msk [vmem:[%s462 + $0x14] sm:$0xf] %vm777, %v774
      %784 = vst.msk [vmem:[%s462 + $0x18] sm:$0xf] %vm777, %v775
      %785 = vst.msk [vmem:[%s462 + $0x1c] sm:$0xf] %vm777, %v776
      %s786 = smul.u32 8, %s25
      %p787 = scmp.lt.s32.totalorder %s24, 1
      %s788 = scalar_select %p787, %s24, 1
      %p789 = scmp.lt.s32.totalorder %s786, 7
      %s790 = scalar_select %p789, %s786, 7
      %s791 = smul.addr %s788, 8
      %s792 = sadd.s32 %s790, %s791
      %s793 = smul.addr %s792, 4
      %s794 = scalar_lea.vmem %s9, %s793
      // Predicated region
      $region57: #{model_forward.17} parent=55 // pred_check
        %p795 = pneg %p275
      $region58: #{model_forward.17} parent=55 // pred_check_branch
        %797 = sbr.rel (%p795) target = $region60
      $region59: #{model_forward.17} parent=55 // pred_region
        %s798 = smul.u32 8, %s25
      $region60: #{model_forward.17} parent=55 // pred_fallthru
        _
    $region56: #{model_forward.17} parent=5 // pred_fallthru
      _
    %p799 = scmp.le.s32.totalorder 2, %s15
    // Predicated region
    $region61: #{model_forward.17} parent=5 // pred_check
      %p800 = pneg %p799
    $region62: #{model_forward.17} parent=5 // pred_check_branch
      %802 = sbr.rel (%p800) target = $region64
    $region63: #{model_forward.17} parent=5 // pred_region
      %s803 = ssub.s32 %s15, 2
      // Predicated region
      $region65: #{model_forward.17} parent=63 // pred_check
        %p804 = pneg %p281
      $region66: #{model_forward.17} parent=63 // pred_check_branch
        %806 = sbr.rel (%p804) target = $region68
      $region67: #{model_forward.17} parent=63 // pred_region
        %s807 = smul.u32 8, %s27
        %p808 = scmp.lt.s32.totalorder %s26, 1
        %s809 = scalar_select %p808, %s26, 1
        %p810 = scmp.lt.s32.totalorder %s807, 7
        %s811 = scalar_select %p810, %s807, 7
        %s812 = smul.addr %s809, 8
        %s813 = sadd.s32 %s811, %s812
        %s814 = smul.addr %s813, 4
        %s815 = scalar_lea.vmem %s9, %s814
      $region68: #{model_forward.17} parent=63 // pred_fallthru
        _
    $region64: #{model_forward.17} parent=5 // pred_fallthru
      _
  $region6: #{model_forward.17} parent=0 // loop_footer
    %s19 = sadd.s32 1, %s15
  $region7: #{model_forward.17} parent=0 // loop_footer_branch
    %14 = sbr.rel target = $region3
  $region8: #{model_forward.17} parent=0 // loop_exit
    _

// kernel: model_forward.19
$region0: #{model_forward.19}
  #allocation0 [shape = 'u32[]', space=smem, size = 0x4, offset = 0x4, fixed_abs, tag = 'smem constant byte address 0x4 - core index']
  #allocation1 [shape = 'u32[72,128]{1,0:T(1,128)}', space=vmem, size = 0x9000, scoped, tag = 'internal scratch']
  %s0 = inlined_call_operand.vmem [shape: bf16[2,64,64], index: 0, kind: input, shape index: {}]
  %s1 = inlined_call_operand.vmem [shape: f32[2,1,64], index: 1, kind: input, shape index: {}]
  %s2 = inlined_call_operand.vmem [shape: f32[1,1,64], index: 2, kind: input, shape index: {}]
  %s3 = inlined_call_operand.vmem [shape: f32[1,1,64], index: 3, kind: input, shape index: {}]
  %s4 = inlined_call_operand.hbm [shape: f32[2,64,64], index: 4, kind: output, shape index: {0}]
  %s5 = inlined_call_operand.vmem [shape: f32[2,1,64], index: 5, kind: output, shape index: {1}]
  %6 = xla_tuple %s4, %s5
  %s7 = sld [smem:[#allocation0]]
  $region65: #{model_forward.19} parent=0
    _
  %s9 = ssub.s32 1, %s7
  %s10 = scalar_select 0, %s9, %s7
  $region1: #{model_forward.19} parent=0
    #allocation2 [shape = 'u8[65536]{0}', space=vmem, size = 0x10000, scoped, tag = 'output window, operand 0']
    #allocation3 [shape = 's32[2]{0}', space=sflag, size = 0x8, scoped, tag = 'scoped memory for model_forward.19']
    %11 = vsyncpa [#allocation3], 0
    %s12 = scalar_lea.sflag [#allocation3], 1
    %13 = vsyncpa %s12, 0
    loop: start=0, step=1, limit=4
    $region2: #{model_forward.19} parent=1 // loop_pre_header
      _
    $region3: #{model_forward.19} parent=1 // loop_header
      %s15 = sphi 0, %s19
      %p16 = scmp.ge.s32.totalorder %s15, 4
      %s22 = sphi 0, %s34
      %s23 = sphi 0, %s30
      %s24 = sphi 0, %s22
      %s25 = sphi 0, %s23
      %s26 = sphi 0, %s24
      %s27 = sphi 0, %s25
      %s39 = sphi 0, %s41
      %s42 = sphi 0, %s39
      %s43 = sphi 0, %s42
      %s59 = sphi 0, %s43
      %s65 = sphi 0, %s67
      %s68 = sphi 0, %s65
      %s69 = sphi 0, %s68
      %s85 = sphi 0, %s69
      %s89 = sphi 0, %s89
      %s91 = sphi 0, %s89
      %s92 = sphi 0, %s91
      %s106 = sphi 0, %s92
      %s110 = sphi 0, %s110
      %s112 = sphi 0, %s110
      %s113 = sphi 0, %s112
      %s127 = sphi 0, %s113
      %s135 = sphi 0, %s137
      %s138 = sphi 0, %s135
      %s139 = sphi 0, %s138
      %s155 = sphi 0, %s139
      %s161 = sphi 0, %s163
      %s164 = sphi 0, %s161
      %s165 = sphi 0, %s164
      %s181 = sphi 0, %s165
    $region4: #{model_forward.19} parent=1 // loop_header_branch
      %18 = sbr.rel (%p16) target = $region8
    $region5: #{model_forward.19} parent=1 // loop_body
      %s20 = ssub.s32 %s15, 1
      %s21 = ssub.s32 %s15, 2
      %s28 = sadd.s32 1, %s23
      %p29 = scmp.ge.s32.totalorder %s28, 1
      %s30 = scalar_select %p29, 0, %s28
      %s31 = sadd.s32 1, %s22
      %s32 = scalar_select %p29, %s31, %s22
      %p33 = scmp.ge.s32.totalorder %s32, 2
      %s34 = scalar_select %p33, 0, %s32
      %s35 = ssub.s32 %s22, %s34
      %s36 = ssub.s32 %s23, %s30
      %s37 = sor.u32 %s35, %s36
      %p38 = scmp.eq.s32.totalorder %s37, 0
      %s40 = sadd.s32 %s39, 1
      %s41 = scalar_select %p38, %s39, %s40
      %p44 = pneg %p38
      %p45 = scmp.eq.s32.totalorder %s15, 1
      %p46 = por %p44, %p45
      %p47 = scmp.ne.s32.totalorder %s39, %s42
      %p48 = scmp.eq.s32.totalorder %s15, 0
      %p49 = por %p47, %p48
      %p50 = scmp.ne.s32.totalorder %s39, %s42
      %p51 = scmp.eq.s32.totalorder %s20, 1
      %p52 = por %p50, %p51
      %p53 = scmp.ne.s32.totalorder %s42, %s43
      %p54 = scmp.eq.s32.totalorder %s20, 0
      %p55 = por %p53, %p54
      %p56 = scmp.ne.s32.totalorder %s42, %s43
      %p57 = scmp.eq.s32.totalorder %s21, 1
      %p58 = por %p56, %p57
      %p60 = scmp.ne.s32.totalorder %s43, %s59
      %p61 = scmp.eq.s32.totalorder %s21, 0
      %p62 = por %p60, %p61
      %s63 = ssub.s32 %s22, %s34
      %p64 = scmp.eq.s32.totalorder %s63, 0
      %s66 = sadd.s32 %s65, 1
      %s67 = scalar_select %p64, %s65, %s66
      %p70 = pneg %p64
      %p71 = scmp.eq.s32.totalorder %s15, 1
      %p72 = por %p70, %p71
      %p73 = scmp.ne.s32.totalorder %s65, %s68
      %p74 = scmp.eq.s32.totalorder %s15, 0
      %p75 = por %p73, %p74
      %p76 = scmp.ne.s32.totalorder %s65, %s68
      %p77 = scmp.eq.s32.totalorder %s20, 1
      %p78 = por %p76, %p77
      %p79 = scmp.ne.s32.totalorder %s68, %s69
      %p80 = scmp.eq.s32.totalorder %s20, 0
      %p81 = por %p79, %p80
      %p82 = scmp.ne.s32.totalorder %s68, %s69
      %p83 = scmp.eq.s32.totalorder %s21, 1
      %p84 = por %p82, %p83
      %p86 = scmp.ne.s32.totalorder %s69, %s85
      %p87 = scmp.eq.s32.totalorder %s21, 0
      %p88 = por %p86, %p87
      %s90 = sadd.s32 %s89, 1
      %p93 = scmp.eq.s32.totalorder %s15, 1
      %p94 = scmp.ne.s32.totalorder %s89, %s91
      %p95 = scmp.eq.s32.totalorder %s15, 0
      %p96 = por %p94, %p95
      %p97 = scmp.ne.s32.totalorder %s89, %s91
      %p98 = scmp.eq.s32.totalorder %s20, 1
      %p99 = por %p97, %p98
      %p100 = scmp.ne.s32.totalorder %s91, %s92
      %p101 = scmp.eq.s32.totalorder %s20, 0
      %p102 = por %p100, %p101
      %p103 = scmp.ne.s32.totalorder %s91, %s92
      %p104 = scmp.eq.s32.totalorder %s21, 1
      %p105 = por %p103, %p104
      %p107 = scmp.ne.s32.totalorder %s92, %s106
      %p108 = scmp.eq.s32.totalorder %s21, 0
      %p109 = por %p107, %p108
      %s111 = sadd.s32 %s110, 1
      %p114 = scmp.eq.s32.totalorder %s15, 1
      %p115 = scmp.ne.s32.totalorder %s110, %s112
      %p116 = scmp.eq.s32.totalorder %s15, 0
      %p117 = por %p115, %p116
      %p118 = scmp.ne.s32.totalorder %s110, %s112
      %p119 = scmp.eq.s32.totalorder %s20, 1
      %p120 = por %p118, %p119
      %p121 = scmp.ne.s32.totalorder %s112, %s113
      %p122 = scmp.eq.s32.totalorder %s20, 0
      %p123 = por %p121, %p122
      %p124 = scmp.ne.s32.totalorder %s112, %s113
      %p125 = scmp.eq.s32.totalorder %s21, 1
      %p126 = por %p124, %p125
      %p128 = scmp.ne.s32.totalorder %s113, %s127
      %p129 = scmp.eq.s32.totalorder %s21, 0
      %p130 = por %p128, %p129
      %s131 = ssub.s32 %s22, %s34
      %s132 = ssub.s32 %s23, %s30
      %s133 = sor.u32 %s131, %s132
      %p134 = scmp.eq.s32.totalorder %s133, 0
      %s136 = sadd.s32 %s135, 1
      %s137 = scalar_select %p134, %s135, %s136
      %p140 = pneg %p134
      %p141 = scmp.eq.s32.totalorder %s15, 1
      %p142 = por %p140, %p141
      %p143 = scmp.ne.s32.totalorder %s135, %s138
      %p144 = scmp.eq.s32.totalorder %s15, 0
      %p145 = por %p143, %p144
      %p146 = scmp.ne.s32.totalorder %s135, %s138
      %p147 = scmp.eq.s32.totalorder %s20, 1
      %p148 = por %p146, %p147
      %p149 = scmp.ne.s32.totalorder %s138, %s139
      %p150 = scmp.eq.s32.totalorder %s20, 0
      %p151 = por %p149, %p150
      %p152 = scmp.ne.s32.totalorder %s138, %s139
      %p153 = scmp.eq.s32.totalorder %s21, 1
      %p154 = por %p152, %p153
      %p156 = scmp.ne.s32.totalorder %s139, %s155
      %p157 = scmp.eq.s32.totalorder %s21, 0
      %p158 = por %p156, %p157
      %s159 = ssub.s32 %s22, %s34
      %p160 = scmp.eq.s32.totalorder %s159, 0
      %s162 = sadd.s32 %s161, 1
      %s163 = scalar_select %p160, %s161, %s162
      %p166 = pneg %p160
      %p167 = scmp.eq.s32.totalorder %s15, 1
      %p168 = por %p166, %p167
      %p169 = scmp.ne.s32.totalorder %s161, %s164
      %p170 = scmp.eq.s32.totalorder %s15, 0
      %p171 = por %p169, %p170
      %p172 = scmp.ne.s32.totalorder %s161, %s164
      %p173 = scmp.eq.s32.totalorder %s20, 1
      %p174 = por %p172, %p173
      %p175 = scmp.ne.s32.totalorder %s164, %s165
      %p176 = scmp.eq.s32.totalorder %s20, 0
      %p177 = por %p175, %p176
      %p178 = scmp.ne.s32.totalorder %s164, %s165
      %p179 = scmp.eq.s32.totalorder %s21, 1
      %p180 = por %p178, %p179
      %p182 = scmp.ne.s32.totalorder %s165, %s181
      %p183 = scmp.eq.s32.totalorder %s21, 0
      %p184 = por %p182, %p183
      %p185 = scmp.le.s32.totalorder 1, %s15
      %p186 = scmp.lt.s32.totalorder %s15, 3
      %p187 = pnand %p185, %p186
      %p188 = pneg %p187
      // Predicated region
      $region9: #{model_forward.19} parent=5 // pred_check
        _
      $region10: #{model_forward.19} parent=5 // pred_check_branch
        %190 = sbr.rel (%p187) target = $region12
      $region11: #{model_forward.19} parent=5 // pred_region
        %s191 = ssub.s32 %s15, 1
        // Predicated region
        $region13: #{model_forward.19} parent=11 // pred_check
          %p192 = pneg %p102
        $region14: #{model_forward.19} parent=11 // pred_check_branch
          %194 = sbr.rel (%p192) target = $region16
        $region15: #{model_forward.19} parent=11 // pred_region
          _
        $region16: #{model_forward.19} parent=11 // pred_fallthru
          _
        // Predicated region
        $region17: #{model_forward.19} parent=11 // pred_check
          %p195 = pneg %p123
        $region18: #{model_forward.19} parent=11 // pred_check_branch
          %197 = sbr.rel (%p195) target = $region20
        $region19: #{model_forward.19} parent=11 // pred_region
          _
        $region20: #{model_forward.19} parent=11 // pred_fallthru
          _
      $region12: #{model_forward.19} parent=5 // pred_fallthru
        _
      %p198 = scmp.lt.s32.totalorder %s15, 2
      // Predicated region
      $region21: #{model_forward.19} parent=5 // pred_check
        %p199 = pneg %p198
      $region22: #{model_forward.19} parent=5 // pred_check_branch
        %201 = sbr.rel (%p199) target = $region24
      $region23: #{model_forward.19} parent=5 // pred_region
        // Predicated region
        $region25: #{model_forward.19} parent=23 // pred_check
          %p202 = pneg %p49
        $region26: #{model_forward.19} parent=23 // pred_check_branch
          %204 = sbr.rel (%p202) target = $region28
        $region27: #{model_forward.19} parent=23 // pred_region
          %s205 = smul.u32 8, %s23
          %p206 = scmp.lt.s32.totalorder %s22, 1
          %s207 = scalar_select %p206, %s22, 1
          %p208 = scmp.lt.s32.totalorder %s205, 7
          %s209 = scalar_select %p208, %s205, 7
          %s210 = smul.addr %s207, 8
          %s211 = sadd.s32 %s209, %s210
          %s212 = smul.addr %s211, 4
          %s213 = scalar_lea.vmem %s0, %s212
          %s214 = smul.u32 8, %s23
        $region28: #{model_forward.19} parent=23 // pred_fallthru
          _
        // Predicated region
        $region29: #{model_forward.19} parent=23 // pred_check
          %p215 = pneg %p75
        $region30: #{model_forward.19} parent=23 // pred_check_branch
          %217 = sbr.rel (%p215) target = $region32
        $region31: #{model_forward.19} parent=23 // pred_region
          %p218 = scmp.lt.s32.totalorder %s22, 1
          %s219 = scalar_select %p218, %s22, 1
          %s220 = scalar_lea.vmem %s1, %s219
        $region32: #{model_forward.19} parent=23 // pred_fallthru
          _
      $region24: #{model_forward.19} parent=5 // pred_fallthru
        _
      %p221 = scmp.le.s32.totalorder 1, %s15
      %p222 = scmp.lt.s32.totalorder %s15, 3
      %p223 = pnand %p221, %p222
      %p224 = pneg %p223
      // Predicated region
      $region33: #{model_forward.19} parent=5 // pred_check
        _
      $region34: #{model_forward.19} parent=5 // pred_check_branch
        %226 = sbr.rel (%p223) target = $region36
      $region35: #{model_forward.19} parent=5 // pred_region
        %s227 = ssub.s32 %s15, 1
        %s228 = smul.u32 8, %s25
        %p229 = scmp.lt.s32.totalorder %s24, 1
        %s230 = scalar_select %p229, %s24, 1
        %p231 = scmp.lt.s32.totalorder %s228, 7
        %s232 = scalar_select %p231, %s228, 7
        %s233 = smul.addr %s230, 8
        %s234 = sadd.s32 %s232, %s233
        %s235 = smul.addr %s234, 4
        %s236 = scalar_lea.vmem %s0, %s235
        %p237 = pneg %p55
        %p238 = pneg %p52
        %p239 = scmp.lt.s32.totalorder %s24, 1
        %s240 = scalar_select %p239, %s24, 1
        %s241 = scalar_lea.vmem %s1, %s240
        %p242 = pneg %p81
        %p243 = pneg %p78
        %p244 = pneg %p102
        %p245 = pneg %p99
        %p246 = pneg %p123
        %p247 = pneg %p120
        %p248 = pneg %p151
        %p249 = pneg %p148
        %s250 = sand.u32 %s138, 1
        %s251 = scalar_lea.sflag [#allocation3], %s250
        %s252 = sand.u32 %s138, 1
        %s253 = smul.addr %s252, 64
        %s254 = scalar_lea.vmem [#allocation2], %s253
        %p255 = pneg %p177
        %p256 = pneg %p174
        %p257 = scmp.lt.s32.totalorder %s24, 1
        %s258 = scalar_select %p257, %s24, 1
        %s259 = scalar_lea.vmem %s5, %s258
        %s260 = smul.u32 8, %s25
        %p261 = scmp.lt.s32.totalorder %s24, 1
        %s262 = scalar_select %p261, %s24, 1
        %p263 = scmp.lt.s32.totalorder %s260, 7
        %s264 = scalar_select %p263, %s260, 7
        %s265 = smul.addr %s262, 8
        %s266 = sadd.s32 %s264, %s265
        %s267 = smul.addr %s266, 4
        %s268 = scalar_lea.vmem %s0, %s267
        %s269 = smul.u32 8, %s25
        %p270 = scmp.lt.s32.totalorder %s24, 1
        %s271 = scalar_select %p270, %s24, 1
        %s272 = scalar_lea.vmem %s1, %s271
        %s273 = smul.u32 8, %s25
        %p274 = scmp.lt.s32.totalorder %s24, 1
        %s275 = scalar_select %p274, %s24, 1
        %s276 = scalar_lea.vmem %s5, %s275
        %v277 = vld [vmem:[%s268] sm:$0xf]
        %v278 = vld [vmem:[%s268 + $0x4] sm:$0xf]
        %v279 = vld [vmem:[%s268 + $0x8] sm:$0xf]
        %v280 = vld [vmem:[%s268 + $0xc] sm:$0xf]
        %v281 = vld [vmem:[%s268 + $0x10] sm:$0xf]
        %v282 = vld [vmem:[%s268 + $0x14] sm:$0xf]
        %v283 = vld [vmem:[%s268 + $0x18] sm:$0xf]
        %v284 = vld [vmem:[%s268 + $0x1c] sm:$0xf]
        %v285 = vunpack.c.l.bf16 %v277
        %v286 = vunpack.c.l.bf16 %v278
        %v287 = vunpack.c.l.bf16 %v279
        %v288 = vunpack.c.l.bf16 %v280
        %v289 = vunpack.c.l.bf16 %v281
        %v290 = vunpack.c.l.bf16 %v282
        %v291 = vunpack.c.l.bf16 %v283
        %v292 = vunpack.c.l.bf16 %v284
        %v293 = vld [vmem:[%s272] sm:$0x1]
        %v294 = vld [vmem:[%s2] sm:$0x1]
        %v296 = vperm.slane %v294, 0
        %v298 = vmul.f32 %v285, %v296
        %v299 = vmul.f32 %v286, %v296
        %v300 = vmul.f32 %v287, %v296
        %v301 = vmul.f32 %v288, %v296
        %v302 = vmul.f32 %v289, %v296
        %v303 = vmul.f32 %v290, %v296
        %v304 = vmul.f32 %v291, %v296
        %v305 = vmul.f32 %v292, %v296
        %v306 = vld [vmem:[%s3] sm:$0x1]
        %v308 = vperm.slane %v306, 0
        %v310 = vadd.f32 %v298, %v308
        %v311 = vadd.f32 %v299, %v308
        %v312 = vadd.f32 %v300, %v308
        %v313 = vadd.f32 %v301, %v308
        %v314 = vadd.f32 %v302, %v308
        %v315 = vadd.f32 %v303, %v308
        %v316 = vadd.f32 %v304, %v308
        %v317 = vadd.f32 %v305, %v308
        %v319 = vperm.slane %v293, 0
        %v321 = vmul.f32 %v319, %v310
        %v322 = vmul.f32 %v319, %v311
        %v323 = vmul.f32 %v319, %v312
        %v324 = vmul.f32 %v319, %v313
        %v325 = vmul.f32 %v319, %v314
        %v326 = vmul.f32 %v319, %v315
        %v327 = vmul.f32 %v319, %v316
        %v328 = vmul.f32 %v319, %v317
        %vm329 = vcmask 523264
        %330 = vst.msk [vmem:[%s254] sm:$0xff] %vm329, %v321
        %331 = vst.msk [vmem:[%s254 + $0x8] sm:$0xff] %vm329, %v322
        %332 = vst.msk [vmem:[%s254 + $0x10] sm:$0xff] %vm329, %v323
        %333 = vst.msk [vmem:[%s254 + $0x18] sm:$0xff] %vm329, %v324
        %334 = vst.msk [vmem:[%s254 + $0x20] sm:$0xff] %vm329, %v325
        %335 = vst.msk [vmem:[%s254 + $0x28] sm:$0xff] %vm329, %v326
        %336 = vst.msk [vmem:[%s254 + $0x30] sm:$0xff] %vm329, %v327
        %337 = vst.msk [vmem:[%s254 + $0x38] sm:$0xff] %vm329, %v328
        %v338 = vmax.f32 %v321, 0.0
        %v339 = vmax.f32 %v322, 0.0
        %v340 = vmax.f32 %v323, 0.0
        %v341 = vmax.f32 %v324, 0.0
        %v342 = vmax.f32 %v325, 0.0
        %v343 = vmax.f32 %v326, 0.0
        %v344 = vmax.f32 %v327, 0.0
        %v345 = vmax.f32 %v328, 0.0
        %v346 = vsel %vm329, %v338, 0.0
        %v347 = vsel %vm329, %v339, 0.0
        %v348 = vadd.f32 %v346, %v347
        %v349 = vsel %vm329, %v340, 0.0
        %v350 = vadd.f32 %v348, %v349
        %v351 = vsel %vm329, %v341, 0.0
        %v352 = vadd.f32 %v350, %v351
        %v353 = vsel %vm329, %v342, 0.0
        %v354 = vadd.f32 %v352, %v353
        %v355 = vsel %vm329, %v343, 0.0
        %v356 = vadd.f32 %v354, %v355
        %v357 = vsel %vm329, %v344, 0.0
        %v358 = vadd.f32 %v356, %v357
        %v359 = vsel %vm329, %v345, 0.0
        %v360 = vadd.f32 %v358, %v359
        %v361 = vrot.slane %v360, 4
        %v362 = vadd.f32 %v360, %v361
        %v363 = vrot.slane %v362, 2
        %v364 = vadd.f32 %v362, %v363
        %v365 = vrot.slane %v364, 1
        %v366 = vadd.f32 %v364, %v365
        %v367 = vmul.f32 %v366, 0.015625
        %p368 = scmp.eq.s32.totalorder %s25, 0
        // Predicated region
        $region37: #{model_forward.19} parent=35 // pred_check
          %p369 = pneg %p368
        $region38: #{model_forward.19} parent=35 // pred_check_branch
          %371 = sbr.rel (%p369) target = $region40
        $region39: #{model_forward.19} parent=35 // pred_region
          %vm372 = vcmask 516096
          %373 = vst.msk [vmem:[%s276] sm:$0x1] %vm372, %v367
        $region40: #{model_forward.19} parent=35 // pred_fallthru
          _
        %p374 = scmp.ne.s32.totalorder %s25, 0
        // Predicated region
        $region41: #{model_forward.19} parent=35 // pred_check
          %p375 = pneg %p374
        $region42: #{model_forward.19} parent=35 // pred_check_branch
          %377 = sbr.rel (%p375) target = $region44
        $region43: #{model_forward.19} parent=35 // pred_region
          %v378 = vld [vmem:[%s276] sm:$0x1]
          %v379 = vadd.f32 %v378, %v367
          %vm380 = vcmask 516096
          %381 = vst.msk [vmem:[%s276] sm:$0x1] %vm380, %v379
        $region44: #{model_forward.19} parent=35 // pred_fallthru
          _
        %s382 = sand.u32 %s138, 1
        %s383 = scalar_lea.sflag [#allocation3], %s382
        %s384 = sand.u32 %s138, 1
        %s385 = smul.addr %s384, 64
        %s386 = scalar_lea.vmem [#allocation2], %s385
        %p387 = scmp.lt.s32.totalorder %s24, 1
        %s388 = scalar_select %p387, %s24, 1
        %s389 = scalar_lea.vmem %s5, %s388
        // Predicated region
        $region45: #{model_forward.19} parent=35 // pred_check
          %p390 = pneg %p148
        $region46: #{model_forward.19} parent=35 // pred_check_branch
          %392 = sbr.rel (%p390) target = $region48
        $region47: #{model_forward.19} parent=35 // pred_region
          %s393 = smul.u32 8, %s25
          %395 = vsyncadd %s383, 0
          %s396 = smul.addr %s24, 8
          %s397 = sadd.s32 %s393, %s396
          %s398 = smul.addr %s397, 8
          %s399 = scalar_lea.hbm %s4, %s398
          %s400 = sshll.u32 %s386, 4
          %s401 = int_to_ptr.vmem [resolvable:$true] %s400
          %s402 = sshll.u32 %s399, 4
          %s403 = int_to_ptr.hbm [resolvable:$true] %s402
          %408 = dma.vmem_to_hbm [thread:$0]  %s401, 1024, %s403, %s383, 128, 128, 8
        $region48: #{model_forward.19} parent=35 // pred_fallthru
          _
        // Predicated region
        $region49: #{model_forward.19} parent=35 // pred_check
          %p409 = pneg %p174
        $region50: #{model_forward.19} parent=35 // pred_check_branch
          %411 = sbr.rel (%p409) target = $region52
        $region51: #{model_forward.19} parent=35 // pred_region
          _
        $region52: #{model_forward.19} parent=35 // pred_fallthru
          _
      $region36: #{model_forward.19} parent=5 // pred_fallthru
        _
      %p412 = scmp.le.s32.totalorder 2, %s15
      // Predicated region
      $region53: #{model_forward.19} parent=5 // pred_check
        %p413 = pneg %p412
      $region54: #{model_forward.19} parent=5 // pred_check_branch
        %415 = sbr.rel (%p413) target = $region56
      $region55: #{model_forward.19} parent=5 // pred_region
        %s416 = ssub.s32 %s15, 2
        // Predicated region
        $region57: #{model_forward.19} parent=55 // pred_check
          %p417 = pneg %p154
        $region58: #{model_forward.19} parent=55 // pred_check_branch
          %419 = sbr.rel (%p417) target = $region60
        $region59: #{model_forward.19} parent=55 // pred_region
          %s420 = sand.u32 %s139, 1
          %s421 = scalar_lea.sflag [#allocation3], %s420
          %s422 = sand.u32 %s139, 1
          %s423 = smul.addr %s422, 64
          %s424 = scalar_lea.vmem [#allocation2], %s423
          %426 = dma.done %s421, 1024
        $region60: #{model_forward.19} parent=55 // pred_fallthru
          _
        // Predicated region
        $region61: #{model_forward.19} parent=55 // pred_check
          %p427 = pneg %p180
        $region62: #{model_forward.19} parent=55 // pred_check_branch
          %429 = sbr.rel (%p427) target = $region64
        $region63: #{model_forward.19} parent=55 // pred_region
          %p430 = scmp.lt.s32.totalorder %s26, 1
          %s431 = scalar_select %p430, %s26, 1
          %s432 = scalar_lea.vmem %s5, %s431
        $region64: #{model_forward.19} parent=55 // pred_fallthru
          _
      $region56: #{model_forward.19} parent=5 // pred_fallthru
        _
    $region6: #{model_forward.19} parent=1 // loop_footer
      %s19 = sadd.s32 1, %s15
    $region7: #{model_forward.19} parent=1 // loop_footer_branch
      %14 = sbr.rel target = $region3
    $region8: #{model_forward.19} parent=1 // loop_exit
      _
    %433 = vsyncpa [#allocation3], 1
    %s434 = scalar_lea.sflag [#allocation3], 1
    %435 = vsyncpa %s434, 1

</llo_original>
